<compile_context>
chip_gen: v7x
topology: tpu7x:2x2x1
jax: 0.10.0
libtpu: 0.0.40
codegen_flags: <defaults>
</compile_context>

<pallas_src>
import jax
import jax.numpy as jnp
from jax.experimental import pallas as pl
from jax.experimental.pallas import tpu as pltpu

CONST_KERNEL_SIZE = 3
CONST_PADDING = 1
CONST_STRIDE = 1          # kernel assumes stride 1 (spatial size preserved by the conv)
POOLING = 2
NUM_CLASSES = 10
LANE = 128                # lane-dense padding width for channels / classes


# ----------------------------------------------------------------------------
# Fused forward kernel: one grid step == one batch element.
# ----------------------------------------------------------------------------
def fused_forward_kernel(x_ref, w1_ref, aff1_ref, w2_ref, aff2_ref, wl_ref,
                         o_ref, pad1_ref, pad2_ref):
    # x_ref:    (1, H, W, Cin)            NHWC input tile
    # w1_ref:   (K, K, Cin, 128)          conv1 weight, Cout zero-padded to 128 lanes
    # aff1_ref: (3, 128)                  rows = [conv bias, BN scale, BN shift] (padded)
    # w2_ref:   (K, K, 128, 128)          conv2 weight, Cin AND Cout zero-padded to 128
    # aff2_ref: (3, 128)
    # wl_ref:   (Ho2*Wo2, 128, 128)       linear weight, (h,w)-major, channels/classes padded
    # o_ref:    (1, 1, 128)               padded logits (single lane-dense store)
    # pad1_ref: VMEM (H+2, W+2, Cin)      zero-halo conv1 input scratch
    # pad2_ref: VMEM (H/2+2, W/2+2, 128)  zero-halo, lane-dense conv2 input scratch
    P = CONST_PADDING
    K = w1_ref.shape[0]
    _, H1, W1, CIN = x_ref.shape
    CP = w1_ref.shape[3]                      # lane-padded channel width (128)
    Hp1, Wp1, _ = pad1_ref.shape
    Hp2, Wp2, _ = pad2_ref.shape
    H2, W2 = Hp2 - 2 * P, Wp2 - 2 * P         # conv2 spatial = pooled conv1 spatial
    Ho1, Wo1 = H1 // POOLING, W1 // POOLING
    Ho2, Wo2 = H2 // POOLING, W2 // POOLING
    assert (Ho1, Wo1) == (H2, W2) and wl_ref.shape[0] == Ho2 * Wo2
    f32 = jnp.float32

    # ---------------- conv1 input: halo-only zeroing + dense interior store ----------------
    pad1_ref[0:P, :, :] = jnp.zeros((P, Wp1, CIN), f32)
    pad1_ref[P + H1:Hp1, :, :] = jnp.zeros((P, Wp1, CIN), f32)
    pad1_ref[P:P + H1, 0:P, :] = jnp.zeros((H1, P, CIN), f32)
    pad1_ref[P:P + H1, P + W1:Wp1, :] = jnp.zeros((H1, P, CIN), f32)
    pad1_ref[P:P + H1, P:P + W1, :] = x_ref[0]

    # ---------------- conv1 + bias + ReLU + BatchNorm ----------------
    acc = jnp.zeros((H1 * W1, CP), f32)
    for kh in range(K):                        # K*K shifted-window matmuls (static unroll)
        for kw in range(K):
            patch = pad1_ref[kh:kh + H1, kw:kw + W1, :].reshape(H1 * W1, CIN)
            acc = acc + jnp.dot(patch, w1_ref[kh, kw],
                                preferred_element_type=f32)
    acc = jnp.maximum(acc + aff1_ref[0:1, :], 0.0)       # conv bias + ReLU (module order)
    acc = acc * aff1_ref[1:2, :] + aff1_ref[2:3, :]      # BatchNorm (inference affine)

    # ---------------- MaxPool2d(2): reshape+max on H and W, ONE dense store ----------------
    hp = jnp.max(acc.reshape(Ho1, POOLING, W1, CP), axis=1)           # (Ho1, W1, CP)
    pooled1 = jnp.max(hp.reshape(Ho1, Wo1, POOLING, CP), axis=2)      # (Ho1, Wo1, CP)

    # conv2 input: halo-only zeroing + single dense 128-lane interior store
    pad2_ref[0:P, :, :] = jnp.zeros((P, Wp2, CP), f32)
    pad2_ref[P + H2:Hp2, :, :] = jnp.zeros((P, Wp2, CP), f32)
    pad2_ref[P:P + H2, 0:P, :] = jnp.zeros((H2, P, CP), f32)
    pad2_ref[P:P + H2, P + W2:Wp2, :] = jnp.zeros((H2, P, CP), f32)
    pad2_ref[P:P + H2, P:P + W2, :] = pooled1

    # ---------------- conv2 + bias + ReLU + BatchNorm (full 128-lane contraction) ----------
    acc2 = jnp.zeros((H2 * W2, CP), f32)
    for kh in range(K):
        for kw in range(K):
            patch = pad2_ref[kh:kh + H2, kw:kw + W2, :].reshape(H2 * W2, CP)
            acc2 = acc2 + jnp.dot(patch, w2_ref[kh, kw],
                                  preferred_element_type=f32)
    acc2 = jnp.maximum(acc2 + aff2_ref[0:1, :], 0.0)
    acc2 = acc2 * aff2_ref[1:2, :] + aff2_ref[2:3, :]
    # Dropout(p=0.2): identity at inference time.

    # ---------------- MaxPool2d(2) + flatten + Linear(bias=False) ----------------
    hp2 = jnp.max(acc2.reshape(Ho2, POOLING, W2, CP), axis=1)         # (Ho2, W2, CP)
    pooled2 = jnp.max(hp2.reshape(Ho2, Wo2, POOLING, CP), axis=2)     # (Ho2, Wo2, CP)
    feat = pooled2.reshape(Ho2 * Wo2, CP)                             # (hw, 128), safe reshape
    # Per-position matvec with the full 128-lane channel contraction; weights are already
    # reordered/zero-padded host-side so there are no narrowing slices and padded lanes
    # contribute exact zeros.  (See header note 3 for why this is not one 2048-deep dot.)
    logits = jnp.zeros((1, CP), f32)
    for i in range(Ho2 * Wo2):
        logits = logits + jnp.dot(feat[i:i + 1, :], wl_ref[i],
                                  preferred_element_type=f32)
    o_ref[0] = logits.astype(o_ref.dtype)                             # single lane-dense store


# ----------------------------------------------------------------------------
# Host-side one-time parameter preparation (BN folding + lane padding + reordering).
# ----------------------------------------------------------------------------
def prepare_params(raw):
    def bn_affine(g, b, m, v, eps=1e-5):
        s = g / jnp.sqrt(v + eps)
        return s, b - m * s

    def pad_last(a, width=LANE):
        return jnp.pad(a, [(0, 0)] * (a.ndim - 1) + [(0, width - a.shape[-1])])

    s1, t1 = bn_affine(raw["g1"], raw["be1"], raw["rm1"], raw["rv1"])
    s2, t2 = bn_affine(raw["g2"], raw["be2"], raw["rm2"], raw["rv2"])
    c1 = raw["w1"].shape[3]
    c2 = raw["w2"].shape[3]

    # conv2 weight: pad BOTH Cin (must stay exactly zero for the 128-lane pad2 activations)
    # and Cout to 128 lanes.
    w2p = jnp.pad(raw["w2"], ((0, 0), (0, 0), (0, LANE - c1), (0, LANE - c2)))

    # Linear weight: torch.flatten on NCHW is channel-major (f = c*hw + h*W + w).
    wl = raw["wl"]                                        # (NUM_CLASSES, c2 * Ho2 * Wo2)
    hw2 = wl.shape[1] // c2
    wl_r = jnp.transpose(wl.reshape(NUM_CLASSES, c2, hw2), (2, 1, 0))   # (hw, c2, class)
    # Pad channel rows and class cols with zeros (padded activation lanes multiply zeros).
    wl_p = jnp.pad(wl_r, ((0, 0), (0, LANE - c2), (0, LANE - NUM_CLASSES)))  # (hw,128,128)

    return {
        "w1": pad_last(raw["w1"]),                                      # (K,K,Cin,128)
        "aff1": pad_last(jnp.stack([raw["b1"], s1, t1], axis=0)),       # (3,128)
        "w2": w2p,                                                      # (K,K,128,128)
        "aff2": pad_last(jnp.stack([raw["b2"], s2, t2], axis=0)),       # (3,128)
        "wl": wl_p,                                                     # (hw,128,128)
    }


# ----------------------------------------------------------------------------
# Full forward pass (one fused pallas_call).
# ----------------------------------------------------------------------------
@jax.jit
def forward(x_nchw, p):
    x = jnp.transpose(x_nchw, (0, 2, 3, 1))          # NCHW -> NHWC (channels on lanes)
    N, H, W, Cin = x.shape
    assert CONST_STRIDE == 1 and H % (POOLING * POOLING) == 0 and W % (POOLING * POOLING) == 0
    CLSP = p["wl"].shape[2]

    out = pl.pallas_call(
        fused_forward_kernel,
        out_shape=jax.ShapeDtypeStruct((N, 1, CLSP), jnp.float32),
        grid=(N,),
        in_specs=[
            pl.BlockSpec((1, H, W, Cin), lambda n: (n, 0, 0, 0)),
            pl.BlockSpec(p["w1"].shape, lambda n: (0, 0, 0, 0)),
            pl.BlockSpec(p["aff1"].shape, lambda n: (0, 0)),
            pl.BlockSpec(p["w2"].shape, lambda n: (0, 0, 0, 0)),
            pl.BlockSpec(p["aff2"].shape, lambda n: (0, 0)),
            pl.BlockSpec(p["wl"].shape, lambda n: (0, 0, 0)),
        ],
        out_specs=pl.BlockSpec((1, 1, CLSP), lambda n: (n, 0, 0)),
        scratch_shapes=[
            pltpu.VMEM((H + 2 * CONST_PADDING, W + 2 * CONST_PADDING, Cin), jnp.float32),
            pltpu.VMEM((H // POOLING + 2 * CONST_PADDING,
                        W // POOLING + 2 * CONST_PADDING, LANE), jnp.float32),
        ],
        compiler_params=pltpu.CompilerParams(dimension_semantics=("parallel",)),
    )(x, p["w1"], p["aff1"], p["w2"], p["aff2"], p["wl"])

    return out[:, 0, :NUM_CLASSES]


# ----------------------------------------------------------------------------
# Deterministic parameter init (weights defined directly in HWIO) + pure-JAX reference.
# ----------------------------------------------------------------------------
def init_raw_params(key, in_channel, out_channel, feat_dim):
    k = CONST_KERNEL_SIZE
    c1, c2 = out_channel, out_channel * 2
    ks = jax.random.split(key, 14)
    return {
        "w1": 0.1 * jax.random.normal(ks[0], (k, k, in_channel, c1), jnp.float32),
        "b1": 0.05 * jax.random.normal(ks[1], (c1,), jnp.float32),
        "w2": 0.1 * jax.random.normal(ks[2], (k, k, c1, c2), jnp.float32),
        "b2": 0.05 * jax.random.normal(ks[3], (c2,), jnp.float32),
        "g1": 1.0 + 0.1 * jax.random.normal(ks[4], (c1,), jnp.float32),
        "be1": 0.05 * jax.random.normal(ks[5], (c1,), jnp.float32),
        "rm1": 0.1 * jax.random.normal(ks[6], (c1,), jnp.float32),
        "rv1": 1.0 + 0.1 * jnp.abs(jax.random.normal(ks[7], (c1,), jnp.float32)),
        "g2": 1.0 + 0.1 * jax.random.normal(ks[8], (c2,), jnp.float32),
        "be2": 0.05 * jax.random.normal(ks[9], (c2,), jnp.float32),
        "rm2": 0.1 * jax.random.normal(ks[10], (c2,), jnp.float32),
        "rv2": 1.0 + 0.1 * jnp.abs(jax.random.normal(ks[11], (c2,), jnp.float32)),
        # Lazily-built nn.Linear(feat_dim, NUM_CLASSES, bias=False) -> weight (C, F)
        "wl": 0.05 * jax.random.normal(ks[12], (NUM_CLASSES, feat_dim), jnp.float32),
    }


def reference_forward(x_nchw, raw):
    """Pure-JAX (XLA) reference: Conv -> ReLU -> BN(eval) -> MaxPool, x2, flatten, linear."""
    def block(x_nhwc, w, b, g, be, rm, rv):
        y = jax.lax.conv_general_dilated(
            x_nhwc, w, window_strides=(CONST_STRIDE, CONST_STRIDE),
            padding=((CONST_PADDING, CONST_PADDING), (CONST_PADDING, CONST_PADDING)),
            dimension_numbers=("NHWC", "HWIO", "NHWC"))
        y = jnp.maximum(y + b, 0.0)
        y = (y - rm) / jnp.sqrt(rv + 1e-5) * g + be
        return jax.lax.reduce_window(y, -jnp.inf, jax.lax.max,
                                     (1, POOLING, POOLING, 1),
                                     (1, POOLING, POOLING, 1), "VALID")

    x = jnp.transpose(x_nchw, (0, 2, 3, 1))
    y = block(x, raw["w1"], raw["b1"], raw["g1"], raw["be1"], raw["rm1"], raw["rv1"])
    y = block(y, raw["w2"], raw["b2"], raw["g2"], raw["be2"], raw["rm2"], raw["rv2"])
    feat = jnp.transpose(y, (0, 3, 1, 2)).reshape(y.shape[0], -1)   # torch.flatten order
    return feat @ raw["wl"].T


if __name__ == "__main__":
    # Small shapes consistent with the module: batch=2, in_channel=4, 16x16 images,
    # out_channel=8.  After two conv+pool blocks: (2, 16, 4, 4) -> flatten F=256.
    N, CIN, HW, COUT = 2, 4, 16, 8
    feat_dim = (COUT * 2) * (HW // 4) * (HW // 4)   # 16 * 4 * 4 = 256

    key = jax.random.PRNGKey(0)
    kx, kp = jax.random.split(key)
    x = jax.random.normal(kx, (N, CIN, HW, HW), jnp.float32)        # NCHW, like PyTorch
    raw = init_raw_params(kp, CIN, COUT, feat_dim)
    params = prepare_params(raw)                                    # one-time host folding

    out = jax.block_until_ready(forward(x, params))
    assert out.shape == (N, NUM_CLASSES), out.shape
    assert bool(jnp.all(jnp.isfinite(out)))

    ref = jax.block_until_ready(reference_forward(x, raw))
    max_err = float(jnp.max(jnp.abs(out - ref)))
    assert max_err < 1e-3, f"max abs err vs reference: {max_err}"

    print("KERNEL_OK")
</pallas_src>

<mosaic_0001>
module attributes {stable_mosaic.version = 11 : i64} {
  func.func @fused_forward_kernel(%arg0: i32, %arg1: memref<1x16x16x4xf32, #tpu.memory_space<vmem>>, %arg2: memref<3x3x4x128xf32, #tpu.memory_space<vmem>>, %arg3: memref<3x128xf32, #tpu.memory_space<vmem>>, %arg4: memref<3x3x128x128xf32, #tpu.memory_space<vmem>>, %arg5: memref<3x128xf32, #tpu.memory_space<vmem>>, %arg6: memref<16x128x128xf32, #tpu.memory_space<vmem>>, %arg7: memref<1x1x128xf32, #tpu.memory_space<vmem>>, %arg8: memref<18x18x4xf32, #tpu.memory_space<vmem>>, %arg9: memref<10x10x128xf32, #tpu.memory_space<vmem>>) attributes {dimension_semantics = [#tpu.dimension_semantics<parallel>], iteration_bounds = array<i64: 2>, scalar_prefetch = 0 : i64, scratch_operands = 2 : i64, tpu.core_type = #tpu.core_type<tc>, window_params = [{transform_indices = @transform_0, window_bounds = array<i64: 1, 16, 16, 4>}, {pipeline_mode = #tpu.pipeline_mode<synchronous>, transform_indices = @transform_1, window_bounds = array<i64: 3, 3, 4, 128>}, {pipeline_mode = #tpu.pipeline_mode<synchronous>, transform_indices = @transform_2, window_bounds = array<i64: 3, 128>}, {pipeline_mode = #tpu.pipeline_mode<synchronous>, transform_indices = @transform_3, window_bounds = array<i64: 3, 3, 128, 128>}, {pipeline_mode = #tpu.pipeline_mode<synchronous>, transform_indices = @transform_4, window_bounds = array<i64: 3, 128>}, {pipeline_mode = #tpu.pipeline_mode<synchronous>, transform_indices = @transform_5, window_bounds = array<i64: 16, 128, 128>}, {transform_indices = @transform_6, window_bounds = array<i64: 1, 1, 128>}]} {
    %cst = arith.constant 0.000000e+00 : f32
    %0 = vector.broadcast %cst : f32 to vector<1x18x4xf32>
    %c0 = arith.constant 0 : index
    %c0_0 = arith.constant 0 : index
    %c0_1 = arith.constant 0 : index
    %1 = vector.load %arg8[%c0, %c0_0, %c0_1] : memref<18x18x4xf32, #tpu.memory_space<vmem>>, vector<1x18x4xf32>
    tpu.vector_store %arg8[%c0, %c0_0, %c0_1], %0 {strides = array<i32>} : memref<18x18x4xf32, #tpu.memory_space<vmem>>, vector<1x18x4xf32>,
    %cst_2 = arith.constant 0.000000e+00 : f32
    %2 = vector.broadcast %cst_2 : f32 to vector<1x18x4xf32>
    %c17 = arith.constant 17 : index
    %c0_3 = arith.constant 0 : index
    %c0_4 = arith.constant 0 : index
    %3 = vector.load %arg8[%c17, %c0_3, %c0_4] : memref<18x18x4xf32, #tpu.memory_space<vmem>>, vector<1x18x4xf32>
    tpu.vector_store %arg8[%c17, %c0_3, %c0_4], %2 {strides = array<i32>} : memref<18x18x4xf32, #tpu.memory_space<vmem>>, vector<1x18x4xf32>,
    %cst_5 = arith.constant 0.000000e+00 : f32
    %4 = vector.broadcast %cst_5 : f32 to vector<16x1x4xf32>
    %c1 = arith.constant 1 : index
    %c0_6 = arith.constant 0 : index
    %c0_7 = arith.constant 0 : index
    %5 = vector.load %arg8[%c1, %c0_6, %c0_7] : memref<18x18x4xf32, #tpu.memory_space<vmem>>, vector<16x1x4xf32>
    tpu.vector_store %arg8[%c1, %c0_6, %c0_7], %4 {strides = array<i32>} : memref<18x18x4xf32, #tpu.memory_space<vmem>>, vector<16x1x4xf32>,
    %cst_8 = arith.constant 0.000000e+00 : f32
    %6 = vector.broadcast %cst_8 : f32 to vector<16x1x4xf32>
    %c1_9 = arith.constant 1 : index
    %c17_10 = arith.constant 17 : index
    %c0_11 = arith.constant 0 : index
    %7 = vector.load %arg8[%c1_9, %c17_10, %c0_11] : memref<18x18x4xf32, #tpu.memory_space<vmem>>, vector<16x1x4xf32>
    tpu.vector_store %arg8[%c1_9, %c17_10, %c0_11], %6 {strides = array<i32>} : memref<18x18x4xf32, #tpu.memory_space<vmem>>, vector<16x1x4xf32>,
    %c0_12 = arith.constant 0 : index
    %c0_13 = arith.constant 0 : index
    %c0_14 = arith.constant 0 : index
    %c0_15 = arith.constant 0 : index
    %8 = vector.load %arg1[%c0_12, %c0_13, %c0_14, %c0_15] : memref<1x16x16x4xf32, #tpu.memory_space<vmem>>, vector<1x16x16x4xf32>
    %9 = vector.shape_cast %8 : vector<1x16x16x4xf32> to vector<16x16x4xf32>
    %c1_16 = arith.constant 1 : index
    %c1_17 = arith.constant 1 : index
    %c0_18 = arith.constant 0 : index
    %10 = vector.load %arg8[%c1_16, %c1_17, %c0_18] : memref<18x18x4xf32, #tpu.memory_space<vmem>>, vector<16x16x4xf32>
    tpu.vector_store %arg8[%c1_16, %c1_17, %c0_18], %9 {strides = array<i32>} : memref<18x18x4xf32, #tpu.memory_space<vmem>>, vector<16x16x4xf32>,
    %cst_19 = arith.constant 0.000000e+00 : f32
    %11 = vector.broadcast %cst_19 : f32 to vector<256x128xf32>
    %c0_20 = arith.constant 0 : index
    %c0_21 = arith.constant 0 : index
    %c0_22 = arith.constant 0 : index
    %12 = vector.load %arg8[%c0_20, %c0_21, %c0_22] : memref<18x18x4xf32, #tpu.memory_space<vmem>>, vector<16x16x4xf32>
    %13 = vector.shape_cast %12 : vector<16x16x4xf32> to vector<256x4xf32>
    %c0_23 = arith.constant 0 : index
    %c0_24 = arith.constant 0 : index
    %c0_25 = arith.constant 0 : index
    %c0_26 = arith.constant 0 : index
    %14 = vector.load %arg2[%c0_23, %c0_24, %c0_25, %c0_26] : memref<3x3x4x128xf32, #tpu.memory_space<vmem>>, vector<1x1x4x128xf32>
    %15 = vector.shape_cast %14 : vector<1x1x4x128xf32> to vector<4x128xf32>
    %cst_27 = arith.constant dense<0.000000e+00> : vector<256x128xf32>
    %16 = tpu.matmul %13, %15, %cst_27 {dimension_numbers = #tpu.dot_dimension_numbers<[1], [0], [0], [1], [0, 0, 1, 1], [], []>} : vector<256x4xf32>, vector<4x128xf32>, vector<256x128xf32> -> vector<256x128xf32>
    %17 = arith.addf %11, %16 : vector<256x128xf32>
    %c0_28 = arith.constant 0 : index
    %c1_29 = arith.constant 1 : index
    %c0_30 = arith.constant 0 : index
    %18 = vector.load %arg8[%c0_28, %c1_29, %c0_30] : memref<18x18x4xf32, #tpu.memory_space<vmem>>, vector<16x16x4xf32>
    %19 = vector.shape_cast %18 : vector<16x16x4xf32> to vector<256x4xf32>
    %c0_31 = arith.constant 0 : index
    %c1_32 = arith.constant 1 : index
    %c0_33 = arith.constant 0 : index
    %c0_34 = arith.constant 0 : index
    %20 = vector.load %arg2[%c0_31, %c1_32, %c0_33, %c0_34] : memref<3x3x4x128xf32, #tpu.memory_space<vmem>>, vector<1x1x4x128xf32>
    %21 = vector.shape_cast %20 : vector<1x1x4x128xf32> to vector<4x128xf32>
    %cst_35 = arith.constant dense<0.000000e+00> : vector<256x128xf32>
    %22 = tpu.matmul %19, %21, %cst_35 {dimension_numbers = #tpu.dot_dimension_numbers<[1], [0], [0], [1], [0, 0, 1, 1], [], []>} : vector<256x4xf32>, vector<4x128xf32>, vector<256x128xf32> -> vector<256x128xf32>
    %23 = arith.addf %17, %22 : vector<256x128xf32>
    %c0_36 = arith.constant 0 : index
    %c2 = arith.constant 2 : index
    %c0_37 = arith.constant 0 : index
    %24 = vector.load %arg8[%c0_36, %c2, %c0_37] : memref<18x18x4xf32, #tpu.memory_space<vmem>>, vector<16x16x4xf32>
    %25 = vector.shape_cast %24 : vector<16x16x4xf32> to vector<256x4xf32>
    %c0_38 = arith.constant 0 : index
    %c2_39 = arith.constant 2 : index
    %c0_40 = arith.constant 0 : index
    %c0_41 = arith.constant 0 : index
    %26 = vector.load %arg2[%c0_38, %c2_39, %c0_40, %c0_41] : memref<3x3x4x128xf32, #tpu.memory_space<vmem>>, vector<1x1x4x128xf32>
    %27 = vector.shape_cast %26 : vector<1x1x4x128xf32> to vector<4x128xf32>
    %cst_42 = arith.constant dense<0.000000e+00> : vector<256x128xf32>
    %28 = tpu.matmul %25, %27, %cst_42 {dimension_numbers = #tpu.dot_dimension_numbers<[1], [0], [0], [1], [0, 0, 1, 1], [], []>} : vector<256x4xf32>, vector<4x128xf32>, vector<256x128xf32> -> vector<256x128xf32>
    %29 = arith.addf %23, %28 : vector<256x128xf32>
    %c1_43 = arith.constant 1 : index
    %c0_44 = arith.constant 0 : index
    %c0_45 = arith.constant 0 : index
    %30 = vector.load %arg8[%c1_43, %c0_44, %c0_45] : memref<18x18x4xf32, #tpu.memory_space<vmem>>, vector<16x16x4xf32>
    %31 = vector.shape_cast %30 : vector<16x16x4xf32> to vector<256x4xf32>
    %c1_46 = arith.constant 1 : index
    %c0_47 = arith.constant 0 : index
    %c0_48 = arith.constant 0 : index
    %c0_49 = arith.constant 0 : index
    %32 = vector.load %arg2[%c1_46, %c0_47, %c0_48, %c0_49] : memref<3x3x4x128xf32, #tpu.memory_space<vmem>>, vector<1x1x4x128xf32>
    %33 = vector.shape_cast %32 : vector<1x1x4x128xf32> to vector<4x128xf32>
    %cst_50 = arith.constant dense<0.000000e+00> : vector<256x128xf32>
    %34 = tpu.matmul %31, %33, %cst_50 {dimension_numbers = #tpu.dot_dimension_numbers<[1], [0], [0], [1], [0, 0, 1, 1], [], []>} : vector<256x4xf32>, vector<4x128xf32>, vector<256x128xf32> -> vector<256x128xf32>
    %35 = arith.addf %29, %34 : vector<256x128xf32>
    %c1_51 = arith.constant 1 : index
    %c1_52 = arith.constant 1 : index
    %c0_53 = arith.constant 0 : index
    %36 = vector.load %arg8[%c1_51, %c1_52, %c0_53] : memref<18x18x4xf32, #tpu.memory_space<vmem>>, vector<16x16x4xf32>
    %37 = vector.shape_cast %36 : vector<16x16x4xf32> to vector<256x4xf32>
    %c1_54 = arith.constant 1 : index
    %c1_55 = arith.constant 1 : index
    %c0_56 = arith.constant 0 : index
    %c0_57 = arith.constant 0 : index
    %38 = vector.load %arg2[%c1_54, %c1_55, %c0_56, %c0_57] : memref<3x3x4x128xf32, #tpu.memory_space<vmem>>, vector<1x1x4x128xf32>
    %39 = vector.shape_cast %38 : vector<1x1x4x128xf32> to vector<4x128xf32>
    %cst_58 = arith.constant dense<0.000000e+00> : vector<256x128xf32>
    %40 = tpu.matmul %37, %39, %cst_58 {dimension_numbers = #tpu.dot_dimension_numbers<[1], [0], [0], [1], [0, 0, 1, 1], [], []>} : vector<256x4xf32>, vector<4x128xf32>, vector<256x128xf32> -> vector<256x128xf32>
    %41 = arith.addf %35, %40 : vector<256x128xf32>
    %c1_59 = arith.constant 1 : index
    %c2_60 = arith.constant 2 : index
    %c0_61 = arith.constant 0 : index
    %42 = vector.load %arg8[%c1_59, %c2_60, %c0_61] : memref<18x18x4xf32, #tpu.memory_space<vmem>>, vector<16x16x4xf32>
    %43 = vector.shape_cast %42 : vector<16x16x4xf32> to vector<256x4xf32>
    %c1_62 = arith.constant 1 : index
    %c2_63 = arith.constant 2 : index
    %c0_64 = arith.constant 0 : index
    %c0_65 = arith.constant 0 : index
    %44 = vector.load %arg2[%c1_62, %c2_63, %c0_64, %c0_65] : memref<3x3x4x128xf32, #tpu.memory_space<vmem>>, vector<1x1x4x128xf32>
    %45 = vector.shape_cast %44 : vector<1x1x4x128xf32> to vector<4x128xf32>
    %cst_66 = arith.constant dense<0.000000e+00> : vector<256x128xf32>
    %46 = tpu.matmul %43, %45, %cst_66 {dimension_numbers = #tpu.dot_dimension_numbers<[1], [0], [0], [1], [0, 0, 1, 1], [], []>} : vector<256x4xf32>, vector<4x128xf32>, vector<256x128xf32> -> vector<256x128xf32>
    %47 = arith.addf %41, %46 : vector<256x128xf32>
    %c2_67 = arith.constant 2 : index
    %c0_68 = arith.constant 0 : index
    %c0_69 = arith.constant 0 : index
    %48 = vector.load %arg8[%c2_67, %c0_68, %c0_69] : memref<18x18x4xf32, #tpu.memory_space<vmem>>, vector<16x16x4xf32>
    %49 = vector.shape_cast %48 : vector<16x16x4xf32> to vector<256x4xf32>
    %c2_70 = arith.constant 2 : index
    %c0_71 = arith.constant 0 : index
    %c0_72 = arith.constant 0 : index
    %c0_73 = arith.constant 0 : index
    %50 = vector.load %arg2[%c2_70, %c0_71, %c0_72, %c0_73] : memref<3x3x4x128xf32, #tpu.memory_space<vmem>>, vector<1x1x4x128xf32>
    %51 = vector.shape_cast %50 : vector<1x1x4x128xf32> to vector<4x128xf32>
    %cst_74 = arith.constant dense<0.000000e+00> : vector<256x128xf32>
    %52 = tpu.matmul %49, %51, %cst_74 {dimension_numbers = #tpu.dot_dimension_numbers<[1], [0], [0], [1], [0, 0, 1, 1], [], []>} : vector<256x4xf32>, vector<4x128xf32>, vector<256x128xf32> -> vector<256x128xf32>
    %53 = arith.addf %47, %52 : vector<256x128xf32>
    %c2_75 = arith.constant 2 : index
    %c1_76 = arith.constant 1 : index
    %c0_77 = arith.constant 0 : index
    %54 = vector.load %arg8[%c2_75, %c1_76, %c0_77] : memref<18x18x4xf32, #tpu.memory_space<vmem>>, vector<16x16x4xf32>
    %55 = vector.shape_cast %54 : vector<16x16x4xf32> to vector<256x4xf32>
    %c2_78 = arith.constant 2 : index
    %c1_79 = arith.constant 1 : index
    %c0_80 = arith.constant 0 : index
    %c0_81 = arith.constant 0 : index
    %56 = vector.load %arg2[%c2_78, %c1_79, %c0_80, %c0_81] : memref<3x3x4x128xf32, #tpu.memory_space<vmem>>, vector<1x1x4x128xf32>
    %57 = vector.shape_cast %56 : vector<1x1x4x128xf32> to vector<4x128xf32>
    %cst_82 = arith.constant dense<0.000000e+00> : vector<256x128xf32>
    %58 = tpu.matmul %55, %57, %cst_82 {dimension_numbers = #tpu.dot_dimension_numbers<[1], [0], [0], [1], [0, 0, 1, 1], [], []>} : vector<256x4xf32>, vector<4x128xf32>, vector<256x128xf32> -> vector<256x128xf32>
    %59 = arith.addf %53, %58 : vector<256x128xf32>
    %c2_83 = arith.constant 2 : index
    %c2_84 = arith.constant 2 : index
    %c0_85 = arith.constant 0 : index
    %60 = vector.load %arg8[%c2_83, %c2_84, %c0_85] : memref<18x18x4xf32, #tpu.memory_space<vmem>>, vector<16x16x4xf32>
    %61 = vector.shape_cast %60 : vector<16x16x4xf32> to vector<256x4xf32>
    %c2_86 = arith.constant 2 : index
    %c2_87 = arith.constant 2 : index
    %c0_88 = arith.constant 0 : index
    %c0_89 = arith.constant 0 : index
    %62 = vector.load %arg2[%c2_86, %c2_87, %c0_88, %c0_89] : memref<3x3x4x128xf32, #tpu.memory_space<vmem>>, vector<1x1x4x128xf32>
    %63 = vector.shape_cast %62 : vector<1x1x4x128xf32> to vector<4x128xf32>
    %cst_90 = arith.constant dense<0.000000e+00> : vector<256x128xf32>
    %64 = tpu.matmul %61, %63, %cst_90 {dimension_numbers = #tpu.dot_dimension_numbers<[1], [0], [0], [1], [0, 0, 1, 1], [], []>} : vector<256x4xf32>, vector<4x128xf32>, vector<256x128xf32> -> vector<256x128xf32>
    %65 = arith.addf %59, %64 : vector<256x128xf32>
    %c0_91 = arith.constant 0 : index
    %c0_92 = arith.constant 0 : index
    %66 = vector.load %arg3[%c0_91, %c0_92] : memref<3x128xf32, #tpu.memory_space<vmem>>, vector<1x128xf32>
    %67 = vector.broadcast %66 : vector<1x128xf32> to vector<256x128xf32>
    %68 = arith.addf %65, %67 : vector<256x128xf32>
    %cst_93 = arith.constant 0.000000e+00 : f32
    %69 = vector.broadcast %cst_93 : f32 to vector<256x128xf32>
    %70 = arith.maximumf %68, %69 : vector<256x128xf32>
    %c1_94 = arith.constant 1 : index
    %c0_95 = arith.constant 0 : index
    %71 = vector.load %arg3[%c1_94, %c0_95] : memref<3x128xf32, #tpu.memory_space<vmem>>, vector<1x128xf32>
    %72 = vector.broadcast %71 : vector<1x128xf32> to vector<256x128xf32>
    %73 = arith.mulf %70, %72 : vector<256x128xf32>
    %c2_96 = arith.constant 2 : index
    %c0_97 = arith.constant 0 : index
    %74 = vector.load %arg3[%c2_96, %c0_97] : memref<3x128xf32, #tpu.memory_space<vmem>>, vector<1x128xf32>
    %75 = vector.broadcast %74 : vector<1x128xf32> to vector<256x128xf32>
    %76 = arith.addf %73, %75 : vector<256x128xf32>
    %77 = vector.shape_cast %76 : vector<256x128xf32> to vector<8x2x16x128xf32>
    %cst_98 = arith.constant dense<0xFF800000> : vector<8x16x128xf32>
    %78 = vector.multi_reduction <maximumf>, %77, %cst_98 [1] : vector<8x2x16x128xf32> to vector<8x16x128xf32>
    %79 = vector.shape_cast %78 : vector<8x16x128xf32> to vector<8x8x2x128xf32>
    %cst_99 = arith.constant dense<0xFF800000> : vector<8x8x128xf32>
    %80 = vector.multi_reduction <maximumf>, %79, %cst_99 [2] : vector<8x8x2x128xf32> to vector<8x8x128xf32>
    %cst_100 = arith.constant 0.000000e+00 : f32
    %81 = vector.broadcast %cst_100 : f32 to vector<1x10x128xf32>
    %c0_101 = arith.constant 0 : index
    %c0_102 = arith.constant 0 : index
    %c0_103 = arith.constant 0 : index
    %82 = vector.load %arg9[%c0_101, %c0_102, %c0_103] : memref<10x10x128xf32, #tpu.memory_space<vmem>>, vector<1x10x128xf32>
    tpu.vector_store %arg9[%c0_101, %c0_102, %c0_103], %81 {strides = array<i32>} : memref<10x10x128xf32, #tpu.memory_space<vmem>>, vector<1x10x128xf32>,
    %cst_104 = arith.constant 0.000000e+00 : f32
    %83 = vector.broadcast %cst_104 : f32 to vector<1x10x128xf32>
    %c9 = arith.constant 9 : index
    %c0_105 = arith.constant 0 : index
    %c0_106 = arith.constant 0 : index
    %84 = vector.load %arg9[%c9, %c0_105, %c0_106] : memref<10x10x128xf32, #tpu.memory_space<vmem>>, vector<1x10x128xf32>
    tpu.vector_store %arg9[%c9, %c0_105, %c0_106], %83 {strides = array<i32>} : memref<10x10x128xf32, #tpu.memory_space<vmem>>, vector<1x10x128xf32>,
    %cst_107 = arith.constant 0.000000e+00 : f32
    %85 = vector.broadcast %cst_107 : f32 to vector<8x1x128xf32>
    %c1_108 = arith.constant 1 : index
    %c0_109 = arith.constant 0 : index
    %c0_110 = arith.constant 0 : index
    %86 = vector.load %arg9[%c1_108, %c0_109, %c0_110] : memref<10x10x128xf32, #tpu.memory_space<vmem>>, vector<8x1x128xf32>
    tpu.vector_store %arg9[%c1_108, %c0_109, %c0_110], %85 {strides = array<i32>} : memref<10x10x128xf32, #tpu.memory_space<vmem>>, vector<8x1x128xf32>,
    %cst_111 = arith.constant 0.000000e+00 : f32
    %87 = vector.broadcast %cst_111 : f32 to vector<8x1x128xf32>
    %c1_112 = arith.constant 1 : index
    %c9_113 = arith.constant 9 : index
    %c0_114 = arith.constant 0 : index
    %88 = vector.load %arg9[%c1_112, %c9_113, %c0_114] : memref<10x10x128xf32, #tpu.memory_space<vmem>>, vector<8x1x128xf32>
    tpu.vector_store %arg9[%c1_112, %c9_113, %c0_114], %87 {strides = array<i32>} : memref<10x10x128xf32, #tpu.memory_space<vmem>>, vector<8x1x128xf32>,
    %c1_115 = arith.constant 1 : index
    %c1_116 = arith.constant 1 : index
    %c0_117 = arith.constant 0 : index
    %89 = vector.load %arg9[%c1_115, %c1_116, %c0_117] : memref<10x10x128xf32, #tpu.memory_space<vmem>>, vector<8x8x128xf32>
    tpu.vector_store %arg9[%c1_115, %c1_116, %c0_117], %80 {strides = array<i32>} : memref<10x10x128xf32, #tpu.memory_space<vmem>>, vector<8x8x128xf32>,
    %cst_118 = arith.constant 0.000000e+00 : f32
    %90 = vector.broadcast %cst_118 : f32 to vector<64x128xf32>
    %c0_119 = arith.constant 0 : index
    %c0_120 = arith.constant 0 : index
    %c0_121 = arith.constant 0 : index
    %91 = vector.load %arg9[%c0_119, %c0_120, %c0_121] : memref<10x10x128xf32, #tpu.memory_space<vmem>>, vector<8x8x128xf32>
    %92 = vector.shape_cast %91 : vector<8x8x128xf32> to vector<64x128xf32>
    %c0_122 = arith.constant 0 : index
    %c0_123 = arith.constant 0 : index
    %c0_124 = arith.constant 0 : index
    %c0_125 = arith.constant 0 : index
    %93 = vector.load %arg4[%c0_122, %c0_123, %c0_124, %c0_125] : memref<3x3x128x128xf32, #tpu.memory_space<vmem>>, vector<1x1x128x128xf32>
    %94 = vector.shape_cast %93 : vector<1x1x128x128xf32> to vector<128x128xf32>
    %cst_126 = arith.constant dense<0.000000e+00> : vector<64x128xf32>
    %95 = tpu.matmul %92, %94, %cst_126 {dimension_numbers = #tpu.dot_dimension_numbers<[1], [0], [0], [1], [0, 0, 1, 1], [], []>} : vector<64x128xf32>, vector<128x128xf32>, vector<64x128xf32> -> vector<64x128xf32>
    %96 = arith.addf %90, %95 : vector<64x128xf32>
    %c0_127 = arith.constant 0 : index
    %c1_128 = arith.constant 1 : index
    %c0_129 = arith.constant 0 : index
    %97 = vector.load %arg9[%c0_127, %c1_128, %c0_129] : memref<10x10x128xf32, #tpu.memory_space<vmem>>, vector<8x8x128xf32>
    %98 = vector.shape_cast %97 : vector<8x8x128xf32> to vector<64x128xf32>
    %c0_130 = arith.constant 0 : index
    %c1_131 = arith.constant 1 : index
    %c0_132 = arith.constant 0 : index
    %c0_133 = arith.constant 0 : index
    %99 = vector.load %arg4[%c0_130, %c1_131, %c0_132, %c0_133] : memref<3x3x128x128xf32, #tpu.memory_space<vmem>>, vector<1x1x128x128xf32>
    %100 = vector.shape_cast %99 : vector<1x1x128x128xf32> to vector<128x128xf32>
    %cst_134 = arith.constant dense<0.000000e+00> : vector<64x128xf32>
    %101 = tpu.matmul %98, %100, %cst_134 {dimension_numbers = #tpu.dot_dimension_numbers<[1], [0], [0], [1], [0, 0, 1, 1], [], []>} : vector<64x128xf32>, vector<128x128xf32>, vector<64x128xf32> -> vector<64x128xf32>
    %102 = arith.addf %96, %101 : vector<64x128xf32>
    %c0_135 = arith.constant 0 : index
    %c2_136 = arith.constant 2 : index
    %c0_137 = arith.constant 0 : index
    %103 = vector.load %arg9[%c0_135, %c2_136, %c0_137] : memref<10x10x128xf32, #tpu.memory_space<vmem>>, vector<8x8x128xf32>
    %104 = vector.shape_cast %103 : vector<8x8x128xf32> to vector<64x128xf32>
    %c0_138 = arith.constant 0 : index
    %c2_139 = arith.constant 2 : index
    %c0_140 = arith.constant 0 : index
    %c0_141 = arith.constant 0 : index
    %105 = vector.load %arg4[%c0_138, %c2_139, %c0_140, %c0_141] : memref<3x3x128x128xf32, #tpu.memory_space<vmem>>, vector<1x1x128x128xf32>
    %106 = vector.shape_cast %105 : vector<1x1x128x128xf32> to vector<128x128xf32>
    %cst_142 = arith.constant dense<0.000000e+00> : vector<64x128xf32>
    %107 = tpu.matmul %104, %106, %cst_142 {dimension_numbers = #tpu.dot_dimension_numbers<[1], [0], [0], [1], [0, 0, 1, 1], [], []>} : vector<64x128xf32>, vector<128x128xf32>, vector<64x128xf32> -> vector<64x128xf32>
    %108 = arith.addf %102, %107 : vector<64x128xf32>
    %c1_143 = arith.constant 1 : index
    %c0_144 = arith.constant 0 : index
    %c0_145 = arith.constant 0 : index
    %109 = vector.load %arg9[%c1_143, %c0_144, %c0_145] : memref<10x10x128xf32, #tpu.memory_space<vmem>>, vector<8x8x128xf32>
    %110 = vector.shape_cast %109 : vector<8x8x128xf32> to vector<64x128xf32>
    %c1_146 = arith.constant 1 : index
    %c0_147 = arith.constant 0 : index
    %c0_148 = arith.constant 0 : index
    %c0_149 = arith.constant 0 : index
    %111 = vector.load %arg4[%c1_146, %c0_147, %c0_148, %c0_149] : memref<3x3x128x128xf32, #tpu.memory_space<vmem>>, vector<1x1x128x128xf32>
    %112 = vector.shape_cast %111 : vector<1x1x128x128xf32> to vector<128x128xf32>
    %cst_150 = arith.constant dense<0.000000e+00> : vector<64x128xf32>
    %113 = tpu.matmul %110, %112, %cst_150 {dimension_numbers = #tpu.dot_dimension_numbers<[1], [0], [0], [1], [0, 0, 1, 1], [], []>} : vector<64x128xf32>, vector<128x128xf32>, vector<64x128xf32> -> vector<64x128xf32>
    %114 = arith.addf %108, %113 : vector<64x128xf32>
    %c1_151 = arith.constant 1 : index
    %c1_152 = arith.constant 1 : index
    %c0_153 = arith.constant 0 : index
    %115 = vector.load %arg9[%c1_151, %c1_152, %c0_153] : memref<10x10x128xf32, #tpu.memory_space<vmem>>, vector<8x8x128xf32>
    %116 = vector.shape_cast %115 : vector<8x8x128xf32> to vector<64x128xf32>
    %c1_154 = arith.constant 1 : index
    %c1_155 = arith.constant 1 : index
    %c0_156 = arith.constant 0 : index
    %c0_157 = arith.constant 0 : index
    %117 = vector.load %arg4[%c1_154, %c1_155, %c0_156, %c0_157] : memref<3x3x128x128xf32, #tpu.memory_space<vmem>>, vector<1x1x128x128xf32>
    %118 = vector.shape_cast %117 : vector<1x1x128x128xf32> to vector<128x128xf32>
    %cst_158 = arith.constant dense<0.000000e+00> : vector<64x128xf32>
    %119 = tpu.matmul %116, %118, %cst_158 {dimension_numbers = #tpu.dot_dimension_numbers<[1], [0], [0], [1], [0, 0, 1, 1], [], []>} : vector<64x128xf32>, vector<128x128xf32>, vector<64x128xf32> -> vector<64x128xf32>
    %120 = arith.addf %114, %119 : vector<64x128xf32>
    %c1_159 = arith.constant 1 : index
    %c2_160 = arith.constant 2 : index
    %c0_161 = arith.constant 0 : index
    %121 = vector.load %arg9[%c1_159, %c2_160, %c0_161] : memref<10x10x128xf32, #tpu.memory_space<vmem>>, vector<8x8x128xf32>
    %122 = vector.shape_cast %121 : vector<8x8x128xf32> to vector<64x128xf32>
    %c1_162 = arith.constant 1 : index
    %c2_163 = arith.constant 2 : index
    %c0_164 = arith.constant 0 : index
    %c0_165 = arith.constant 0 : index
    %123 = vector.load %arg4[%c1_162, %c2_163, %c0_164, %c0_165] : memref<3x3x128x128xf32, #tpu.memory_space<vmem>>, vector<1x1x128x128xf32>
    %124 = vector.shape_cast %123 : vector<1x1x128x128xf32> to vector<128x128xf32>
    %cst_166 = arith.constant dense<0.000000e+00> : vector<64x128xf32>
    %125 = tpu.matmul %122, %124, %cst_166 {dimension_numbers = #tpu.dot_dimension_numbers<[1], [0], [0], [1], [0, 0, 1, 1], [], []>} : vector<64x128xf32>, vector<128x128xf32>, vector<64x128xf32> -> vector<64x128xf32>
    %126 = arith.addf %120, %125 : vector<64x128xf32>
    %c2_167 = arith.constant 2 : index
    %c0_168 = arith.constant 0 : index
    %c0_169 = arith.constant 0 : index
    %127 = vector.load %arg9[%c2_167, %c0_168, %c0_169] : memref<10x10x128xf32, #tpu.memory_space<vmem>>, vector<8x8x128xf32>
    %128 = vector.shape_cast %127 : vector<8x8x128xf32> to vector<64x128xf32>
    %c2_170 = arith.constant 2 : index
    %c0_171 = arith.constant 0 : index
    %c0_172 = arith.constant 0 : index
    %c0_173 = arith.constant 0 : index
    %129 = vector.load %arg4[%c2_170, %c0_171, %c0_172, %c0_173] : memref<3x3x128x128xf32, #tpu.memory_space<vmem>>, vector<1x1x128x128xf32>
    %130 = vector.shape_cast %129 : vector<1x1x128x128xf32> to vector<128x128xf32>
    %cst_174 = arith.constant dense<0.000000e+00> : vector<64x128xf32>
    %131 = tpu.matmul %128, %130, %cst_174 {dimension_numbers = #tpu.dot_dimension_numbers<[1], [0], [0], [1], [0, 0, 1, 1], [], []>} : vector<64x128xf32>, vector<128x128xf32>, vector<64x128xf32> -> vector<64x128xf32>
    %132 = arith.addf %126, %131 : vector<64x128xf32>
    %c2_175 = arith.constant 2 : index
    %c1_176 = arith.constant 1 : index
    %c0_177 = arith.constant 0 : index
    %133 = vector.load %arg9[%c2_175, %c1_176, %c0_177] : memref<10x10x128xf32, #tpu.memory_space<vmem>>, vector<8x8x128xf32>
    %134 = vector.shape_cast %133 : vector<8x8x128xf32> to vector<64x128xf32>
    %c2_178 = arith.constant 2 : index
    %c1_179 = arith.constant 1 : index
    %c0_180 = arith.constant 0 : index
    %c0_181 = arith.constant 0 : index
    %135 = vector.load %arg4[%c2_178, %c1_179, %c0_180, %c0_181] : memref<3x3x128x128xf32, #tpu.memory_space<vmem>>, vector<1x1x128x128xf32>
    %136 = vector.shape_cast %135 : vector<1x1x128x128xf32> to vector<128x128xf32>
    %cst_182 = arith.constant dense<0.000000e+00> : vector<64x128xf32>
    %137 = tpu.matmul %134, %136, %cst_182 {dimension_numbers = #tpu.dot_dimension_numbers<[1], [0], [0], [1], [0, 0, 1, 1], [], []>} : vector<64x128xf32>, vector<128x128xf32>, vector<64x128xf32> -> vector<64x128xf32>
    %138 = arith.addf %132, %137 : vector<64x128xf32>
    %c2_183 = arith.constant 2 : index
    %c2_184 = arith.constant 2 : index
    %c0_185 = arith.constant 0 : index
    %139 = vector.load %arg9[%c2_183, %c2_184, %c0_185] : memref<10x10x128xf32, #tpu.memory_space<vmem>>, vector<8x8x128xf32>
    %140 = vector.shape_cast %139 : vector<8x8x128xf32> to vector<64x128xf32>
    %c2_186 = arith.constant 2 : index
    %c2_187 = arith.constant 2 : index
    %c0_188 = arith.constant 0 : index
    %c0_189 = arith.constant 0 : index
    %141 = vector.load %arg4[%c2_186, %c2_187, %c0_188, %c0_189] : memref<3x3x128x128xf32, #tpu.memory_space<vmem>>, vector<1x1x128x128xf32>
    %142 = vector.shape_cast %141 : vector<1x1x128x128xf32> to vector<128x128xf32>
    %cst_190 = arith.constant dense<0.000000e+00> : vector<64x128xf32>
    %143 = tpu.matmul %140, %142, %cst_190 {dimension_numbers = #tpu.dot_dimension_numbers<[1], [0], [0], [1], [0, 0, 1, 1], [], []>} : vector<64x128xf32>, vector<128x128xf32>, vector<64x128xf32> -> vector<64x128xf32>
    %144 = arith.addf %138, %143 : vector<64x128xf32>
    %c0_191 = arith.constant 0 : index
    %c0_192 = arith.constant 0 : index
    %145 = vector.load %arg5[%c0_191, %c0_192] : memref<3x128xf32, #tpu.memory_space<vmem>>, vector<1x128xf32>
    %146 = vector.broadcast %145 : vector<1x128xf32> to vector<64x128xf32>
    %147 = arith.addf %144, %146 : vector<64x128xf32>
    %cst_193 = arith.constant 0.000000e+00 : f32
    %148 = vector.broadcast %cst_193 : f32 to vector<64x128xf32>
    %149 = arith.maximumf %147, %148 : vector<64x128xf32>
    %c1_194 = arith.constant 1 : index
    %c0_195 = arith.constant 0 : index
    %150 = vector.load %arg5[%c1_194, %c0_195] : memref<3x128xf32, #tpu.memory_space<vmem>>, vector<1x128xf32>
    %151 = vector.broadcast %150 : vector<1x128xf32> to vector<64x128xf32>
    %152 = arith.mulf %149, %151 : vector<64x128xf32>
    %c2_196 = arith.constant 2 : index
    %c0_197 = arith.constant 0 : index
    %153 = vector.load %arg5[%c2_196, %c0_197] : memref<3x128xf32, #tpu.memory_space<vmem>>, vector<1x128xf32>
    %154 = vector.broadcast %153 : vector<1x128xf32> to vector<64x128xf32>
    %155 = arith.addf %152, %154 : vector<64x128xf32>
    %156 = vector.shape_cast %155 : vector<64x128xf32> to vector<4x2x8x128xf32>
    %cst_198 = arith.constant dense<0xFF800000> : vector<4x8x128xf32>
    %157 = vector.multi_reduction <maximumf>, %156, %cst_198 [1] : vector<4x2x8x128xf32> to vector<4x8x128xf32>
    %158 = vector.shape_cast %157 : vector<4x8x128xf32> to vector<4x4x2x128xf32>
    %cst_199 = arith.constant dense<0xFF800000> : vector<4x4x128xf32>
    %159 = vector.multi_reduction <maximumf>, %158, %cst_199 [2] : vector<4x4x2x128xf32> to vector<4x4x128xf32>
    %160 = vector.shape_cast %159 : vector<4x4x128xf32> to vector<16x128xf32>
    %cst_200 = arith.constant 0.000000e+00 : f32
    %161 = vector.broadcast %cst_200 : f32 to vector<1x128xf32>
    %162 = vector.extract_strided_slice %160 {offsets = [0, 0], sizes = [1, 128], strides = [1, 1]} : vector<16x128xf32> to vector<1x128xf32>
    %c0_201 = arith.constant 0 : index
    %c0_202 = arith.constant 0 : index
    %c0_203 = arith.constant 0 : index
    %163 = vector.load %arg6[%c0_201, %c0_202, %c0_203] : memref<16x128x128xf32, #tpu.memory_space<vmem>>, vector<1x128x128xf32>
    %164 = vector.shape_cast %163 : vector<1x128x128xf32> to vector<128x128xf32>
    %cst_204 = arith.constant dense<0.000000e+00> : vector<1x128xf32>
    %165 = tpu.matmul %162, %164, %cst_204 {dimension_numbers = #tpu.dot_dimension_numbers<[1], [0], [0], [1], [0, 0, 1, 1], [], []>} : vector<1x128xf32>, vector<128x128xf32>, vector<1x128xf32> -> vector<1x128xf32>
    %166 = arith.addf %161, %165 : vector<1x128xf32>
    %167 = vector.extract_strided_slice %160 {offsets = [1, 0], sizes = [1, 128], strides = [1, 1]} : vector<16x128xf32> to vector<1x128xf32>
    %c1_205 = arith.constant 1 : index
    %c0_206 = arith.constant 0 : index
    %c0_207 = arith.constant 0 : index
    %168 = vector.load %arg6[%c1_205, %c0_206, %c0_207] : memref<16x128x128xf32, #tpu.memory_space<vmem>>, vector<1x128x128xf32>
    %169 = vector.shape_cast %168 : vector<1x128x128xf32> to vector<128x128xf32>
    %cst_208 = arith.constant dense<0.000000e+00> : vector<1x128xf32>
    %170 = tpu.matmul %167, %169, %cst_208 {dimension_numbers = #tpu.dot_dimension_numbers<[1], [0], [0], [1], [0, 0, 1, 1], [], []>} : vector<1x128xf32>, vector<128x128xf32>, vector<1x128xf32> -> vector<1x128xf32>
    %171 = arith.addf %166, %170 : vector<1x128xf32>
    %172 = vector.extract_strided_slice %160 {offsets = [2, 0], sizes = [1, 128], strides = [1, 1]} : vector<16x128xf32> to vector<1x128xf32>
    %c2_209 = arith.constant 2 : index
    %c0_210 = arith.constant 0 : index
    %c0_211 = arith.constant 0 : index
    %173 = vector.load %arg6[%c2_209, %c0_210, %c0_211] : memref<16x128x128xf32, #tpu.memory_space<vmem>>, vector<1x128x128xf32>
    %174 = vector.shape_cast %173 : vector<1x128x128xf32> to vector<128x128xf32>
    %cst_212 = arith.constant dense<0.000000e+00> : vector<1x128xf32>
    %175 = tpu.matmul %172, %174, %cst_212 {dimension_numbers = #tpu.dot_dimension_numbers<[1], [0], [0], [1], [0, 0, 1, 1], [], []>} : vector<1x128xf32>, vector<128x128xf32>, vector<1x128xf32> -> vector<1x128xf32>
    %176 = arith.addf %171, %175 : vector<1x128xf32>
    %177 = vector.extract_strided_slice %160 {offsets = [3, 0], sizes = [1, 128], strides = [1, 1]} : vector<16x128xf32> to vector<1x128xf32>
    %c3 = arith.constant 3 : index
    %c0_213 = arith.constant 0 : index
    %c0_214 = arith.constant 0 : index
    %178 = vector.load %arg6[%c3, %c0_213, %c0_214] : memref<16x128x128xf32, #tpu.memory_space<vmem>>, vector<1x128x128xf32>
    %179 = vector.shape_cast %178 : vector<1x128x128xf32> to vector<128x128xf32>
    %cst_215 = arith.constant dense<0.000000e+00> : vector<1x128xf32>
    %180 = tpu.matmul %177, %179, %cst_215 {dimension_numbers = #tpu.dot_dimension_numbers<[1], [0], [0], [1], [0, 0, 1, 1], [], []>} : vector<1x128xf32>, vector<128x128xf32>, vector<1x128xf32> -> vector<1x128xf32>
    %181 = arith.addf %176, %180 : vector<1x128xf32>
    %182 = vector.extract_strided_slice %160 {offsets = [4, 0], sizes = [1, 128], strides = [1, 1]} : vector<16x128xf32> to vector<1x128xf32>
    %c4 = arith.constant 4 : index
    %c0_216 = arith.constant 0 : index
    %c0_217 = arith.constant 0 : index
    %183 = vector.load %arg6[%c4, %c0_216, %c0_217] : memref<16x128x128xf32, #tpu.memory_space<vmem>>, vector<1x128x128xf32>
    %184 = vector.shape_cast %183 : vector<1x128x128xf32> to vector<128x128xf32>
    %cst_218 = arith.constant dense<0.000000e+00> : vector<1x128xf32>
    %185 = tpu.matmul %182, %184, %cst_218 {dimension_numbers = #tpu.dot_dimension_numbers<[1], [0], [0], [1], [0, 0, 1, 1], [], []>} : vector<1x128xf32>, vector<128x128xf32>, vector<1x128xf32> -> vector<1x128xf32>
    %186 = arith.addf %181, %185 : vector<1x128xf32>
    %187 = vector.extract_strided_slice %160 {offsets = [5, 0], sizes = [1, 128], strides = [1, 1]} : vector<16x128xf32> to vector<1x128xf32>
    %c5 = arith.constant 5 : index
    %c0_219 = arith.constant 0 : index
    %c0_220 = arith.constant 0 : index
    %188 = vector.load %arg6[%c5, %c0_219, %c0_220] : memref<16x128x128xf32, #tpu.memory_space<vmem>>, vector<1x128x128xf32>
    %189 = vector.shape_cast %188 : vector<1x128x128xf32> to vector<128x128xf32>
    %cst_221 = arith.constant dense<0.000000e+00> : vector<1x128xf32>
    %190 = tpu.matmul %187, %189, %cst_221 {dimension_numbers = #tpu.dot_dimension_numbers<[1], [0], [0], [1], [0, 0, 1, 1], [], []>} : vector<1x128xf32>, vector<128x128xf32>, vector<1x128xf32> -> vector<1x128xf32>
    %191 = arith.addf %186, %190 : vector<1x128xf32>
    %192 = vector.extract_strided_slice %160 {offsets = [6, 0], sizes = [1, 128], strides = [1, 1]} : vector<16x128xf32> to vector<1x128xf32>
    %c6 = arith.constant 6 : index
    %c0_222 = arith.constant 0 : index
    %c0_223 = arith.constant 0 : index
    %193 = vector.load %arg6[%c6, %c0_222, %c0_223] : memref<16x128x128xf32, #tpu.memory_space<vmem>>, vector<1x128x128xf32>
    %194 = vector.shape_cast %193 : vector<1x128x128xf32> to vector<128x128xf32>
    %cst_224 = arith.constant dense<0.000000e+00> : vector<1x128xf32>
    %195 = tpu.matmul %192, %194, %cst_224 {dimension_numbers = #tpu.dot_dimension_numbers<[1], [0], [0], [1], [0, 0, 1, 1], [], []>} : vector<1x128xf32>, vector<128x128xf32>, vector<1x128xf32> -> vector<1x128xf32>
    %196 = arith.addf %191, %195 : vector<1x128xf32>
    %197 = vector.extract_strided_slice %160 {offsets = [7, 0], sizes = [1, 128], strides = [1, 1]} : vector<16x128xf32> to vector<1x128xf32>
    %c7 = arith.constant 7 : index
    %c0_225 = arith.constant 0 : index
    %c0_226 = arith.constant 0 : index
    %198 = vector.load %arg6[%c7, %c0_225, %c0_226] : memref<16x128x128xf32, #tpu.memory_space<vmem>>, vector<1x128x128xf32>
    %199 = vector.shape_cast %198 : vector<1x128x128xf32> to vector<128x128xf32>
    %cst_227 = arith.constant dense<0.000000e+00> : vector<1x128xf32>
    %200 = tpu.matmul %197, %199, %cst_227 {dimension_numbers = #tpu.dot_dimension_numbers<[1], [0], [0], [1], [0, 0, 1, 1], [], []>} : vector<1x128xf32>, vector<128x128xf32>, vector<1x128xf32> -> vector<1x128xf32>
    %201 = arith.addf %196, %200 : vector<1x128xf32>
    %202 = vector.extract_strided_slice %160 {offsets = [8, 0], sizes = [1, 128], strides = [1, 1]} : vector<16x128xf32> to vector<1x128xf32>
    %c8 = arith.constant 8 : index
    %c0_228 = arith.constant 0 : index
    %c0_229 = arith.constant 0 : index
    %203 = vector.load %arg6[%c8, %c0_228, %c0_229] : memref<16x128x128xf32, #tpu.memory_space<vmem>>, vector<1x128x128xf32>
    %204 = vector.shape_cast %203 : vector<1x128x128xf32> to vector<128x128xf32>
    %cst_230 = arith.constant dense<0.000000e+00> : vector<1x128xf32>
    %205 = tpu.matmul %202, %204, %cst_230 {dimension_numbers = #tpu.dot_dimension_numbers<[1], [0], [0], [1], [0, 0, 1, 1], [], []>} : vector<1x128xf32>, vector<128x128xf32>, vector<1x128xf32> -> vector<1x128xf32>
    %206 = arith.addf %201, %205 : vector<1x128xf32>
    %207 = vector.extract_strided_slice %160 {offsets = [9, 0], sizes = [1, 128], strides = [1, 1]} : vector<16x128xf32> to vector<1x128xf32>
    %c9_231 = arith.constant 9 : index
    %c0_232 = arith.constant 0 : index
    %c0_233 = arith.constant 0 : index
    %208 = vector.load %arg6[%c9_231, %c0_232, %c0_233] : memref<16x128x128xf32, #tpu.memory_space<vmem>>, vector<1x128x128xf32>
    %209 = vector.shape_cast %208 : vector<1x128x128xf32> to vector<128x128xf32>
    %cst_234 = arith.constant dense<0.000000e+00> : vector<1x128xf32>
    %210 = tpu.matmul %207, %209, %cst_234 {dimension_numbers = #tpu.dot_dimension_numbers<[1], [0], [0], [1], [0, 0, 1, 1], [], []>} : vector<1x128xf32>, vector<128x128xf32>, vector<1x128xf32> -> vector<1x128xf32>
    %211 = arith.addf %206, %210 : vector<1x128xf32>
    %212 = vector.extract_strided_slice %160 {offsets = [10, 0], sizes = [1, 128], strides = [1, 1]} : vector<16x128xf32> to vector<1x128xf32>
    %c10 = arith.constant 10 : index
    %c0_235 = arith.constant 0 : index
    %c0_236 = arith.constant 0 : index
    %213 = vector.load %arg6[%c10, %c0_235, %c0_236] : memref<16x128x128xf32, #tpu.memory_space<vmem>>, vector<1x128x128xf32>
    %214 = vector.shape_cast %213 : vector<1x128x128xf32> to vector<128x128xf32>
    %cst_237 = arith.constant dense<0.000000e+00> : vector<1x128xf32>
    %215 = tpu.matmul %212, %214, %cst_237 {dimension_numbers = #tpu.dot_dimension_numbers<[1], [0], [0], [1], [0, 0, 1, 1], [], []>} : vector<1x128xf32>, vector<128x128xf32>, vector<1x128xf32> -> vector<1x128xf32>
    %216 = arith.addf %211, %215 : vector<1x128xf32>
    %217 = vector.extract_strided_slice %160 {offsets = [11, 0], sizes = [1, 128], strides = [1, 1]} : vector<16x128xf32> to vector<1x128xf32>
    %c11 = arith.constant 11 : index
    %c0_238 = arith.constant 0 : index
    %c0_239 = arith.constant 0 : index
    %218 = vector.load %arg6[%c11, %c0_238, %c0_239] : memref<16x128x128xf32, #tpu.memory_space<vmem>>, vector<1x128x128xf32>
    %219 = vector.shape_cast %218 : vector<1x128x128xf32> to vector<128x128xf32>
    %cst_240 = arith.constant dense<0.000000e+00> : vector<1x128xf32>
    %220 = tpu.matmul %217, %219, %cst_240 {dimension_numbers = #tpu.dot_dimension_numbers<[1], [0], [0], [1], [0, 0, 1, 1], [], []>} : vector<1x128xf32>, vector<128x128xf32>, vector<1x128xf32> -> vector<1x128xf32>
    %221 = arith.addf %216, %220 : vector<1x128xf32>
    %222 = vector.extract_strided_slice %160 {offsets = [12, 0], sizes = [1, 128], strides = [1, 1]} : vector<16x128xf32> to vector<1x128xf32>
    %c12 = arith.constant 12 : index
    %c0_241 = arith.constant 0 : index
    %c0_242 = arith.constant 0 : index
    %223 = vector.load %arg6[%c12, %c0_241, %c0_242] : memref<16x128x128xf32, #tpu.memory_space<vmem>>, vector<1x128x128xf32>
    %224 = vector.shape_cast %223 : vector<1x128x128xf32> to vector<128x128xf32>
    %cst_243 = arith.constant dense<0.000000e+00> : vector<1x128xf32>
    %225 = tpu.matmul %222, %224, %cst_243 {dimension_numbers = #tpu.dot_dimension_numbers<[1], [0], [0], [1], [0, 0, 1, 1], [], []>} : vector<1x128xf32>, vector<128x128xf32>, vector<1x128xf32> -> vector<1x128xf32>
    %226 = arith.addf %221, %225 : vector<1x128xf32>
    %227 = vector.extract_strided_slice %160 {offsets = [13, 0], sizes = [1, 128], strides = [1, 1]} : vector<16x128xf32> to vector<1x128xf32>
    %c13 = arith.constant 13 : index
    %c0_244 = arith.constant 0 : index
    %c0_245 = arith.constant 0 : index
    %228 = vector.load %arg6[%c13, %c0_244, %c0_245] : memref<16x128x128xf32, #tpu.memory_space<vmem>>, vector<1x128x128xf32>
    %229 = vector.shape_cast %228 : vector<1x128x128xf32> to vector<128x128xf32>
    %cst_246 = arith.constant dense<0.000000e+00> : vector<1x128xf32>
    %230 = tpu.matmul %227, %229, %cst_246 {dimension_numbers = #tpu.dot_dimension_numbers<[1], [0], [0], [1], [0, 0, 1, 1], [], []>} : vector<1x128xf32>, vector<128x128xf32>, vector<1x128xf32> -> vector<1x128xf32>
    %231 = arith.addf %226, %230 : vector<1x128xf32>
    %232 = vector.extract_strided_slice %160 {offsets = [14, 0], sizes = [1, 128], strides = [1, 1]} : vector<16x128xf32> to vector<1x128xf32>
    %c14 = arith.constant 14 : index
    %c0_247 = arith.constant 0 : index
    %c0_248 = arith.constant 0 : index
    %233 = vector.load %arg6[%c14, %c0_247, %c0_248] : memref<16x128x128xf32, #tpu.memory_space<vmem>>, vector<1x128x128xf32>
    %234 = vector.shape_cast %233 : vector<1x128x128xf32> to vector<128x128xf32>
    %cst_249 = arith.constant dense<0.000000e+00> : vector<1x128xf32>
    %235 = tpu.matmul %232, %234, %cst_249 {dimension_numbers = #tpu.dot_dimension_numbers<[1], [0], [0], [1], [0, 0, 1, 1], [], []>} : vector<1x128xf32>, vector<128x128xf32>, vector<1x128xf32> -> vector<1x128xf32>
    %236 = arith.addf %231, %235 : vector<1x128xf32>
    %237 = vector.extract_strided_slice %160 {offsets = [15, 0], sizes = [1, 128], strides = [1, 1]} : vector<16x128xf32> to vector<1x128xf32>
    %c15 = arith.constant 15 : index
    %c0_250 = arith.constant 0 : index
    %c0_251 = arith.constant 0 : index
    %238 = vector.load %arg6[%c15, %c0_250, %c0_251] : memref<16x128x128xf32, #tpu.memory_space<vmem>>, vector<1x128x128xf32>
    %239 = vector.shape_cast %238 : vector<1x128x128xf32> to vector<128x128xf32>
    %cst_252 = arith.constant dense<0.000000e+00> : vector<1x128xf32>
    %240 = tpu.matmul %237, %239, %cst_252 {dimension_numbers = #tpu.dot_dimension_numbers<[1], [0], [0], [1], [0, 0, 1, 1], [], []>} : vector<1x128xf32>, vector<128x128xf32>, vector<1x128xf32> -> vector<1x128xf32>
    %241 = arith.addf %236, %240 : vector<1x128xf32>
    %c0_253 = arith.constant 0 : index
    %c0_254 = arith.constant 0 : index
    %c0_255 = arith.constant 0 : index
    %242 = vector.load %arg7[%c0_253, %c0_254, %c0_255] : memref<1x1x128xf32, #tpu.memory_space<vmem>>, vector<1x1x128xf32>
    %243 = vector.shape_cast %242 : vector<1x1x128xf32> to vector<1x128xf32>
    %244 = vector.shape_cast %241 : vector<1x128xf32> to vector<1x1x128xf32>
    tpu.vector_store %arg7[%c0_253, %c0_254, %c0_255], %244 {strides = array<i32>} : memref<1x1x128xf32, #tpu.memory_space<vmem>>, vector<1x1x128xf32>,
    return
  }
  func.func @transform_0(%arg0: i32) -> (i32, i32, i32, i32) {
    %c0_i32 = arith.constant 0 : i32
    %c0_i32_0 = arith.constant 0 : i32
    %c0_i32_1 = arith.constant 0 : i32
    %c0_i32_2 = arith.constant 0 : i32
    return %arg0, %c0_i32, %c0_i32_0, %c0_i32_1 : i32, i32, i32, i32
  }
  func.func @transform_1(%arg0: i32) -> (i32, i32, i32, i32) {
    %c0_i32 = arith.constant 0 : i32
    %c0_i32_0 = arith.constant 0 : i32
    %c0_i32_1 = arith.constant 0 : i32
    %c0_i32_2 = arith.constant 0 : i32
    %c0_i32_3 = arith.constant 0 : i32
    return %c0_i32, %c0_i32_0, %c0_i32_1, %c0_i32_2 : i32, i32, i32, i32
  }
  func.func @transform_2(%arg0: i32) -> (i32, i32) {
    %c0_i32 = arith.constant 0 : i32
    %c0_i32_0 = arith.constant 0 : i32
    %c0_i32_1 = arith.constant 0 : i32
    return %c0_i32, %c0_i32_0 : i32, i32
  }
  func.func @transform_3(%arg0: i32) -> (i32, i32, i32, i32) {
    %c0_i32 = arith.constant 0 : i32
    %c0_i32_0 = arith.constant 0 : i32
    %c0_i32_1 = arith.constant 0 : i32
    %c0_i32_2 = arith.constant 0 : i32
    %c0_i32_3 = arith.constant 0 : i32
    return %c0_i32, %c0_i32_0, %c0_i32_1, %c0_i32_2 : i32, i32, i32, i32
  }
  func.func @transform_4(%arg0: i32) -> (i32, i32) {
    %c0_i32 = arith.constant 0 : i32
    %c0_i32_0 = arith.constant 0 : i32
    %c0_i32_1 = arith.constant 0 : i32
    return %c0_i32, %c0_i32_0 : i32, i32
  }
  func.func @transform_5(%arg0: i32) -> (i32, i32, i32) {
    %c0_i32 = arith.constant 0 : i32
    %c0_i32_0 = arith.constant 0 : i32
    %c0_i32_1 = arith.constant 0 : i32
    %c0_i32_2 = arith.constant 0 : i32
    return %c0_i32, %c0_i32_0, %c0_i32_1 : i32, i32, i32
  }
  func.func @transform_6(%arg0: i32) -> (i32, i32, i32) {
    %c0_i32 = arith.constant 0 : i32
    %c0_i32_0 = arith.constant 0 : i32
    %c0_i32_1 = arith.constant 0 : i32
    return %arg0, %c0_i32, %c0_i32_0 : i32, i32, i32
  }
}

</mosaic_0001>

<llo_original>
// kernel: forward.1
$region0: #{forward.1}
  #allocation0 [shape = 'u32[]', space=smem, size = 0x4, offset = 0x4, fixed_abs, tag = 'smem constant byte address 0x4 - core index']
  #allocation1 [shape = 'u32[144,128]{1,0:T(1,128)}', space=vmem, size = 0x12000, scoped, tag = 'internal scratch']
  #allocation2 [shape = 'f32[18,18,4]{2,1,0:T(8,128)}', space=vmem, size = 0x36000, scoped, tag = 'scratch operand']
  #allocation3 [shape = 'f32[10,10,128]{2,1,0:T(8,128)}', space=vmem, size = 0x14000, scoped, tag = 'scratch operand']
  %s0 = inlined_call_operand.vmem [shape: f32[2,16,16,4], index: 0, kind: input, shape index: {}]
  %s1 = inlined_call_operand.vmem [shape: f32[3,3,4,128], index: 1, kind: input, shape index: {}]
  %s2 = inlined_call_operand.vmem [shape: f32[3,128], index: 2, kind: input, shape index: {}]
  %s3 = inlined_call_operand.hbm [shape: f32[3,3,128,128], index: 3, kind: input, shape index: {}]
  %s4 = inlined_call_operand.vmem [shape: f32[3,128], index: 4, kind: input, shape index: {}]
  %s5 = inlined_call_operand.hbm [shape: f32[16,128,128], index: 5, kind: input, shape index: {}]
  %s6 = inlined_call_operand.hbm [shape: f32[2,1,128], index: 6, kind: output, shape index: {}]
  %s7 = sld [smem:[#allocation0]]
  $region65: #{forward.1} parent=0
    _
  %s9 = ssub.s32 1, %s7
  %s10 = scalar_select 0, %s9, %s7
  $region1: #{forward.1} parent=0
    #allocation4 [shape = 'u8[589824]{0}', space=vmem, size = 0x90000, scoped, tag = 'input window, operand 3, single buffered']
    #allocation5 [shape = 's32[2]{0}', space=sflag, size = 0x8, scoped, tag = 'scoped memory for forward.1']
    #allocation6 [shape = 's32[2]{0}', space=sflag, size = 0x8, scoped, tag = 'scoped memory for forward.1']
    #allocation7 [shape = 'u8[1048576]{0}', space=vmem, size = 0x100000, scoped, tag = 'input window, operand 5, single buffered']
    #allocation8 [shape = 's32[1]{0}', space=sflag, size = 0x4, scoped, tag = 'scoped memory for forward.1']
    #allocation9 [shape = 'u8[1024]{0}', space=vmem, size = 0x400, scoped, tag = 'output window, operand 0']
    %11 = vsyncpa [#allocation5], 0
    %12 = vsyncpa [#allocation8], 0
    %13 = vsyncpa [#allocation6], 0
    %s14 = scalar_lea.sflag [#allocation6], 1
    %15 = vsyncpa %s14, 0
    loop: start=0, step=1, limit=4
    $region2: #{forward.1} parent=1 // loop_pre_header
      _
    $region3: #{forward.1} parent=1 // loop_header
      %s17 = sphi 0, %s21
      %p18 = scmp.ge.s32.totalorder %s17, 4
      %s27 = sphi 0, %s29
      %s30 = sphi 0, %s27
      %s31 = sphi 0, %s30
      %s47 = sphi 0, %s31
      %s51 = sphi 0, %s51
      %s53 = sphi 0, %s51
      %s54 = sphi 0, %s53
      %s68 = sphi 0, %s54
      %s72 = sphi 0, %s72
      %s74 = sphi 0, %s72
      %s75 = sphi 0, %s74
      %s89 = sphi 0, %s75
      %s93 = sphi 0, %s93
      %s95 = sphi 0, %s93
      %s96 = sphi 0, %s95
      %s110 = sphi 0, %s96
      %s114 = sphi 0, %s114
      %s116 = sphi 0, %s114
      %s117 = sphi 0, %s116
      %s131 = sphi 0, %s117
      %s135 = sphi 0, %s135
      %s137 = sphi 0, %s135
      %s138 = sphi 0, %s137
      %s152 = sphi 0, %s138
      %s158 = sphi 0, %s160
      %s161 = sphi 0, %s158
      %s162 = sphi 0, %s161
      %s178 = sphi 0, %s162
    $region4: #{forward.1} parent=1 // loop_header_branch
      %20 = sbr.rel (%p18) target = $region8
    $region5: #{forward.1} parent=1 // loop_body
      %s22 = ssub.s32 %s17, 1
      %s23 = ssub.s32 %s17, 2
      %s24 = sadd.s32 %s17, 1
      %s25 = ssub.s32 %s17, %s24
      %p26 = scmp.eq.s32.totalorder %s25, 0
      %s28 = sadd.s32 %s27, 1
      %s29 = scalar_select %p26, %s27, %s28
      %p32 = pneg %p26
      %p33 = scmp.eq.s32.totalorder %s17, 1
      %p34 = por %p32, %p33
      %p35 = scmp.ne.s32.totalorder %s27, %s30
      %p36 = scmp.eq.s32.totalorder %s17, 0
      %p37 = por %p35, %p36
      %p38 = scmp.ne.s32.totalorder %s27, %s30
      %p39 = scmp.eq.s32.totalorder %s22, 1
      %p40 = por %p38, %p39
      %p41 = scmp.ne.s32.totalorder %s30, %s31
      %p42 = scmp.eq.s32.totalorder %s22, 0
      %p43 = por %p41, %p42
      %p44 = scmp.ne.s32.totalorder %s30, %s31
      %p45 = scmp.eq.s32.totalorder %s23, 1
      %p46 = por %p44, %p45
      %p48 = scmp.ne.s32.totalorder %s31, %s47
      %p49 = scmp.eq.s32.totalorder %s23, 0
      %p50 = por %p48, %p49
      %s52 = sadd.s32 %s51, 1
      %p55 = scmp.eq.s32.totalorder %s17, 1
      %p56 = scmp.ne.s32.totalorder %s51, %s53
      %p57 = scmp.eq.s32.totalorder %s17, 0
      %p58 = por %p56, %p57
      %p59 = scmp.ne.s32.totalorder %s51, %s53
      %p60 = scmp.eq.s32.totalorder %s22, 1
      %p61 = por %p59, %p60
      %p62 = scmp.ne.s32.totalorder %s53, %s54
      %p63 = scmp.eq.s32.totalorder %s22, 0
      %p64 = por %p62, %p63
      %p65 = scmp.ne.s32.totalorder %s53, %s54
      %p66 = scmp.eq.s32.totalorder %s23, 1
      %p67 = por %p65, %p66
      %p69 = scmp.ne.s32.totalorder %s54, %s68
      %p70 = scmp.eq.s32.totalorder %s23, 0
      %p71 = por %p69, %p70
      %s73 = sadd.s32 %s72, 1
      %p76 = scmp.eq.s32.totalorder %s17, 1
      %p77 = scmp.ne.s32.totalorder %s72, %s74
      %p78 = scmp.eq.s32.totalorder %s17, 0
      %p79 = por %p77, %p78
      %p80 = scmp.ne.s32.totalorder %s72, %s74
      %p81 = scmp.eq.s32.totalorder %s22, 1
      %p82 = por %p80, %p81
      %p83 = scmp.ne.s32.totalorder %s74, %s75
      %p84 = scmp.eq.s32.totalorder %s22, 0
      %p85 = por %p83, %p84
      %p86 = scmp.ne.s32.totalorder %s74, %s75
      %p87 = scmp.eq.s32.totalorder %s23, 1
      %p88 = por %p86, %p87
      %p90 = scmp.ne.s32.totalorder %s75, %s89
      %p91 = scmp.eq.s32.totalorder %s23, 0
      %p92 = por %p90, %p91
      %s94 = sadd.s32 %s93, 1
      %p97 = scmp.eq.s32.totalorder %s17, 1
      %p98 = scmp.ne.s32.totalorder %s93, %s95
      %p99 = scmp.eq.s32.totalorder %s17, 0
      %p100 = por %p98, %p99
      %p101 = scmp.ne.s32.totalorder %s93, %s95
      %p102 = scmp.eq.s32.totalorder %s22, 1
      %p103 = por %p101, %p102
      %p104 = scmp.ne.s32.totalorder %s95, %s96
      %p105 = scmp.eq.s32.totalorder %s22, 0
      %p106 = por %p104, %p105
      %p107 = scmp.ne.s32.totalorder %s95, %s96
      %p108 = scmp.eq.s32.totalorder %s23, 1
      %p109 = por %p107, %p108
      %p111 = scmp.ne.s32.totalorder %s96, %s110
      %p112 = scmp.eq.s32.totalorder %s23, 0
      %p113 = por %p111, %p112
      %s115 = sadd.s32 %s114, 1
      %p118 = scmp.eq.s32.totalorder %s17, 1
      %p119 = scmp.ne.s32.totalorder %s114, %s116
      %p120 = scmp.eq.s32.totalorder %s17, 0
      %p121 = por %p119, %p120
      %p122 = scmp.ne.s32.totalorder %s114, %s116
      %p123 = scmp.eq.s32.totalorder %s22, 1
      %p124 = por %p122, %p123
      %p125 = scmp.ne.s32.totalorder %s116, %s117
      %p126 = scmp.eq.s32.totalorder %s22, 0
      %p127 = por %p125, %p126
      %p128 = scmp.ne.s32.totalorder %s116, %s117
      %p129 = scmp.eq.s32.totalorder %s23, 1
      %p130 = por %p128, %p129
      %p132 = scmp.ne.s32.totalorder %s117, %s131
      %p133 = scmp.eq.s32.totalorder %s23, 0
      %p134 = por %p132, %p133
      %s136 = sadd.s32 %s135, 1
      %p139 = scmp.eq.s32.totalorder %s17, 1
      %p140 = scmp.ne.s32.totalorder %s135, %s137
      %p141 = scmp.eq.s32.totalorder %s17, 0
      %p142 = por %p140, %p141
      %p143 = scmp.ne.s32.totalorder %s135, %s137
      %p144 = scmp.eq.s32.totalorder %s22, 1
      %p145 = por %p143, %p144
      %p146 = scmp.ne.s32.totalorder %s137, %s138
      %p147 = scmp.eq.s32.totalorder %s22, 0
      %p148 = por %p146, %p147
      %p149 = scmp.ne.s32.totalorder %s137, %s138
      %p150 = scmp.eq.s32.totalorder %s23, 1
      %p151 = por %p149, %p150
      %p153 = scmp.ne.s32.totalorder %s138, %s152
      %p154 = scmp.eq.s32.totalorder %s23, 0
      %p155 = por %p153, %p154
      %s156 = ssub.s32 %s17, %s24
      %p157 = scmp.eq.s32.totalorder %s156, 0
      %s159 = sadd.s32 %s158, 1
      %s160 = scalar_select %p157, %s158, %s159
      %p163 = pneg %p157
      %p164 = scmp.eq.s32.totalorder %s17, 1
      %p165 = por %p163, %p164
      %p166 = scmp.ne.s32.totalorder %s158, %s161
      %p167 = scmp.eq.s32.totalorder %s17, 0
      %p168 = por %p166, %p167
      %p169 = scmp.ne.s32.totalorder %s158, %s161
      %p170 = scmp.eq.s32.totalorder %s22, 1
      %p171 = por %p169, %p170
      %p172 = scmp.ne.s32.totalorder %s161, %s162
      %p173 = scmp.eq.s32.totalorder %s22, 0
      %p174 = por %p172, %p173
      %p175 = scmp.ne.s32.totalorder %s161, %s162
      %p176 = scmp.eq.s32.totalorder %s23, 1
      %p177 = por %p175, %p176
      %p179 = scmp.ne.s32.totalorder %s162, %s178
      %p180 = scmp.eq.s32.totalorder %s23, 0
      %p181 = por %p179, %p180
      %p182 = scmp.le.s32.totalorder 1, %s17
      %p183 = scmp.lt.s32.totalorder %s17, 3
      %p184 = pnand %p182, %p183
      %p185 = pneg %p184
      // Predicated region
      $region9: #{forward.1} parent=5 // pred_check
        _
      $region10: #{forward.1} parent=5 // pred_check_branch
        %187 = sbr.rel (%p184) target = $region12
      $region11: #{forward.1} parent=5 // pred_region
        %s188 = ssub.s32 %s17, 1
        // Predicated region
        $region13: #{forward.1} parent=11 // pred_check
          %p189 = pneg %p64
        $region14: #{forward.1} parent=11 // pred_check_branch
          %191 = sbr.rel (%p189) target = $region16
        $region15: #{forward.1} parent=11 // pred_region
          _
        $region16: #{forward.1} parent=11 // pred_fallthru
          _
        // Predicated region
        $region17: #{forward.1} parent=11 // pred_check
          %p192 = pneg %p85
        $region18: #{forward.1} parent=11 // pred_check_branch
          %194 = sbr.rel (%p192) target = $region20
        $region19: #{forward.1} parent=11 // pred_region
          _
        $region20: #{forward.1} parent=11 // pred_fallthru
          _
        // Predicated region
        $region21: #{forward.1} parent=11 // pred_check
          %p195 = pneg %p106
        $region22: #{forward.1} parent=11 // pred_check_branch
          %197 = sbr.rel (%p195) target = $region24
        $region23: #{forward.1} parent=11 // pred_region
          %s199 = ssub.s32 18432, 18432
          %200 = vsyncadd [#allocation5], %s199
          %s201 = sshll.u32 [#allocation4], 4
          %s202 = int_to_ptr.vmem [resolvable:$true] %s201
          %207 = dma.hbm_to_vmem [thread:$0]  %s3, 18432, %s202, [#allocation5], 128, 128, 8
        $region24: #{forward.1} parent=11 // pred_fallthru
          _
        // Predicated region
        $region25: #{forward.1} parent=11 // pred_check
          %p208 = pneg %p127
        $region26: #{forward.1} parent=11 // pred_check_branch
          %210 = sbr.rel (%p208) target = $region28
        $region27: #{forward.1} parent=11 // pred_region
          _
        $region28: #{forward.1} parent=11 // pred_fallthru
          _
        // Predicated region
        $region29: #{forward.1} parent=11 // pred_check
          %p211 = pneg %p148
        $region30: #{forward.1} parent=11 // pred_check_branch
          %213 = sbr.rel (%p211) target = $region32
        $region31: #{forward.1} parent=11 // pred_region
          %s215 = ssub.s32 32768, 32768
          %216 = vsyncadd [#allocation8], %s215
          %s217 = sshll.u32 [#allocation7], 4
          %s218 = int_to_ptr.vmem [resolvable:$true] %s217
          %223 = dma.hbm_to_vmem [thread:$0]  %s5, 32768, %s218, [#allocation8], 128, 128, 8
        $region32: #{forward.1} parent=11 // pred_fallthru
          _
      $region12: #{forward.1} parent=5 // pred_fallthru
        _
      %p224 = scmp.lt.s32.totalorder %s17, 2
      // Predicated region
      $region33: #{forward.1} parent=5 // pred_check
        %p225 = pneg %p224
      $region34: #{forward.1} parent=5 // pred_check_branch
        %227 = sbr.rel (%p225) target = $region36
      $region35: #{forward.1} parent=5 // pred_region
        // Predicated region
        $region37: #{forward.1} parent=35 // pred_check
          %p228 = pneg %p37
        $region38: #{forward.1} parent=35 // pred_check_branch
          %230 = sbr.rel (%p228) target = $region40
        $region39: #{forward.1} parent=35 // pred_region
          %p231 = scmp.lt.s32.totalorder %s17, 1
          %s232 = scalar_select %p231, %s17, 1
          %s233 = smul.addr %s232, 32
          %s234 = smul.addr %s233, 8
          %s235 = scalar_lea.vmem %s0, %s234
        $region40: #{forward.1} parent=35 // pred_fallthru
          _
      $region36: #{forward.1} parent=5 // pred_fallthru
        _
      %p236 = scmp.le.s32.totalorder 1, %s17
      %p237 = scmp.lt.s32.totalorder %s17, 3
      %p238 = pnand %p236, %p237
      %p239 = pneg %p238
      // Predicated region
      $region41: #{forward.1} parent=5 // pred_check
        _
      $region42: #{forward.1} parent=5 // pred_check_branch
        %241 = sbr.rel (%p238) target = $region44
      $region43: #{forward.1} parent=5 // pred_region
        %s242 = ssub.s32 %s17, 1
        // Predicated region
        $region45: #{forward.1} parent=43 // pred_check
          %p243 = pneg %p106
        $region46: #{forward.1} parent=43 // pred_check_branch
          %245 = sbr.rel (%p243) target = $region48
        $region47: #{forward.1} parent=43 // pred_region
          %246 = dma.done [#allocation5], 18432
        $region48: #{forward.1} parent=43 // pred_fallthru
          _
        // Predicated region
        $region49: #{forward.1} parent=43 // pred_check
          %p247 = pneg %p148
        $region50: #{forward.1} parent=43 // pred_check_branch
          %249 = sbr.rel (%p247) target = $region52
        $region51: #{forward.1} parent=43 // pred_region
          %250 = dma.done [#allocation8], 32768
        $region52: #{forward.1} parent=43 // pred_fallthru
          _
        %p251 = scmp.lt.s32.totalorder %s22, 1
        %s252 = scalar_select %p251, %s22, 1
        %s253 = smul.addr %s252, 32
        %s254 = smul.addr %s253, 8
        %s255 = scalar_lea.vmem %s0, %s254
        %p256 = pneg %p43
        %p257 = pneg %p40
        %p258 = pneg %p64
        %p259 = pneg %p61
        %p260 = pneg %p85
        %p261 = pneg %p82
        %p262 = pneg %p106
        %p263 = pneg %p103
        %p264 = pneg %p127
        %p265 = pneg %p124
        %p266 = pneg %p148
        %p267 = pneg %p145
        %p268 = pneg %p174
        %p269 = pneg %p171
        %s270 = sand.u32 %s161, 1
        %s271 = scalar_lea.sflag [#allocation6], %s270
        %s272 = sand.u32 %s161, 1
        %s273 = scalar_lea.vmem [#allocation9], %s272
        %p274 = scmp.lt.s32.totalorder %s22, 1
        %s275 = scalar_select %p274, %s22, 1
        %s276 = smul.addr %s275, 32
        %s277 = smul.addr %s276, 8
        %s278 = scalar_lea.vmem %s0, %s277
        %vm279 = vcmask 31744
        %280 = vst.msk [vmem:[#allocation2] sm:$0xff] %vm279, 0.0
        %281 = vst.msk [vmem:[#allocation2 + $0x8] sm:$0xff] %vm279, 0.0
        %vm282 = vcmask 25600
        %283 = vst.msk [vmem:[#allocation2 + $0x10] sm:$0x3] %vm282, 0.0
        %s284 = scalar_lea.vmem [#allocation2], 408
        %285 = vst.msk [vmem:[%s284] sm:$0xff] %vm279, 0.0
        %286 = vst.msk [vmem:[%s284 + $0x8] sm:$0xff] %vm279, 0.0
        %287 = vst.msk [vmem:[%s284 + $0x10] sm:$0x3] %vm282, 0.0
        %s288 = scalar_lea.vmem [#allocation2], 24
        %vm289 = vcmask 24576
        %290 = vst.msk [vmem:[%s288] sm:$0x1] %vm289, 0.0
        %291 = vst.msk [vmem:[%s288 + $0x18] sm:$0x1] %vm289, 0.0
        %292 = vst.msk [vmem:[%s288 + $0x30] sm:$0x1] %vm289, 0.0
        %293 = vst.msk [vmem:[%s288 + $0x48] sm:$0x1] %vm289, 0.0
        %294 = vst.msk [vmem:[%s288 + $0x60] sm:$0x1] %vm289, 0.0
        %295 = vst.msk [vmem:[%s288 + $0x78] sm:$0x1] %vm289, 0.0
        %296 = vst.msk [vmem:[%s288 + $0x90] sm:$0x1] %vm289, 0.0
        %297 = vst.msk [vmem:[%s288 + $0xa8] sm:$0x1] %vm289, 0.0
        %298 = vst.msk [vmem:[%s288 + $0xc0] sm:$0x1] %vm289, 0.0
        %299 = vst.msk [vmem:[%s288 + $0xd8] sm:$0x1] %vm289, 0.0
        %300 = vst.msk [vmem:[%s288 + $0xf0] sm:$0x1] %vm289, 0.0
        %301 = vst.msk [vmem:[%s288 + $0x108] sm:$0x1] %vm289, 0.0
        %302 = vst.msk [vmem:[%s288 + $0x120] sm:$0x1] %vm289, 0.0
        %303 = vst.msk [vmem:[%s288 + $0x138] sm:$0x1] %vm289, 0.0
        %304 = vst.msk [vmem:[%s288 + $0x150] sm:$0x1] %vm289, 0.0
        %305 = vst.msk [vmem:[%s288 + $0x168] sm:$0x1] %vm289, 0.0
        %306 = vst.msk [vmem:[%s288 + $0x11] sm:$0x1] %vm289, 0.0
        %307 = vst.msk [vmem:[%s288 + $0x29] sm:$0x1] %vm289, 0.0
        %308 = vst.msk [vmem:[%s288 + $0x41] sm:$0x1] %vm289, 0.0
        %309 = vst.msk [vmem:[%s288 + $0x59] sm:$0x1] %vm289, 0.0
        %310 = vst.msk [vmem:[%s288 + $0x71] sm:$0x1] %vm289, 0.0
        %311 = vst.msk [vmem:[%s288 + $0x89] sm:$0x1] %vm289, 0.0
        %312 = vst.msk [vmem:[%s288 + $0xa1] sm:$0x1] %vm289, 0.0
        %313 = vst.msk [vmem:[%s288 + $0xb9] sm:$0x1] %vm289, 0.0
        %314 = vst.msk [vmem:[%s288 + $0xd1] sm:$0x1] %vm289, 0.0
        %315 = vst.msk [vmem:[%s288 + $0xe9] sm:$0x1] %vm289, 0.0
        %316 = vst.msk [vmem:[%s288 + $0x101] sm:$0x1] %vm289, 0.0
        %317 = vst.msk [vmem:[%s288 + $0x119] sm:$0x1] %vm289, 0.0
        %318 = vst.msk [vmem:[%s288 + $0x131] sm:$0x1] %vm289, 0.0
        %319 = vst.msk [vmem:[%s288 + $0x149] sm:$0x1] %vm289, 0.0
        %320 = vst.msk [vmem:[%s288 + $0x161] sm:$0x1] %vm289, 0.0
        %321 = vst.msk [vmem:[%s288 + $0x179] sm:$0x1] %vm289, 0.0
        %v322 = vld [vmem:[%s278] sm:$0xff]
        %v323 = vld [vmem:[%s278 + $0x8] sm:$0xff]
        %v324 = vld [vmem:[%s278 + $0x10] sm:$0xff]
        %v325 = vld [vmem:[%s278 + $0x18] sm:$0xff]
        %v326 = vld [vmem:[%s278 + $0x20] sm:$0xff]
        %v327 = vld [vmem:[%s278 + $0x28] sm:$0xff]
        %v328 = vld [vmem:[%s278 + $0x30] sm:$0xff]
        %v329 = vld [vmem:[%s278 + $0x38] sm:$0xff]
        %v330 = vld [vmem:[%s278 + $0x40] sm:$0xff]
        %v331 = vld [vmem:[%s278 + $0x48] sm:$0xff]
        %v332 = vld [vmem:[%s278 + $0x50] sm:$0xff]
        %v333 = vld [vmem:[%s278 + $0x58] sm:$0xff]
        %v334 = vld [vmem:[%s278 + $0x60] sm:$0xff]
        %v335 = vld [vmem:[%s278 + $0x68] sm:$0xff]
        %v336 = vld [vmem:[%s278 + $0x70] sm:$0xff]
        %v337 = vld [vmem:[%s278 + $0x78] sm:$0xff]
        %v338 = vld [vmem:[%s278 + $0x80] sm:$0xff]
        %v339 = vld [vmem:[%s278 + $0x88] sm:$0xff]
        %v340 = vld [vmem:[%s278 + $0x90] sm:$0xff]
        %v341 = vld [vmem:[%s278 + $0x98] sm:$0xff]
        %v342 = vld [vmem:[%s278 + $0xa0] sm:$0xff]
        %v343 = vld [vmem:[%s278 + $0xa8] sm:$0xff]
        %v344 = vld [vmem:[%s278 + $0xb0] sm:$0xff]
        %v345 = vld [vmem:[%s278 + $0xb8] sm:$0xff]
        %v346 = vld [vmem:[%s278 + $0xc0] sm:$0xff]
        %v347 = vld [vmem:[%s278 + $0xc8] sm:$0xff]
        %v348 = vld [vmem:[%s278 + $0xd0] sm:$0xff]
        %v349 = vld [vmem:[%s278 + $0xd8] sm:$0xff]
        %v350 = vld [vmem:[%s278 + $0xe0] sm:$0xff]
        %v351 = vld [vmem:[%s278 + $0xe8] sm:$0xff]
        %v352 = vld [vmem:[%s278 + $0xf0] sm:$0xff]
        %v353 = vld [vmem:[%s278 + $0xf8] sm:$0xff]
        %354 = vst.msk [vmem:[%s288 + $0x1] sm:$0xff] %vm279, %v322
        %355 = vst.msk [vmem:[%s288 + $0x9] sm:$0xff] %vm279, %v323
        %356 = vst.msk [vmem:[%s288 + $0x19] sm:$0xff] %vm279, %v324
        %357 = vst.msk [vmem:[%s288 + $0x21] sm:$0xff] %vm279, %v325
        %358 = vst.msk [vmem:[%s288 + $0x31] sm:$0xff] %vm279, %v326
        %359 = vst.msk [vmem:[%s288 + $0x39] sm:$0xff] %vm279, %v327
        %360 = vst.msk [vmem:[%s288 + $0x49] sm:$0xff] %vm279, %v328
        %361 = vst.msk [vmem:[%s288 + $0x51] sm:$0xff] %vm279, %v329
        %362 = vst.msk [vmem:[%s288 + $0x61] sm:$0xff] %vm279, %v330
        %363 = vst.msk [vmem:[%s288 + $0x69] sm:$0xff] %vm279, %v331
        %364 = vst.msk [vmem:[%s288 + $0x79] sm:$0xff] %vm279, %v332
        %365 = vst.msk [vmem:[%s288 + $0x81] sm:$0xff] %vm279, %v333
        %366 = vst.msk [vmem:[%s288 + $0x91] sm:$0xff] %vm279, %v334
        %367 = vst.msk [vmem:[%s288 + $0x99] sm:$0xff] %vm279, %v335
        %368 = vst.msk [vmem:[%s288 + $0xa9] sm:$0xff] %vm279, %v336
        %369 = vst.msk [vmem:[%s288 + $0xb1] sm:$0xff] %vm279, %v337
        %370 = vst.msk [vmem:[%s288 + $0xc1] sm:$0xff] %vm279, %v338
        %371 = vst.msk [vmem:[%s288 + $0xc9] sm:$0xff] %vm279, %v339
        %372 = vst.msk [vmem:[%s288 + $0xd9] sm:$0xff] %vm279, %v340
        %373 = vst.msk [vmem:[%s288 + $0xe1] sm:$0xff] %vm279, %v341
        %374 = vst.msk [vmem:[%s288 + $0xf1] sm:$0xff] %vm279, %v342
        %375 = vst.msk [vmem:[%s288 + $0xf9] sm:$0xff] %vm279, %v343
        %376 = vst.msk [vmem:[%s288 + $0x109] sm:$0xff] %vm279, %v344
        %377 = vst.msk [vmem:[%s288 + $0x111] sm:$0xff] %vm279, %v345
        %378 = vst.msk [vmem:[%s288 + $0x121] sm:$0xff] %vm279, %v346
        %379 = vst.msk [vmem:[%s288 + $0x129] sm:$0xff] %vm279, %v347
        %380 = vst.msk [vmem:[%s288 + $0x139] sm:$0xff] %vm279, %v348
        %381 = vst.msk [vmem:[%s288 + $0x141] sm:$0xff] %vm279, %v349
        %382 = vst.msk [vmem:[%s288 + $0x151] sm:$0xff] %vm279, %v350
        %383 = vst.msk [vmem:[%s288 + $0x159] sm:$0xff] %vm279, %v351
        %384 = vst.msk [vmem:[%s288 + $0x169] sm:$0xff] %vm279, %v352
        %385 = vst.msk [vmem:[%s288 + $0x171] sm:$0xff] %vm279, %v353
        %v386 = vld [vmem:[#allocation2] sm:$0xff]
        %v387 = vld [vmem:[#allocation2 + $0x8] sm:$0xff]
        %v388 = vld [vmem:[#allocation2 + $0x18] sm:$0xff]
        %v389 = vld [vmem:[#allocation2 + $0x20] sm:$0xff]
        %v390 = vld [vmem:[#allocation2 + $0x30] sm:$0xff]
        %v391 = vld [vmem:[#allocation2 + $0x38] sm:$0xff]
        %v392 = vld [vmem:[#allocation2 + $0x48] sm:$0xff]
        %v393 = vld [vmem:[#allocation2 + $0x50] sm:$0xff]
        %v394 = vld [vmem:[#allocation2 + $0x60] sm:$0xff]
        %v395 = vld [vmem:[#allocation2 + $0x68] sm:$0xff]
        %v396 = vld [vmem:[#allocation2 + $0x78] sm:$0xff]
        %v397 = vld [vmem:[#allocation2 + $0x80] sm:$0xff]
        %v398 = vld [vmem:[#allocation2 + $0x90] sm:$0xff]
        %v399 = vld [vmem:[#allocation2 + $0x98] sm:$0xff]
        %v400 = vld [vmem:[#allocation2 + $0xa8] sm:$0xff]
        %v401 = vld [vmem:[#allocation2 + $0xb0] sm:$0xff]
        %v402 = vld [vmem:[#allocation2 + $0xc0] sm:$0xff]
        %v403 = vld [vmem:[#allocation2 + $0xc8] sm:$0xff]
        %v404 = vld [vmem:[#allocation2 + $0xd8] sm:$0xff]
        %v405 = vld [vmem:[#allocation2 + $0xe0] sm:$0xff]
        %v406 = vld [vmem:[#allocation2 + $0xf0] sm:$0xff]
        %v407 = vld [vmem:[#allocation2 + $0xf8] sm:$0xff]
        %v408 = vld [vmem:[#allocation2 + $0x108] sm:$0xff]
        %v409 = vld [vmem:[#allocation2 + $0x110] sm:$0xff]
        %v410 = vld [vmem:[#allocation2 + $0x120] sm:$0xff]
        %v411 = vld [vmem:[#allocation2 + $0x128] sm:$0xff]
        %v412 = vld [vmem:[#allocation2 + $0x138] sm:$0xff]
        %v413 = vld [vmem:[#allocation2 + $0x140] sm:$0xff]
        %v414 = vld [vmem:[#allocation2 + $0x150] sm:$0xff]
        %v415 = vld [vmem:[#allocation2 + $0x158] sm:$0xff]
        %v416 = vld [vmem:[#allocation2 + $0x168] sm:$0xff]
        %v417 = vld [vmem:[#allocation2 + $0x170] sm:$0xff]
        %v418 = vld [vmem:[%s1] sm:$0xf]
        %v419 = vld [vmem:[#allocation2 + $0x1] sm:$0xff]
        %v420 = vld [vmem:[#allocation2 + $0x9] sm:$0xff]
        %v421 = vld [vmem:[#allocation2 + $0x19] sm:$0xff]
        %v422 = vld [vmem:[#allocation2 + $0x21] sm:$0xff]
        %v423 = vld [vmem:[#allocation2 + $0x31] sm:$0xff]
        %v424 = vld [vmem:[#allocation2 + $0x39] sm:$0xff]
        %v425 = vld [vmem:[#allocation2 + $0x49] sm:$0xff]
        %v426 = vld [vmem:[#allocation2 + $0x51] sm:$0xff]
        %v427 = vld [vmem:[#allocation2 + $0x61] sm:$0xff]
        %v428 = vld [vmem:[#allocation2 + $0x69] sm:$0xff]
        %v429 = vld [vmem:[#allocation2 + $0x79] sm:$0xff]
        %v430 = vld [vmem:[#allocation2 + $0x81] sm:$0xff]
        %v431 = vld [vmem:[#allocation2 + $0x91] sm:$0xff]
        %v432 = vld [vmem:[#allocation2 + $0x99] sm:$0xff]
        %v433 = vld [vmem:[#allocation2 + $0xa9] sm:$0xff]
        %v434 = vld [vmem:[#allocation2 + $0xb1] sm:$0xff]
        %v435 = vld [vmem:[#allocation2 + $0xc1] sm:$0xff]
        %v436 = vld [vmem:[#allocation2 + $0xc9] sm:$0xff]
        %v437 = vld [vmem:[#allocation2 + $0xd9] sm:$0xff]
        %v438 = vld [vmem:[#allocation2 + $0xe1] sm:$0xff]
        %v439 = vld [vmem:[#allocation2 + $0xf1] sm:$0xff]
        %v440 = vld [vmem:[#allocation2 + $0xf9] sm:$0xff]
        %v441 = vld [vmem:[#allocation2 + $0x109] sm:$0xff]
        %v442 = vld [vmem:[#allocation2 + $0x111] sm:$0xff]
        %v443 = vld [vmem:[#allocation2 + $0x121] sm:$0xff]
        %v444 = vld [vmem:[#allocation2 + $0x129] sm:$0xff]
        %v445 = vld [vmem:[#allocation2 + $0x139] sm:$0xff]
        %v446 = vld [vmem:[#allocation2 + $0x141] sm:$0xff]
        %v447 = vld [vmem:[#allocation2 + $0x151] sm:$0xff]
        %v448 = vld [vmem:[#allocation2 + $0x159] sm:$0xff]
        %v449 = vld [vmem:[#allocation2 + $0x169] sm:$0xff]
        %v450 = vld [vmem:[#allocation2 + $0x171] sm:$0xff]
        %s451 = scalar_lea.vmem %s1, 4
        %v452 = vld [vmem:[%s451] sm:$0xf]
        %v454 = vsel %vm279, %v419, 0
        %v457 = vsel %vm279, %v420, 0
        %v460 = vsel %vm279, %v421, 0
        %v463 = vsel %vm279, %v422, 0
        %v466 = vsel %vm279, %v423, 0
        %v469 = vsel %vm279, %v424, 0
        %v472 = vsel %vm279, %v425, 0
        %v475 = vsel %vm279, %v426, 0
        %v478 = vsel %vm279, %v427, 0
        %v481 = vsel %vm279, %v428, 0
        %v484 = vsel %vm279, %v429, 0
        %v487 = vsel %vm279, %v430, 0
        %v490 = vsel %vm279, %v431, 0
        %v493 = vsel %vm279, %v432, 0
        %v496 = vsel %vm279, %v433, 0
        %v499 = vsel %vm279, %v434, 0
        %v502 = vsel %vm279, %v435, 0
        %v505 = vsel %vm279, %v436, 0
        %v508 = vsel %vm279, %v437, 0
        %v511 = vsel %vm279, %v438, 0
        %v514 = vsel %vm279, %v439, 0
        %v517 = vsel %vm279, %v440, 0
        %v520 = vsel %vm279, %v441, 0
        %v523 = vsel %vm279, %v442, 0
        %v526 = vsel %vm279, %v443, 0
        %v529 = vsel %vm279, %v444, 0
        %v532 = vsel %vm279, %v445, 0
        %v535 = vsel %vm279, %v446, 0
        %v538 = vsel %vm279, %v447, 0
        %v541 = vsel %vm279, %v448, 0
        %v544 = vsel %vm279, %v449, 0
        %v547 = vsel %vm279, %v450, 0
        %vm549 = vcmask 1043456
        %v551 = vsel %vm549, %v452, 0
        %553 = vmatprep.subr.mxu0 0.0
        %554 = vmatpush1.msra.mxu0 %v551
        %555 = vmatprep.subr.mxu0 0.0
        %556 = vmatpush1.msra.mxu0 0.0
        %557 = vmatprep.subr.mxu0 0.0
        %558 = vmatpush1.msra.mxu0 0.0
        %559 = vmatprep.subr.mxu0 0.0
        %560 = vmatpush1.msra.mxu0 0.0
        %561 = vmatprep.subr.mxu0 0.0
        %562 = vmatpush1.msra.mxu0 0.0
        %563 = vmatprep.subr.mxu0 0.0
        %564 = vmatpush1.msra.mxu0 0.0
        %565 = vmatprep.subr.mxu0 0.0
        %566 = vmatpush1.msra.mxu0 0.0
        %567 = vmatprep.subr.mxu0 0.0
        %568 = vmatpush1.msra.mxu0 0.0
        %569 = vmatprep.subr.mxu0 0.0
        %570 = vmatpush1.msra.mxu0 0.0
        %571 = vmatprep.subr.mxu0 0.0
        %572 = vmatpush1.msra.mxu0 0.0
        %573 = vmatprep.subr.mxu0 0.0
        %574 = vmatpush1.msra.mxu0 0.0
        %575 = vmatprep.subr.mxu0 0.0
        %576 = vmatpush1.msra.mxu0 0.0
        %577 = vmatprep.subr.mxu0 0.0
        %578 = vmatpush1.msra.mxu0 0.0
        %579 = vmatprep.subr.mxu0 0.0
        %580 = vmatpush1.msra.mxu0 0.0
        %581 = vmatprep.subr.mxu0 0.0
        %582 = vmatpush1.msra.mxu0 0.0
        %583 = vmatprep.subr.mxu0 0.0
        %584 = vmatpush1.msra.mxu0 0.0
        %585 = vmatprep.subr.mxu0 0.0
        %586 = vmatpush1.msra.mxu0 0.0
        %587 = vmatprep.subr.mxu0 0.0
        %588 = vmatpush1.msra.mxu0 0.0
        %589 = vmatprep.subr.mxu0 0.0
        %590 = vmatpush1.msra.mxu0 0.0
        %591 = vmatprep.subr.mxu0 0.0
        %592 = vmatpush1.msra.mxu0 0.0
        %593 = vmatprep.subr.mxu0 0.0
        %594 = vmatpush1.msra.mxu0 0.0
        %595 = vmatprep.subr.mxu0 0.0
        %596 = vmatpush1.msra.mxu0 0.0
        %597 = vmatprep.subr.mxu0 0.0
        %598 = vmatpush1.msra.mxu0 0.0
        %599 = vmatprep.subr.mxu0 0.0
        %600 = vmatpush1.msra.mxu0 0.0
        %601 = vmatprep.subr.mxu0 0.0
        %602 = vmatpush1.msra.mxu0 0.0
        %603 = vmatprep.subr.mxu0 0.0
        %604 = vmatpush1.msra.mxu0 0.0
        %605 = vmatprep.subr.mxu0 0.0
        %606 = vmatpush1.msra.mxu0 0.0
        %607 = vmatprep.subr.mxu0 0.0
        %608 = vmatpush1.msra.mxu0 0.0
        %609 = vmatprep.subr.mxu0 0.0
        %610 = vmatpush1.msra.mxu0 0.0
        %611 = vmatprep.subr.mxu0 0.0
        %612 = vmatpush1.msra.mxu0 0.0
        %613 = vmatprep.subr.mxu0 0.0
        %614 = vmatpush1.msra.mxu0 0.0
        %615 = vmatprep.subr.mxu0 0.0
        %616 = vmatpush1.msra.mxu0 0.0
        %617 = vmatprep.mubr.f32.mxu0 0.0
        %618 = vmatmul.mubr.f32.gmra.mrb[0].mxu0 %v454
        %v619 = vpop.f32.mrb[0].mxu0
        %v620 = vadd.f32 0.0, %v619
        %v621 = vpop.f32.mrb[0].mxu0
        %622 = vmatprep.mubr.f32.mxu0 0.0
        %623 = vmatmul.mubr.f32.gmra.mrb[0].mxu0 %v457
        %v624 = vpop.f32.mrb[0].mxu0
        %v625 = vadd.f32 0.0, %v624
        %v626 = vpop.f32.mrb[0].mxu0
        %627 = vmatprep.mubr.f32.mxu0 0.0
        %628 = vmatmul.mubr.f32.gmra.mrb[0].mxu0 %v460
        %v629 = vpop.f32.mrb[0].mxu0
        %v630 = vadd.f32 0.0, %v629
        %v631 = vpop.f32.mrb[0].mxu0
        %632 = vmatprep.mubr.f32.mxu0 0.0
        %633 = vmatmul.mubr.f32.gmra.mrb[0].mxu0 %v463
        %v634 = vpop.f32.mrb[0].mxu0
        %v635 = vadd.f32 0.0, %v634
        %v636 = vpop.f32.mrb[0].mxu0
        %637 = vmatprep.mubr.f32.mxu0 0.0
        %638 = vmatmul.mubr.f32.gmra.mrb[0].mxu0 %v466
        %v639 = vpop.f32.mrb[0].mxu0
        %v640 = vadd.f32 0.0, %v639
        %v641 = vpop.f32.mrb[0].mxu0
        %642 = vmatprep.mubr.f32.mxu0 0.0
        %643 = vmatmul.mubr.f32.gmra.mrb[0].mxu0 %v469
        %v644 = vpop.f32.mrb[0].mxu0
        %v645 = vadd.f32 0.0, %v644
        %v646 = vpop.f32.mrb[0].mxu0
        %647 = vmatprep.mubr.f32.mxu0 0.0
        %648 = vmatmul.mubr.f32.gmra.mrb[0].mxu0 %v472
        %v649 = vpop.f32.mrb[0].mxu0
        %v650 = vadd.f32 0.0, %v649
        %v651 = vpop.f32.mrb[0].mxu0
        %652 = vmatprep.mubr.f32.mxu0 0.0
        %653 = vmatmul.mubr.f32.gmra.mrb[0].mxu0 %v475
        %v654 = vpop.f32.mrb[0].mxu0
        %v655 = vadd.f32 0.0, %v654
        %v656 = vpop.f32.mrb[0].mxu0
        %657 = vmatprep.mubr.f32.mxu0 0.0
        %658 = vmatmul.mubr.f32.gmra.mrb[0].mxu0 %v478
        %v659 = vpop.f32.mrb[0].mxu0
        %v660 = vadd.f32 0.0, %v659
        %v661 = vpop.f32.mrb[0].mxu0
        %662 = vmatprep.mubr.f32.mxu0 0.0
        %663 = vmatmul.mubr.f32.gmra.mrb[0].mxu0 %v481
        %v664 = vpop.f32.mrb[0].mxu0
        %v665 = vadd.f32 0.0, %v664
        %v666 = vpop.f32.mrb[0].mxu0
        %667 = vmatprep.mubr.f32.mxu0 0.0
        %668 = vmatmul.mubr.f32.gmra.mrb[0].mxu0 %v484
        %v669 = vpop.f32.mrb[0].mxu0
        %v670 = vadd.f32 0.0, %v669
        %v671 = vpop.f32.mrb[0].mxu0
        %672 = vmatprep.mubr.f32.mxu0 0.0
        %673 = vmatmul.mubr.f32.gmra.mrb[0].mxu0 %v487
        %v674 = vpop.f32.mrb[0].mxu0
        %v675 = vadd.f32 0.0, %v674
        %v676 = vpop.f32.mrb[0].mxu0
        %677 = vmatprep.mubr.f32.mxu0 0.0
        %678 = vmatmul.mubr.f32.gmra.mrb[0].mxu0 %v490
        %v679 = vpop.f32.mrb[0].mxu0
        %v680 = vadd.f32 0.0, %v679
        %v681 = vpop.f32.mrb[0].mxu0
        %682 = vmatprep.mubr.f32.mxu0 0.0
        %683 = vmatmul.mubr.f32.gmra.mrb[0].mxu0 %v493
        %v684 = vpop.f32.mrb[0].mxu0
        %v685 = vadd.f32 0.0, %v684
        %v686 = vpop.f32.mrb[0].mxu0
        %687 = vmatprep.mubr.f32.mxu0 0.0
        %688 = vmatmul.mubr.f32.gmra.mrb[0].mxu0 %v496
        %v689 = vpop.f32.mrb[0].mxu0
        %v690 = vadd.f32 0.0, %v689
        %v691 = vpop.f32.mrb[0].mxu0
        %692 = vmatprep.mubr.f32.mxu0 0.0
        %693 = vmatmul.mubr.f32.gmra.mrb[0].mxu0 %v499
        %v694 = vpop.f32.mrb[0].mxu0
        %v695 = vadd.f32 0.0, %v694
        %v696 = vpop.f32.mrb[0].mxu0
        %697 = vmatprep.mubr.f32.mxu0 0.0
        %698 = vmatmul.mubr.f32.gmra.mrb[0].mxu0 %v502
        %v699 = vpop.f32.mrb[0].mxu0
        %v700 = vadd.f32 0.0, %v699
        %v701 = vpop.f32.mrb[0].mxu0
        %702 = vmatprep.mubr.f32.mxu0 0.0
        %703 = vmatmul.mubr.f32.gmra.mrb[0].mxu0 %v505
        %v704 = vpop.f32.mrb[0].mxu0
        %v705 = vadd.f32 0.0, %v704
        %v706 = vpop.f32.mrb[0].mxu0
        %707 = vmatprep.mubr.f32.mxu0 0.0
        %708 = vmatmul.mubr.f32.gmra.mrb[0].mxu0 %v508
        %v709 = vpop.f32.mrb[0].mxu0
        %v710 = vadd.f32 0.0, %v709
        %v711 = vpop.f32.mrb[0].mxu0
        %712 = vmatprep.mubr.f32.mxu0 0.0
        %713 = vmatmul.mubr.f32.gmra.mrb[0].mxu0 %v511
        %v714 = vpop.f32.mrb[0].mxu0
        %v715 = vadd.f32 0.0, %v714
        %v716 = vpop.f32.mrb[0].mxu0
        %717 = vmatprep.mubr.f32.mxu0 0.0
        %718 = vmatmul.mubr.f32.gmra.mrb[0].mxu0 %v514
        %v719 = vpop.f32.mrb[0].mxu0
        %v720 = vadd.f32 0.0, %v719
        %v721 = vpop.f32.mrb[0].mxu0
        %722 = vmatprep.mubr.f32.mxu0 0.0
        %723 = vmatmul.mubr.f32.gmra.mrb[0].mxu0 %v517
        %v724 = vpop.f32.mrb[0].mxu0
        %v725 = vadd.f32 0.0, %v724
        %v726 = vpop.f32.mrb[0].mxu0
        %727 = vmatprep.mubr.f32.mxu0 0.0
        %728 = vmatmul.mubr.f32.gmra.mrb[0].mxu0 %v520
        %v729 = vpop.f32.mrb[0].mxu0
        %v730 = vadd.f32 0.0, %v729
        %v731 = vpop.f32.mrb[0].mxu0
        %732 = vmatprep.mubr.f32.mxu0 0.0
        %733 = vmatmul.mubr.f32.gmra.mrb[0].mxu0 %v523
        %v734 = vpop.f32.mrb[0].mxu0
        %v735 = vadd.f32 0.0, %v734
        %v736 = vpop.f32.mrb[0].mxu0
        %737 = vmatprep.mubr.f32.mxu0 0.0
        %738 = vmatmul.mubr.f32.gmra.mrb[0].mxu0 %v526
        %v739 = vpop.f32.mrb[0].mxu0
        %v740 = vadd.f32 0.0, %v739
        %v741 = vpop.f32.mrb[0].mxu0
        %742 = vmatprep.mubr.f32.mxu0 0.0
        %743 = vmatmul.mubr.f32.gmra.mrb[0].mxu0 %v529
        %v744 = vpop.f32.mrb[0].mxu0
        %v745 = vadd.f32 0.0, %v744
        %v746 = vpop.f32.mrb[0].mxu0
        %747 = vmatprep.mubr.f32.mxu0 0.0
        %748 = vmatmul.mubr.f32.gmra.mrb[0].mxu0 %v532
        %v749 = vpop.f32.mrb[0].mxu0
        %v750 = vadd.f32 0.0, %v749
        %v751 = vpop.f32.mrb[0].mxu0
        %752 = vmatprep.mubr.f32.mxu0 0.0
        %753 = vmatmul.mubr.f32.gmra.mrb[0].mxu0 %v535
        %v754 = vpop.f32.mrb[0].mxu0
        %v755 = vadd.f32 0.0, %v754
        %v756 = vpop.f32.mrb[0].mxu0
        %757 = vmatprep.mubr.f32.mxu0 0.0
        %758 = vmatmul.mubr.f32.gmra.mrb[0].mxu0 %v538
        %v759 = vpop.f32.mrb[0].mxu0
        %v760 = vadd.f32 0.0, %v759
        %v761 = vpop.f32.mrb[0].mxu0
        %762 = vmatprep.mubr.f32.mxu0 0.0
        %763 = vmatmul.mubr.f32.gmra.mrb[0].mxu0 %v541
        %v764 = vpop.f32.mrb[0].mxu0
        %v765 = vadd.f32 0.0, %v764
        %v766 = vpop.f32.mrb[0].mxu0
        %767 = vmatprep.mubr.f32.mxu0 0.0
        %768 = vmatmul.mubr.f32.gmra.mrb[0].mxu0 %v544
        %v769 = vpop.f32.mrb[0].mxu0
        %v770 = vadd.f32 0.0, %v769
        %v771 = vpop.f32.mrb[0].mxu0
        %772 = vmatprep.mubr.f32.mxu0 0.0
        %773 = vmatmul.mubr.f32.gmra.mrb[0].mxu0 %v547
        %v774 = vpop.f32.mrb[0].mxu0
        %v775 = vadd.f32 0.0, %v774
        %v776 = vpop.f32.mrb[0].mxu0
        %777 = vdwg.mxu0
        %v779 = vsel %vm279, %v386, 0
        %v782 = vsel %vm279, %v387, 0
        %v785 = vsel %vm279, %v388, 0
        %v788 = vsel %vm279, %v389, 0
        %v791 = vsel %vm279, %v390, 0
        %v794 = vsel %vm279, %v391, 0
        %v797 = vsel %vm279, %v392, 0
        %v800 = vsel %vm279, %v393, 0
        %v803 = vsel %vm279, %v394, 0
        %v806 = vsel %vm279, %v395, 0
        %v809 = vsel %vm279, %v396, 0
        %v812 = vsel %vm279, %v397, 0
        %v815 = vsel %vm279, %v398, 0
        %v818 = vsel %vm279, %v399, 0
        %v821 = vsel %vm279, %v400, 0
        %v824 = vsel %vm279, %v401, 0
        %v827 = vsel %vm279, %v402, 0
        %v830 = vsel %vm279, %v403, 0
        %v833 = vsel %vm279, %v404, 0
        %v836 = vsel %vm279, %v405, 0
        %v839 = vsel %vm279, %v406, 0
        %v842 = vsel %vm279, %v407, 0
        %v845 = vsel %vm279, %v408, 0
        %v848 = vsel %vm279, %v409, 0
        %v851 = vsel %vm279, %v410, 0
        %v854 = vsel %vm279, %v411, 0
        %v857 = vsel %vm279, %v412, 0
        %v860 = vsel %vm279, %v413, 0
        %v863 = vsel %vm279, %v414, 0
        %v866 = vsel %vm279, %v415, 0
        %v869 = vsel %vm279, %v416, 0
        %v872 = vsel %vm279, %v417, 0
        %v875 = vsel %vm549, %v418, 0
        %877 = vmatprep.subr.mxu0 0.0
        %878 = vmatpush1.msra.mxu0 %v875
        %879 = vmatprep.subr.mxu0 0.0
        %880 = vmatpush1.msra.mxu0 0.0
        %881 = vmatprep.subr.mxu0 0.0
        %882 = vmatpush1.msra.mxu0 0.0
        %883 = vmatprep.subr.mxu0 0.0
        %884 = vmatpush1.msra.mxu0 0.0
        %885 = vmatprep.subr.mxu0 0.0
        %886 = vmatpush1.msra.mxu0 0.0
        %887 = vmatprep.subr.mxu0 0.0
        %888 = vmatpush1.msra.mxu0 0.0
        %889 = vmatprep.subr.mxu0 0.0
        %890 = vmatpush1.msra.mxu0 0.0
        %891 = vmatprep.subr.mxu0 0.0
        %892 = vmatpush1.msra.mxu0 0.0
        %893 = vmatprep.subr.mxu0 0.0
        %894 = vmatpush1.msra.mxu0 0.0
        %895 = vmatprep.subr.mxu0 0.0
        %896 = vmatpush1.msra.mxu0 0.0
        %897 = vmatprep.subr.mxu0 0.0
        %898 = vmatpush1.msra.mxu0 0.0
        %899 = vmatprep.subr.mxu0 0.0
        %900 = vmatpush1.msra.mxu0 0.0
        %901 = vmatprep.subr.mxu0 0.0
        %902 = vmatpush1.msra.mxu0 0.0
        %903 = vmatprep.subr.mxu0 0.0
        %904 = vmatpush1.msra.mxu0 0.0
        %905 = vmatprep.subr.mxu0 0.0
        %906 = vmatpush1.msra.mxu0 0.0
        %907 = vmatprep.subr.mxu0 0.0
        %908 = vmatpush1.msra.mxu0 0.0
        %909 = vmatprep.subr.mxu0 0.0
        %910 = vmatpush1.msra.mxu0 0.0
        %911 = vmatprep.subr.mxu0 0.0
        %912 = vmatpush1.msra.mxu0 0.0
        %913 = vmatprep.subr.mxu0 0.0
        %914 = vmatpush1.msra.mxu0 0.0
        %915 = vmatprep.subr.mxu0 0.0
        %916 = vmatpush1.msra.mxu0 0.0
        %917 = vmatprep.subr.mxu0 0.0
        %918 = vmatpush1.msra.mxu0 0.0
        %919 = vmatprep.subr.mxu0 0.0
        %920 = vmatpush1.msra.mxu0 0.0
        %921 = vmatprep.subr.mxu0 0.0
        %922 = vmatpush1.msra.mxu0 0.0
        %923 = vmatprep.subr.mxu0 0.0
        %924 = vmatpush1.msra.mxu0 0.0
        %925 = vmatprep.subr.mxu0 0.0
        %926 = vmatpush1.msra.mxu0 0.0
        %927 = vmatprep.subr.mxu0 0.0
        %928 = vmatpush1.msra.mxu0 0.0
        %929 = vmatprep.subr.mxu0 0.0
        %930 = vmatpush1.msra.mxu0 0.0
        %931 = vmatprep.subr.mxu0 0.0
        %932 = vmatpush1.msra.mxu0 0.0
        %933 = vmatprep.subr.mxu0 0.0
        %934 = vmatpush1.msra.mxu0 0.0
        %935 = vmatprep.subr.mxu0 0.0
        %936 = vmatpush1.msra.mxu0 0.0
        %937 = vmatprep.subr.mxu0 0.0
        %938 = vmatpush1.msra.mxu0 0.0
        %939 = vmatprep.subr.mxu0 0.0
        %940 = vmatpush1.msra.mxu0 0.0
        %941 = vmatprep.mubr.f32.mxu0 0.0
        %942 = vmatmul.mubr.f32.gmra.mrb[0].mxu0 %v779
        %v943 = vpop.f32.mrb[0].mxu0
        %v944 = vadd.f32 %v620, %v943
        %v945 = vpop.f32.mrb[0].mxu0
        %946 = vmatprep.mubr.f32.mxu0 0.0
        %947 = vmatmul.mubr.f32.gmra.mrb[0].mxu0 %v782
        %v948 = vpop.f32.mrb[0].mxu0
        %v949 = vadd.f32 %v625, %v948
        %v950 = vpop.f32.mrb[0].mxu0
        %951 = vmatprep.mubr.f32.mxu0 0.0
        %952 = vmatmul.mubr.f32.gmra.mrb[0].mxu0 %v785
        %v953 = vpop.f32.mrb[0].mxu0
        %v954 = vadd.f32 %v630, %v953
        %v955 = vpop.f32.mrb[0].mxu0
        %956 = vmatprep.mubr.f32.mxu0 0.0
        %957 = vmatmul.mubr.f32.gmra.mrb[0].mxu0 %v788
        %v958 = vpop.f32.mrb[0].mxu0
        %v959 = vadd.f32 %v635, %v958
        %v960 = vpop.f32.mrb[0].mxu0
        %961 = vmatprep.mubr.f32.mxu0 0.0
        %962 = vmatmul.mubr.f32.gmra.mrb[0].mxu0 %v791
        %v963 = vpop.f32.mrb[0].mxu0
        %v964 = vadd.f32 %v640, %v963
        %v965 = vpop.f32.mrb[0].mxu0
        %966 = vmatprep.mubr.f32.mxu0 0.0
        %967 = vmatmul.mubr.f32.gmra.mrb[0].mxu0 %v794
        %v968 = vpop.f32.mrb[0].mxu0
        %v969 = vadd.f32 %v645, %v968
        %v970 = vpop.f32.mrb[0].mxu0
        %971 = vmatprep.mubr.f32.mxu0 0.0
        %972 = vmatmul.mubr.f32.gmra.mrb[0].mxu0 %v797
        %v973 = vpop.f32.mrb[0].mxu0
        %v974 = vadd.f32 %v650, %v973
        %v975 = vpop.f32.mrb[0].mxu0
        %976 = vmatprep.mubr.f32.mxu0 0.0
        %977 = vmatmul.mubr.f32.gmra.mrb[0].mxu0 %v800
        %v978 = vpop.f32.mrb[0].mxu0
        %v979 = vadd.f32 %v655, %v978
        %v980 = vpop.f32.mrb[0].mxu0
        %981 = vmatprep.mubr.f32.mxu0 0.0
        %982 = vmatmul.mubr.f32.gmra.mrb[0].mxu0 %v803
        %v983 = vpop.f32.mrb[0].mxu0
        %v984 = vadd.f32 %v660, %v983
        %v985 = vpop.f32.mrb[0].mxu0
        %986 = vmatprep.mubr.f32.mxu0 0.0
        %987 = vmatmul.mubr.f32.gmra.mrb[0].mxu0 %v806
        %v988 = vpop.f32.mrb[0].mxu0
        %v989 = vadd.f32 %v665, %v988
        %v990 = vpop.f32.mrb[0].mxu0
        %991 = vmatprep.mubr.f32.mxu0 0.0
        %992 = vmatmul.mubr.f32.gmra.mrb[0].mxu0 %v809
        %v993 = vpop.f32.mrb[0].mxu0
        %v994 = vadd.f32 %v670, %v993
        %v995 = vpop.f32.mrb[0].mxu0
        %996 = vmatprep.mubr.f32.mxu0 0.0
        %997 = vmatmul.mubr.f32.gmra.mrb[0].mxu0 %v812
        %v998 = vpop.f32.mrb[0].mxu0
        %v999 = vadd.f32 %v675, %v998
        %v1000 = vpop.f32.mrb[0].mxu0
        %1001 = vmatprep.mubr.f32.mxu0 0.0
        %1002 = vmatmul.mubr.f32.gmra.mrb[0].mxu0 %v815
        %v1003 = vpop.f32.mrb[0].mxu0
        %v1004 = vadd.f32 %v680, %v1003
        %v1005 = vpop.f32.mrb[0].mxu0
        %1006 = vmatprep.mubr.f32.mxu0 0.0
        %1007 = vmatmul.mubr.f32.gmra.mrb[0].mxu0 %v818
        %v1008 = vpop.f32.mrb[0].mxu0
        %v1009 = vadd.f32 %v685, %v1008
        %v1010 = vpop.f32.mrb[0].mxu0
        %1011 = vmatprep.mubr.f32.mxu0 0.0
        %1012 = vmatmul.mubr.f32.gmra.mrb[0].mxu0 %v821
        %v1013 = vpop.f32.mrb[0].mxu0
        %v1014 = vadd.f32 %v690, %v1013
        %v1015 = vpop.f32.mrb[0].mxu0
        %1016 = vmatprep.mubr.f32.mxu0 0.0
        %1017 = vmatmul.mubr.f32.gmra.mrb[0].mxu0 %v824
        %v1018 = vpop.f32.mrb[0].mxu0
        %v1019 = vadd.f32 %v695, %v1018
        %v1020 = vpop.f32.mrb[0].mxu0
        %1021 = vmatprep.mubr.f32.mxu0 0.0
        %1022 = vmatmul.mubr.f32.gmra.mrb[0].mxu0 %v827
        %v1023 = vpop.f32.mrb[0].mxu0
        %v1024 = vadd.f32 %v700, %v1023
        %v1025 = vpop.f32.mrb[0].mxu0
        %1026 = vmatprep.mubr.f32.mxu0 0.0
        %1027 = vmatmul.mubr.f32.gmra.mrb[0].mxu0 %v830
        %v1028 = vpop.f32.mrb[0].mxu0
        %v1029 = vadd.f32 %v705, %v1028
        %v1030 = vpop.f32.mrb[0].mxu0
        %1031 = vmatprep.mubr.f32.mxu0 0.0
        %1032 = vmatmul.mubr.f32.gmra.mrb[0].mxu0 %v833
        %v1033 = vpop.f32.mrb[0].mxu0
        %v1034 = vadd.f32 %v710, %v1033
        %v1035 = vpop.f32.mrb[0].mxu0
        %1036 = vmatprep.mubr.f32.mxu0 0.0
        %1037 = vmatmul.mubr.f32.gmra.mrb[0].mxu0 %v836
        %v1038 = vpop.f32.mrb[0].mxu0
        %v1039 = vadd.f32 %v715, %v1038
        %v1040 = vpop.f32.mrb[0].mxu0
        %1041 = vmatprep.mubr.f32.mxu0 0.0
        %1042 = vmatmul.mubr.f32.gmra.mrb[0].mxu0 %v839
        %v1043 = vpop.f32.mrb[0].mxu0
        %v1044 = vadd.f32 %v720, %v1043
        %v1045 = vpop.f32.mrb[0].mxu0
        %1046 = vmatprep.mubr.f32.mxu0 0.0
        %1047 = vmatmul.mubr.f32.gmra.mrb[0].mxu0 %v842
        %v1048 = vpop.f32.mrb[0].mxu0
        %v1049 = vadd.f32 %v725, %v1048
        %v1050 = vpop.f32.mrb[0].mxu0
        %1051 = vmatprep.mubr.f32.mxu0 0.0
        %1052 = vmatmul.mubr.f32.gmra.mrb[0].mxu0 %v845
        %v1053 = vpop.f32.mrb[0].mxu0
        %v1054 = vadd.f32 %v730, %v1053
        %v1055 = vpop.f32.mrb[0].mxu0
        %1056 = vmatprep.mubr.f32.mxu0 0.0
        %1057 = vmatmul.mubr.f32.gmra.mrb[0].mxu0 %v848
        %v1058 = vpop.f32.mrb[0].mxu0
        %v1059 = vadd.f32 %v735, %v1058
        %v1060 = vpop.f32.mrb[0].mxu0
        %1061 = vmatprep.mubr.f32.mxu0 0.0
        %1062 = vmatmul.mubr.f32.gmra.mrb[0].mxu0 %v851
        %v1063 = vpop.f32.mrb[0].mxu0
        %v1064 = vadd.f32 %v740, %v1063
        %v1065 = vpop.f32.mrb[0].mxu0
        %1066 = vmatprep.mubr.f32.mxu0 0.0
        %1067 = vmatmul.mubr.f32.gmra.mrb[0].mxu0 %v854
        %v1068 = vpop.f32.mrb[0].mxu0
        %v1069 = vadd.f32 %v745, %v1068
        %v1070 = vpop.f32.mrb[0].mxu0
        %1071 = vmatprep.mubr.f32.mxu0 0.0
        %1072 = vmatmul.mubr.f32.gmra.mrb[0].mxu0 %v857
        %v1073 = vpop.f32.mrb[0].mxu0
        %v1074 = vadd.f32 %v750, %v1073
        %v1075 = vpop.f32.mrb[0].mxu0
        %1076 = vmatprep.mubr.f32.mxu0 0.0
        %1077 = vmatmul.mubr.f32.gmra.mrb[0].mxu0 %v860
        %v1078 = vpop.f32.mrb[0].mxu0
        %v1079 = vadd.f32 %v755, %v1078
        %v1080 = vpop.f32.mrb[0].mxu0
        %1081 = vmatprep.mubr.f32.mxu0 0.0
        %1082 = vmatmul.mubr.f32.gmra.mrb[0].mxu0 %v863
        %v1083 = vpop.f32.mrb[0].mxu0
        %v1084 = vadd.f32 %v760, %v1083
        %v1085 = vpop.f32.mrb[0].mxu0
        %1086 = vmatprep.mubr.f32.mxu0 0.0
        %1087 = vmatmul.mubr.f32.gmra.mrb[0].mxu0 %v866
        %v1088 = vpop.f32.mrb[0].mxu0
        %v1089 = vadd.f32 %v765, %v1088
        %v1090 = vpop.f32.mrb[0].mxu0
        %1091 = vmatprep.mubr.f32.mxu0 0.0
        %1092 = vmatmul.mubr.f32.gmra.mrb[0].mxu0 %v869
        %v1093 = vpop.f32.mrb[0].mxu0
        %v1094 = vadd.f32 %v770, %v1093
        %v1095 = vpop.f32.mrb[0].mxu0
        %1096 = vmatprep.mubr.f32.mxu0 0.0
        %1097 = vmatmul.mubr.f32.gmra.mrb[0].mxu0 %v872
        %v1098 = vpop.f32.mrb[0].mxu0
        %v1099 = vadd.f32 %v775, %v1098
        %v1100 = vpop.f32.mrb[0].mxu0
        %1101 = vdwg.mxu0
        %v1102 = vld [vmem:[#allocation2 + $0x2] sm:$0xff]
        %v1103 = vld [vmem:[#allocation2 + $0xa] sm:$0xff]
        %v1104 = vld [vmem:[#allocation2 + $0x1a] sm:$0xff]
        %v1105 = vld [vmem:[#allocation2 + $0x22] sm:$0xff]
        %v1106 = vld [vmem:[#allocation2 + $0x32] sm:$0xff]
        %v1107 = vld [vmem:[#allocation2 + $0x3a] sm:$0xff]
        %v1108 = vld [vmem:[#allocation2 + $0x4a] sm:$0xff]
        %v1109 = vld [vmem:[#allocation2 + $0x52] sm:$0xff]
        %v1110 = vld [vmem:[#allocation2 + $0x62] sm:$0xff]
        %v1111 = vld [vmem:[#allocation2 + $0x6a] sm:$0xff]
        %v1112 = vld [vmem:[#allocation2 + $0x7a] sm:$0xff]
        %v1113 = vld [vmem:[#allocation2 + $0x82] sm:$0xff]
        %v1114 = vld [vmem:[#allocation2 + $0x92] sm:$0xff]
        %v1115 = vld [vmem:[#allocation2 + $0x9a] sm:$0xff]
        %v1116 = vld [vmem:[#allocation2 + $0xaa] sm:$0xff]
        %v1117 = vld [vmem:[#allocation2 + $0xb2] sm:$0xff]
        %v1118 = vld [vmem:[#allocation2 + $0xc2] sm:$0xff]
        %v1119 = vld [vmem:[#allocation2 + $0xca] sm:$0xff]
        %v1120 = vld [vmem:[#allocation2 + $0xda] sm:$0xff]
        %v1121 = vld [vmem:[#allocation2 + $0xe2] sm:$0xff]
        %v1122 = vld [vmem:[#allocation2 + $0xf2] sm:$0xff]
        %v1123 = vld [vmem:[#allocation2 + $0xfa] sm:$0xff]
        %v1124 = vld [vmem:[#allocation2 + $0x10a] sm:$0xff]
        %v1125 = vld [vmem:[#allocation2 + $0x112] sm:$0xff]
        %v1126 = vld [vmem:[#allocation2 + $0x122] sm:$0xff]
        %v1127 = vld [vmem:[#allocation2 + $0x12a] sm:$0xff]
        %v1128 = vld [vmem:[#allocation2 + $0x13a] sm:$0xff]
        %v1129 = vld [vmem:[#allocation2 + $0x142] sm:$0xff]
        %v1130 = vld [vmem:[#allocation2 + $0x152] sm:$0xff]
        %v1131 = vld [vmem:[#allocation2 + $0x15a] sm:$0xff]
        %v1132 = vld [vmem:[#allocation2 + $0x16a] sm:$0xff]
        %v1133 = vld [vmem:[#allocation2 + $0x172] sm:$0xff]
        %s1134 = scalar_lea.vmem %s1, 8
        %v1135 = vld [vmem:[%s1134] sm:$0xf]
        %v1137 = vsel %vm279, %v1102, 0
        %v1140 = vsel %vm279, %v1103, 0
        %v1143 = vsel %vm279, %v1104, 0
        %v1146 = vsel %vm279, %v1105, 0
        %v1149 = vsel %vm279, %v1106, 0
        %v1152 = vsel %vm279, %v1107, 0
        %v1155 = vsel %vm279, %v1108, 0
        %v1158 = vsel %vm279, %v1109, 0
        %v1161 = vsel %vm279, %v1110, 0
        %v1164 = vsel %vm279, %v1111, 0
        %v1167 = vsel %vm279, %v1112, 0
        %v1170 = vsel %vm279, %v1113, 0
        %v1173 = vsel %vm279, %v1114, 0
        %v1176 = vsel %vm279, %v1115, 0
        %v1179 = vsel %vm279, %v1116, 0
        %v1182 = vsel %vm279, %v1117, 0
        %v1185 = vsel %vm279, %v1118, 0
        %v1188 = vsel %vm279, %v1119, 0
        %v1191 = vsel %vm279, %v1120, 0
        %v1194 = vsel %vm279, %v1121, 0
        %v1197 = vsel %vm279, %v1122, 0
        %v1200 = vsel %vm279, %v1123, 0
        %v1203 = vsel %vm279, %v1124, 0
        %v1206 = vsel %vm279, %v1125, 0
        %v1209 = vsel %vm279, %v1126, 0
        %v1212 = vsel %vm279, %v1127, 0
        %v1215 = vsel %vm279, %v1128, 0
        %v1218 = vsel %vm279, %v1129, 0
        %v1221 = vsel %vm279, %v1130, 0
        %v1224 = vsel %vm279, %v1131, 0
        %v1227 = vsel %vm279, %v1132, 0
        %v1230 = vsel %vm279, %v1133, 0
        %v1233 = vsel %vm549, %v1135, 0
        %1235 = vmatprep.subr.mxu0 0.0
        %1236 = vmatpush1.msra.mxu0 %v1233
        %1237 = vmatprep.subr.mxu0 0.0
        %1238 = vmatpush1.msra.mxu0 0.0
        %1239 = vmatprep.subr.mxu0 0.0
        %1240 = vmatpush1.msra.mxu0 0.0
        %1241 = vmatprep.subr.mxu0 0.0
        %1242 = vmatpush1.msra.mxu0 0.0
        %1243 = vmatprep.subr.mxu0 0.0
        %1244 = vmatpush1.msra.mxu0 0.0
        %1245 = vmatprep.subr.mxu0 0.0
        %1246 = vmatpush1.msra.mxu0 0.0
        %1247 = vmatprep.subr.mxu0 0.0
        %1248 = vmatpush1.msra.mxu0 0.0
        %1249 = vmatprep.subr.mxu0 0.0
        %1250 = vmatpush1.msra.mxu0 0.0
        %1251 = vmatprep.subr.mxu0 0.0
        %1252 = vmatpush1.msra.mxu0 0.0
        %1253 = vmatprep.subr.mxu0 0.0
        %1254 = vmatpush1.msra.mxu0 0.0
        %1255 = vmatprep.subr.mxu0 0.0
        %1256 = vmatpush1.msra.mxu0 0.0
        %1257 = vmatprep.subr.mxu0 0.0
        %1258 = vmatpush1.msra.mxu0 0.0
        %1259 = vmatprep.subr.mxu0 0.0
        %1260 = vmatpush1.msra.mxu0 0.0
        %1261 = vmatprep.subr.mxu0 0.0
        %1262 = vmatpush1.msra.mxu0 0.0
        %1263 = vmatprep.subr.mxu0 0.0
        %1264 = vmatpush1.msra.mxu0 0.0
        %1265 = vmatprep.subr.mxu0 0.0
        %1266 = vmatpush1.msra.mxu0 0.0
        %1267 = vmatprep.subr.mxu0 0.0
        %1268 = vmatpush1.msra.mxu0 0.0
        %1269 = vmatprep.subr.mxu0 0.0
        %1270 = vmatpush1.msra.mxu0 0.0
        %1271 = vmatprep.subr.mxu0 0.0
        %1272 = vmatpush1.msra.mxu0 0.0
        %1273 = vmatprep.subr.mxu0 0.0
        %1274 = vmatpush1.msra.mxu0 0.0
        %1275 = vmatprep.subr.mxu0 0.0
        %1276 = vmatpush1.msra.mxu0 0.0
        %1277 = vmatprep.subr.mxu0 0.0
        %1278 = vmatpush1.msra.mxu0 0.0
        %1279 = vmatprep.subr.mxu0 0.0
        %1280 = vmatpush1.msra.mxu0 0.0
        %1281 = vmatprep.subr.mxu0 0.0
        %1282 = vmatpush1.msra.mxu0 0.0
        %1283 = vmatprep.subr.mxu0 0.0
        %1284 = vmatpush1.msra.mxu0 0.0
        %1285 = vmatprep.subr.mxu0 0.0
        %1286 = vmatpush1.msra.mxu0 0.0
        %1287 = vmatprep.subr.mxu0 0.0
        %1288 = vmatpush1.msra.mxu0 0.0
        %1289 = vmatprep.subr.mxu0 0.0
        %1290 = vmatpush1.msra.mxu0 0.0
        %1291 = vmatprep.subr.mxu0 0.0
        %1292 = vmatpush1.msra.mxu0 0.0
        %1293 = vmatprep.subr.mxu0 0.0
        %1294 = vmatpush1.msra.mxu0 0.0
        %1295 = vmatprep.subr.mxu0 0.0
        %1296 = vmatpush1.msra.mxu0 0.0
        %1297 = vmatprep.subr.mxu0 0.0
        %1298 = vmatpush1.msra.mxu0 0.0
        %1299 = vmatprep.mubr.f32.mxu0 0.0
        %1300 = vmatmul.mubr.f32.gmra.mrb[0].mxu0 %v1137
        %v1301 = vpop.f32.mrb[0].mxu0
        %v1302 = vadd.f32 0.0, %v1301
        %v1303 = vpop.f32.mrb[0].mxu0
        %1304 = vmatprep.mubr.f32.mxu0 0.0
        %1305 = vmatmul.mubr.f32.gmra.mrb[0].mxu0 %v1140
        %v1306 = vpop.f32.mrb[0].mxu0
        %v1307 = vadd.f32 0.0, %v1306
        %v1308 = vpop.f32.mrb[0].mxu0
        %1309 = vmatprep.mubr.f32.mxu0 0.0
        %1310 = vmatmul.mubr.f32.gmra.mrb[0].mxu0 %v1143
        %v1311 = vpop.f32.mrb[0].mxu0
        %v1312 = vadd.f32 0.0, %v1311
        %v1313 = vpop.f32.mrb[0].mxu0
        %1314 = vmatprep.mubr.f32.mxu0 0.0
        %1315 = vmatmul.mubr.f32.gmra.mrb[0].mxu0 %v1146
        %v1316 = vpop.f32.mrb[0].mxu0
        %v1317 = vadd.f32 0.0, %v1316
        %v1318 = vpop.f32.mrb[0].mxu0
        %1319 = vmatprep.mubr.f32.mxu0 0.0
        %1320 = vmatmul.mubr.f32.gmra.mrb[0].mxu0 %v1149
        %v1321 = vpop.f32.mrb[0].mxu0
        %v1322 = vadd.f32 0.0, %v1321
        %v1323 = vpop.f32.mrb[0].mxu0
        %1324 = vmatprep.mubr.f32.mxu0 0.0
        %1325 = vmatmul.mubr.f32.gmra.mrb[0].mxu0 %v1152
        %v1326 = vpop.f32.mrb[0].mxu0
        %v1327 = vadd.f32 0.0, %v1326
        %v1328 = vpop.f32.mrb[0].mxu0
        %1329 = vmatprep.mubr.f32.mxu0 0.0
        %1330 = vmatmul.mubr.f32.gmra.mrb[0].mxu0 %v1155
        %v1331 = vpop.f32.mrb[0].mxu0
        %v1332 = vadd.f32 0.0, %v1331
        %v1333 = vpop.f32.mrb[0].mxu0
        %1334 = vmatprep.mubr.f32.mxu0 0.0
        %1335 = vmatmul.mubr.f32.gmra.mrb[0].mxu0 %v1158
        %v1336 = vpop.f32.mrb[0].mxu0
        %v1337 = vadd.f32 0.0, %v1336
        %v1338 = vpop.f32.mrb[0].mxu0
        %1339 = vmatprep.mubr.f32.mxu0 0.0
        %1340 = vmatmul.mubr.f32.gmra.mrb[0].mxu0 %v1161
        %v1341 = vpop.f32.mrb[0].mxu0
        %v1342 = vadd.f32 0.0, %v1341
        %v1343 = vpop.f32.mrb[0].mxu0
        %1344 = vmatprep.mubr.f32.mxu0 0.0
        %1345 = vmatmul.mubr.f32.gmra.mrb[0].mxu0 %v1164
        %v1346 = vpop.f32.mrb[0].mxu0
        %v1347 = vadd.f32 0.0, %v1346
        %v1348 = vpop.f32.mrb[0].mxu0
        %1349 = vmatprep.mubr.f32.mxu0 0.0
        %1350 = vmatmul.mubr.f32.gmra.mrb[0].mxu0 %v1167
        %v1351 = vpop.f32.mrb[0].mxu0
        %v1352 = vadd.f32 0.0, %v1351
        %v1353 = vpop.f32.mrb[0].mxu0
        %1354 = vmatprep.mubr.f32.mxu0 0.0
        %1355 = vmatmul.mubr.f32.gmra.mrb[0].mxu0 %v1170
        %v1356 = vpop.f32.mrb[0].mxu0
        %v1357 = vadd.f32 0.0, %v1356
        %v1358 = vpop.f32.mrb[0].mxu0
        %1359 = vmatprep.mubr.f32.mxu0 0.0
        %1360 = vmatmul.mubr.f32.gmra.mrb[0].mxu0 %v1173
        %v1361 = vpop.f32.mrb[0].mxu0
        %v1362 = vadd.f32 0.0, %v1361
        %v1363 = vpop.f32.mrb[0].mxu0
        %1364 = vmatprep.mubr.f32.mxu0 0.0
        %1365 = vmatmul.mubr.f32.gmra.mrb[0].mxu0 %v1176
        %v1366 = vpop.f32.mrb[0].mxu0
        %v1367 = vadd.f32 0.0, %v1366
        %v1368 = vpop.f32.mrb[0].mxu0
        %1369 = vmatprep.mubr.f32.mxu0 0.0
        %1370 = vmatmul.mubr.f32.gmra.mrb[0].mxu0 %v1179
        %v1371 = vpop.f32.mrb[0].mxu0
        %v1372 = vadd.f32 0.0, %v1371
        %v1373 = vpop.f32.mrb[0].mxu0
        %1374 = vmatprep.mubr.f32.mxu0 0.0
        %1375 = vmatmul.mubr.f32.gmra.mrb[0].mxu0 %v1182
        %v1376 = vpop.f32.mrb[0].mxu0
        %v1377 = vadd.f32 0.0, %v1376
        %v1378 = vpop.f32.mrb[0].mxu0
        %1379 = vmatprep.mubr.f32.mxu0 0.0
        %1380 = vmatmul.mubr.f32.gmra.mrb[0].mxu0 %v1185
        %v1381 = vpop.f32.mrb[0].mxu0
        %v1382 = vadd.f32 0.0, %v1381
        %v1383 = vpop.f32.mrb[0].mxu0
        %1384 = vmatprep.mubr.f32.mxu0 0.0
        %1385 = vmatmul.mubr.f32.gmra.mrb[0].mxu0 %v1188
        %v1386 = vpop.f32.mrb[0].mxu0
        %v1387 = vadd.f32 0.0, %v1386
        %v1388 = vpop.f32.mrb[0].mxu0
        %1389 = vmatprep.mubr.f32.mxu0 0.0
        %1390 = vmatmul.mubr.f32.gmra.mrb[0].mxu0 %v1191
        %v1391 = vpop.f32.mrb[0].mxu0
        %v1392 = vadd.f32 0.0, %v1391
        %v1393 = vpop.f32.mrb[0].mxu0
        %1394 = vmatprep.mubr.f32.mxu0 0.0
        %1395 = vmatmul.mubr.f32.gmra.mrb[0].mxu0 %v1194
        %v1396 = vpop.f32.mrb[0].mxu0
        %v1397 = vadd.f32 0.0, %v1396
        %v1398 = vpop.f32.mrb[0].mxu0
        %1399 = vmatprep.mubr.f32.mxu0 0.0
        %1400 = vmatmul.mubr.f32.gmra.mrb[0].mxu0 %v1197
        %v1401 = vpop.f32.mrb[0].mxu0
        %v1402 = vadd.f32 0.0, %v1401
        %v1403 = vpop.f32.mrb[0].mxu0
        %1404 = vmatprep.mubr.f32.mxu0 0.0
        %1405 = vmatmul.mubr.f32.gmra.mrb[0].mxu0 %v1200
        %v1406 = vpop.f32.mrb[0].mxu0
        %v1407 = vadd.f32 0.0, %v1406
        %v1408 = vpop.f32.mrb[0].mxu0
        %1409 = vmatprep.mubr.f32.mxu0 0.0
        %1410 = vmatmul.mubr.f32.gmra.mrb[0].mxu0 %v1203
        %v1411 = vpop.f32.mrb[0].mxu0
        %v1412 = vadd.f32 0.0, %v1411
        %v1413 = vpop.f32.mrb[0].mxu0
        %1414 = vmatprep.mubr.f32.mxu0 0.0
        %1415 = vmatmul.mubr.f32.gmra.mrb[0].mxu0 %v1206
        %v1416 = vpop.f32.mrb[0].mxu0
        %v1417 = vadd.f32 0.0, %v1416
        %v1418 = vpop.f32.mrb[0].mxu0
        %1419 = vmatprep.mubr.f32.mxu0 0.0
        %1420 = vmatmul.mubr.f32.gmra.mrb[0].mxu0 %v1209
        %v1421 = vpop.f32.mrb[0].mxu0
        %v1422 = vadd.f32 0.0, %v1421
        %v1423 = vpop.f32.mrb[0].mxu0
        %1424 = vmatprep.mubr.f32.mxu0 0.0
        %1425 = vmatmul.mubr.f32.gmra.mrb[0].mxu0 %v1212
        %v1426 = vpop.f32.mrb[0].mxu0
        %v1427 = vadd.f32 0.0, %v1426
        %v1428 = vpop.f32.mrb[0].mxu0
        %1429 = vmatprep.mubr.f32.mxu0 0.0
        %1430 = vmatmul.mubr.f32.gmra.mrb[0].mxu0 %v1215
        %v1431 = vpop.f32.mrb[0].mxu0
        %v1432 = vadd.f32 0.0, %v1431
        %v1433 = vpop.f32.mrb[0].mxu0
        %1434 = vmatprep.mubr.f32.mxu0 0.0
        %1435 = vmatmul.mubr.f32.gmra.mrb[0].mxu0 %v1218
        %v1436 = vpop.f32.mrb[0].mxu0
        %v1437 = vadd.f32 0.0, %v1436
        %v1438 = vpop.f32.mrb[0].mxu0
        %1439 = vmatprep.mubr.f32.mxu0 0.0
        %1440 = vmatmul.mubr.f32.gmra.mrb[0].mxu0 %v1221
        %v1441 = vpop.f32.mrb[0].mxu0
        %v1442 = vadd.f32 0.0, %v1441
        %v1443 = vpop.f32.mrb[0].mxu0
        %1444 = vmatprep.mubr.f32.mxu0 0.0
        %1445 = vmatmul.mubr.f32.gmra.mrb[0].mxu0 %v1224
        %v1446 = vpop.f32.mrb[0].mxu0
        %v1447 = vadd.f32 0.0, %v1446
        %v1448 = vpop.f32.mrb[0].mxu0
        %1449 = vmatprep.mubr.f32.mxu0 0.0
        %1450 = vmatmul.mubr.f32.gmra.mrb[0].mxu0 %v1227
        %v1451 = vpop.f32.mrb[0].mxu0
        %v1452 = vadd.f32 0.0, %v1451
        %v1453 = vpop.f32.mrb[0].mxu0
        %1454 = vmatprep.mubr.f32.mxu0 0.0
        %1455 = vmatmul.mubr.f32.gmra.mrb[0].mxu0 %v1230
        %v1456 = vpop.f32.mrb[0].mxu0
        %v1457 = vadd.f32 0.0, %v1456
        %v1458 = vpop.f32.mrb[0].mxu0
        %1459 = vdwg.mxu0
        %v1460 = vadd.f32 %v944, %v1302
        %v1461 = vadd.f32 %v949, %v1307
        %v1462 = vadd.f32 %v954, %v1312
        %v1463 = vadd.f32 %v959, %v1317
        %v1464 = vadd.f32 %v964, %v1322
        %v1465 = vadd.f32 %v969, %v1327
        %v1466 = vadd.f32 %v974, %v1332
        %v1467 = vadd.f32 %v979, %v1337
        %v1468 = vadd.f32 %v984, %v1342
        %v1469 = vadd.f32 %v989, %v1347
        %v1470 = vadd.f32 %v994, %v1352
        %v1471 = vadd.f32 %v999, %v1357
        %v1472 = vadd.f32 %v1004, %v1362
        %v1473 = vadd.f32 %v1009, %v1367
        %v1474 = vadd.f32 %v1014, %v1372
        %v1475 = vadd.f32 %v1019, %v1377
        %v1476 = vadd.f32 %v1024, %v1382
        %v1477 = vadd.f32 %v1029, %v1387
        %v1478 = vadd.f32 %v1034, %v1392
        %v1479 = vadd.f32 %v1039, %v1397
        %v1480 = vadd.f32 %v1044, %v1402
        %v1481 = vadd.f32 %v1049, %v1407
        %v1482 = vadd.f32 %v1054, %v1412
        %v1483 = vadd.f32 %v1059, %v1417
        %v1484 = vadd.f32 %v1064, %v1422
        %v1485 = vadd.f32 %v1069, %v1427
        %v1486 = vadd.f32 %v1074, %v1432
        %v1487 = vadd.f32 %v1079, %v1437
        %v1488 = vadd.f32 %v1084, %v1442
        %v1489 = vadd.f32 %v1089, %v1447
        %v1490 = vadd.f32 %v1094, %v1452
        %v1491 = vadd.f32 %v1099, %v1457
        %v1492 = vld [vmem:[%s288] sm:$0xff]
        %v1493 = vld [vmem:[%s288 + $0x8] sm:$0xff]
        %v1494 = vld [vmem:[%s288 + $0x18] sm:$0xff]
        %v1495 = vld [vmem:[%s288 + $0x20] sm:$0xff]
        %v1496 = vld [vmem:[%s288 + $0x30] sm:$0xff]
        %v1497 = vld [vmem:[%s288 + $0x38] sm:$0xff]
        %v1498 = vld [vmem:[%s288 + $0x48] sm:$0xff]
        %v1499 = vld [vmem:[%s288 + $0x50] sm:$0xff]
        %v1500 = vld [vmem:[%s288 + $0x60] sm:$0xff]
        %v1501 = vld [vmem:[%s288 + $0x68] sm:$0xff]
        %v1502 = vld [vmem:[%s288 + $0x78] sm:$0xff]
        %v1503 = vld [vmem:[%s288 + $0x80] sm:$0xff]
        %v1504 = vld [vmem:[%s288 + $0x90] sm:$0xff]
        %v1505 = vld [vmem:[%s288 + $0x98] sm:$0xff]
        %v1506 = vld [vmem:[%s288 + $0xa8] sm:$0xff]
        %v1507 = vld [vmem:[%s288 + $0xb0] sm:$0xff]
        %v1508 = vld [vmem:[%s288 + $0xc0] sm:$0xff]
        %v1509 = vld [vmem:[%s288 + $0xc8] sm:$0xff]
        %v1510 = vld [vmem:[%s288 + $0xd8] sm:$0xff]
        %v1511 = vld [vmem:[%s288 + $0xe0] sm:$0xff]
        %v1512 = vld [vmem:[%s288 + $0xf0] sm:$0xff]
        %v1513 = vld [vmem:[%s288 + $0xf8] sm:$0xff]
        %v1514 = vld [vmem:[%s288 + $0x108] sm:$0xff]
        %v1515 = vld [vmem:[%s288 + $0x110] sm:$0xff]
        %v1516 = vld [vmem:[%s288 + $0x120] sm:$0xff]
        %v1517 = vld [vmem:[%s288 + $0x128] sm:$0xff]
        %v1518 = vld [vmem:[%s288 + $0x138] sm:$0xff]
        %v1519 = vld [vmem:[%s288 + $0x140] sm:$0xff]
        %v1520 = vld [vmem:[%s288 + $0x150] sm:$0xff]
        %v1521 = vld [vmem:[%s288 + $0x158] sm:$0xff]
        %v1522 = vld [vmem:[%s288 + $0x168] sm:$0xff]
        %v1523 = vld [vmem:[%s288 + $0x170] sm:$0xff]
        %s1524 = scalar_lea.vmem %s1, 12
        %v1525 = vld [vmem:[%s1524] sm:$0xf]
        %v1527 = vsel %vm279, %v1492, 0
        %v1530 = vsel %vm279, %v1493, 0
        %v1533 = vsel %vm279, %v1494, 0
        %v1536 = vsel %vm279, %v1495, 0
        %v1539 = vsel %vm279, %v1496, 0
        %v1542 = vsel %vm279, %v1497, 0
        %v1545 = vsel %vm279, %v1498, 0
        %v1548 = vsel %vm279, %v1499, 0
        %v1551 = vsel %vm279, %v1500, 0
        %v1554 = vsel %vm279, %v1501, 0
        %v1557 = vsel %vm279, %v1502, 0
        %v1560 = vsel %vm279, %v1503, 0
        %v1563 = vsel %vm279, %v1504, 0
        %v1566 = vsel %vm279, %v1505, 0
        %v1569 = vsel %vm279, %v1506, 0
        %v1572 = vsel %vm279, %v1507, 0
        %v1575 = vsel %vm279, %v1508, 0
        %v1578 = vsel %vm279, %v1509, 0
        %v1581 = vsel %vm279, %v1510, 0
        %v1584 = vsel %vm279, %v1511, 0
        %v1587 = vsel %vm279, %v1512, 0
        %v1590 = vsel %vm279, %v1513, 0
        %v1593 = vsel %vm279, %v1514, 0
        %v1596 = vsel %vm279, %v1515, 0
        %v1599 = vsel %vm279, %v1516, 0
        %v1602 = vsel %vm279, %v1517, 0
        %v1605 = vsel %vm279, %v1518, 0
        %v1608 = vsel %vm279, %v1519, 0
        %v1611 = vsel %vm279, %v1520, 0
        %v1614 = vsel %vm279, %v1521, 0
        %v1617 = vsel %vm279, %v1522, 0
        %v1620 = vsel %vm279, %v1523, 0
        %v1623 = vsel %vm549, %v1525, 0
        %1625 = vmatprep.subr.mxu0 0.0
        %1626 = vmatpush1.msra.mxu0 %v1623
        %1627 = vmatprep.subr.mxu0 0.0
        %1628 = vmatpush1.msra.mxu0 0.0
        %1629 = vmatprep.subr.mxu0 0.0
        %1630 = vmatpush1.msra.mxu0 0.0
        %1631 = vmatprep.subr.mxu0 0.0
        %1632 = vmatpush1.msra.mxu0 0.0
        %1633 = vmatprep.subr.mxu0 0.0
        %1634 = vmatpush1.msra.mxu0 0.0
        %1635 = vmatprep.subr.mxu0 0.0
        %1636 = vmatpush1.msra.mxu0 0.0
        %1637 = vmatprep.subr.mxu0 0.0
        %1638 = vmatpush1.msra.mxu0 0.0
        %1639 = vmatprep.subr.mxu0 0.0
        %1640 = vmatpush1.msra.mxu0 0.0
        %1641 = vmatprep.subr.mxu0 0.0
        %1642 = vmatpush1.msra.mxu0 0.0
        %1643 = vmatprep.subr.mxu0 0.0
        %1644 = vmatpush1.msra.mxu0 0.0
        %1645 = vmatprep.subr.mxu0 0.0
        %1646 = vmatpush1.msra.mxu0 0.0
        %1647 = vmatprep.subr.mxu0 0.0
        %1648 = vmatpush1.msra.mxu0 0.0
        %1649 = vmatprep.subr.mxu0 0.0
        %1650 = vmatpush1.msra.mxu0 0.0
        %1651 = vmatprep.subr.mxu0 0.0
        %1652 = vmatpush1.msra.mxu0 0.0
        %1653 = vmatprep.subr.mxu0 0.0
        %1654 = vmatpush1.msra.mxu0 0.0
        %1655 = vmatprep.subr.mxu0 0.0
        %1656 = vmatpush1.msra.mxu0 0.0
        %1657 = vmatprep.subr.mxu0 0.0
        %1658 = vmatpush1.msra.mxu0 0.0
        %1659 = vmatprep.subr.mxu0 0.0
        %1660 = vmatpush1.msra.mxu0 0.0
        %1661 = vmatprep.subr.mxu0 0.0
        %1662 = vmatpush1.msra.mxu0 0.0
        %1663 = vmatprep.subr.mxu0 0.0
        %1664 = vmatpush1.msra.mxu0 0.0
        %1665 = vmatprep.subr.mxu0 0.0
        %1666 = vmatpush1.msra.mxu0 0.0
        %1667 = vmatprep.subr.mxu0 0.0
        %1668 = vmatpush1.msra.mxu0 0.0
        %1669 = vmatprep.subr.mxu0 0.0
        %1670 = vmatpush1.msra.mxu0 0.0
        %1671 = vmatprep.subr.mxu0 0.0
        %1672 = vmatpush1.msra.mxu0 0.0
        %1673 = vmatprep.subr.mxu0 0.0
        %1674 = vmatpush1.msra.mxu0 0.0
        %1675 = vmatprep.subr.mxu0 0.0
        %1676 = vmatpush1.msra.mxu0 0.0
        %1677 = vmatprep.subr.mxu0 0.0
        %1678 = vmatpush1.msra.mxu0 0.0
        %1679 = vmatprep.subr.mxu0 0.0
        %1680 = vmatpush1.msra.mxu0 0.0
        %1681 = vmatprep.subr.mxu0 0.0
        %1682 = vmatpush1.msra.mxu0 0.0
        %1683 = vmatprep.subr.mxu0 0.0
        %1684 = vmatpush1.msra.mxu0 0.0
        %1685 = vmatprep.subr.mxu0 0.0
        %1686 = vmatpush1.msra.mxu0 0.0
        %1687 = vmatprep.subr.mxu0 0.0
        %1688 = vmatpush1.msra.mxu0 0.0
        %1689 = vmatprep.mubr.f32.mxu0 0.0
        %1690 = vmatmul.mubr.f32.gmra.mrb[0].mxu0 %v1527
        %v1691 = vpop.f32.mrb[0].mxu0
        %v1692 = vadd.f32 0.0, %v1691
        %v1693 = vpop.f32.mrb[0].mxu0
        %1694 = vmatprep.mubr.f32.mxu0 0.0
        %1695 = vmatmul.mubr.f32.gmra.mrb[0].mxu0 %v1530
        %v1696 = vpop.f32.mrb[0].mxu0
        %v1697 = vadd.f32 0.0, %v1696
        %v1698 = vpop.f32.mrb[0].mxu0
        %1699 = vmatprep.mubr.f32.mxu0 0.0
        %1700 = vmatmul.mubr.f32.gmra.mrb[0].mxu0 %v1533
        %v1701 = vpop.f32.mrb[0].mxu0
        %v1702 = vadd.f32 0.0, %v1701
        %v1703 = vpop.f32.mrb[0].mxu0
        %1704 = vmatprep.mubr.f32.mxu0 0.0
        %1705 = vmatmul.mubr.f32.gmra.mrb[0].mxu0 %v1536
        %v1706 = vpop.f32.mrb[0].mxu0
        %v1707 = vadd.f32 0.0, %v1706
        %v1708 = vpop.f32.mrb[0].mxu0
        %1709 = vmatprep.mubr.f32.mxu0 0.0
        %1710 = vmatmul.mubr.f32.gmra.mrb[0].mxu0 %v1539
        %v1711 = vpop.f32.mrb[0].mxu0
        %v1712 = vadd.f32 0.0, %v1711
        %v1713 = vpop.f32.mrb[0].mxu0
        %1714 = vmatprep.mubr.f32.mxu0 0.0
        %1715 = vmatmul.mubr.f32.gmra.mrb[0].mxu0 %v1542
        %v1716 = vpop.f32.mrb[0].mxu0
        %v1717 = vadd.f32 0.0, %v1716
        %v1718 = vpop.f32.mrb[0].mxu0
        %1719 = vmatprep.mubr.f32.mxu0 0.0
        %1720 = vmatmul.mubr.f32.gmra.mrb[0].mxu0 %v1545
        %v1721 = vpop.f32.mrb[0].mxu0
        %v1722 = vadd.f32 0.0, %v1721
        %v1723 = vpop.f32.mrb[0].mxu0
        %1724 = vmatprep.mubr.f32.mxu0 0.0
        %1725 = vmatmul.mubr.f32.gmra.mrb[0].mxu0 %v1548
        %v1726 = vpop.f32.mrb[0].mxu0
        %v1727 = vadd.f32 0.0, %v1726
        %v1728 = vpop.f32.mrb[0].mxu0
        %1729 = vmatprep.mubr.f32.mxu0 0.0
        %1730 = vmatmul.mubr.f32.gmra.mrb[0].mxu0 %v1551
        %v1731 = vpop.f32.mrb[0].mxu0
        %v1732 = vadd.f32 0.0, %v1731
        %v1733 = vpop.f32.mrb[0].mxu0
        %1734 = vmatprep.mubr.f32.mxu0 0.0
        %1735 = vmatmul.mubr.f32.gmra.mrb[0].mxu0 %v1554
        %v1736 = vpop.f32.mrb[0].mxu0
        %v1737 = vadd.f32 0.0, %v1736
        %v1738 = vpop.f32.mrb[0].mxu0
        %1739 = vmatprep.mubr.f32.mxu0 0.0
        %1740 = vmatmul.mubr.f32.gmra.mrb[0].mxu0 %v1557
        %v1741 = vpop.f32.mrb[0].mxu0
        %v1742 = vadd.f32 0.0, %v1741
        %v1743 = vpop.f32.mrb[0].mxu0
        %1744 = vmatprep.mubr.f32.mxu0 0.0
        %1745 = vmatmul.mubr.f32.gmra.mrb[0].mxu0 %v1560
        %v1746 = vpop.f32.mrb[0].mxu0
        %v1747 = vadd.f32 0.0, %v1746
        %v1748 = vpop.f32.mrb[0].mxu0
        %1749 = vmatprep.mubr.f32.mxu0 0.0
        %1750 = vmatmul.mubr.f32.gmra.mrb[0].mxu0 %v1563
        %v1751 = vpop.f32.mrb[0].mxu0
        %v1752 = vadd.f32 0.0, %v1751
        %v1753 = vpop.f32.mrb[0].mxu0
        %1754 = vmatprep.mubr.f32.mxu0 0.0
        %1755 = vmatmul.mubr.f32.gmra.mrb[0].mxu0 %v1566
        %v1756 = vpop.f32.mrb[0].mxu0
        %v1757 = vadd.f32 0.0, %v1756
        %v1758 = vpop.f32.mrb[0].mxu0
        %1759 = vmatprep.mubr.f32.mxu0 0.0
        %1760 = vmatmul.mubr.f32.gmra.mrb[0].mxu0 %v1569
        %v1761 = vpop.f32.mrb[0].mxu0
        %v1762 = vadd.f32 0.0, %v1761
        %v1763 = vpop.f32.mrb[0].mxu0
        %1764 = vmatprep.mubr.f32.mxu0 0.0
        %1765 = vmatmul.mubr.f32.gmra.mrb[0].mxu0 %v1572
        %v1766 = vpop.f32.mrb[0].mxu0
        %v1767 = vadd.f32 0.0, %v1766
        %v1768 = vpop.f32.mrb[0].mxu0
        %1769 = vmatprep.mubr.f32.mxu0 0.0
        %1770 = vmatmul.mubr.f32.gmra.mrb[0].mxu0 %v1575
        %v1771 = vpop.f32.mrb[0].mxu0
        %v1772 = vadd.f32 0.0, %v1771
        %v1773 = vpop.f32.mrb[0].mxu0
        %1774 = vmatprep.mubr.f32.mxu0 0.0
        %1775 = vmatmul.mubr.f32.gmra.mrb[0].mxu0 %v1578
        %v1776 = vpop.f32.mrb[0].mxu0
        %v1777 = vadd.f32 0.0, %v1776
        %v1778 = vpop.f32.mrb[0].mxu0
        %1779 = vmatprep.mubr.f32.mxu0 0.0
        %1780 = vmatmul.mubr.f32.gmra.mrb[0].mxu0 %v1581
        %v1781 = vpop.f32.mrb[0].mxu0
        %v1782 = vadd.f32 0.0, %v1781
        %v1783 = vpop.f32.mrb[0].mxu0
        %1784 = vmatprep.mubr.f32.mxu0 0.0
        %1785 = vmatmul.mubr.f32.gmra.mrb[0].mxu0 %v1584
        %v1786 = vpop.f32.mrb[0].mxu0
        %v1787 = vadd.f32 0.0, %v1786
        %v1788 = vpop.f32.mrb[0].mxu0
        %1789 = vmatprep.mubr.f32.mxu0 0.0
        %1790 = vmatmul.mubr.f32.gmra.mrb[0].mxu0 %v1587
        %v1791 = vpop.f32.mrb[0].mxu0
        %v1792 = vadd.f32 0.0, %v1791
        %v1793 = vpop.f32.mrb[0].mxu0
        %1794 = vmatprep.mubr.f32.mxu0 0.0
        %1795 = vmatmul.mubr.f32.gmra.mrb[0].mxu0 %v1590
        %v1796 = vpop.f32.mrb[0].mxu0
        %v1797 = vadd.f32 0.0, %v1796
        %v1798 = vpop.f32.mrb[0].mxu0
        %1799 = vmatprep.mubr.f32.mxu0 0.0
        %1800 = vmatmul.mubr.f32.gmra.mrb[0].mxu0 %v1593
        %v1801 = vpop.f32.mrb[0].mxu0
        %v1802 = vadd.f32 0.0, %v1801
        %v1803 = vpop.f32.mrb[0].mxu0
        %1804 = vmatprep.mubr.f32.mxu0 0.0
        %1805 = vmatmul.mubr.f32.gmra.mrb[0].mxu0 %v1596
        %v1806 = vpop.f32.mrb[0].mxu0
        %v1807 = vadd.f32 0.0, %v1806
        %v1808 = vpop.f32.mrb[0].mxu0
        %1809 = vmatprep.mubr.f32.mxu0 0.0
        %1810 = vmatmul.mubr.f32.gmra.mrb[0].mxu0 %v1599
        %v1811 = vpop.f32.mrb[0].mxu0
        %v1812 = vadd.f32 0.0, %v1811
        %v1813 = vpop.f32.mrb[0].mxu0
        %1814 = vmatprep.mubr.f32.mxu0 0.0
        %1815 = vmatmul.mubr.f32.gmra.mrb[0].mxu0 %v1602
        %v1816 = vpop.f32.mrb[0].mxu0
        %v1817 = vadd.f32 0.0, %v1816
        %v1818 = vpop.f32.mrb[0].mxu0
        %1819 = vmatprep.mubr.f32.mxu0 0.0
        %1820 = vmatmul.mubr.f32.gmra.mrb[0].mxu0 %v1605
        %v1821 = vpop.f32.mrb[0].mxu0
        %v1822 = vadd.f32 0.0, %v1821
        %v1823 = vpop.f32.mrb[0].mxu0
        %1824 = vmatprep.mubr.f32.mxu0 0.0
        %1825 = vmatmul.mubr.f32.gmra.mrb[0].mxu0 %v1608
        %v1826 = vpop.f32.mrb[0].mxu0
        %v1827 = vadd.f32 0.0, %v1826
        %v1828 = vpop.f32.mrb[0].mxu0
        %1829 = vmatprep.mubr.f32.mxu0 0.0
        %1830 = vmatmul.mubr.f32.gmra.mrb[0].mxu0 %v1611
        %v1831 = vpop.f32.mrb[0].mxu0
        %v1832 = vadd.f32 0.0, %v1831
        %v1833 = vpop.f32.mrb[0].mxu0
        %1834 = vmatprep.mubr.f32.mxu0 0.0
        %1835 = vmatmul.mubr.f32.gmra.mrb[0].mxu0 %v1614
        %v1836 = vpop.f32.mrb[0].mxu0
        %v1837 = vadd.f32 0.0, %v1836
        %v1838 = vpop.f32.mrb[0].mxu0
        %1839 = vmatprep.mubr.f32.mxu0 0.0
        %1840 = vmatmul.mubr.f32.gmra.mrb[0].mxu0 %v1617
        %v1841 = vpop.f32.mrb[0].mxu0
        %v1842 = vadd.f32 0.0, %v1841
        %v1843 = vpop.f32.mrb[0].mxu0
        %1844 = vmatprep.mubr.f32.mxu0 0.0
        %1845 = vmatmul.mubr.f32.gmra.mrb[0].mxu0 %v1620
        %v1846 = vpop.f32.mrb[0].mxu0
        %v1847 = vadd.f32 0.0, %v1846
        %v1848 = vpop.f32.mrb[0].mxu0
        %1849 = vdwg.mxu0
        %v1850 = vadd.f32 %v1460, %v1692
        %v1851 = vadd.f32 %v1461, %v1697
        %v1852 = vadd.f32 %v1462, %v1702
        %v1853 = vadd.f32 %v1463, %v1707
        %v1854 = vadd.f32 %v1464, %v1712
        %v1855 = vadd.f32 %v1465, %v1717
        %v1856 = vadd.f32 %v1466, %v1722
        %v1857 = vadd.f32 %v1467, %v1727
        %v1858 = vadd.f32 %v1468, %v1732
        %v1859 = vadd.f32 %v1469, %v1737
        %v1860 = vadd.f32 %v1470, %v1742
        %v1861 = vadd.f32 %v1471, %v1747
        %v1862 = vadd.f32 %v1472, %v1752
        %v1863 = vadd.f32 %v1473, %v1757
        %v1864 = vadd.f32 %v1474, %v1762
        %v1865 = vadd.f32 %v1475, %v1767
        %v1866 = vadd.f32 %v1476, %v1772
        %v1867 = vadd.f32 %v1477, %v1777
        %v1868 = vadd.f32 %v1478, %v1782
        %v1869 = vadd.f32 %v1479, %v1787
        %v1870 = vadd.f32 %v1480, %v1792
        %v1871 = vadd.f32 %v1481, %v1797
        %v1872 = vadd.f32 %v1482, %v1802
        %v1873 = vadd.f32 %v1483, %v1807
        %v1874 = vadd.f32 %v1484, %v1812
        %v1875 = vadd.f32 %v1485, %v1817
        %v1876 = vadd.f32 %v1486, %v1822
        %v1877 = vadd.f32 %v1487, %v1827
        %v1878 = vadd.f32 %v1488, %v1832
        %v1879 = vadd.f32 %v1489, %v1837
        %v1880 = vadd.f32 %v1490, %v1842
        %v1881 = vadd.f32 %v1491, %v1847
        %v1882 = vld [vmem:[%s288 + $0x1] sm:$0xff]
        %v1883 = vld [vmem:[%s288 + $0x9] sm:$0xff]
        %v1884 = vld [vmem:[%s288 + $0x19] sm:$0xff]
        %v1885 = vld [vmem:[%s288 + $0x21] sm:$0xff]
        %v1886 = vld [vmem:[%s288 + $0x31] sm:$0xff]
        %v1887 = vld [vmem:[%s288 + $0x39] sm:$0xff]
        %v1888 = vld [vmem:[%s288 + $0x49] sm:$0xff]
        %v1889 = vld [vmem:[%s288 + $0x51] sm:$0xff]
        %v1890 = vld [vmem:[%s288 + $0x61] sm:$0xff]
        %v1891 = vld [vmem:[%s288 + $0x69] sm:$0xff]
        %v1892 = vld [vmem:[%s288 + $0x79] sm:$0xff]
        %v1893 = vld [vmem:[%s288 + $0x81] sm:$0xff]
        %v1894 = vld [vmem:[%s288 + $0x91] sm:$0xff]
        %v1895 = vld [vmem:[%s288 + $0x99] sm:$0xff]
        %v1896 = vld [vmem:[%s288 + $0xa9] sm:$0xff]
        %v1897 = vld [vmem:[%s288 + $0xb1] sm:$0xff]
        %v1898 = vld [vmem:[%s288 + $0xc1] sm:$0xff]
        %v1899 = vld [vmem:[%s288 + $0xc9] sm:$0xff]
        %v1900 = vld [vmem:[%s288 + $0xd9] sm:$0xff]
        %v1901 = vld [vmem:[%s288 + $0xe1] sm:$0xff]
        %v1902 = vld [vmem:[%s288 + $0xf1] sm:$0xff]
        %v1903 = vld [vmem:[%s288 + $0xf9] sm:$0xff]
        %v1904 = vld [vmem:[%s288 + $0x109] sm:$0xff]
        %v1905 = vld [vmem:[%s288 + $0x111] sm:$0xff]
        %v1906 = vld [vmem:[%s288 + $0x121] sm:$0xff]
        %v1907 = vld [vmem:[%s288 + $0x129] sm:$0xff]
        %v1908 = vld [vmem:[%s288 + $0x139] sm:$0xff]
        %v1909 = vld [vmem:[%s288 + $0x141] sm:$0xff]
        %v1910 = vld [vmem:[%s288 + $0x151] sm:$0xff]
        %v1911 = vld [vmem:[%s288 + $0x159] sm:$0xff]
        %v1912 = vld [vmem:[%s288 + $0x169] sm:$0xff]
        %v1913 = vld [vmem:[%s288 + $0x171] sm:$0xff]
        %s1914 = scalar_lea.vmem %s1, 16
        %v1915 = vld [vmem:[%s1914] sm:$0xf]
        %v1917 = vsel %vm279, %v1882, 0
        %v1920 = vsel %vm279, %v1883, 0
        %v1923 = vsel %vm279, %v1884, 0
        %v1926 = vsel %vm279, %v1885, 0
        %v1929 = vsel %vm279, %v1886, 0
        %v1932 = vsel %vm279, %v1887, 0
        %v1935 = vsel %vm279, %v1888, 0
        %v1938 = vsel %vm279, %v1889, 0
        %v1941 = vsel %vm279, %v1890, 0
        %v1944 = vsel %vm279, %v1891, 0
        %v1947 = vsel %vm279, %v1892, 0
        %v1950 = vsel %vm279, %v1893, 0
        %v1953 = vsel %vm279, %v1894, 0
        %v1956 = vsel %vm279, %v1895, 0
        %v1959 = vsel %vm279, %v1896, 0
        %v1962 = vsel %vm279, %v1897, 0
        %v1965 = vsel %vm279, %v1898, 0
        %v1968 = vsel %vm279, %v1899, 0
        %v1971 = vsel %vm279, %v1900, 0
        %v1974 = vsel %vm279, %v1901, 0
        %v1977 = vsel %vm279, %v1902, 0
        %v1980 = vsel %vm279, %v1903, 0
        %v1983 = vsel %vm279, %v1904, 0
        %v1986 = vsel %vm279, %v1905, 0
        %v1989 = vsel %vm279, %v1906, 0
        %v1992 = vsel %vm279, %v1907, 0
        %v1995 = vsel %vm279, %v1908, 0
        %v1998 = vsel %vm279, %v1909, 0
        %v2001 = vsel %vm279, %v1910, 0
        %v2004 = vsel %vm279, %v1911, 0
        %v2007 = vsel %vm279, %v1912, 0
        %v2010 = vsel %vm279, %v1913, 0
        %v2013 = vsel %vm549, %v1915, 0
        %2015 = vmatprep.subr.mxu0 0.0
        %2016 = vmatpush1.msra.mxu0 %v2013
        %2017 = vmatprep.subr.mxu0 0.0
        %2018 = vmatpush1.msra.mxu0 0.0
        %2019 = vmatprep.subr.mxu0 0.0
        %2020 = vmatpush1.msra.mxu0 0.0
        %2021 = vmatprep.subr.mxu0 0.0
        %2022 = vmatpush1.msra.mxu0 0.0
        %2023 = vmatprep.subr.mxu0 0.0
        %2024 = vmatpush1.msra.mxu0 0.0
        %2025 = vmatprep.subr.mxu0 0.0
        %2026 = vmatpush1.msra.mxu0 0.0
        %2027 = vmatprep.subr.mxu0 0.0
        %2028 = vmatpush1.msra.mxu0 0.0
        %2029 = vmatprep.subr.mxu0 0.0
        %2030 = vmatpush1.msra.mxu0 0.0
        %2031 = vmatprep.subr.mxu0 0.0
        %2032 = vmatpush1.msra.mxu0 0.0
        %2033 = vmatprep.subr.mxu0 0.0
        %2034 = vmatpush1.msra.mxu0 0.0
        %2035 = vmatprep.subr.mxu0 0.0
        %2036 = vmatpush1.msra.mxu0 0.0
        %2037 = vmatprep.subr.mxu0 0.0
        %2038 = vmatpush1.msra.mxu0 0.0
        %2039 = vmatprep.subr.mxu0 0.0
        %2040 = vmatpush1.msra.mxu0 0.0
        %2041 = vmatprep.subr.mxu0 0.0
        %2042 = vmatpush1.msra.mxu0 0.0
        %2043 = vmatprep.subr.mxu0 0.0
        %2044 = vmatpush1.msra.mxu0 0.0
        %2045 = vmatprep.subr.mxu0 0.0
        %2046 = vmatpush1.msra.mxu0 0.0
        %2047 = vmatprep.subr.mxu0 0.0
        %2048 = vmatpush1.msra.mxu0 0.0
        %2049 = vmatprep.subr.mxu0 0.0
        %2050 = vmatpush1.msra.mxu0 0.0
        %2051 = vmatprep.subr.mxu0 0.0
        %2052 = vmatpush1.msra.mxu0 0.0
        %2053 = vmatprep.subr.mxu0 0.0
        %2054 = vmatpush1.msra.mxu0 0.0
        %2055 = vmatprep.subr.mxu0 0.0
        %2056 = vmatpush1.msra.mxu0 0.0
        %2057 = vmatprep.subr.mxu0 0.0
        %2058 = vmatpush1.msra.mxu0 0.0
        %2059 = vmatprep.subr.mxu0 0.0
        %2060 = vmatpush1.msra.mxu0 0.0
        %2061 = vmatprep.subr.mxu0 0.0
        %2062 = vmatpush1.msra.mxu0 0.0
        %2063 = vmatprep.subr.mxu0 0.0
        %2064 = vmatpush1.msra.mxu0 0.0
        %2065 = vmatprep.subr.mxu0 0.0
        %2066 = vmatpush1.msra.mxu0 0.0
        %2067 = vmatprep.subr.mxu0 0.0
        %2068 = vmatpush1.msra.mxu0 0.0
        %2069 = vmatprep.subr.mxu0 0.0
        %2070 = vmatpush1.msra.mxu0 0.0
        %2071 = vmatprep.subr.mxu0 0.0
        %2072 = vmatpush1.msra.mxu0 0.0
        %2073 = vmatprep.subr.mxu0 0.0
        %2074 = vmatpush1.msra.mxu0 0.0
        %2075 = vmatprep.subr.mxu0 0.0
        %2076 = vmatpush1.msra.mxu0 0.0
        %2077 = vmatprep.subr.mxu0 0.0
        %2078 = vmatpush1.msra.mxu0 0.0
        %2079 = vmatprep.mubr.f32.mxu0 0.0
        %2080 = vmatmul.mubr.f32.gmra.mrb[0].mxu0 %v1917
        %v2081 = vpop.f32.mrb[0].mxu0
        %v2082 = vadd.f32 0.0, %v2081
        %v2083 = vpop.f32.mrb[0].mxu0
        %2084 = vmatprep.mubr.f32.mxu0 0.0
        %2085 = vmatmul.mubr.f32.gmra.mrb[0].mxu0 %v1920
        %v2086 = vpop.f32.mrb[0].mxu0
        %v2087 = vadd.f32 0.0, %v2086
        %v2088 = vpop.f32.mrb[0].mxu0
        %2089 = vmatprep.mubr.f32.mxu0 0.0
        %2090 = vmatmul.mubr.f32.gmra.mrb[0].mxu0 %v1923
        %v2091 = vpop.f32.mrb[0].mxu0
        %v2092 = vadd.f32 0.0, %v2091
        %v2093 = vpop.f32.mrb[0].mxu0
        %2094 = vmatprep.mubr.f32.mxu0 0.0
        %2095 = vmatmul.mubr.f32.gmra.mrb[0].mxu0 %v1926
        %v2096 = vpop.f32.mrb[0].mxu0
        %v2097 = vadd.f32 0.0, %v2096
        %v2098 = vpop.f32.mrb[0].mxu0
        %2099 = vmatprep.mubr.f32.mxu0 0.0
        %2100 = vmatmul.mubr.f32.gmra.mrb[0].mxu0 %v1929
        %v2101 = vpop.f32.mrb[0].mxu0
        %v2102 = vadd.f32 0.0, %v2101
        %v2103 = vpop.f32.mrb[0].mxu0
        %2104 = vmatprep.mubr.f32.mxu0 0.0
        %2105 = vmatmul.mubr.f32.gmra.mrb[0].mxu0 %v1932
        %v2106 = vpop.f32.mrb[0].mxu0
        %v2107 = vadd.f32 0.0, %v2106
        %v2108 = vpop.f32.mrb[0].mxu0
        %2109 = vmatprep.mubr.f32.mxu0 0.0
        %2110 = vmatmul.mubr.f32.gmra.mrb[0].mxu0 %v1935
        %v2111 = vpop.f32.mrb[0].mxu0
        %v2112 = vadd.f32 0.0, %v2111
        %v2113 = vpop.f32.mrb[0].mxu0
        %2114 = vmatprep.mubr.f32.mxu0 0.0
        %2115 = vmatmul.mubr.f32.gmra.mrb[0].mxu0 %v1938
        %v2116 = vpop.f32.mrb[0].mxu0
        %v2117 = vadd.f32 0.0, %v2116
        %v2118 = vpop.f32.mrb[0].mxu0
        %2119 = vmatprep.mubr.f32.mxu0 0.0
        %2120 = vmatmul.mubr.f32.gmra.mrb[0].mxu0 %v1941
        %v2121 = vpop.f32.mrb[0].mxu0
        %v2122 = vadd.f32 0.0, %v2121
        %v2123 = vpop.f32.mrb[0].mxu0
        %2124 = vmatprep.mubr.f32.mxu0 0.0
        %2125 = vmatmul.mubr.f32.gmra.mrb[0].mxu0 %v1944
        %v2126 = vpop.f32.mrb[0].mxu0
        %v2127 = vadd.f32 0.0, %v2126
        %v2128 = vpop.f32.mrb[0].mxu0
        %2129 = vmatprep.mubr.f32.mxu0 0.0
        %2130 = vmatmul.mubr.f32.gmra.mrb[0].mxu0 %v1947
        %v2131 = vpop.f32.mrb[0].mxu0
        %v2132 = vadd.f32 0.0, %v2131
        %v2133 = vpop.f32.mrb[0].mxu0
        %2134 = vmatprep.mubr.f32.mxu0 0.0
        %2135 = vmatmul.mubr.f32.gmra.mrb[0].mxu0 %v1950
        %v2136 = vpop.f32.mrb[0].mxu0
        %v2137 = vadd.f32 0.0, %v2136
        %v2138 = vpop.f32.mrb[0].mxu0
        %2139 = vmatprep.mubr.f32.mxu0 0.0
        %2140 = vmatmul.mubr.f32.gmra.mrb[0].mxu0 %v1953
        %v2141 = vpop.f32.mrb[0].mxu0
        %v2142 = vadd.f32 0.0, %v2141
        %v2143 = vpop.f32.mrb[0].mxu0
        %2144 = vmatprep.mubr.f32.mxu0 0.0
        %2145 = vmatmul.mubr.f32.gmra.mrb[0].mxu0 %v1956
        %v2146 = vpop.f32.mrb[0].mxu0
        %v2147 = vadd.f32 0.0, %v2146
        %v2148 = vpop.f32.mrb[0].mxu0
        %2149 = vmatprep.mubr.f32.mxu0 0.0
        %2150 = vmatmul.mubr.f32.gmra.mrb[0].mxu0 %v1959
        %v2151 = vpop.f32.mrb[0].mxu0
        %v2152 = vadd.f32 0.0, %v2151
        %v2153 = vpop.f32.mrb[0].mxu0
        %2154 = vmatprep.mubr.f32.mxu0 0.0
        %2155 = vmatmul.mubr.f32.gmra.mrb[0].mxu0 %v1962
        %v2156 = vpop.f32.mrb[0].mxu0
        %v2157 = vadd.f32 0.0, %v2156
        %v2158 = vpop.f32.mrb[0].mxu0
        %2159 = vmatprep.mubr.f32.mxu0 0.0
        %2160 = vmatmul.mubr.f32.gmra.mrb[0].mxu0 %v1965
        %v2161 = vpop.f32.mrb[0].mxu0
        %v2162 = vadd.f32 0.0, %v2161
        %v2163 = vpop.f32.mrb[0].mxu0
        %2164 = vmatprep.mubr.f32.mxu0 0.0
        %2165 = vmatmul.mubr.f32.gmra.mrb[0].mxu0 %v1968
        %v2166 = vpop.f32.mrb[0].mxu0
        %v2167 = vadd.f32 0.0, %v2166
        %v2168 = vpop.f32.mrb[0].mxu0
        %2169 = vmatprep.mubr.f32.mxu0 0.0
        %2170 = vmatmul.mubr.f32.gmra.mrb[0].mxu0 %v1971
        %v2171 = vpop.f32.mrb[0].mxu0
        %v2172 = vadd.f32 0.0, %v2171
        %v2173 = vpop.f32.mrb[0].mxu0
        %2174 = vmatprep.mubr.f32.mxu0 0.0
        %2175 = vmatmul.mubr.f32.gmra.mrb[0].mxu0 %v1974
        %v2176 = vpop.f32.mrb[0].mxu0
        %v2177 = vadd.f32 0.0, %v2176
        %v2178 = vpop.f32.mrb[0].mxu0
        %2179 = vmatprep.mubr.f32.mxu0 0.0
        %2180 = vmatmul.mubr.f32.gmra.mrb[0].mxu0 %v1977
        %v2181 = vpop.f32.mrb[0].mxu0
        %v2182 = vadd.f32 0.0, %v2181
        %v2183 = vpop.f32.mrb[0].mxu0
        %2184 = vmatprep.mubr.f32.mxu0 0.0
        %2185 = vmatmul.mubr.f32.gmra.mrb[0].mxu0 %v1980
        %v2186 = vpop.f32.mrb[0].mxu0
        %v2187 = vadd.f32 0.0, %v2186
        %v2188 = vpop.f32.mrb[0].mxu0
        %2189 = vmatprep.mubr.f32.mxu0 0.0
        %2190 = vmatmul.mubr.f32.gmra.mrb[0].mxu0 %v1983
        %v2191 = vpop.f32.mrb[0].mxu0
        %v2192 = vadd.f32 0.0, %v2191
        %v2193 = vpop.f32.mrb[0].mxu0
        %2194 = vmatprep.mubr.f32.mxu0 0.0
        %2195 = vmatmul.mubr.f32.gmra.mrb[0].mxu0 %v1986
        %v2196 = vpop.f32.mrb[0].mxu0
        %v2197 = vadd.f32 0.0, %v2196
        %v2198 = vpop.f32.mrb[0].mxu0
        %2199 = vmatprep.mubr.f32.mxu0 0.0
        %2200 = vmatmul.mubr.f32.gmra.mrb[0].mxu0 %v1989
        %v2201 = vpop.f32.mrb[0].mxu0
        %v2202 = vadd.f32 0.0, %v2201
        %v2203 = vpop.f32.mrb[0].mxu0
        %2204 = vmatprep.mubr.f32.mxu0 0.0
        %2205 = vmatmul.mubr.f32.gmra.mrb[0].mxu0 %v1992
        %v2206 = vpop.f32.mrb[0].mxu0
        %v2207 = vadd.f32 0.0, %v2206
        %v2208 = vpop.f32.mrb[0].mxu0
        %2209 = vmatprep.mubr.f32.mxu0 0.0
        %2210 = vmatmul.mubr.f32.gmra.mrb[0].mxu0 %v1995
        %v2211 = vpop.f32.mrb[0].mxu0
        %v2212 = vadd.f32 0.0, %v2211
        %v2213 = vpop.f32.mrb[0].mxu0
        %2214 = vmatprep.mubr.f32.mxu0 0.0
        %2215 = vmatmul.mubr.f32.gmra.mrb[0].mxu0 %v1998
        %v2216 = vpop.f32.mrb[0].mxu0
        %v2217 = vadd.f32 0.0, %v2216
        %v2218 = vpop.f32.mrb[0].mxu0
        %2219 = vmatprep.mubr.f32.mxu0 0.0
        %2220 = vmatmul.mubr.f32.gmra.mrb[0].mxu0 %v2001
        %v2221 = vpop.f32.mrb[0].mxu0
        %v2222 = vadd.f32 0.0, %v2221
        %v2223 = vpop.f32.mrb[0].mxu0
        %2224 = vmatprep.mubr.f32.mxu0 0.0
        %2225 = vmatmul.mubr.f32.gmra.mrb[0].mxu0 %v2004
        %v2226 = vpop.f32.mrb[0].mxu0
        %v2227 = vadd.f32 0.0, %v2226
        %v2228 = vpop.f32.mrb[0].mxu0
        %2229 = vmatprep.mubr.f32.mxu0 0.0
        %2230 = vmatmul.mubr.f32.gmra.mrb[0].mxu0 %v2007
        %v2231 = vpop.f32.mrb[0].mxu0
        %v2232 = vadd.f32 0.0, %v2231
        %v2233 = vpop.f32.mrb[0].mxu0
        %2234 = vmatprep.mubr.f32.mxu0 0.0
        %2235 = vmatmul.mubr.f32.gmra.mrb[0].mxu0 %v2010
        %v2236 = vpop.f32.mrb[0].mxu0
        %v2237 = vadd.f32 0.0, %v2236
        %v2238 = vpop.f32.mrb[0].mxu0
        %2239 = vdwg.mxu0
        %v2240 = vadd.f32 %v1850, %v2082
        %v2241 = vadd.f32 %v1851, %v2087
        %v2242 = vadd.f32 %v1852, %v2092
        %v2243 = vadd.f32 %v1853, %v2097
        %v2244 = vadd.f32 %v1854, %v2102
        %v2245 = vadd.f32 %v1855, %v2107
        %v2246 = vadd.f32 %v1856, %v2112
        %v2247 = vadd.f32 %v1857, %v2117
        %v2248 = vadd.f32 %v1858, %v2122
        %v2249 = vadd.f32 %v1859, %v2127
        %v2250 = vadd.f32 %v1860, %v2132
        %v2251 = vadd.f32 %v1861, %v2137
        %v2252 = vadd.f32 %v1862, %v2142
        %v2253 = vadd.f32 %v1863, %v2147
        %v2254 = vadd.f32 %v1864, %v2152
        %v2255 = vadd.f32 %v1865, %v2157
        %v2256 = vadd.f32 %v1866, %v2162
        %v2257 = vadd.f32 %v1867, %v2167
        %v2258 = vadd.f32 %v1868, %v2172
        %v2259 = vadd.f32 %v1869, %v2177
        %v2260 = vadd.f32 %v1870, %v2182
        %v2261 = vadd.f32 %v1871, %v2187
        %v2262 = vadd.f32 %v1872, %v2192
        %v2263 = vadd.f32 %v1873, %v2197
        %v2264 = vadd.f32 %v1874, %v2202
        %v2265 = vadd.f32 %v1875, %v2207
        %v2266 = vadd.f32 %v1876, %v2212
        %v2267 = vadd.f32 %v1877, %v2217
        %v2268 = vadd.f32 %v1878, %v2222
        %v2269 = vadd.f32 %v1879, %v2227
        %v2270 = vadd.f32 %v1880, %v2232
        %v2271 = vadd.f32 %v1881, %v2237
        %v2272 = vld [vmem:[%s288 + $0x2] sm:$0xff]
        %v2273 = vld [vmem:[%s288 + $0xa] sm:$0xff]
        %v2274 = vld [vmem:[%s288 + $0x1a] sm:$0xff]
        %v2275 = vld [vmem:[%s288 + $0x22] sm:$0xff]
        %v2276 = vld [vmem:[%s288 + $0x32] sm:$0xff]
        %v2277 = vld [vmem:[%s288 + $0x3a] sm:$0xff]
        %v2278 = vld [vmem:[%s288 + $0x4a] sm:$0xff]
        %v2279 = vld [vmem:[%s288 + $0x52] sm:$0xff]
        %v2280 = vld [vmem:[%s288 + $0x62] sm:$0xff]
        %v2281 = vld [vmem:[%s288 + $0x6a] sm:$0xff]
        %v2282 = vld [vmem:[%s288 + $0x7a] sm:$0xff]
        %v2283 = vld [vmem:[%s288 + $0x82] sm:$0xff]
        %v2284 = vld [vmem:[%s288 + $0x92] sm:$0xff]
        %v2285 = vld [vmem:[%s288 + $0x9a] sm:$0xff]
        %v2286 = vld [vmem:[%s288 + $0xaa] sm:$0xff]
        %v2287 = vld [vmem:[%s288 + $0xb2] sm:$0xff]
        %v2288 = vld [vmem:[%s288 + $0xc2] sm:$0xff]
        %v2289 = vld [vmem:[%s288 + $0xca] sm:$0xff]
        %v2290 = vld [vmem:[%s288 + $0xda] sm:$0xff]
        %v2291 = vld [vmem:[%s288 + $0xe2] sm:$0xff]
        %v2292 = vld [vmem:[%s288 + $0xf2] sm:$0xff]
        %v2293 = vld [vmem:[%s288 + $0xfa] sm:$0xff]
        %v2294 = vld [vmem:[%s288 + $0x10a] sm:$0xff]
        %v2295 = vld [vmem:[%s288 + $0x112] sm:$0xff]
        %v2296 = vld [vmem:[%s288 + $0x122] sm:$0xff]
        %v2297 = vld [vmem:[%s288 + $0x12a] sm:$0xff]
        %v2298 = vld [vmem:[%s288 + $0x13a] sm:$0xff]
        %v2299 = vld [vmem:[%s288 + $0x142] sm:$0xff]
        %v2300 = vld [vmem:[%s288 + $0x152] sm:$0xff]
        %v2301 = vld [vmem:[%s288 + $0x15a] sm:$0xff]
        %v2302 = vld [vmem:[%s288 + $0x16a] sm:$0xff]
        %v2303 = vld [vmem:[%s288 + $0x172] sm:$0xff]
        %s2304 = scalar_lea.vmem %s1, 20
        %v2305 = vld [vmem:[%s2304] sm:$0xf]
        %v2307 = vsel %vm279, %v2272, 0
        %v2310 = vsel %vm279, %v2273, 0
        %v2313 = vsel %vm279, %v2274, 0
        %v2316 = vsel %vm279, %v2275, 0
        %v2319 = vsel %vm279, %v2276, 0
        %v2322 = vsel %vm279, %v2277, 0
        %v2325 = vsel %vm279, %v2278, 0
        %v2328 = vsel %vm279, %v2279, 0
        %v2331 = vsel %vm279, %v2280, 0
        %v2334 = vsel %vm279, %v2281, 0
        %v2337 = vsel %vm279, %v2282, 0
        %v2340 = vsel %vm279, %v2283, 0
        %v2343 = vsel %vm279, %v2284, 0
        %v2346 = vsel %vm279, %v2285, 0
        %v2349 = vsel %vm279, %v2286, 0
        %v2352 = vsel %vm279, %v2287, 0
        %v2355 = vsel %vm279, %v2288, 0
        %v2358 = vsel %vm279, %v2289, 0
        %v2361 = vsel %vm279, %v2290, 0
        %v2364 = vsel %vm279, %v2291, 0
        %v2367 = vsel %vm279, %v2292, 0
        %v2370 = vsel %vm279, %v2293, 0
        %v2373 = vsel %vm279, %v2294, 0
        %v2376 = vsel %vm279, %v2295, 0
        %v2379 = vsel %vm279, %v2296, 0
        %v2382 = vsel %vm279, %v2297, 0
        %v2385 = vsel %vm279, %v2298, 0
        %v2388 = vsel %vm279, %v2299, 0
        %v2391 = vsel %vm279, %v2300, 0
        %v2394 = vsel %vm279, %v2301, 0
        %v2397 = vsel %vm279, %v2302, 0
        %v2400 = vsel %vm279, %v2303, 0
        %v2403 = vsel %vm549, %v2305, 0
        %2405 = vmatprep.subr.mxu0 0.0
        %2406 = vmatpush1.msra.mxu0 %v2403
        %2407 = vmatprep.subr.mxu0 0.0
        %2408 = vmatpush1.msra.mxu0 0.0
        %2409 = vmatprep.subr.mxu0 0.0
        %2410 = vmatpush1.msra.mxu0 0.0
        %2411 = vmatprep.subr.mxu0 0.0
        %2412 = vmatpush1.msra.mxu0 0.0
        %2413 = vmatprep.subr.mxu0 0.0
        %2414 = vmatpush1.msra.mxu0 0.0
        %2415 = vmatprep.subr.mxu0 0.0
        %2416 = vmatpush1.msra.mxu0 0.0
        %2417 = vmatprep.subr.mxu0 0.0
        %2418 = vmatpush1.msra.mxu0 0.0
        %2419 = vmatprep.subr.mxu0 0.0
        %2420 = vmatpush1.msra.mxu0 0.0
        %2421 = vmatprep.subr.mxu0 0.0
        %2422 = vmatpush1.msra.mxu0 0.0
        %2423 = vmatprep.subr.mxu0 0.0
        %2424 = vmatpush1.msra.mxu0 0.0
        %2425 = vmatprep.subr.mxu0 0.0
        %2426 = vmatpush1.msra.mxu0 0.0
        %2427 = vmatprep.subr.mxu0 0.0
        %2428 = vmatpush1.msra.mxu0 0.0
        %2429 = vmatprep.subr.mxu0 0.0
        %2430 = vmatpush1.msra.mxu0 0.0
        %2431 = vmatprep.subr.mxu0 0.0
        %2432 = vmatpush1.msra.mxu0 0.0
        %2433 = vmatprep.subr.mxu0 0.0
        %2434 = vmatpush1.msra.mxu0 0.0
        %2435 = vmatprep.subr.mxu0 0.0
        %2436 = vmatpush1.msra.mxu0 0.0
        %2437 = vmatprep.subr.mxu0 0.0
        %2438 = vmatpush1.msra.mxu0 0.0
        %2439 = vmatprep.subr.mxu0 0.0
        %2440 = vmatpush1.msra.mxu0 0.0
        %2441 = vmatprep.subr.mxu0 0.0
        %2442 = vmatpush1.msra.mxu0 0.0
        %2443 = vmatprep.subr.mxu0 0.0
        %2444 = vmatpush1.msra.mxu0 0.0
        %2445 = vmatprep.subr.mxu0 0.0
        %2446 = vmatpush1.msra.mxu0 0.0
        %2447 = vmatprep.subr.mxu0 0.0
        %2448 = vmatpush1.msra.mxu0 0.0
        %2449 = vmatprep.subr.mxu0 0.0
        %2450 = vmatpush1.msra.mxu0 0.0
        %2451 = vmatprep.subr.mxu0 0.0
        %2452 = vmatpush1.msra.mxu0 0.0
        %2453 = vmatprep.subr.mxu0 0.0
        %2454 = vmatpush1.msra.mxu0 0.0
        %2455 = vmatprep.subr.mxu0 0.0
        %2456 = vmatpush1.msra.mxu0 0.0
        %2457 = vmatprep.subr.mxu0 0.0
        %2458 = vmatpush1.msra.mxu0 0.0
        %2459 = vmatprep.subr.mxu0 0.0
        %2460 = vmatpush1.msra.mxu0 0.0
        %2461 = vmatprep.subr.mxu0 0.0
        %2462 = vmatpush1.msra.mxu0 0.0
        %2463 = vmatprep.subr.mxu0 0.0
        %2464 = vmatpush1.msra.mxu0 0.0
        %2465 = vmatprep.subr.mxu0 0.0
        %2466 = vmatpush1.msra.mxu0 0.0
        %2467 = vmatprep.subr.mxu0 0.0
        %2468 = vmatpush1.msra.mxu0 0.0
        %2469 = vmatprep.mubr.f32.mxu0 0.0
        %2470 = vmatmul.mubr.f32.gmra.mrb[0].mxu0 %v2307
        %v2471 = vpop.f32.mrb[0].mxu0
        %v2472 = vadd.f32 0.0, %v2471
        %v2473 = vpop.f32.mrb[0].mxu0
        %2474 = vmatprep.mubr.f32.mxu0 0.0
        %2475 = vmatmul.mubr.f32.gmra.mrb[0].mxu0 %v2310
        %v2476 = vpop.f32.mrb[0].mxu0
        %v2477 = vadd.f32 0.0, %v2476
        %v2478 = vpop.f32.mrb[0].mxu0
        %2479 = vmatprep.mubr.f32.mxu0 0.0
        %2480 = vmatmul.mubr.f32.gmra.mrb[0].mxu0 %v2313
        %v2481 = vpop.f32.mrb[0].mxu0
        %v2482 = vadd.f32 0.0, %v2481
        %v2483 = vpop.f32.mrb[0].mxu0
        %2484 = vmatprep.mubr.f32.mxu0 0.0
        %2485 = vmatmul.mubr.f32.gmra.mrb[0].mxu0 %v2316
        %v2486 = vpop.f32.mrb[0].mxu0
        %v2487 = vadd.f32 0.0, %v2486
        %v2488 = vpop.f32.mrb[0].mxu0
        %2489 = vmatprep.mubr.f32.mxu0 0.0
        %2490 = vmatmul.mubr.f32.gmra.mrb[0].mxu0 %v2319
        %v2491 = vpop.f32.mrb[0].mxu0
        %v2492 = vadd.f32 0.0, %v2491
        %v2493 = vpop.f32.mrb[0].mxu0
        %2494 = vmatprep.mubr.f32.mxu0 0.0
        %2495 = vmatmul.mubr.f32.gmra.mrb[0].mxu0 %v2322
        %v2496 = vpop.f32.mrb[0].mxu0
        %v2497 = vadd.f32 0.0, %v2496
        %v2498 = vpop.f32.mrb[0].mxu0
        %2499 = vmatprep.mubr.f32.mxu0 0.0
        %2500 = vmatmul.mubr.f32.gmra.mrb[0].mxu0 %v2325
        %v2501 = vpop.f32.mrb[0].mxu0
        %v2502 = vadd.f32 0.0, %v2501
        %v2503 = vpop.f32.mrb[0].mxu0
        %2504 = vmatprep.mubr.f32.mxu0 0.0
        %2505 = vmatmul.mubr.f32.gmra.mrb[0].mxu0 %v2328
        %v2506 = vpop.f32.mrb[0].mxu0
        %v2507 = vadd.f32 0.0, %v2506
        %v2508 = vpop.f32.mrb[0].mxu0
        %2509 = vmatprep.mubr.f32.mxu0 0.0
        %2510 = vmatmul.mubr.f32.gmra.mrb[0].mxu0 %v2331
        %v2511 = vpop.f32.mrb[0].mxu0
        %v2512 = vadd.f32 0.0, %v2511
        %v2513 = vpop.f32.mrb[0].mxu0
        %2514 = vmatprep.mubr.f32.mxu0 0.0
        %2515 = vmatmul.mubr.f32.gmra.mrb[0].mxu0 %v2334
        %v2516 = vpop.f32.mrb[0].mxu0
        %v2517 = vadd.f32 0.0, %v2516
        %v2518 = vpop.f32.mrb[0].mxu0
        %2519 = vmatprep.mubr.f32.mxu0 0.0
        %2520 = vmatmul.mubr.f32.gmra.mrb[0].mxu0 %v2337
        %v2521 = vpop.f32.mrb[0].mxu0
        %v2522 = vadd.f32 0.0, %v2521
        %v2523 = vpop.f32.mrb[0].mxu0
        %2524 = vmatprep.mubr.f32.mxu0 0.0
        %2525 = vmatmul.mubr.f32.gmra.mrb[0].mxu0 %v2340
        %v2526 = vpop.f32.mrb[0].mxu0
        %v2527 = vadd.f32 0.0, %v2526
        %v2528 = vpop.f32.mrb[0].mxu0
        %2529 = vmatprep.mubr.f32.mxu0 0.0
        %2530 = vmatmul.mubr.f32.gmra.mrb[0].mxu0 %v2343
        %v2531 = vpop.f32.mrb[0].mxu0
        %v2532 = vadd.f32 0.0, %v2531
        %v2533 = vpop.f32.mrb[0].mxu0
        %2534 = vmatprep.mubr.f32.mxu0 0.0
        %2535 = vmatmul.mubr.f32.gmra.mrb[0].mxu0 %v2346
        %v2536 = vpop.f32.mrb[0].mxu0
        %v2537 = vadd.f32 0.0, %v2536
        %v2538 = vpop.f32.mrb[0].mxu0
        %2539 = vmatprep.mubr.f32.mxu0 0.0
        %2540 = vmatmul.mubr.f32.gmra.mrb[0].mxu0 %v2349
        %v2541 = vpop.f32.mrb[0].mxu0
        %v2542 = vadd.f32 0.0, %v2541
        %v2543 = vpop.f32.mrb[0].mxu0
        %2544 = vmatprep.mubr.f32.mxu0 0.0
        %2545 = vmatmul.mubr.f32.gmra.mrb[0].mxu0 %v2352
        %v2546 = vpop.f32.mrb[0].mxu0
        %v2547 = vadd.f32 0.0, %v2546
        %v2548 = vpop.f32.mrb[0].mxu0
        %2549 = vmatprep.mubr.f32.mxu0 0.0
        %2550 = vmatmul.mubr.f32.gmra.mrb[0].mxu0 %v2355
        %v2551 = vpop.f32.mrb[0].mxu0
        %v2552 = vadd.f32 0.0, %v2551
        %v2553 = vpop.f32.mrb[0].mxu0
        %2554 = vmatprep.mubr.f32.mxu0 0.0
        %2555 = vmatmul.mubr.f32.gmra.mrb[0].mxu0 %v2358
        %v2556 = vpop.f32.mrb[0].mxu0
        %v2557 = vadd.f32 0.0, %v2556
        %v2558 = vpop.f32.mrb[0].mxu0
        %2559 = vmatprep.mubr.f32.mxu0 0.0
        %2560 = vmatmul.mubr.f32.gmra.mrb[0].mxu0 %v2361
        %v2561 = vpop.f32.mrb[0].mxu0
        %v2562 = vadd.f32 0.0, %v2561
        %v2563 = vpop.f32.mrb[0].mxu0
        %2564 = vmatprep.mubr.f32.mxu0 0.0
        %2565 = vmatmul.mubr.f32.gmra.mrb[0].mxu0 %v2364
        %v2566 = vpop.f32.mrb[0].mxu0
        %v2567 = vadd.f32 0.0, %v2566
        %v2568 = vpop.f32.mrb[0].mxu0
        %2569 = vmatprep.mubr.f32.mxu0 0.0
        %2570 = vmatmul.mubr.f32.gmra.mrb[0].mxu0 %v2367
        %v2571 = vpop.f32.mrb[0].mxu0
        %v2572 = vadd.f32 0.0, %v2571
        %v2573 = vpop.f32.mrb[0].mxu0
        %2574 = vmatprep.mubr.f32.mxu0 0.0
        %2575 = vmatmul.mubr.f32.gmra.mrb[0].mxu0 %v2370
        %v2576 = vpop.f32.mrb[0].mxu0
        %v2577 = vadd.f32 0.0, %v2576
        %v2578 = vpop.f32.mrb[0].mxu0
        %2579 = vmatprep.mubr.f32.mxu0 0.0
        %2580 = vmatmul.mubr.f32.gmra.mrb[0].mxu0 %v2373
        %v2581 = vpop.f32.mrb[0].mxu0
        %v2582 = vadd.f32 0.0, %v2581
        %v2583 = vpop.f32.mrb[0].mxu0
        %2584 = vmatprep.mubr.f32.mxu0 0.0
        %2585 = vmatmul.mubr.f32.gmra.mrb[0].mxu0 %v2376
        %v2586 = vpop.f32.mrb[0].mxu0
        %v2587 = vadd.f32 0.0, %v2586
        %v2588 = vpop.f32.mrb[0].mxu0
        %2589 = vmatprep.mubr.f32.mxu0 0.0
        %2590 = vmatmul.mubr.f32.gmra.mrb[0].mxu0 %v2379
        %v2591 = vpop.f32.mrb[0].mxu0
        %v2592 = vadd.f32 0.0, %v2591
        %v2593 = vpop.f32.mrb[0].mxu0
        %2594 = vmatprep.mubr.f32.mxu0 0.0
        %2595 = vmatmul.mubr.f32.gmra.mrb[0].mxu0 %v2382
        %v2596 = vpop.f32.mrb[0].mxu0
        %v2597 = vadd.f32 0.0, %v2596
        %v2598 = vpop.f32.mrb[0].mxu0
        %2599 = vmatprep.mubr.f32.mxu0 0.0
        %2600 = vmatmul.mubr.f32.gmra.mrb[0].mxu0 %v2385
        %v2601 = vpop.f32.mrb[0].mxu0
        %v2602 = vadd.f32 0.0, %v2601
        %v2603 = vpop.f32.mrb[0].mxu0
        %2604 = vmatprep.mubr.f32.mxu0 0.0
        %2605 = vmatmul.mubr.f32.gmra.mrb[0].mxu0 %v2388
        %v2606 = vpop.f32.mrb[0].mxu0
        %v2607 = vadd.f32 0.0, %v2606
        %v2608 = vpop.f32.mrb[0].mxu0
        %2609 = vmatprep.mubr.f32.mxu0 0.0
        %2610 = vmatmul.mubr.f32.gmra.mrb[0].mxu0 %v2391
        %v2611 = vpop.f32.mrb[0].mxu0
        %v2612 = vadd.f32 0.0, %v2611
        %v2613 = vpop.f32.mrb[0].mxu0
        %2614 = vmatprep.mubr.f32.mxu0 0.0
        %2615 = vmatmul.mubr.f32.gmra.mrb[0].mxu0 %v2394
        %v2616 = vpop.f32.mrb[0].mxu0
        %v2617 = vadd.f32 0.0, %v2616
        %v2618 = vpop.f32.mrb[0].mxu0
        %2619 = vmatprep.mubr.f32.mxu0 0.0
        %2620 = vmatmul.mubr.f32.gmra.mrb[0].mxu0 %v2397
        %v2621 = vpop.f32.mrb[0].mxu0
        %v2622 = vadd.f32 0.0, %v2621
        %v2623 = vpop.f32.mrb[0].mxu0
        %2624 = vmatprep.mubr.f32.mxu0 0.0
        %2625 = vmatmul.mubr.f32.gmra.mrb[0].mxu0 %v2400
        %v2626 = vpop.f32.mrb[0].mxu0
        %v2627 = vadd.f32 0.0, %v2626
        %v2628 = vpop.f32.mrb[0].mxu0
        %2629 = vdwg.mxu0
        %v2630 = vadd.f32 %v2240, %v2472
        %v2631 = vadd.f32 %v2241, %v2477
        %v2632 = vadd.f32 %v2242, %v2482
        %v2633 = vadd.f32 %v2243, %v2487
        %v2634 = vadd.f32 %v2244, %v2492
        %v2635 = vadd.f32 %v2245, %v2497
        %v2636 = vadd.f32 %v2246, %v2502
        %v2637 = vadd.f32 %v2247, %v2507
        %v2638 = vadd.f32 %v2248, %v2512
        %v2639 = vadd.f32 %v2249, %v2517
        %v2640 = vadd.f32 %v2250, %v2522
        %v2641 = vadd.f32 %v2251, %v2527
        %v2642 = vadd.f32 %v2252, %v2532
        %v2643 = vadd.f32 %v2253, %v2537
        %v2644 = vadd.f32 %v2254, %v2542
        %v2645 = vadd.f32 %v2255, %v2547
        %v2646 = vadd.f32 %v2256, %v2552
        %v2647 = vadd.f32 %v2257, %v2557
        %v2648 = vadd.f32 %v2258, %v2562
        %v2649 = vadd.f32 %v2259, %v2567
        %v2650 = vadd.f32 %v2260, %v2572
        %v2651 = vadd.f32 %v2261, %v2577
        %v2652 = vadd.f32 %v2262, %v2582
        %v2653 = vadd.f32 %v2263, %v2587
        %v2654 = vadd.f32 %v2264, %v2592
        %v2655 = vadd.f32 %v2265, %v2597
        %v2656 = vadd.f32 %v2266, %v2602
        %v2657 = vadd.f32 %v2267, %v2607
        %v2658 = vadd.f32 %v2268, %v2612
        %v2659 = vadd.f32 %v2269, %v2617
        %v2660 = vadd.f32 %v2270, %v2622
        %v2661 = vadd.f32 %v2271, %v2627
        %s2662 = scalar_lea.vmem [#allocation2], 48
        %v2663 = vld [vmem:[%s2662] sm:$0xff]
        %v2664 = vld [vmem:[%s2662 + $0x8] sm:$0xff]
        %v2665 = vld [vmem:[%s2662 + $0x18] sm:$0xff]
        %v2666 = vld [vmem:[%s2662 + $0x20] sm:$0xff]
        %v2667 = vld [vmem:[%s2662 + $0x30] sm:$0xff]
        %v2668 = vld [vmem:[%s2662 + $0x38] sm:$0xff]
        %v2669 = vld [vmem:[%s2662 + $0x48] sm:$0xff]
        %v2670 = vld [vmem:[%s2662 + $0x50] sm:$0xff]
        %v2671 = vld [vmem:[%s2662 + $0x60] sm:$0xff]
        %v2672 = vld [vmem:[%s2662 + $0x68] sm:$0xff]
        %v2673 = vld [vmem:[%s2662 + $0x78] sm:$0xff]
        %v2674 = vld [vmem:[%s2662 + $0x80] sm:$0xff]
        %v2675 = vld [vmem:[%s2662 + $0x90] sm:$0xff]
        %v2676 = vld [vmem:[%s2662 + $0x98] sm:$0xff]
        %v2677 = vld [vmem:[%s2662 + $0xa8] sm:$0xff]
        %v2678 = vld [vmem:[%s2662 + $0xb0] sm:$0xff]
        %v2679 = vld [vmem:[%s2662 + $0xc0] sm:$0xff]
        %v2680 = vld [vmem:[%s2662 + $0xc8] sm:$0xff]
        %v2681 = vld [vmem:[%s2662 + $0xd8] sm:$0xff]
        %v2682 = vld [vmem:[%s2662 + $0xe0] sm:$0xff]
        %v2683 = vld [vmem:[%s2662 + $0xf0] sm:$0xff]
        %v2684 = vld [vmem:[%s2662 + $0xf8] sm:$0xff]
        %v2685 = vld [vmem:[%s2662 + $0x108] sm:$0xff]
        %v2686 = vld [vmem:[%s2662 + $0x110] sm:$0xff]
        %v2687 = vld [vmem:[%s2662 + $0x120] sm:$0xff]
        %v2688 = vld [vmem:[%s2662 + $0x128] sm:$0xff]
        %v2689 = vld [vmem:[%s2662 + $0x138] sm:$0xff]
        %v2690 = vld [vmem:[%s2662 + $0x140] sm:$0xff]
        %v2691 = vld [vmem:[%s2662 + $0x150] sm:$0xff]
        %v2692 = vld [vmem:[%s2662 + $0x158] sm:$0xff]
        %v2693 = vld [vmem:[%s2662 + $0x168] sm:$0xff]
        %v2694 = vld [vmem:[%s2662 + $0x170] sm:$0xff]
        %s2695 = scalar_lea.vmem %s1, 24
        %v2696 = vld [vmem:[%s2695] sm:$0xf]
        %v2698 = vsel %vm279, %v2663, 0
        %v2701 = vsel %vm279, %v2664, 0
        %v2704 = vsel %vm279, %v2665, 0
        %v2707 = vsel %vm279, %v2666, 0
        %v2710 = vsel %vm279, %v2667, 0
        %v2713 = vsel %vm279, %v2668, 0
        %v2716 = vsel %vm279, %v2669, 0
        %v2719 = vsel %vm279, %v2670, 0
        %v2722 = vsel %vm279, %v2671, 0
        %v2725 = vsel %vm279, %v2672, 0
        %v2728 = vsel %vm279, %v2673, 0
        %v2731 = vsel %vm279, %v2674, 0
        %v2734 = vsel %vm279, %v2675, 0
        %v2737 = vsel %vm279, %v2676, 0
        %v2740 = vsel %vm279, %v2677, 0
        %v2743 = vsel %vm279, %v2678, 0
        %v2746 = vsel %vm279, %v2679, 0
        %v2749 = vsel %vm279, %v2680, 0
        %v2752 = vsel %vm279, %v2681, 0
        %v2755 = vsel %vm279, %v2682, 0
        %v2758 = vsel %vm279, %v2683, 0
        %v2761 = vsel %vm279, %v2684, 0
        %v2764 = vsel %vm279, %v2685, 0
        %v2767 = vsel %vm279, %v2686, 0
        %v2770 = vsel %vm279, %v2687, 0
        %v2773 = vsel %vm279, %v2688, 0
        %v2776 = vsel %vm279, %v2689, 0
        %v2779 = vsel %vm279, %v2690, 0
        %v2782 = vsel %vm279, %v2691, 0
        %v2785 = vsel %vm279, %v2692, 0
        %v2788 = vsel %vm279, %v2693, 0
        %v2791 = vsel %vm279, %v2694, 0
        %v2794 = vsel %vm549, %v2696, 0
        %2796 = vmatprep.subr.mxu0 0.0
        %2797 = vmatpush1.msra.mxu0 %v2794
        %2798 = vmatprep.subr.mxu0 0.0
        %2799 = vmatpush1.msra.mxu0 0.0
        %2800 = vmatprep.subr.mxu0 0.0
        %2801 = vmatpush1.msra.mxu0 0.0
        %2802 = vmatprep.subr.mxu0 0.0
        %2803 = vmatpush1.msra.mxu0 0.0
        %2804 = vmatprep.subr.mxu0 0.0
        %2805 = vmatpush1.msra.mxu0 0.0
        %2806 = vmatprep.subr.mxu0 0.0
        %2807 = vmatpush1.msra.mxu0 0.0
        %2808 = vmatprep.subr.mxu0 0.0
        %2809 = vmatpush1.msra.mxu0 0.0
        %2810 = vmatprep.subr.mxu0 0.0
        %2811 = vmatpush1.msra.mxu0 0.0
        %2812 = vmatprep.subr.mxu0 0.0
        %2813 = vmatpush1.msra.mxu0 0.0
        %2814 = vmatprep.subr.mxu0 0.0
        %2815 = vmatpush1.msra.mxu0 0.0
        %2816 = vmatprep.subr.mxu0 0.0
        %2817 = vmatpush1.msra.mxu0 0.0
        %2818 = vmatprep.subr.mxu0 0.0
        %2819 = vmatpush1.msra.mxu0 0.0
        %2820 = vmatprep.subr.mxu0 0.0
        %2821 = vmatpush1.msra.mxu0 0.0
        %2822 = vmatprep.subr.mxu0 0.0
        %2823 = vmatpush1.msra.mxu0 0.0
        %2824 = vmatprep.subr.mxu0 0.0
        %2825 = vmatpush1.msra.mxu0 0.0
        %2826 = vmatprep.subr.mxu0 0.0
        %2827 = vmatpush1.msra.mxu0 0.0
        %2828 = vmatprep.subr.mxu0 0.0
        %2829 = vmatpush1.msra.mxu0 0.0
        %2830 = vmatprep.subr.mxu0 0.0
        %2831 = vmatpush1.msra.mxu0 0.0
        %2832 = vmatprep.subr.mxu0 0.0
        %2833 = vmatpush1.msra.mxu0 0.0
        %2834 = vmatprep.subr.mxu0 0.0
        %2835 = vmatpush1.msra.mxu0 0.0
        %2836 = vmatprep.subr.mxu0 0.0
        %2837 = vmatpush1.msra.mxu0 0.0
        %2838 = vmatprep.subr.mxu0 0.0
        %2839 = vmatpush1.msra.mxu0 0.0
        %2840 = vmatprep.subr.mxu0 0.0
        %2841 = vmatpush1.msra.mxu0 0.0
        %2842 = vmatprep.subr.mxu0 0.0
        %2843 = vmatpush1.msra.mxu0 0.0
        %2844 = vmatprep.subr.mxu0 0.0
        %2845 = vmatpush1.msra.mxu0 0.0
        %2846 = vmatprep.subr.mxu0 0.0
        %2847 = vmatpush1.msra.mxu0 0.0
        %2848 = vmatprep.subr.mxu0 0.0
        %2849 = vmatpush1.msra.mxu0 0.0
        %2850 = vmatprep.subr.mxu0 0.0
        %2851 = vmatpush1.msra.mxu0 0.0
        %2852 = vmatprep.subr.mxu0 0.0
        %2853 = vmatpush1.msra.mxu0 0.0
        %2854 = vmatprep.subr.mxu0 0.0
        %2855 = vmatpush1.msra.mxu0 0.0
        %2856 = vmatprep.subr.mxu0 0.0
        %2857 = vmatpush1.msra.mxu0 0.0
        %2858 = vmatprep.subr.mxu0 0.0
        %2859 = vmatpush1.msra.mxu0 0.0
        %2860 = vmatprep.mubr.f32.mxu0 0.0
        %2861 = vmatmul.mubr.f32.gmra.mrb[0].mxu0 %v2698
        %v2862 = vpop.f32.mrb[0].mxu0
        %v2863 = vadd.f32 0.0, %v2862
        %v2864 = vpop.f32.mrb[0].mxu0
        %2865 = vmatprep.mubr.f32.mxu0 0.0
        %2866 = vmatmul.mubr.f32.gmra.mrb[0].mxu0 %v2701
        %v2867 = vpop.f32.mrb[0].mxu0
        %v2868 = vadd.f32 0.0, %v2867
        %v2869 = vpop.f32.mrb[0].mxu0
        %2870 = vmatprep.mubr.f32.mxu0 0.0
        %2871 = vmatmul.mubr.f32.gmra.mrb[0].mxu0 %v2704
        %v2872 = vpop.f32.mrb[0].mxu0
        %v2873 = vadd.f32 0.0, %v2872
        %v2874 = vpop.f32.mrb[0].mxu0
        %2875 = vmatprep.mubr.f32.mxu0 0.0
        %2876 = vmatmul.mubr.f32.gmra.mrb[0].mxu0 %v2707
        %v2877 = vpop.f32.mrb[0].mxu0
        %v2878 = vadd.f32 0.0, %v2877
        %v2879 = vpop.f32.mrb[0].mxu0
        %2880 = vmatprep.mubr.f32.mxu0 0.0
        %2881 = vmatmul.mubr.f32.gmra.mrb[0].mxu0 %v2710
        %v2882 = vpop.f32.mrb[0].mxu0
        %v2883 = vadd.f32 0.0, %v2882
        %v2884 = vpop.f32.mrb[0].mxu0
        %2885 = vmatprep.mubr.f32.mxu0 0.0
        %2886 = vmatmul.mubr.f32.gmra.mrb[0].mxu0 %v2713
        %v2887 = vpop.f32.mrb[0].mxu0
        %v2888 = vadd.f32 0.0, %v2887
        %v2889 = vpop.f32.mrb[0].mxu0
        %2890 = vmatprep.mubr.f32.mxu0 0.0
        %2891 = vmatmul.mubr.f32.gmra.mrb[0].mxu0 %v2716
        %v2892 = vpop.f32.mrb[0].mxu0
        %v2893 = vadd.f32 0.0, %v2892
        %v2894 = vpop.f32.mrb[0].mxu0
        %2895 = vmatprep.mubr.f32.mxu0 0.0
        %2896 = vmatmul.mubr.f32.gmra.mrb[0].mxu0 %v2719
        %v2897 = vpop.f32.mrb[0].mxu0
        %v2898 = vadd.f32 0.0, %v2897
        %v2899 = vpop.f32.mrb[0].mxu0
        %2900 = vmatprep.mubr.f32.mxu0 0.0
        %2901 = vmatmul.mubr.f32.gmra.mrb[0].mxu0 %v2722
        %v2902 = vpop.f32.mrb[0].mxu0
        %v2903 = vadd.f32 0.0, %v2902
        %v2904 = vpop.f32.mrb[0].mxu0
        %2905 = vmatprep.mubr.f32.mxu0 0.0
        %2906 = vmatmul.mubr.f32.gmra.mrb[0].mxu0 %v2725
        %v2907 = vpop.f32.mrb[0].mxu0
        %v2908 = vadd.f32 0.0, %v2907
        %v2909 = vpop.f32.mrb[0].mxu0
        %2910 = vmatprep.mubr.f32.mxu0 0.0
        %2911 = vmatmul.mubr.f32.gmra.mrb[0].mxu0 %v2728
        %v2912 = vpop.f32.mrb[0].mxu0
        %v2913 = vadd.f32 0.0, %v2912
        %v2914 = vpop.f32.mrb[0].mxu0
        %2915 = vmatprep.mubr.f32.mxu0 0.0
        %2916 = vmatmul.mubr.f32.gmra.mrb[0].mxu0 %v2731
        %v2917 = vpop.f32.mrb[0].mxu0
        %v2918 = vadd.f32 0.0, %v2917
        %v2919 = vpop.f32.mrb[0].mxu0
        %2920 = vmatprep.mubr.f32.mxu0 0.0
        %2921 = vmatmul.mubr.f32.gmra.mrb[0].mxu0 %v2734
        %v2922 = vpop.f32.mrb[0].mxu0
        %v2923 = vadd.f32 0.0, %v2922
        %v2924 = vpop.f32.mrb[0].mxu0
        %2925 = vmatprep.mubr.f32.mxu0 0.0
        %2926 = vmatmul.mubr.f32.gmra.mrb[0].mxu0 %v2737
        %v2927 = vpop.f32.mrb[0].mxu0
        %v2928 = vadd.f32 0.0, %v2927
        %v2929 = vpop.f32.mrb[0].mxu0
        %2930 = vmatprep.mubr.f32.mxu0 0.0
        %2931 = vmatmul.mubr.f32.gmra.mrb[0].mxu0 %v2740
        %v2932 = vpop.f32.mrb[0].mxu0
        %v2933 = vadd.f32 0.0, %v2932
        %v2934 = vpop.f32.mrb[0].mxu0
        %2935 = vmatprep.mubr.f32.mxu0 0.0
        %2936 = vmatmul.mubr.f32.gmra.mrb[0].mxu0 %v2743
        %v2937 = vpop.f32.mrb[0].mxu0
        %v2938 = vadd.f32 0.0, %v2937
        %v2939 = vpop.f32.mrb[0].mxu0
        %2940 = vmatprep.mubr.f32.mxu0 0.0
        %2941 = vmatmul.mubr.f32.gmra.mrb[0].mxu0 %v2746
        %v2942 = vpop.f32.mrb[0].mxu0
        %v2943 = vadd.f32 0.0, %v2942
        %v2944 = vpop.f32.mrb[0].mxu0
        %2945 = vmatprep.mubr.f32.mxu0 0.0
        %2946 = vmatmul.mubr.f32.gmra.mrb[0].mxu0 %v2749
        %v2947 = vpop.f32.mrb[0].mxu0
        %v2948 = vadd.f32 0.0, %v2947
        %v2949 = vpop.f32.mrb[0].mxu0
        %2950 = vmatprep.mubr.f32.mxu0 0.0
        %2951 = vmatmul.mubr.f32.gmra.mrb[0].mxu0 %v2752
        %v2952 = vpop.f32.mrb[0].mxu0
        %v2953 = vadd.f32 0.0, %v2952
        %v2954 = vpop.f32.mrb[0].mxu0
        %2955 = vmatprep.mubr.f32.mxu0 0.0
        %2956 = vmatmul.mubr.f32.gmra.mrb[0].mxu0 %v2755
        %v2957 = vpop.f32.mrb[0].mxu0
        %v2958 = vadd.f32 0.0, %v2957
        %v2959 = vpop.f32.mrb[0].mxu0
        %2960 = vmatprep.mubr.f32.mxu0 0.0
        %2961 = vmatmul.mubr.f32.gmra.mrb[0].mxu0 %v2758
        %v2962 = vpop.f32.mrb[0].mxu0
        %v2963 = vadd.f32 0.0, %v2962
        %v2964 = vpop.f32.mrb[0].mxu0
        %2965 = vmatprep.mubr.f32.mxu0 0.0
        %2966 = vmatmul.mubr.f32.gmra.mrb[0].mxu0 %v2761
        %v2967 = vpop.f32.mrb[0].mxu0
        %v2968 = vadd.f32 0.0, %v2967
        %v2969 = vpop.f32.mrb[0].mxu0
        %2970 = vmatprep.mubr.f32.mxu0 0.0
        %2971 = vmatmul.mubr.f32.gmra.mrb[0].mxu0 %v2764
        %v2972 = vpop.f32.mrb[0].mxu0
        %v2973 = vadd.f32 0.0, %v2972
        %v2974 = vpop.f32.mrb[0].mxu0
        %2975 = vmatprep.mubr.f32.mxu0 0.0
        %2976 = vmatmul.mubr.f32.gmra.mrb[0].mxu0 %v2767
        %v2977 = vpop.f32.mrb[0].mxu0
        %v2978 = vadd.f32 0.0, %v2977
        %v2979 = vpop.f32.mrb[0].mxu0
        %2980 = vmatprep.mubr.f32.mxu0 0.0
        %2981 = vmatmul.mubr.f32.gmra.mrb[0].mxu0 %v2770
        %v2982 = vpop.f32.mrb[0].mxu0
        %v2983 = vadd.f32 0.0, %v2982
        %v2984 = vpop.f32.mrb[0].mxu0
        %2985 = vmatprep.mubr.f32.mxu0 0.0
        %2986 = vmatmul.mubr.f32.gmra.mrb[0].mxu0 %v2773
        %v2987 = vpop.f32.mrb[0].mxu0
        %v2988 = vadd.f32 0.0, %v2987
        %v2989 = vpop.f32.mrb[0].mxu0
        %2990 = vmatprep.mubr.f32.mxu0 0.0
        %2991 = vmatmul.mubr.f32.gmra.mrb[0].mxu0 %v2776
        %v2992 = vpop.f32.mrb[0].mxu0
        %v2993 = vadd.f32 0.0, %v2992
        %v2994 = vpop.f32.mrb[0].mxu0
        %2995 = vmatprep.mubr.f32.mxu0 0.0
        %2996 = vmatmul.mubr.f32.gmra.mrb[0].mxu0 %v2779
        %v2997 = vpop.f32.mrb[0].mxu0
        %v2998 = vadd.f32 0.0, %v2997
        %v2999 = vpop.f32.mrb[0].mxu0
        %3000 = vmatprep.mubr.f32.mxu0 0.0
        %3001 = vmatmul.mubr.f32.gmra.mrb[0].mxu0 %v2782
        %v3002 = vpop.f32.mrb[0].mxu0
        %v3003 = vadd.f32 0.0, %v3002
        %v3004 = vpop.f32.mrb[0].mxu0
        %3005 = vmatprep.mubr.f32.mxu0 0.0
        %3006 = vmatmul.mubr.f32.gmra.mrb[0].mxu0 %v2785
        %v3007 = vpop.f32.mrb[0].mxu0
        %v3008 = vadd.f32 0.0, %v3007
        %v3009 = vpop.f32.mrb[0].mxu0
        %3010 = vmatprep.mubr.f32.mxu0 0.0
        %3011 = vmatmul.mubr.f32.gmra.mrb[0].mxu0 %v2788
        %v3012 = vpop.f32.mrb[0].mxu0
        %v3013 = vadd.f32 0.0, %v3012
        %v3014 = vpop.f32.mrb[0].mxu0
        %3015 = vmatprep.mubr.f32.mxu0 0.0
        %3016 = vmatmul.mubr.f32.gmra.mrb[0].mxu0 %v2791
        %v3017 = vpop.f32.mrb[0].mxu0
        %v3018 = vadd.f32 0.0, %v3017
        %v3019 = vpop.f32.mrb[0].mxu0
        %3020 = vdwg.mxu0
        %v3021 = vadd.f32 %v2630, %v2863
        %v3022 = vadd.f32 %v2631, %v2868
        %v3023 = vadd.f32 %v2632, %v2873
        %v3024 = vadd.f32 %v2633, %v2878
        %v3025 = vadd.f32 %v2634, %v2883
        %v3026 = vadd.f32 %v2635, %v2888
        %v3027 = vadd.f32 %v2636, %v2893
        %v3028 = vadd.f32 %v2637, %v2898
        %v3029 = vadd.f32 %v2638, %v2903
        %v3030 = vadd.f32 %v2639, %v2908
        %v3031 = vadd.f32 %v2640, %v2913
        %v3032 = vadd.f32 %v2641, %v2918
        %v3033 = vadd.f32 %v2642, %v2923
        %v3034 = vadd.f32 %v2643, %v2928
        %v3035 = vadd.f32 %v2644, %v2933
        %v3036 = vadd.f32 %v2645, %v2938
        %v3037 = vadd.f32 %v2646, %v2943
        %v3038 = vadd.f32 %v2647, %v2948
        %v3039 = vadd.f32 %v2648, %v2953
        %v3040 = vadd.f32 %v2649, %v2958
        %v3041 = vadd.f32 %v2650, %v2963
        %v3042 = vadd.f32 %v2651, %v2968
        %v3043 = vadd.f32 %v2652, %v2973
        %v3044 = vadd.f32 %v2653, %v2978
        %v3045 = vadd.f32 %v2654, %v2983
        %v3046 = vadd.f32 %v2655, %v2988
        %v3047 = vadd.f32 %v2656, %v2993
        %v3048 = vadd.f32 %v2657, %v2998
        %v3049 = vadd.f32 %v2658, %v3003
        %v3050 = vadd.f32 %v2659, %v3008
        %v3051 = vadd.f32 %v2660, %v3013
        %v3052 = vadd.f32 %v2661, %v3018
        %v3053 = vld [vmem:[%s2662 + $0x1] sm:$0xff]
        %v3054 = vld [vmem:[%s2662 + $0x9] sm:$0xff]
        %v3055 = vld [vmem:[%s2662 + $0x19] sm:$0xff]
        %v3056 = vld [vmem:[%s2662 + $0x21] sm:$0xff]
        %v3057 = vld [vmem:[%s2662 + $0x31] sm:$0xff]
        %v3058 = vld [vmem:[%s2662 + $0x39] sm:$0xff]
        %v3059 = vld [vmem:[%s2662 + $0x49] sm:$0xff]
        %v3060 = vld [vmem:[%s2662 + $0x51] sm:$0xff]
        %v3061 = vld [vmem:[%s2662 + $0x61] sm:$0xff]
        %v3062 = vld [vmem:[%s2662 + $0x69] sm:$0xff]
        %v3063 = vld [vmem:[%s2662 + $0x79] sm:$0xff]
        %v3064 = vld [vmem:[%s2662 + $0x81] sm:$0xff]
        %v3065 = vld [vmem:[%s2662 + $0x91] sm:$0xff]
        %v3066 = vld [vmem:[%s2662 + $0x99] sm:$0xff]
        %v3067 = vld [vmem:[%s2662 + $0xa9] sm:$0xff]
        %v3068 = vld [vmem:[%s2662 + $0xb1] sm:$0xff]
        %v3069 = vld [vmem:[%s2662 + $0xc1] sm:$0xff]
        %v3070 = vld [vmem:[%s2662 + $0xc9] sm:$0xff]
        %v3071 = vld [vmem:[%s2662 + $0xd9] sm:$0xff]
        %v3072 = vld [vmem:[%s2662 + $0xe1] sm:$0xff]
        %v3073 = vld [vmem:[%s2662 + $0xf1] sm:$0xff]
        %v3074 = vld [vmem:[%s2662 + $0xf9] sm:$0xff]
        %v3075 = vld [vmem:[%s2662 + $0x109] sm:$0xff]
        %v3076 = vld [vmem:[%s2662 + $0x111] sm:$0xff]
        %v3077 = vld [vmem:[%s2662 + $0x121] sm:$0xff]
        %v3078 = vld [vmem:[%s2662 + $0x129] sm:$0xff]
        %v3079 = vld [vmem:[%s2662 + $0x139] sm:$0xff]
        %v3080 = vld [vmem:[%s2662 + $0x141] sm:$0xff]
        %v3081 = vld [vmem:[%s2662 + $0x151] sm:$0xff]
        %v3082 = vld [vmem:[%s2662 + $0x159] sm:$0xff]
        %v3083 = vld [vmem:[%s2662 + $0x169] sm:$0xff]
        %v3084 = vld [vmem:[%s2662 + $0x171] sm:$0xff]
        %s3085 = scalar_lea.vmem %s1, 28
        %v3086 = vld [vmem:[%s3085] sm:$0xf]
        %v3088 = vsel %vm279, %v3053, 0
        %v3091 = vsel %vm279, %v3054, 0
        %v3094 = vsel %vm279, %v3055, 0
        %v3097 = vsel %vm279, %v3056, 0
        %v3100 = vsel %vm279, %v3057, 0
        %v3103 = vsel %vm279, %v3058, 0
        %v3106 = vsel %vm279, %v3059, 0
        %v3109 = vsel %vm279, %v3060, 0
        %v3112 = vsel %vm279, %v3061, 0
        %v3115 = vsel %vm279, %v3062, 0
        %v3118 = vsel %vm279, %v3063, 0
        %v3121 = vsel %vm279, %v3064, 0
        %v3124 = vsel %vm279, %v3065, 0
        %v3127 = vsel %vm279, %v3066, 0
        %v3130 = vsel %vm279, %v3067, 0
        %v3133 = vsel %vm279, %v3068, 0
        %v3136 = vsel %vm279, %v3069, 0
        %v3139 = vsel %vm279, %v3070, 0
        %v3142 = vsel %vm279, %v3071, 0
        %v3145 = vsel %vm279, %v3072, 0
        %v3148 = vsel %vm279, %v3073, 0
        %v3151 = vsel %vm279, %v3074, 0
        %v3154 = vsel %vm279, %v3075, 0
        %v3157 = vsel %vm279, %v3076, 0
        %v3160 = vsel %vm279, %v3077, 0
        %v3163 = vsel %vm279, %v3078, 0
        %v3166 = vsel %vm279, %v3079, 0
        %v3169 = vsel %vm279, %v3080, 0
        %v3172 = vsel %vm279, %v3081, 0
        %v3175 = vsel %vm279, %v3082, 0
        %v3178 = vsel %vm279, %v3083, 0
        %v3181 = vsel %vm279, %v3084, 0
        %v3184 = vsel %vm549, %v3086, 0
        %3186 = vmatprep.subr.mxu0 0.0
        %3187 = vmatpush1.msra.mxu0 %v3184
        %3188 = vmatprep.subr.mxu0 0.0
        %3189 = vmatpush1.msra.mxu0 0.0
        %3190 = vmatprep.subr.mxu0 0.0
        %3191 = vmatpush1.msra.mxu0 0.0
        %3192 = vmatprep.subr.mxu0 0.0
        %3193 = vmatpush1.msra.mxu0 0.0
        %3194 = vmatprep.subr.mxu0 0.0
        %3195 = vmatpush1.msra.mxu0 0.0
        %3196 = vmatprep.subr.mxu0 0.0
        %3197 = vmatpush1.msra.mxu0 0.0
        %3198 = vmatprep.subr.mxu0 0.0
        %3199 = vmatpush1.msra.mxu0 0.0
        %3200 = vmatprep.subr.mxu0 0.0
        %3201 = vmatpush1.msra.mxu0 0.0
        %3202 = vmatprep.subr.mxu0 0.0
        %3203 = vmatpush1.msra.mxu0 0.0
        %3204 = vmatprep.subr.mxu0 0.0
        %3205 = vmatpush1.msra.mxu0 0.0
        %3206 = vmatprep.subr.mxu0 0.0
        %3207 = vmatpush1.msra.mxu0 0.0
        %3208 = vmatprep.subr.mxu0 0.0
        %3209 = vmatpush1.msra.mxu0 0.0
        %3210 = vmatprep.subr.mxu0 0.0
        %3211 = vmatpush1.msra.mxu0 0.0
        %3212 = vmatprep.subr.mxu0 0.0
        %3213 = vmatpush1.msra.mxu0 0.0
        %3214 = vmatprep.subr.mxu0 0.0
        %3215 = vmatpush1.msra.mxu0 0.0
        %3216 = vmatprep.subr.mxu0 0.0
        %3217 = vmatpush1.msra.mxu0 0.0
        %3218 = vmatprep.subr.mxu0 0.0
        %3219 = vmatpush1.msra.mxu0 0.0
        %3220 = vmatprep.subr.mxu0 0.0
        %3221 = vmatpush1.msra.mxu0 0.0
        %3222 = vmatprep.subr.mxu0 0.0
        %3223 = vmatpush1.msra.mxu0 0.0
        %3224 = vmatprep.subr.mxu0 0.0
        %3225 = vmatpush1.msra.mxu0 0.0
        %3226 = vmatprep.subr.mxu0 0.0
        %3227 = vmatpush1.msra.mxu0 0.0
        %3228 = vmatprep.subr.mxu0 0.0
        %3229 = vmatpush1.msra.mxu0 0.0
        %3230 = vmatprep.subr.mxu0 0.0
        %3231 = vmatpush1.msra.mxu0 0.0
        %3232 = vmatprep.subr.mxu0 0.0
        %3233 = vmatpush1.msra.mxu0 0.0
        %3234 = vmatprep.subr.mxu0 0.0
        %3235 = vmatpush1.msra.mxu0 0.0
        %3236 = vmatprep.subr.mxu0 0.0
        %3237 = vmatpush1.msra.mxu0 0.0
        %3238 = vmatprep.subr.mxu0 0.0
        %3239 = vmatpush1.msra.mxu0 0.0
        %3240 = vmatprep.subr.mxu0 0.0
        %3241 = vmatpush1.msra.mxu0 0.0
        %3242 = vmatprep.subr.mxu0 0.0
        %3243 = vmatpush1.msra.mxu0 0.0
        %3244 = vmatprep.subr.mxu0 0.0
        %3245 = vmatpush1.msra.mxu0 0.0
        %3246 = vmatprep.subr.mxu0 0.0
        %3247 = vmatpush1.msra.mxu0 0.0
        %3248 = vmatprep.subr.mxu0 0.0
        %3249 = vmatpush1.msra.mxu0 0.0
        %3250 = vmatprep.mubr.f32.mxu0 0.0
        %3251 = vmatmul.mubr.f32.gmra.mrb[0].mxu0 %v3088
        %v3252 = vpop.f32.mrb[0].mxu0
        %v3253 = vadd.f32 0.0, %v3252
        %v3254 = vpop.f32.mrb[0].mxu0
        %3255 = vmatprep.mubr.f32.mxu0 0.0
        %3256 = vmatmul.mubr.f32.gmra.mrb[0].mxu0 %v3091
        %v3257 = vpop.f32.mrb[0].mxu0
        %v3258 = vadd.f32 0.0, %v3257
        %v3259 = vpop.f32.mrb[0].mxu0
        %3260 = vmatprep.mubr.f32.mxu0 0.0
        %3261 = vmatmul.mubr.f32.gmra.mrb[0].mxu0 %v3094
        %v3262 = vpop.f32.mrb[0].mxu0
        %v3263 = vadd.f32 0.0, %v3262
        %v3264 = vpop.f32.mrb[0].mxu0
        %3265 = vmatprep.mubr.f32.mxu0 0.0
        %3266 = vmatmul.mubr.f32.gmra.mrb[0].mxu0 %v3097
        %v3267 = vpop.f32.mrb[0].mxu0
        %v3268 = vadd.f32 0.0, %v3267
        %v3269 = vpop.f32.mrb[0].mxu0
        %3270 = vmatprep.mubr.f32.mxu0 0.0
        %3271 = vmatmul.mubr.f32.gmra.mrb[0].mxu0 %v3100
        %v3272 = vpop.f32.mrb[0].mxu0
        %v3273 = vadd.f32 0.0, %v3272
        %v3274 = vpop.f32.mrb[0].mxu0
        %3275 = vmatprep.mubr.f32.mxu0 0.0
        %3276 = vmatmul.mubr.f32.gmra.mrb[0].mxu0 %v3103
        %v3277 = vpop.f32.mrb[0].mxu0
        %v3278 = vadd.f32 0.0, %v3277
        %v3279 = vpop.f32.mrb[0].mxu0
        %3280 = vmatprep.mubr.f32.mxu0 0.0
        %3281 = vmatmul.mubr.f32.gmra.mrb[0].mxu0 %v3106
        %v3282 = vpop.f32.mrb[0].mxu0
        %v3283 = vadd.f32 0.0, %v3282
        %v3284 = vpop.f32.mrb[0].mxu0
        %3285 = vmatprep.mubr.f32.mxu0 0.0
        %3286 = vmatmul.mubr.f32.gmra.mrb[0].mxu0 %v3109
        %v3287 = vpop.f32.mrb[0].mxu0
        %v3288 = vadd.f32 0.0, %v3287
        %v3289 = vpop.f32.mrb[0].mxu0
        %3290 = vmatprep.mubr.f32.mxu0 0.0
        %3291 = vmatmul.mubr.f32.gmra.mrb[0].mxu0 %v3112
        %v3292 = vpop.f32.mrb[0].mxu0
        %v3293 = vadd.f32 0.0, %v3292
        %v3294 = vpop.f32.mrb[0].mxu0
        %3295 = vmatprep.mubr.f32.mxu0 0.0
        %3296 = vmatmul.mubr.f32.gmra.mrb[0].mxu0 %v3115
        %v3297 = vpop.f32.mrb[0].mxu0
        %v3298 = vadd.f32 0.0, %v3297
        %v3299 = vpop.f32.mrb[0].mxu0
        %3300 = vmatprep.mubr.f32.mxu0 0.0
        %3301 = vmatmul.mubr.f32.gmra.mrb[0].mxu0 %v3118
        %v3302 = vpop.f32.mrb[0].mxu0
        %v3303 = vadd.f32 0.0, %v3302
        %v3304 = vpop.f32.mrb[0].mxu0
        %3305 = vmatprep.mubr.f32.mxu0 0.0
        %3306 = vmatmul.mubr.f32.gmra.mrb[0].mxu0 %v3121
        %v3307 = vpop.f32.mrb[0].mxu0
        %v3308 = vadd.f32 0.0, %v3307
        %v3309 = vpop.f32.mrb[0].mxu0
        %3310 = vmatprep.mubr.f32.mxu0 0.0
        %3311 = vmatmul.mubr.f32.gmra.mrb[0].mxu0 %v3124
        %v3312 = vpop.f32.mrb[0].mxu0
        %v3313 = vadd.f32 0.0, %v3312
        %v3314 = vpop.f32.mrb[0].mxu0
        %3315 = vmatprep.mubr.f32.mxu0 0.0
        %3316 = vmatmul.mubr.f32.gmra.mrb[0].mxu0 %v3127
        %v3317 = vpop.f32.mrb[0].mxu0
        %v3318 = vadd.f32 0.0, %v3317
        %v3319 = vpop.f32.mrb[0].mxu0
        %3320 = vmatprep.mubr.f32.mxu0 0.0
        %3321 = vmatmul.mubr.f32.gmra.mrb[0].mxu0 %v3130
        %v3322 = vpop.f32.mrb[0].mxu0
        %v3323 = vadd.f32 0.0, %v3322
        %v3324 = vpop.f32.mrb[0].mxu0
        %3325 = vmatprep.mubr.f32.mxu0 0.0
        %3326 = vmatmul.mubr.f32.gmra.mrb[0].mxu0 %v3133
        %v3327 = vpop.f32.mrb[0].mxu0
        %v3328 = vadd.f32 0.0, %v3327
        %v3329 = vpop.f32.mrb[0].mxu0
        %3330 = vmatprep.mubr.f32.mxu0 0.0
        %3331 = vmatmul.mubr.f32.gmra.mrb[0].mxu0 %v3136
        %v3332 = vpop.f32.mrb[0].mxu0
        %v3333 = vadd.f32 0.0, %v3332
        %v3334 = vpop.f32.mrb[0].mxu0
        %3335 = vmatprep.mubr.f32.mxu0 0.0
        %3336 = vmatmul.mubr.f32.gmra.mrb[0].mxu0 %v3139
        %v3337 = vpop.f32.mrb[0].mxu0
        %v3338 = vadd.f32 0.0, %v3337
        %v3339 = vpop.f32.mrb[0].mxu0
        %3340 = vmatprep.mubr.f32.mxu0 0.0
        %3341 = vmatmul.mubr.f32.gmra.mrb[0].mxu0 %v3142
        %v3342 = vpop.f32.mrb[0].mxu0
        %v3343 = vadd.f32 0.0, %v3342
        %v3344 = vpop.f32.mrb[0].mxu0
        %3345 = vmatprep.mubr.f32.mxu0 0.0
        %3346 = vmatmul.mubr.f32.gmra.mrb[0].mxu0 %v3145
        %v3347 = vpop.f32.mrb[0].mxu0
        %v3348 = vadd.f32 0.0, %v3347
        %v3349 = vpop.f32.mrb[0].mxu0
        %3350 = vmatprep.mubr.f32.mxu0 0.0
        %3351 = vmatmul.mubr.f32.gmra.mrb[0].mxu0 %v3148
        %v3352 = vpop.f32.mrb[0].mxu0
        %v3353 = vadd.f32 0.0, %v3352
        %v3354 = vpop.f32.mrb[0].mxu0
        %3355 = vmatprep.mubr.f32.mxu0 0.0
        %3356 = vmatmul.mubr.f32.gmra.mrb[0].mxu0 %v3151
        %v3357 = vpop.f32.mrb[0].mxu0
        %v3358 = vadd.f32 0.0, %v3357
        %v3359 = vpop.f32.mrb[0].mxu0
        %3360 = vmatprep.mubr.f32.mxu0 0.0
        %3361 = vmatmul.mubr.f32.gmra.mrb[0].mxu0 %v3154
        %v3362 = vpop.f32.mrb[0].mxu0
        %v3363 = vadd.f32 0.0, %v3362
        %v3364 = vpop.f32.mrb[0].mxu0
        %3365 = vmatprep.mubr.f32.mxu0 0.0
        %3366 = vmatmul.mubr.f32.gmra.mrb[0].mxu0 %v3157
        %v3367 = vpop.f32.mrb[0].mxu0
        %v3368 = vadd.f32 0.0, %v3367
        %v3369 = vpop.f32.mrb[0].mxu0
        %3370 = vmatprep.mubr.f32.mxu0 0.0
        %3371 = vmatmul.mubr.f32.gmra.mrb[0].mxu0 %v3160
        %v3372 = vpop.f32.mrb[0].mxu0
        %v3373 = vadd.f32 0.0, %v3372
        %v3374 = vpop.f32.mrb[0].mxu0
        %3375 = vmatprep.mubr.f32.mxu0 0.0
        %3376 = vmatmul.mubr.f32.gmra.mrb[0].mxu0 %v3163
        %v3377 = vpop.f32.mrb[0].mxu0
        %v3378 = vadd.f32 0.0, %v3377
        %v3379 = vpop.f32.mrb[0].mxu0
        %3380 = vmatprep.mubr.f32.mxu0 0.0
        %3381 = vmatmul.mubr.f32.gmra.mrb[0].mxu0 %v3166
        %v3382 = vpop.f32.mrb[0].mxu0
        %v3383 = vadd.f32 0.0, %v3382
        %v3384 = vpop.f32.mrb[0].mxu0
        %3385 = vmatprep.mubr.f32.mxu0 0.0
        %3386 = vmatmul.mubr.f32.gmra.mrb[0].mxu0 %v3169
        %v3387 = vpop.f32.mrb[0].mxu0
        %v3388 = vadd.f32 0.0, %v3387
        %v3389 = vpop.f32.mrb[0].mxu0
        %3390 = vmatprep.mubr.f32.mxu0 0.0
        %3391 = vmatmul.mubr.f32.gmra.mrb[0].mxu0 %v3172
        %v3392 = vpop.f32.mrb[0].mxu0
        %v3393 = vadd.f32 0.0, %v3392
        %v3394 = vpop.f32.mrb[0].mxu0
        %3395 = vmatprep.mubr.f32.mxu0 0.0
        %3396 = vmatmul.mubr.f32.gmra.mrb[0].mxu0 %v3175
        %v3397 = vpop.f32.mrb[0].mxu0
        %v3398 = vadd.f32 0.0, %v3397
        %v3399 = vpop.f32.mrb[0].mxu0
        %3400 = vmatprep.mubr.f32.mxu0 0.0
        %3401 = vmatmul.mubr.f32.gmra.mrb[0].mxu0 %v3178
        %v3402 = vpop.f32.mrb[0].mxu0
        %v3403 = vadd.f32 0.0, %v3402
        %v3404 = vpop.f32.mrb[0].mxu0
        %3405 = vmatprep.mubr.f32.mxu0 0.0
        %3406 = vmatmul.mubr.f32.gmra.mrb[0].mxu0 %v3181
        %v3407 = vpop.f32.mrb[0].mxu0
        %v3408 = vadd.f32 0.0, %v3407
        %v3409 = vpop.f32.mrb[0].mxu0
        %3410 = vdwg.mxu0
        %v3411 = vadd.f32 %v3021, %v3253
        %v3412 = vadd.f32 %v3022, %v3258
        %v3413 = vadd.f32 %v3023, %v3263
        %v3414 = vadd.f32 %v3024, %v3268
        %v3415 = vadd.f32 %v3025, %v3273
        %v3416 = vadd.f32 %v3026, %v3278
        %v3417 = vadd.f32 %v3027, %v3283
        %v3418 = vadd.f32 %v3028, %v3288
        %v3419 = vadd.f32 %v3029, %v3293
        %v3420 = vadd.f32 %v3030, %v3298
        %v3421 = vadd.f32 %v3031, %v3303
        %v3422 = vadd.f32 %v3032, %v3308
        %v3423 = vadd.f32 %v3033, %v3313
        %v3424 = vadd.f32 %v3034, %v3318
        %v3425 = vadd.f32 %v3035, %v3323
        %v3426 = vadd.f32 %v3036, %v3328
        %v3427 = vadd.f32 %v3037, %v3333
        %v3428 = vadd.f32 %v3038, %v3338
        %v3429 = vadd.f32 %v3039, %v3343
        %v3430 = vadd.f32 %v3040, %v3348
        %v3431 = vadd.f32 %v3041, %v3353
        %v3432 = vadd.f32 %v3042, %v3358
        %v3433 = vadd.f32 %v3043, %v3363
        %v3434 = vadd.f32 %v3044, %v3368
        %v3435 = vadd.f32 %v3045, %v3373
        %v3436 = vadd.f32 %v3046, %v3378
        %v3437 = vadd.f32 %v3047, %v3383
        %v3438 = vadd.f32 %v3048, %v3388
        %v3439 = vadd.f32 %v3049, %v3393
        %v3440 = vadd.f32 %v3050, %v3398
        %v3441 = vadd.f32 %v3051, %v3403
        %v3442 = vadd.f32 %v3052, %v3408
        %v3443 = vld [vmem:[%s2662 + $0x2] sm:$0xff]
        %v3444 = vld [vmem:[%s2662 + $0xa] sm:$0xff]
        %v3445 = vld [vmem:[%s2662 + $0x1a] sm:$0xff]
        %v3446 = vld [vmem:[%s2662 + $0x22] sm:$0xff]
        %v3447 = vld [vmem:[%s2662 + $0x32] sm:$0xff]
        %v3448 = vld [vmem:[%s2662 + $0x3a] sm:$0xff]
        %v3449 = vld [vmem:[%s2662 + $0x4a] sm:$0xff]
        %v3450 = vld [vmem:[%s2662 + $0x52] sm:$0xff]
        %v3451 = vld [vmem:[%s2662 + $0x62] sm:$0xff]
        %v3452 = vld [vmem:[%s2662 + $0x6a] sm:$0xff]
        %v3453 = vld [vmem:[%s2662 + $0x7a] sm:$0xff]
        %v3454 = vld [vmem:[%s2662 + $0x82] sm:$0xff]
        %v3455 = vld [vmem:[%s2662 + $0x92] sm:$0xff]
        %v3456 = vld [vmem:[%s2662 + $0x9a] sm:$0xff]
        %v3457 = vld [vmem:[%s2662 + $0xaa] sm:$0xff]
        %v3458 = vld [vmem:[%s2662 + $0xb2] sm:$0xff]
        %v3459 = vld [vmem:[%s2662 + $0xc2] sm:$0xff]
        %v3460 = vld [vmem:[%s2662 + $0xca] sm:$0xff]
        %v3461 = vld [vmem:[%s2662 + $0xda] sm:$0xff]
        %v3462 = vld [vmem:[%s2662 + $0xe2] sm:$0xff]
        %v3463 = vld [vmem:[%s2662 + $0xf2] sm:$0xff]
        %v3464 = vld [vmem:[%s2662 + $0xfa] sm:$0xff]
        %v3465 = vld [vmem:[%s2662 + $0x10a] sm:$0xff]
        %v3466 = vld [vmem:[%s2662 + $0x112] sm:$0xff]
        %v3467 = vld [vmem:[%s2662 + $0x122] sm:$0xff]
        %v3468 = vld [vmem:[%s2662 + $0x12a] sm:$0xff]
        %v3469 = vld [vmem:[%s2662 + $0x13a] sm:$0xff]
        %v3470 = vld [vmem:[%s2662 + $0x142] sm:$0xff]
        %v3471 = vld [vmem:[%s2662 + $0x152] sm:$0xff]
        %v3472 = vld [vmem:[%s2662 + $0x15a] sm:$0xff]
        %v3473 = vld [vmem:[%s2662 + $0x16a] sm:$0xff]
        %v3474 = vld [vmem:[%s2662 + $0x172] sm:$0xff]
        %s3475 = scalar_lea.vmem %s1, 32
        %v3476 = vld [vmem:[%s3475] sm:$0xf]
        %v3478 = vsel %vm279, %v3443, 0
        %v3481 = vsel %vm279, %v3444, 0
        %v3484 = vsel %vm279, %v3445, 0
        %v3487 = vsel %vm279, %v3446, 0
        %v3490 = vsel %vm279, %v3447, 0
        %v3493 = vsel %vm279, %v3448, 0
        %v3496 = vsel %vm279, %v3449, 0
        %v3499 = vsel %vm279, %v3450, 0
        %v3502 = vsel %vm279, %v3451, 0
        %v3505 = vsel %vm279, %v3452, 0
        %v3508 = vsel %vm279, %v3453, 0
        %v3511 = vsel %vm279, %v3454, 0
        %v3514 = vsel %vm279, %v3455, 0
        %v3517 = vsel %vm279, %v3456, 0
        %v3520 = vsel %vm279, %v3457, 0
        %v3523 = vsel %vm279, %v3458, 0
        %v3526 = vsel %vm279, %v3459, 0
        %v3529 = vsel %vm279, %v3460, 0
        %v3532 = vsel %vm279, %v3461, 0
        %v3535 = vsel %vm279, %v3462, 0
        %v3538 = vsel %vm279, %v3463, 0
        %v3541 = vsel %vm279, %v3464, 0
        %v3544 = vsel %vm279, %v3465, 0
        %v3547 = vsel %vm279, %v3466, 0
        %v3550 = vsel %vm279, %v3467, 0
        %v3553 = vsel %vm279, %v3468, 0
        %v3556 = vsel %vm279, %v3469, 0
        %v3559 = vsel %vm279, %v3470, 0
        %v3562 = vsel %vm279, %v3471, 0
        %v3565 = vsel %vm279, %v3472, 0
        %v3568 = vsel %vm279, %v3473, 0
        %v3571 = vsel %vm279, %v3474, 0
        %v3574 = vsel %vm549, %v3476, 0
        %3576 = vmatprep.subr.mxu0 0.0
        %3577 = vmatpush1.msra.mxu0 %v3574
        %3578 = vmatprep.subr.mxu0 0.0
        %3579 = vmatpush1.msra.mxu0 0.0
        %3580 = vmatprep.subr.mxu0 0.0
        %3581 = vmatpush1.msra.mxu0 0.0
        %3582 = vmatprep.subr.mxu0 0.0
        %3583 = vmatpush1.msra.mxu0 0.0
        %3584 = vmatprep.subr.mxu0 0.0
        %3585 = vmatpush1.msra.mxu0 0.0
        %3586 = vmatprep.subr.mxu0 0.0
        %3587 = vmatpush1.msra.mxu0 0.0
        %3588 = vmatprep.subr.mxu0 0.0
        %3589 = vmatpush1.msra.mxu0 0.0
        %3590 = vmatprep.subr.mxu0 0.0
        %3591 = vmatpush1.msra.mxu0 0.0
        %3592 = vmatprep.subr.mxu0 0.0
        %3593 = vmatpush1.msra.mxu0 0.0
        %3594 = vmatprep.subr.mxu0 0.0
        %3595 = vmatpush1.msra.mxu0 0.0
        %3596 = vmatprep.subr.mxu0 0.0
        %3597 = vmatpush1.msra.mxu0 0.0
        %3598 = vmatprep.subr.mxu0 0.0
        %3599 = vmatpush1.msra.mxu0 0.0
        %3600 = vmatprep.subr.mxu0 0.0
        %3601 = vmatpush1.msra.mxu0 0.0
        %3602 = vmatprep.subr.mxu0 0.0
        %3603 = vmatpush1.msra.mxu0 0.0
        %3604 = vmatprep.subr.mxu0 0.0
        %3605 = vmatpush1.msra.mxu0 0.0
        %3606 = vmatprep.subr.mxu0 0.0
        %3607 = vmatpush1.msra.mxu0 0.0
        %3608 = vmatprep.subr.mxu0 0.0
        %3609 = vmatpush1.msra.mxu0 0.0
        %3610 = vmatprep.subr.mxu0 0.0
        %3611 = vmatpush1.msra.mxu0 0.0
        %3612 = vmatprep.subr.mxu0 0.0
        %3613 = vmatpush1.msra.mxu0 0.0
        %3614 = vmatprep.subr.mxu0 0.0
        %3615 = vmatpush1.msra.mxu0 0.0
        %3616 = vmatprep.subr.mxu0 0.0
        %3617 = vmatpush1.msra.mxu0 0.0
        %3618 = vmatprep.subr.mxu0 0.0
        %3619 = vmatpush1.msra.mxu0 0.0
        %3620 = vmatprep.subr.mxu0 0.0
        %3621 = vmatpush1.msra.mxu0 0.0
        %3622 = vmatprep.subr.mxu0 0.0
        %3623 = vmatpush1.msra.mxu0 0.0
        %3624 = vmatprep.subr.mxu0 0.0
        %3625 = vmatpush1.msra.mxu0 0.0
        %3626 = vmatprep.subr.mxu0 0.0
        %3627 = vmatpush1.msra.mxu0 0.0
        %3628 = vmatprep.subr.mxu0 0.0
        %3629 = vmatpush1.msra.mxu0 0.0
        %3630 = vmatprep.subr.mxu0 0.0
        %3631 = vmatpush1.msra.mxu0 0.0
        %3632 = vmatprep.subr.mxu0 0.0
        %3633 = vmatpush1.msra.mxu0 0.0
        %3634 = vmatprep.subr.mxu0 0.0
        %3635 = vmatpush1.msra.mxu0 0.0
        %3636 = vmatprep.subr.mxu0 0.0
        %3637 = vmatpush1.msra.mxu0 0.0
        %3638 = vmatprep.subr.mxu0 0.0
        %3639 = vmatpush1.msra.mxu0 0.0
        %3640 = vmatprep.mubr.f32.mxu0 0.0
        %3641 = vmatmul.mubr.f32.gmra.mrb[0].mxu0 %v3478
        %v3642 = vpop.f32.mrb[0].mxu0
        %v3643 = vadd.f32 0.0, %v3642
        %v3644 = vpop.f32.mrb[0].mxu0
        %3645 = vmatprep.mubr.f32.mxu0 0.0
        %3646 = vmatmul.mubr.f32.gmra.mrb[0].mxu0 %v3481
        %v3647 = vpop.f32.mrb[0].mxu0
        %v3648 = vadd.f32 0.0, %v3647
        %v3649 = vpop.f32.mrb[0].mxu0
        %3650 = vmatprep.mubr.f32.mxu0 0.0
        %3651 = vmatmul.mubr.f32.gmra.mrb[0].mxu0 %v3484
        %v3652 = vpop.f32.mrb[0].mxu0
        %v3653 = vadd.f32 0.0, %v3652
        %v3654 = vpop.f32.mrb[0].mxu0
        %3655 = vmatprep.mubr.f32.mxu0 0.0
        %3656 = vmatmul.mubr.f32.gmra.mrb[0].mxu0 %v3487
        %v3657 = vpop.f32.mrb[0].mxu0
        %v3658 = vadd.f32 0.0, %v3657
        %v3659 = vpop.f32.mrb[0].mxu0
        %3660 = vmatprep.mubr.f32.mxu0 0.0
        %3661 = vmatmul.mubr.f32.gmra.mrb[0].mxu0 %v3490
        %v3662 = vpop.f32.mrb[0].mxu0
        %v3663 = vadd.f32 0.0, %v3662
        %v3664 = vpop.f32.mrb[0].mxu0
        %3665 = vmatprep.mubr.f32.mxu0 0.0
        %3666 = vmatmul.mubr.f32.gmra.mrb[0].mxu0 %v3493
        %v3667 = vpop.f32.mrb[0].mxu0
        %v3668 = vadd.f32 0.0, %v3667
        %v3669 = vpop.f32.mrb[0].mxu0
        %3670 = vmatprep.mubr.f32.mxu0 0.0
        %3671 = vmatmul.mubr.f32.gmra.mrb[0].mxu0 %v3496
        %v3672 = vpop.f32.mrb[0].mxu0
        %v3673 = vadd.f32 0.0, %v3672
        %v3674 = vpop.f32.mrb[0].mxu0
        %3675 = vmatprep.mubr.f32.mxu0 0.0
        %3676 = vmatmul.mubr.f32.gmra.mrb[0].mxu0 %v3499
        %v3677 = vpop.f32.mrb[0].mxu0
        %v3678 = vadd.f32 0.0, %v3677
        %v3679 = vpop.f32.mrb[0].mxu0
        %3680 = vmatprep.mubr.f32.mxu0 0.0
        %3681 = vmatmul.mubr.f32.gmra.mrb[0].mxu0 %v3502
        %v3682 = vpop.f32.mrb[0].mxu0
        %v3683 = vadd.f32 0.0, %v3682
        %v3684 = vpop.f32.mrb[0].mxu0
        %3685 = vmatprep.mubr.f32.mxu0 0.0
        %3686 = vmatmul.mubr.f32.gmra.mrb[0].mxu0 %v3505
        %v3687 = vpop.f32.mrb[0].mxu0
        %v3688 = vadd.f32 0.0, %v3687
        %v3689 = vpop.f32.mrb[0].mxu0
        %3690 = vmatprep.mubr.f32.mxu0 0.0
        %3691 = vmatmul.mubr.f32.gmra.mrb[0].mxu0 %v3508
        %v3692 = vpop.f32.mrb[0].mxu0
        %v3693 = vadd.f32 0.0, %v3692
        %v3694 = vpop.f32.mrb[0].mxu0
        %3695 = vmatprep.mubr.f32.mxu0 0.0
        %3696 = vmatmul.mubr.f32.gmra.mrb[0].mxu0 %v3511
        %v3697 = vpop.f32.mrb[0].mxu0
        %v3698 = vadd.f32 0.0, %v3697
        %v3699 = vpop.f32.mrb[0].mxu0
        %3700 = vmatprep.mubr.f32.mxu0 0.0
        %3701 = vmatmul.mubr.f32.gmra.mrb[0].mxu0 %v3514
        %v3702 = vpop.f32.mrb[0].mxu0
        %v3703 = vadd.f32 0.0, %v3702
        %v3704 = vpop.f32.mrb[0].mxu0
        %3705 = vmatprep.mubr.f32.mxu0 0.0
        %3706 = vmatmul.mubr.f32.gmra.mrb[0].mxu0 %v3517
        %v3707 = vpop.f32.mrb[0].mxu0
        %v3708 = vadd.f32 0.0, %v3707
        %v3709 = vpop.f32.mrb[0].mxu0
        %3710 = vmatprep.mubr.f32.mxu0 0.0
        %3711 = vmatmul.mubr.f32.gmra.mrb[0].mxu0 %v3520
        %v3712 = vpop.f32.mrb[0].mxu0
        %v3713 = vadd.f32 0.0, %v3712
        %v3714 = vpop.f32.mrb[0].mxu0
        %3715 = vmatprep.mubr.f32.mxu0 0.0
        %3716 = vmatmul.mubr.f32.gmra.mrb[0].mxu0 %v3523
        %v3717 = vpop.f32.mrb[0].mxu0
        %v3718 = vadd.f32 0.0, %v3717
        %v3719 = vpop.f32.mrb[0].mxu0
        %3720 = vmatprep.mubr.f32.mxu0 0.0
        %3721 = vmatmul.mubr.f32.gmra.mrb[0].mxu0 %v3526
        %v3722 = vpop.f32.mrb[0].mxu0
        %v3723 = vadd.f32 0.0, %v3722
        %v3724 = vpop.f32.mrb[0].mxu0
        %3725 = vmatprep.mubr.f32.mxu0 0.0
        %3726 = vmatmul.mubr.f32.gmra.mrb[0].mxu0 %v3529
        %v3727 = vpop.f32.mrb[0].mxu0
        %v3728 = vadd.f32 0.0, %v3727
        %v3729 = vpop.f32.mrb[0].mxu0
        %3730 = vmatprep.mubr.f32.mxu0 0.0
        %3731 = vmatmul.mubr.f32.gmra.mrb[0].mxu0 %v3532
        %v3732 = vpop.f32.mrb[0].mxu0
        %v3733 = vadd.f32 0.0, %v3732
        %v3734 = vpop.f32.mrb[0].mxu0
        %3735 = vmatprep.mubr.f32.mxu0 0.0
        %3736 = vmatmul.mubr.f32.gmra.mrb[0].mxu0 %v3535
        %v3737 = vpop.f32.mrb[0].mxu0
        %v3738 = vadd.f32 0.0, %v3737
        %v3739 = vpop.f32.mrb[0].mxu0
        %3740 = vmatprep.mubr.f32.mxu0 0.0
        %3741 = vmatmul.mubr.f32.gmra.mrb[0].mxu0 %v3538
        %v3742 = vpop.f32.mrb[0].mxu0
        %v3743 = vadd.f32 0.0, %v3742
        %v3744 = vpop.f32.mrb[0].mxu0
        %3745 = vmatprep.mubr.f32.mxu0 0.0
        %3746 = vmatmul.mubr.f32.gmra.mrb[0].mxu0 %v3541
        %v3747 = vpop.f32.mrb[0].mxu0
        %v3748 = vadd.f32 0.0, %v3747
        %v3749 = vpop.f32.mrb[0].mxu0
        %3750 = vmatprep.mubr.f32.mxu0 0.0
        %3751 = vmatmul.mubr.f32.gmra.mrb[0].mxu0 %v3544
        %v3752 = vpop.f32.mrb[0].mxu0
        %v3753 = vadd.f32 0.0, %v3752
        %v3754 = vpop.f32.mrb[0].mxu0
        %3755 = vmatprep.mubr.f32.mxu0 0.0
        %3756 = vmatmul.mubr.f32.gmra.mrb[0].mxu0 %v3547
        %v3757 = vpop.f32.mrb[0].mxu0
        %v3758 = vadd.f32 0.0, %v3757
        %v3759 = vpop.f32.mrb[0].mxu0
        %3760 = vmatprep.mubr.f32.mxu0 0.0
        %3761 = vmatmul.mubr.f32.gmra.mrb[0].mxu0 %v3550
        %v3762 = vpop.f32.mrb[0].mxu0
        %v3763 = vadd.f32 0.0, %v3762
        %v3764 = vpop.f32.mrb[0].mxu0
        %3765 = vmatprep.mubr.f32.mxu0 0.0
        %3766 = vmatmul.mubr.f32.gmra.mrb[0].mxu0 %v3553
        %v3767 = vpop.f32.mrb[0].mxu0
        %v3768 = vadd.f32 0.0, %v3767
        %v3769 = vpop.f32.mrb[0].mxu0
        %3770 = vmatprep.mubr.f32.mxu0 0.0
        %3771 = vmatmul.mubr.f32.gmra.mrb[0].mxu0 %v3556
        %v3772 = vpop.f32.mrb[0].mxu0
        %v3773 = vadd.f32 0.0, %v3772
        %v3774 = vpop.f32.mrb[0].mxu0
        %3775 = vmatprep.mubr.f32.mxu0 0.0
        %3776 = vmatmul.mubr.f32.gmra.mrb[0].mxu0 %v3559
        %v3777 = vpop.f32.mrb[0].mxu0
        %v3778 = vadd.f32 0.0, %v3777
        %v3779 = vpop.f32.mrb[0].mxu0
        %3780 = vmatprep.mubr.f32.mxu0 0.0
        %3781 = vmatmul.mubr.f32.gmra.mrb[0].mxu0 %v3562
        %v3782 = vpop.f32.mrb[0].mxu0
        %v3783 = vadd.f32 0.0, %v3782
        %v3784 = vpop.f32.mrb[0].mxu0
        %3785 = vmatprep.mubr.f32.mxu0 0.0
        %3786 = vmatmul.mubr.f32.gmra.mrb[0].mxu0 %v3565
        %v3787 = vpop.f32.mrb[0].mxu0
        %v3788 = vadd.f32 0.0, %v3787
        %v3789 = vpop.f32.mrb[0].mxu0
        %3790 = vmatprep.mubr.f32.mxu0 0.0
        %3791 = vmatmul.mubr.f32.gmra.mrb[0].mxu0 %v3568
        %v3792 = vpop.f32.mrb[0].mxu0
        %v3793 = vadd.f32 0.0, %v3792
        %v3794 = vpop.f32.mrb[0].mxu0
        %3795 = vmatprep.mubr.f32.mxu0 0.0
        %3796 = vmatmul.mubr.f32.gmra.mrb[0].mxu0 %v3571
        %v3797 = vpop.f32.mrb[0].mxu0
        %v3798 = vadd.f32 0.0, %v3797
        %v3799 = vpop.f32.mrb[0].mxu0
        %3800 = vdwg.mxu0
        %v3801 = vadd.f32 %v3411, %v3643
        %v3802 = vadd.f32 %v3412, %v3648
        %v3803 = vadd.f32 %v3413, %v3653
        %v3804 = vadd.f32 %v3414, %v3658
        %v3805 = vadd.f32 %v3415, %v3663
        %v3806 = vadd.f32 %v3416, %v3668
        %v3807 = vadd.f32 %v3417, %v3673
        %v3808 = vadd.f32 %v3418, %v3678
        %v3809 = vadd.f32 %v3419, %v3683
        %v3810 = vadd.f32 %v3420, %v3688
        %v3811 = vadd.f32 %v3421, %v3693
        %v3812 = vadd.f32 %v3422, %v3698
        %v3813 = vadd.f32 %v3423, %v3703
        %v3814 = vadd.f32 %v3424, %v3708
        %v3815 = vadd.f32 %v3425, %v3713
        %v3816 = vadd.f32 %v3426, %v3718
        %v3817 = vadd.f32 %v3427, %v3723
        %v3818 = vadd.f32 %v3428, %v3728
        %v3819 = vadd.f32 %v3429, %v3733
        %v3820 = vadd.f32 %v3430, %v3738
        %v3821 = vadd.f32 %v3431, %v3743
        %v3822 = vadd.f32 %v3432, %v3748
        %v3823 = vadd.f32 %v3433, %v3753
        %v3824 = vadd.f32 %v3434, %v3758
        %v3825 = vadd.f32 %v3435, %v3763
        %v3826 = vadd.f32 %v3436, %v3768
        %v3827 = vadd.f32 %v3437, %v3773
        %v3828 = vadd.f32 %v3438, %v3778
        %v3829 = vadd.f32 %v3439, %v3783
        %v3830 = vadd.f32 %v3440, %v3788
        %v3831 = vadd.f32 %v3441, %v3793
        %v3832 = vadd.f32 %v3442, %v3798
        %v3833 = vld [vmem:[%s2] sm:$0x1]
        %v3834 = vlaneseq
        %v3835 = vshrl.u32 %v3834, 7
        %v3836 = vsub.s32 0, %v3835
        %v3837 = vrot.slane %v3833, %v3836
        %v3838 = vadd.f32 %v3801, %v3837
        %v3839 = vadd.f32 %v3802, %v3837
        %v3840 = vadd.f32 %v3803, %v3837
        %v3841 = vadd.f32 %v3804, %v3837
        %v3842 = vadd.f32 %v3805, %v3837
        %v3843 = vadd.f32 %v3806, %v3837
        %v3844 = vadd.f32 %v3807, %v3837
        %v3845 = vadd.f32 %v3808, %v3837
        %v3846 = vadd.f32 %v3809, %v3837
        %v3847 = vadd.f32 %v3810, %v3837
        %v3848 = vadd.f32 %v3811, %v3837
        %v3849 = vadd.f32 %v3812, %v3837
        %v3850 = vadd.f32 %v3813, %v3837
        %v3851 = vadd.f32 %v3814, %v3837
        %v3852 = vadd.f32 %v3815, %v3837
        %v3853 = vadd.f32 %v3816, %v3837
        %v3854 = vadd.f32 %v3817, %v3837
        %v3855 = vadd.f32 %v3818, %v3837
        %v3856 = vadd.f32 %v3819, %v3837
        %v3857 = vadd.f32 %v3820, %v3837
        %v3858 = vadd.f32 %v3821, %v3837
        %v3859 = vadd.f32 %v3822, %v3837
        %v3860 = vadd.f32 %v3823, %v3837
        %v3861 = vadd.f32 %v3824, %v3837
        %v3862 = vadd.f32 %v3825, %v3837
        %v3863 = vadd.f32 %v3826, %v3837
        %v3864 = vadd.f32 %v3827, %v3837
        %v3865 = vadd.f32 %v3828, %v3837
        %v3866 = vadd.f32 %v3829, %v3837
        %v3867 = vadd.f32 %v3830, %v3837
        %v3868 = vadd.f32 %v3831, %v3837
        %v3869 = vadd.f32 %v3832, %v3837
        %v3870 = vmax.f32 %v3838, 0.0
        %v3871 = vmax.f32 %v3839, 0.0
        %v3872 = vmax.f32 %v3840, 0.0
        %v3873 = vmax.f32 %v3841, 0.0
        %v3874 = vmax.f32 %v3842, 0.0
        %v3875 = vmax.f32 %v3843, 0.0
        %v3876 = vmax.f32 %v3844, 0.0
        %v3877 = vmax.f32 %v3845, 0.0
        %v3878 = vmax.f32 %v3846, 0.0
        %v3879 = vmax.f32 %v3847, 0.0
        %v3880 = vmax.f32 %v3848, 0.0
        %v3881 = vmax.f32 %v3849, 0.0
        %v3882 = vmax.f32 %v3850, 0.0
        %v3883 = vmax.f32 %v3851, 0.0
        %v3884 = vmax.f32 %v3852, 0.0
        %v3885 = vmax.f32 %v3853, 0.0
        %v3886 = vmax.f32 %v3854, 0.0
        %v3887 = vmax.f32 %v3855, 0.0
        %v3888 = vmax.f32 %v3856, 0.0
        %v3889 = vmax.f32 %v3857, 0.0
        %v3890 = vmax.f32 %v3858, 0.0
        %v3891 = vmax.f32 %v3859, 0.0
        %v3892 = vmax.f32 %v3860, 0.0
        %v3893 = vmax.f32 %v3861, 0.0
        %v3894 = vmax.f32 %v3862, 0.0
        %v3895 = vmax.f32 %v3863, 0.0
        %v3896 = vmax.f32 %v3864, 0.0
        %v3897 = vmax.f32 %v3865, 0.0
        %v3898 = vmax.f32 %v3866, 0.0
        %v3899 = vmax.f32 %v3867, 0.0
        %v3900 = vmax.f32 %v3868, 0.0
        %v3901 = vmax.f32 %v3869, 0.0
        %v3902 = vld [vmem:[%s2 + $0x1] sm:$0x1]
        %v3903 = vlaneseq
        %v3904 = vshrl.u32 %v3903, 7
        %v3905 = vsub.s32 0, %v3904
        %v3906 = vrot.slane %v3902, %v3905
        %v3907 = vmul.f32 %v3870, %v3906
        %v3908 = vmul.f32 %v3871, %v3906
        %v3909 = vmul.f32 %v3872, %v3906
        %v3910 = vmul.f32 %v3873, %v3906
        %v3911 = vmul.f32 %v3874, %v3906
        %v3912 = vmul.f32 %v3875, %v3906
        %v3913 = vmul.f32 %v3876, %v3906
        %v3914 = vmul.f32 %v3877, %v3906
        %v3915 = vmul.f32 %v3878, %v3906
        %v3916 = vmul.f32 %v3879, %v3906
        %v3917 = vmul.f32 %v3880, %v3906
        %v3918 = vmul.f32 %v3881, %v3906
        %v3919 = vmul.f32 %v3882, %v3906
        %v3920 = vmul.f32 %v3883, %v3906
        %v3921 = vmul.f32 %v3884, %v3906
        %v3922 = vmul.f32 %v3885, %v3906
        %v3923 = vmul.f32 %v3886, %v3906
        %v3924 = vmul.f32 %v3887, %v3906
        %v3925 = vmul.f32 %v3888, %v3906
        %v3926 = vmul.f32 %v3889, %v3906
        %v3927 = vmul.f32 %v3890, %v3906
        %v3928 = vmul.f32 %v3891, %v3906
        %v3929 = vmul.f32 %v3892, %v3906
        %v3930 = vmul.f32 %v3893, %v3906
        %v3931 = vmul.f32 %v3894, %v3906
        %v3932 = vmul.f32 %v3895, %v3906
        %v3933 = vmul.f32 %v3896, %v3906
        %v3934 = vmul.f32 %v3897, %v3906
        %v3935 = vmul.f32 %v3898, %v3906
        %v3936 = vmul.f32 %v3899, %v3906
        %v3937 = vmul.f32 %v3900, %v3906
        %v3938 = vmul.f32 %v3901, %v3906
        %v3939 = vld [vmem:[%s2 + $0x2] sm:$0x1]
        %v3940 = vlaneseq
        %v3941 = vshrl.u32 %v3940, 7
        %v3942 = vsub.s32 0, %v3941
        %v3943 = vrot.slane %v3939, %v3942
        %v3944 = vadd.f32 %v3907, %v3943
        %v3945 = vadd.f32 %v3908, %v3943
        %v3946 = vadd.f32 %v3909, %v3943
        %v3947 = vadd.f32 %v3910, %v3943
        %v3948 = vadd.f32 %v3911, %v3943
        %v3949 = vadd.f32 %v3912, %v3943
        %v3950 = vadd.f32 %v3913, %v3943
        %v3951 = vadd.f32 %v3914, %v3943
        %v3952 = vadd.f32 %v3915, %v3943
        %v3953 = vadd.f32 %v3916, %v3943
        %v3954 = vadd.f32 %v3917, %v3943
        %v3955 = vadd.f32 %v3918, %v3943
        %v3956 = vadd.f32 %v3919, %v3943
        %v3957 = vadd.f32 %v3920, %v3943
        %v3958 = vadd.f32 %v3921, %v3943
        %v3959 = vadd.f32 %v3922, %v3943
        %v3960 = vadd.f32 %v3923, %v3943
        %v3961 = vadd.f32 %v3924, %v3943
        %v3962 = vadd.f32 %v3925, %v3943
        %v3963 = vadd.f32 %v3926, %v3943
        %v3964 = vadd.f32 %v3927, %v3943
        %v3965 = vadd.f32 %v3928, %v3943
        %v3966 = vadd.f32 %v3929, %v3943
        %v3967 = vadd.f32 %v3930, %v3943
        %v3968 = vadd.f32 %v3931, %v3943
        %v3969 = vadd.f32 %v3932, %v3943
        %v3970 = vadd.f32 %v3933, %v3943
        %v3971 = vadd.f32 %v3934, %v3943
        %v3972 = vadd.f32 %v3935, %v3943
        %v3973 = vadd.f32 %v3936, %v3943
        %v3974 = vadd.f32 %v3937, %v3943
        %v3975 = vadd.f32 %v3938, %v3943
        %v3976 = vmax.f32 %v3944, %v3946
        %v3977 = vmax.f32 %v3945, %v3947
        %v3978 = vmax.f32 %v3948, %v3950
        %v3979 = vmax.f32 %v3949, %v3951
        %v3980 = vmax.f32 %v3952, %v3954
        %v3981 = vmax.f32 %v3953, %v3955
        %v3982 = vmax.f32 %v3956, %v3958
        %v3983 = vmax.f32 %v3957, %v3959
        %v3984 = vmax.f32 %v3960, %v3962
        %v3985 = vmax.f32 %v3961, %v3963
        %v3986 = vmax.f32 %v3964, %v3966
        %v3987 = vmax.f32 %v3965, %v3967
        %v3988 = vmax.f32 %v3968, %v3970
        %v3989 = vmax.f32 %v3969, %v3971
        %v3990 = vmax.f32 %v3972, %v3974
        %v3991 = vmax.f32 %v3973, %v3975
        %v4008 = vcombine.high %v3976, %v3976
        %v4010 = vunpack.c.l.s4 1983009808
        %v4011 = vunpack.c.0.s8 %v4010
        %v4012 = vlaneseq
        %v4013 = vshrl.u32 %v4012, 7
        %v4014 = vsub.s32 %v4011, %v4013
        %v4015 = vrot.slane %v3976, %v4014
        %v4017 = vunpack.c.l.s4 1983009808
        %v4018 = vunpack.c.0.s8 %v4017
        %v4019 = vlaneseq
        %v4020 = vshrl.u32 %v4019, 7
        %v4021 = vsub.s32 %v4018, %v4020
        %v4022 = vrot.slane %v4008, %v4021
        %v4023 = vcombine.high %v4015, %v4015
        %v4024 = vcombine.high %v4022, %v4022
        %v4025 = vcombine.high %v3977, %v3977
        %v4027 = vunpack.c.l.s4 1983009808
        %v4028 = vunpack.c.0.s8 %v4027
        %v4029 = vlaneseq
        %v4030 = vshrl.u32 %v4029, 7
        %v4031 = vsub.s32 %v4028, %v4030
        %v4032 = vrot.slane %v3977, %v4031
        %v4034 = vunpack.c.l.s4 1983009808
        %v4035 = vunpack.c.0.s8 %v4034
        %v4036 = vlaneseq
        %v4037 = vshrl.u32 %v4036, 7
        %v4038 = vsub.s32 %v4035, %v4037
        %v4039 = vrot.slane %v4025, %v4038
        %v4040 = vcombine.high %v4032, %v4032
        %v4041 = vcombine.high %v4039, %v4039
        %v4042 = vcombine.high %v3978, %v3978
        %v4044 = vunpack.c.l.s4 1983009808
        %v4045 = vunpack.c.0.s8 %v4044
        %v4046 = vlaneseq
        %v4047 = vshrl.u32 %v4046, 7
        %v4048 = vsub.s32 %v4045, %v4047
        %v4049 = vrot.slane %v3978, %v4048
        %v4051 = vunpack.c.l.s4 1983009808
        %v4052 = vunpack.c.0.s8 %v4051
        %v4053 = vlaneseq
        %v4054 = vshrl.u32 %v4053, 7
        %v4055 = vsub.s32 %v4052, %v4054
        %v4056 = vrot.slane %v4042, %v4055
        %v4057 = vcombine.high %v4049, %v4049
        %v4058 = vcombine.high %v4056, %v4056
        %v4059 = vcombine.high %v3979, %v3979
        %v4061 = vunpack.c.l.s4 1983009808
        %v4062 = vunpack.c.0.s8 %v4061
        %v4063 = vlaneseq
        %v4064 = vshrl.u32 %v4063, 7
        %v4065 = vsub.s32 %v4062, %v4064
        %v4066 = vrot.slane %v3979, %v4065
        %v4068 = vunpack.c.l.s4 1983009808
        %v4069 = vunpack.c.0.s8 %v4068
        %v4070 = vlaneseq
        %v4071 = vshrl.u32 %v4070, 7
        %v4072 = vsub.s32 %v4069, %v4071
        %v4073 = vrot.slane %v4059, %v4072
        %v4074 = vcombine.high %v4066, %v4066
        %v4075 = vcombine.high %v4073, %v4073
        %v4076 = vcombine.high %v3980, %v3980
        %v4078 = vunpack.c.l.s4 1983009808
        %v4079 = vunpack.c.0.s8 %v4078
        %v4080 = vlaneseq
        %v4081 = vshrl.u32 %v4080, 7
        %v4082 = vsub.s32 %v4079, %v4081
        %v4083 = vrot.slane %v3980, %v4082
        %v4085 = vunpack.c.l.s4 1983009808
        %v4086 = vunpack.c.0.s8 %v4085
        %v4087 = vlaneseq
        %v4088 = vshrl.u32 %v4087, 7
        %v4089 = vsub.s32 %v4086, %v4088
        %v4090 = vrot.slane %v4076, %v4089
        %v4091 = vcombine.high %v4083, %v4083
        %v4092 = vcombine.high %v4090, %v4090
        %v4093 = vcombine.high %v3981, %v3981
        %v4095 = vunpack.c.l.s4 1983009808
        %v4096 = vunpack.c.0.s8 %v4095
        %v4097 = vlaneseq
        %v4098 = vshrl.u32 %v4097, 7
        %v4099 = vsub.s32 %v4096, %v4098
        %v4100 = vrot.slane %v3981, %v4099
        %v4102 = vunpack.c.l.s4 1983009808
        %v4103 = vunpack.c.0.s8 %v4102
        %v4104 = vlaneseq
        %v4105 = vshrl.u32 %v4104, 7
        %v4106 = vsub.s32 %v4103, %v4105
        %v4107 = vrot.slane %v4093, %v4106
        %v4108 = vcombine.high %v4100, %v4100
        %v4109 = vcombine.high %v4107, %v4107
        %v4110 = vcombine.high %v3982, %v3982
        %v4112 = vunpack.c.l.s4 1983009808
        %v4113 = vunpack.c.0.s8 %v4112
        %v4114 = vlaneseq
        %v4115 = vshrl.u32 %v4114, 7
        %v4116 = vsub.s32 %v4113, %v4115
        %v4117 = vrot.slane %v3982, %v4116
        %v4119 = vunpack.c.l.s4 1983009808
        %v4120 = vunpack.c.0.s8 %v4119
        %v4121 = vlaneseq
        %v4122 = vshrl.u32 %v4121, 7
        %v4123 = vsub.s32 %v4120, %v4122
        %v4124 = vrot.slane %v4110, %v4123
        %v4125 = vcombine.high %v4117, %v4117
        %v4126 = vcombine.high %v4124, %v4124
        %v4127 = vcombine.high %v3983, %v3983
        %v4129 = vunpack.c.l.s4 1983009808
        %v4130 = vunpack.c.0.s8 %v4129
        %v4131 = vlaneseq
        %v4132 = vshrl.u32 %v4131, 7
        %v4133 = vsub.s32 %v4130, %v4132
        %v4134 = vrot.slane %v3983, %v4133
        %v4136 = vunpack.c.l.s4 1983009808
        %v4137 = vunpack.c.0.s8 %v4136
        %v4138 = vlaneseq
        %v4139 = vshrl.u32 %v4138, 7
        %v4140 = vsub.s32 %v4137, %v4139
        %v4141 = vrot.slane %v4127, %v4140
        %v4142 = vcombine.high %v4134, %v4134
        %v4143 = vcombine.high %v4141, %v4141
        %v4144 = vcombine.high %v3984, %v3984
        %v4146 = vunpack.c.l.s4 1983009808
        %v4147 = vunpack.c.0.s8 %v4146
        %v4148 = vlaneseq
        %v4149 = vshrl.u32 %v4148, 7
        %v4150 = vsub.s32 %v4147, %v4149
        %v4151 = vrot.slane %v3984, %v4150
        %v4153 = vunpack.c.l.s4 1983009808
        %v4154 = vunpack.c.0.s8 %v4153
        %v4155 = vlaneseq
        %v4156 = vshrl.u32 %v4155, 7
        %v4157 = vsub.s32 %v4154, %v4156
        %v4158 = vrot.slane %v4144, %v4157
        %v4159 = vcombine.high %v4151, %v4151
        %v4160 = vcombine.high %v4158, %v4158
        %v4161 = vcombine.high %v3985, %v3985
        %v4163 = vunpack.c.l.s4 1983009808
        %v4164 = vunpack.c.0.s8 %v4163
        %v4165 = vlaneseq
        %v4166 = vshrl.u32 %v4165, 7
        %v4167 = vsub.s32 %v4164, %v4166
        %v4168 = vrot.slane %v3985, %v4167
        %v4170 = vunpack.c.l.s4 1983009808
        %v4171 = vunpack.c.0.s8 %v4170
        %v4172 = vlaneseq
        %v4173 = vshrl.u32 %v4172, 7
        %v4174 = vsub.s32 %v4171, %v4173
        %v4175 = vrot.slane %v4161, %v4174
        %v4176 = vcombine.high %v4168, %v4168
        %v4177 = vcombine.high %v4175, %v4175
        %v4178 = vcombine.high %v3986, %v3986
        %v4180 = vunpack.c.l.s4 1983009808
        %v4181 = vunpack.c.0.s8 %v4180
        %v4182 = vlaneseq
        %v4183 = vshrl.u32 %v4182, 7
        %v4184 = vsub.s32 %v4181, %v4183
        %v4185 = vrot.slane %v3986, %v4184
        %v4187 = vunpack.c.l.s4 1983009808
        %v4188 = vunpack.c.0.s8 %v4187
        %v4189 = vlaneseq
        %v4190 = vshrl.u32 %v4189, 7
        %v4191 = vsub.s32 %v4188, %v4190
        %v4192 = vrot.slane %v4178, %v4191
        %v4193 = vcombine.high %v4185, %v4185
        %v4194 = vcombine.high %v4192, %v4192
        %v4195 = vcombine.high %v3987, %v3987
        %v4197 = vunpack.c.l.s4 1983009808
        %v4198 = vunpack.c.0.s8 %v4197
        %v4199 = vlaneseq
        %v4200 = vshrl.u32 %v4199, 7
        %v4201 = vsub.s32 %v4198, %v4200
        %v4202 = vrot.slane %v3987, %v4201
        %v4204 = vunpack.c.l.s4 1983009808
        %v4205 = vunpack.c.0.s8 %v4204
        %v4206 = vlaneseq
        %v4207 = vshrl.u32 %v4206, 7
        %v4208 = vsub.s32 %v4205, %v4207
        %v4209 = vrot.slane %v4195, %v4208
        %v4210 = vcombine.high %v4202, %v4202
        %v4211 = vcombine.high %v4209, %v4209
        %v4212 = vcombine.high %v3988, %v3988
        %v4214 = vunpack.c.l.s4 1983009808
        %v4215 = vunpack.c.0.s8 %v4214
        %v4216 = vlaneseq
        %v4217 = vshrl.u32 %v4216, 7
        %v4218 = vsub.s32 %v4215, %v4217
        %v4219 = vrot.slane %v3988, %v4218
        %v4221 = vunpack.c.l.s4 1983009808
        %v4222 = vunpack.c.0.s8 %v4221
        %v4223 = vlaneseq
        %v4224 = vshrl.u32 %v4223, 7
        %v4225 = vsub.s32 %v4222, %v4224
        %v4226 = vrot.slane %v4212, %v4225
        %v4227 = vcombine.high %v4219, %v4219
        %v4228 = vcombine.high %v4226, %v4226
        %v4229 = vcombine.high %v3989, %v3989
        %v4231 = vunpack.c.l.s4 1983009808
        %v4232 = vunpack.c.0.s8 %v4231
        %v4233 = vlaneseq
        %v4234 = vshrl.u32 %v4233, 7
        %v4235 = vsub.s32 %v4232, %v4234
        %v4236 = vrot.slane %v3989, %v4235
        %v4238 = vunpack.c.l.s4 1983009808
        %v4239 = vunpack.c.0.s8 %v4238
        %v4240 = vlaneseq
        %v4241 = vshrl.u32 %v4240, 7
        %v4242 = vsub.s32 %v4239, %v4241
        %v4243 = vrot.slane %v4229, %v4242
        %v4244 = vcombine.high %v4236, %v4236
        %v4245 = vcombine.high %v4243, %v4243
        %v4246 = vcombine.high %v3990, %v3990
        %v4248 = vunpack.c.l.s4 1983009808
        %v4249 = vunpack.c.0.s8 %v4248
        %v4250 = vlaneseq
        %v4251 = vshrl.u32 %v4250, 7
        %v4252 = vsub.s32 %v4249, %v4251
        %v4253 = vrot.slane %v3990, %v4252
        %v4255 = vunpack.c.l.s4 1983009808
        %v4256 = vunpack.c.0.s8 %v4255
        %v4257 = vlaneseq
        %v4258 = vshrl.u32 %v4257, 7
        %v4259 = vsub.s32 %v4256, %v4258
        %v4260 = vrot.slane %v4246, %v4259
        %v4261 = vcombine.high %v4253, %v4253
        %v4262 = vcombine.high %v4260, %v4260
        %v4263 = vcombine.high %v3991, %v3991
        %v4265 = vunpack.c.l.s4 1983009808
        %v4266 = vunpack.c.0.s8 %v4265
        %v4267 = vlaneseq
        %v4268 = vshrl.u32 %v4267, 7
        %v4269 = vsub.s32 %v4266, %v4268
        %v4270 = vrot.slane %v3991, %v4269
        %v4272 = vunpack.c.l.s4 1983009808
        %v4273 = vunpack.c.0.s8 %v4272
        %v4274 = vlaneseq
        %v4275 = vshrl.u32 %v4274, 7
        %v4276 = vsub.s32 %v4273, %v4275
        %v4277 = vrot.slane %v4263, %v4276
        %v4278 = vcombine.high %v4270, %v4270
        %v4279 = vcombine.high %v4277, %v4277
        %vm4344 = vcmask 1041408
        %v4345 = vsel %vm4344, %v4015, -inf
        %v4346 = vrot.slane %v4345, 4
        %v4347 = vmax.f32 %v4345, %v4346
        %v4348 = vrot.slane %v4347, 2
        %v4349 = vmax.f32 %v4347, %v4348
        %v4350 = vrot.slane %v4349, 1
        %v4351 = vmax.f32 %v4349, %v4350
        %v4352 = vsel %vm4344, %v4023, -inf
        %v4353 = vrot.slane %v4352, 4
        %v4354 = vmax.f32 %v4352, %v4353
        %v4355 = vrot.slane %v4354, 2
        %v4356 = vmax.f32 %v4354, %v4355
        %v4357 = vrot.slane %v4356, 1
        %v4358 = vmax.f32 %v4356, %v4357
        %v4359 = vsel %vm4344, %v4022, -inf
        %v4360 = vrot.slane %v4359, 4
        %v4361 = vmax.f32 %v4359, %v4360
        %v4362 = vrot.slane %v4361, 2
        %v4363 = vmax.f32 %v4361, %v4362
        %v4364 = vrot.slane %v4363, 1
        %v4365 = vmax.f32 %v4363, %v4364
        %v4366 = vsel %vm4344, %v4024, -inf
        %v4367 = vrot.slane %v4366, 4
        %v4368 = vmax.f32 %v4366, %v4367
        %v4369 = vrot.slane %v4368, 2
        %v4370 = vmax.f32 %v4368, %v4369
        %v4371 = vrot.slane %v4370, 1
        %v4372 = vmax.f32 %v4370, %v4371
        %v4373 = vsel %vm4344, %v4032, -inf
        %v4374 = vrot.slane %v4373, 4
        %v4375 = vmax.f32 %v4373, %v4374
        %v4376 = vrot.slane %v4375, 2
        %v4377 = vmax.f32 %v4375, %v4376
        %v4378 = vrot.slane %v4377, 1
        %v4379 = vmax.f32 %v4377, %v4378
        %v4380 = vsel %vm4344, %v4040, -inf
        %v4381 = vrot.slane %v4380, 4
        %v4382 = vmax.f32 %v4380, %v4381
        %v4383 = vrot.slane %v4382, 2
        %v4384 = vmax.f32 %v4382, %v4383
        %v4385 = vrot.slane %v4384, 1
        %v4386 = vmax.f32 %v4384, %v4385
        %v4387 = vsel %vm4344, %v4039, -inf
        %v4388 = vrot.slane %v4387, 4
        %v4389 = vmax.f32 %v4387, %v4388
        %v4390 = vrot.slane %v4389, 2
        %v4391 = vmax.f32 %v4389, %v4390
        %v4392 = vrot.slane %v4391, 1
        %v4393 = vmax.f32 %v4391, %v4392
        %v4394 = vsel %vm4344, %v4041, -inf
        %v4395 = vrot.slane %v4394, 4
        %v4396 = vmax.f32 %v4394, %v4395
        %v4397 = vrot.slane %v4396, 2
        %v4398 = vmax.f32 %v4396, %v4397
        %v4399 = vrot.slane %v4398, 1
        %v4400 = vmax.f32 %v4398, %v4399
        %v4401 = vsel %vm4344, %v4049, -inf
        %v4402 = vrot.slane %v4401, 4
        %v4403 = vmax.f32 %v4401, %v4402
        %v4404 = vrot.slane %v4403, 2
        %v4405 = vmax.f32 %v4403, %v4404
        %v4406 = vrot.slane %v4405, 1
        %v4407 = vmax.f32 %v4405, %v4406
        %v4408 = vsel %vm4344, %v4057, -inf
        %v4409 = vrot.slane %v4408, 4
        %v4410 = vmax.f32 %v4408, %v4409
        %v4411 = vrot.slane %v4410, 2
        %v4412 = vmax.f32 %v4410, %v4411
        %v4413 = vrot.slane %v4412, 1
        %v4414 = vmax.f32 %v4412, %v4413
        %v4415 = vsel %vm4344, %v4056, -inf
        %v4416 = vrot.slane %v4415, 4
        %v4417 = vmax.f32 %v4415, %v4416
        %v4418 = vrot.slane %v4417, 2
        %v4419 = vmax.f32 %v4417, %v4418
        %v4420 = vrot.slane %v4419, 1
        %v4421 = vmax.f32 %v4419, %v4420
        %v4422 = vsel %vm4344, %v4058, -inf
        %v4423 = vrot.slane %v4422, 4
        %v4424 = vmax.f32 %v4422, %v4423
        %v4425 = vrot.slane %v4424, 2
        %v4426 = vmax.f32 %v4424, %v4425
        %v4427 = vrot.slane %v4426, 1
        %v4428 = vmax.f32 %v4426, %v4427
        %v4429 = vsel %vm4344, %v4066, -inf
        %v4430 = vrot.slane %v4429, 4
        %v4431 = vmax.f32 %v4429, %v4430
        %v4432 = vrot.slane %v4431, 2
        %v4433 = vmax.f32 %v4431, %v4432
        %v4434 = vrot.slane %v4433, 1
        %v4435 = vmax.f32 %v4433, %v4434
        %v4436 = vsel %vm4344, %v4074, -inf
        %v4437 = vrot.slane %v4436, 4
        %v4438 = vmax.f32 %v4436, %v4437
        %v4439 = vrot.slane %v4438, 2
        %v4440 = vmax.f32 %v4438, %v4439
        %v4441 = vrot.slane %v4440, 1
        %v4442 = vmax.f32 %v4440, %v4441
        %v4443 = vsel %vm4344, %v4073, -inf
        %v4444 = vrot.slane %v4443, 4
        %v4445 = vmax.f32 %v4443, %v4444
        %v4446 = vrot.slane %v4445, 2
        %v4447 = vmax.f32 %v4445, %v4446
        %v4448 = vrot.slane %v4447, 1
        %v4449 = vmax.f32 %v4447, %v4448
        %v4450 = vsel %vm4344, %v4075, -inf
        %v4451 = vrot.slane %v4450, 4
        %v4452 = vmax.f32 %v4450, %v4451
        %v4453 = vrot.slane %v4452, 2
        %v4454 = vmax.f32 %v4452, %v4453
        %v4455 = vrot.slane %v4454, 1
        %v4456 = vmax.f32 %v4454, %v4455
        %v4457 = vsel %vm4344, %v4083, -inf
        %v4458 = vrot.slane %v4457, 4
        %v4459 = vmax.f32 %v4457, %v4458
        %v4460 = vrot.slane %v4459, 2
        %v4461 = vmax.f32 %v4459, %v4460
        %v4462 = vrot.slane %v4461, 1
        %v4463 = vmax.f32 %v4461, %v4462
        %v4464 = vsel %vm4344, %v4091, -inf
        %v4465 = vrot.slane %v4464, 4
        %v4466 = vmax.f32 %v4464, %v4465
        %v4467 = vrot.slane %v4466, 2
        %v4468 = vmax.f32 %v4466, %v4467
        %v4469 = vrot.slane %v4468, 1
        %v4470 = vmax.f32 %v4468, %v4469
        %v4471 = vsel %vm4344, %v4090, -inf
        %v4472 = vrot.slane %v4471, 4
        %v4473 = vmax.f32 %v4471, %v4472
        %v4474 = vrot.slane %v4473, 2
        %v4475 = vmax.f32 %v4473, %v4474
        %v4476 = vrot.slane %v4475, 1
        %v4477 = vmax.f32 %v4475, %v4476
        %v4478 = vsel %vm4344, %v4092, -inf
        %v4479 = vrot.slane %v4478, 4
        %v4480 = vmax.f32 %v4478, %v4479
        %v4481 = vrot.slane %v4480, 2
        %v4482 = vmax.f32 %v4480, %v4481
        %v4483 = vrot.slane %v4482, 1
        %v4484 = vmax.f32 %v4482, %v4483
        %v4485 = vsel %vm4344, %v4100, -inf
        %v4486 = vrot.slane %v4485, 4
        %v4487 = vmax.f32 %v4485, %v4486
        %v4488 = vrot.slane %v4487, 2
        %v4489 = vmax.f32 %v4487, %v4488
        %v4490 = vrot.slane %v4489, 1
        %v4491 = vmax.f32 %v4489, %v4490
        %v4492 = vsel %vm4344, %v4108, -inf
        %v4493 = vrot.slane %v4492, 4
        %v4494 = vmax.f32 %v4492, %v4493
        %v4495 = vrot.slane %v4494, 2
        %v4496 = vmax.f32 %v4494, %v4495
        %v4497 = vrot.slane %v4496, 1
        %v4498 = vmax.f32 %v4496, %v4497
        %v4499 = vsel %vm4344, %v4107, -inf
        %v4500 = vrot.slane %v4499, 4
        %v4501 = vmax.f32 %v4499, %v4500
        %v4502 = vrot.slane %v4501, 2
        %v4503 = vmax.f32 %v4501, %v4502
        %v4504 = vrot.slane %v4503, 1
        %v4505 = vmax.f32 %v4503, %v4504
        %v4506 = vsel %vm4344, %v4109, -inf
        %v4507 = vrot.slane %v4506, 4
        %v4508 = vmax.f32 %v4506, %v4507
        %v4509 = vrot.slane %v4508, 2
        %v4510 = vmax.f32 %v4508, %v4509
        %v4511 = vrot.slane %v4510, 1
        %v4512 = vmax.f32 %v4510, %v4511
        %v4513 = vsel %vm4344, %v4117, -inf
        %v4514 = vrot.slane %v4513, 4
        %v4515 = vmax.f32 %v4513, %v4514
        %v4516 = vrot.slane %v4515, 2
        %v4517 = vmax.f32 %v4515, %v4516
        %v4518 = vrot.slane %v4517, 1
        %v4519 = vmax.f32 %v4517, %v4518
        %v4520 = vsel %vm4344, %v4125, -inf
        %v4521 = vrot.slane %v4520, 4
        %v4522 = vmax.f32 %v4520, %v4521
        %v4523 = vrot.slane %v4522, 2
        %v4524 = vmax.f32 %v4522, %v4523
        %v4525 = vrot.slane %v4524, 1
        %v4526 = vmax.f32 %v4524, %v4525
        %v4527 = vsel %vm4344, %v4124, -inf
        %v4528 = vrot.slane %v4527, 4
        %v4529 = vmax.f32 %v4527, %v4528
        %v4530 = vrot.slane %v4529, 2
        %v4531 = vmax.f32 %v4529, %v4530
        %v4532 = vrot.slane %v4531, 1
        %v4533 = vmax.f32 %v4531, %v4532
        %v4534 = vsel %vm4344, %v4126, -inf
        %v4535 = vrot.slane %v4534, 4
        %v4536 = vmax.f32 %v4534, %v4535
        %v4537 = vrot.slane %v4536, 2
        %v4538 = vmax.f32 %v4536, %v4537
        %v4539 = vrot.slane %v4538, 1
        %v4540 = vmax.f32 %v4538, %v4539
        %v4541 = vsel %vm4344, %v4134, -inf
        %v4542 = vrot.slane %v4541, 4
        %v4543 = vmax.f32 %v4541, %v4542
        %v4544 = vrot.slane %v4543, 2
        %v4545 = vmax.f32 %v4543, %v4544
        %v4546 = vrot.slane %v4545, 1
        %v4547 = vmax.f32 %v4545, %v4546
        %v4548 = vsel %vm4344, %v4142, -inf
        %v4549 = vrot.slane %v4548, 4
        %v4550 = vmax.f32 %v4548, %v4549
        %v4551 = vrot.slane %v4550, 2
        %v4552 = vmax.f32 %v4550, %v4551
        %v4553 = vrot.slane %v4552, 1
        %v4554 = vmax.f32 %v4552, %v4553
        %v4555 = vsel %vm4344, %v4141, -inf
        %v4556 = vrot.slane %v4555, 4
        %v4557 = vmax.f32 %v4555, %v4556
        %v4558 = vrot.slane %v4557, 2
        %v4559 = vmax.f32 %v4557, %v4558
        %v4560 = vrot.slane %v4559, 1
        %v4561 = vmax.f32 %v4559, %v4560
        %v4562 = vsel %vm4344, %v4143, -inf
        %v4563 = vrot.slane %v4562, 4
        %v4564 = vmax.f32 %v4562, %v4563
        %v4565 = vrot.slane %v4564, 2
        %v4566 = vmax.f32 %v4564, %v4565
        %v4567 = vrot.slane %v4566, 1
        %v4568 = vmax.f32 %v4566, %v4567
        %v4569 = vsel %vm4344, %v4151, -inf
        %v4570 = vrot.slane %v4569, 4
        %v4571 = vmax.f32 %v4569, %v4570
        %v4572 = vrot.slane %v4571, 2
        %v4573 = vmax.f32 %v4571, %v4572
        %v4574 = vrot.slane %v4573, 1
        %v4575 = vmax.f32 %v4573, %v4574
        %v4576 = vsel %vm4344, %v4159, -inf
        %v4577 = vrot.slane %v4576, 4
        %v4578 = vmax.f32 %v4576, %v4577
        %v4579 = vrot.slane %v4578, 2
        %v4580 = vmax.f32 %v4578, %v4579
        %v4581 = vrot.slane %v4580, 1
        %v4582 = vmax.f32 %v4580, %v4581
        %v4583 = vsel %vm4344, %v4158, -inf
        %v4584 = vrot.slane %v4583, 4
        %v4585 = vmax.f32 %v4583, %v4584
        %v4586 = vrot.slane %v4585, 2
        %v4587 = vmax.f32 %v4585, %v4586
        %v4588 = vrot.slane %v4587, 1
        %v4589 = vmax.f32 %v4587, %v4588
        %v4590 = vsel %vm4344, %v4160, -inf
        %v4591 = vrot.slane %v4590, 4
        %v4592 = vmax.f32 %v4590, %v4591
        %v4593 = vrot.slane %v4592, 2
        %v4594 = vmax.f32 %v4592, %v4593
        %v4595 = vrot.slane %v4594, 1
        %v4596 = vmax.f32 %v4594, %v4595
        %v4597 = vsel %vm4344, %v4168, -inf
        %v4598 = vrot.slane %v4597, 4
        %v4599 = vmax.f32 %v4597, %v4598
        %v4600 = vrot.slane %v4599, 2
        %v4601 = vmax.f32 %v4599, %v4600
        %v4602 = vrot.slane %v4601, 1
        %v4603 = vmax.f32 %v4601, %v4602
        %v4604 = vsel %vm4344, %v4176, -inf
        %v4605 = vrot.slane %v4604, 4
        %v4606 = vmax.f32 %v4604, %v4605
        %v4607 = vrot.slane %v4606, 2
        %v4608 = vmax.f32 %v4606, %v4607
        %v4609 = vrot.slane %v4608, 1
        %v4610 = vmax.f32 %v4608, %v4609
        %v4611 = vsel %vm4344, %v4175, -inf
        %v4612 = vrot.slane %v4611, 4
        %v4613 = vmax.f32 %v4611, %v4612
        %v4614 = vrot.slane %v4613, 2
        %v4615 = vmax.f32 %v4613, %v4614
        %v4616 = vrot.slane %v4615, 1
        %v4617 = vmax.f32 %v4615, %v4616
        %v4618 = vsel %vm4344, %v4177, -inf
        %v4619 = vrot.slane %v4618, 4
        %v4620 = vmax.f32 %v4618, %v4619
        %v4621 = vrot.slane %v4620, 2
        %v4622 = vmax.f32 %v4620, %v4621
        %v4623 = vrot.slane %v4622, 1
        %v4624 = vmax.f32 %v4622, %v4623
        %v4625 = vsel %vm4344, %v4185, -inf
        %v4626 = vrot.slane %v4625, 4
        %v4627 = vmax.f32 %v4625, %v4626
        %v4628 = vrot.slane %v4627, 2
        %v4629 = vmax.f32 %v4627, %v4628
        %v4630 = vrot.slane %v4629, 1
        %v4631 = vmax.f32 %v4629, %v4630
        %v4632 = vsel %vm4344, %v4193, -inf
        %v4633 = vrot.slane %v4632, 4
        %v4634 = vmax.f32 %v4632, %v4633
        %v4635 = vrot.slane %v4634, 2
        %v4636 = vmax.f32 %v4634, %v4635
        %v4637 = vrot.slane %v4636, 1
        %v4638 = vmax.f32 %v4636, %v4637
        %v4639 = vsel %vm4344, %v4192, -inf
        %v4640 = vrot.slane %v4639, 4
        %v4641 = vmax.f32 %v4639, %v4640
        %v4642 = vrot.slane %v4641, 2
        %v4643 = vmax.f32 %v4641, %v4642
        %v4644 = vrot.slane %v4643, 1
        %v4645 = vmax.f32 %v4643, %v4644
        %v4646 = vsel %vm4344, %v4194, -inf
        %v4647 = vrot.slane %v4646, 4
        %v4648 = vmax.f32 %v4646, %v4647
        %v4649 = vrot.slane %v4648, 2
        %v4650 = vmax.f32 %v4648, %v4649
        %v4651 = vrot.slane %v4650, 1
        %v4652 = vmax.f32 %v4650, %v4651
        %v4653 = vsel %vm4344, %v4202, -inf
        %v4654 = vrot.slane %v4653, 4
        %v4655 = vmax.f32 %v4653, %v4654
        %v4656 = vrot.slane %v4655, 2
        %v4657 = vmax.f32 %v4655, %v4656
        %v4658 = vrot.slane %v4657, 1
        %v4659 = vmax.f32 %v4657, %v4658
        %v4660 = vsel %vm4344, %v4210, -inf
        %v4661 = vrot.slane %v4660, 4
        %v4662 = vmax.f32 %v4660, %v4661
        %v4663 = vrot.slane %v4662, 2
        %v4664 = vmax.f32 %v4662, %v4663
        %v4665 = vrot.slane %v4664, 1
        %v4666 = vmax.f32 %v4664, %v4665
        %v4667 = vsel %vm4344, %v4209, -inf
        %v4668 = vrot.slane %v4667, 4
        %v4669 = vmax.f32 %v4667, %v4668
        %v4670 = vrot.slane %v4669, 2
        %v4671 = vmax.f32 %v4669, %v4670
        %v4672 = vrot.slane %v4671, 1
        %v4673 = vmax.f32 %v4671, %v4672
        %v4674 = vsel %vm4344, %v4211, -inf
        %v4675 = vrot.slane %v4674, 4
        %v4676 = vmax.f32 %v4674, %v4675
        %v4677 = vrot.slane %v4676, 2
        %v4678 = vmax.f32 %v4676, %v4677
        %v4679 = vrot.slane %v4678, 1
        %v4680 = vmax.f32 %v4678, %v4679
        %v4681 = vsel %vm4344, %v4219, -inf
        %v4682 = vrot.slane %v4681, 4
        %v4683 = vmax.f32 %v4681, %v4682
        %v4684 = vrot.slane %v4683, 2
        %v4685 = vmax.f32 %v4683, %v4684
        %v4686 = vrot.slane %v4685, 1
        %v4687 = vmax.f32 %v4685, %v4686
        %v4688 = vsel %vm4344, %v4227, -inf
        %v4689 = vrot.slane %v4688, 4
        %v4690 = vmax.f32 %v4688, %v4689
        %v4691 = vrot.slane %v4690, 2
        %v4692 = vmax.f32 %v4690, %v4691
        %v4693 = vrot.slane %v4692, 1
        %v4694 = vmax.f32 %v4692, %v4693
        %v4695 = vsel %vm4344, %v4226, -inf
        %v4696 = vrot.slane %v4695, 4
        %v4697 = vmax.f32 %v4695, %v4696
        %v4698 = vrot.slane %v4697, 2
        %v4699 = vmax.f32 %v4697, %v4698
        %v4700 = vrot.slane %v4699, 1
        %v4701 = vmax.f32 %v4699, %v4700
        %v4702 = vsel %vm4344, %v4228, -inf
        %v4703 = vrot.slane %v4702, 4
        %v4704 = vmax.f32 %v4702, %v4703
        %v4705 = vrot.slane %v4704, 2
        %v4706 = vmax.f32 %v4704, %v4705
        %v4707 = vrot.slane %v4706, 1
        %v4708 = vmax.f32 %v4706, %v4707
        %v4709 = vsel %vm4344, %v4236, -inf
        %v4710 = vrot.slane %v4709, 4
        %v4711 = vmax.f32 %v4709, %v4710
        %v4712 = vrot.slane %v4711, 2
        %v4713 = vmax.f32 %v4711, %v4712
        %v4714 = vrot.slane %v4713, 1
        %v4715 = vmax.f32 %v4713, %v4714
        %v4716 = vsel %vm4344, %v4244, -inf
        %v4717 = vrot.slane %v4716, 4
        %v4718 = vmax.f32 %v4716, %v4717
        %v4719 = vrot.slane %v4718, 2
        %v4720 = vmax.f32 %v4718, %v4719
        %v4721 = vrot.slane %v4720, 1
        %v4722 = vmax.f32 %v4720, %v4721
        %v4723 = vsel %vm4344, %v4243, -inf
        %v4724 = vrot.slane %v4723, 4
        %v4725 = vmax.f32 %v4723, %v4724
        %v4726 = vrot.slane %v4725, 2
        %v4727 = vmax.f32 %v4725, %v4726
        %v4728 = vrot.slane %v4727, 1
        %v4729 = vmax.f32 %v4727, %v4728
        %v4730 = vsel %vm4344, %v4245, -inf
        %v4731 = vrot.slane %v4730, 4
        %v4732 = vmax.f32 %v4730, %v4731
        %v4733 = vrot.slane %v4732, 2
        %v4734 = vmax.f32 %v4732, %v4733
        %v4735 = vrot.slane %v4734, 1
        %v4736 = vmax.f32 %v4734, %v4735
        %v4737 = vsel %vm4344, %v4253, -inf
        %v4738 = vrot.slane %v4737, 4
        %v4739 = vmax.f32 %v4737, %v4738
        %v4740 = vrot.slane %v4739, 2
        %v4741 = vmax.f32 %v4739, %v4740
        %v4742 = vrot.slane %v4741, 1
        %v4743 = vmax.f32 %v4741, %v4742
        %v4744 = vsel %vm4344, %v4261, -inf
        %v4745 = vrot.slane %v4744, 4
        %v4746 = vmax.f32 %v4744, %v4745
        %v4747 = vrot.slane %v4746, 2
        %v4748 = vmax.f32 %v4746, %v4747
        %v4749 = vrot.slane %v4748, 1
        %v4750 = vmax.f32 %v4748, %v4749
        %v4751 = vsel %vm4344, %v4260, -inf
        %v4752 = vrot.slane %v4751, 4
        %v4753 = vmax.f32 %v4751, %v4752
        %v4754 = vrot.slane %v4753, 2
        %v4755 = vmax.f32 %v4753, %v4754
        %v4756 = vrot.slane %v4755, 1
        %v4757 = vmax.f32 %v4755, %v4756
        %v4758 = vsel %vm4344, %v4262, -inf
        %v4759 = vrot.slane %v4758, 4
        %v4760 = vmax.f32 %v4758, %v4759
        %v4761 = vrot.slane %v4760, 2
        %v4762 = vmax.f32 %v4760, %v4761
        %v4763 = vrot.slane %v4762, 1
        %v4764 = vmax.f32 %v4762, %v4763
        %v4765 = vsel %vm4344, %v4270, -inf
        %v4766 = vrot.slane %v4765, 4
        %v4767 = vmax.f32 %v4765, %v4766
        %v4768 = vrot.slane %v4767, 2
        %v4769 = vmax.f32 %v4767, %v4768
        %v4770 = vrot.slane %v4769, 1
        %v4771 = vmax.f32 %v4769, %v4770
        %v4772 = vsel %vm4344, %v4278, -inf
        %v4773 = vrot.slane %v4772, 4
        %v4774 = vmax.f32 %v4772, %v4773
        %v4775 = vrot.slane %v4774, 2
        %v4776 = vmax.f32 %v4774, %v4775
        %v4777 = vrot.slane %v4776, 1
        %v4778 = vmax.f32 %v4776, %v4777
        %v4779 = vsel %vm4344, %v4277, -inf
        %v4780 = vrot.slane %v4779, 4
        %v4781 = vmax.f32 %v4779, %v4780
        %v4782 = vrot.slane %v4781, 2
        %v4783 = vmax.f32 %v4781, %v4782
        %v4784 = vrot.slane %v4783, 1
        %v4785 = vmax.f32 %v4783, %v4784
        %v4786 = vsel %vm4344, %v4279, -inf
        %v4787 = vrot.slane %v4786, 4
        %v4788 = vmax.f32 %v4786, %v4787
        %v4789 = vrot.slane %v4788, 2
        %v4790 = vmax.f32 %v4788, %v4789
        %v4791 = vrot.slane %v4790, 1
        %v4792 = vmax.f32 %v4790, %v4791
        %4793 = vst [vmem:[#allocation3] sm:$0xff] 0.0
        %4794 = vst [vmem:[#allocation3 + $0x8] sm:$0x3] 0.0
        %s4795 = scalar_lea.vmem [#allocation3], 144
        %4796 = vst [vmem:[%s4795] sm:$0xff] 0.0
        %4797 = vst [vmem:[%s4795 + $0x8] sm:$0x3] 0.0
        %s4798 = scalar_lea.vmem [#allocation3], 16
        %4799 = vst [vmem:[%s4798] sm:$0x1] 0.0
        %4800 = vst [vmem:[%s4798 + $0x10] sm:$0x1] 0.0
        %4801 = vst [vmem:[%s4798 + $0x20] sm:$0x1] 0.0
        %4802 = vst [vmem:[%s4798 + $0x30] sm:$0x1] 0.0
        %4803 = vst [vmem:[%s4798 + $0x40] sm:$0x1] 0.0
        %4804 = vst [vmem:[%s4798 + $0x50] sm:$0x1] 0.0
        %4805 = vst [vmem:[%s4798 + $0x60] sm:$0x1] 0.0
        %4806 = vst [vmem:[%s4798 + $0x70] sm:$0x1] 0.0
        %4807 = vst [vmem:[%s4798 + $0x9] sm:$0x1] 0.0
        %4808 = vst [vmem:[%s4798 + $0x19] sm:$0x1] 0.0
        %4809 = vst [vmem:[%s4798 + $0x29] sm:$0x1] 0.0
        %4810 = vst [vmem:[%s4798 + $0x39] sm:$0x1] 0.0
        %4811 = vst [vmem:[%s4798 + $0x49] sm:$0x1] 0.0
        %4812 = vst [vmem:[%s4798 + $0x59] sm:$0x1] 0.0
        %4813 = vst [vmem:[%s4798 + $0x69] sm:$0x1] 0.0
        %4814 = vst [vmem:[%s4798 + $0x79] sm:$0x1] 0.0
        %vm4879 = vcmask 1041409
        %v4880 = vsel %vm4879, %v4358, %v4351
        %vm4881 = vcmask 1042434
        %v4882 = vsel %vm4881, %v4365, %v4880
        %vm4883 = vcmask 1043459
        %v4884 = vsel %vm4883, %v4372, %v4882
        %vm4885 = vcmask 1044484
        %v4886 = vsel %vm4885, %v4379, %v4884
        %vm4887 = vcmask 1045509
        %v4888 = vsel %vm4887, %v4386, %v4886
        %vm4889 = vcmask 1046534
        %v4890 = vsel %vm4889, %v4393, %v4888
        %vm4891 = vcmask 1047559
        %v4892 = vsel %vm4891, %v4400, %v4890
        %v4893 = vsel %vm4879, %v4414, %v4407
        %v4894 = vsel %vm4881, %v4421, %v4893
        %v4895 = vsel %vm4883, %v4428, %v4894
        %v4896 = vsel %vm4885, %v4435, %v4895
        %v4897 = vsel %vm4887, %v4442, %v4896
        %v4898 = vsel %vm4889, %v4449, %v4897
        %v4899 = vsel %vm4891, %v4456, %v4898
        %v4900 = vsel %vm4879, %v4470, %v4463
        %v4901 = vsel %vm4881, %v4477, %v4900
        %v4902 = vsel %vm4883, %v4484, %v4901
        %v4903 = vsel %vm4885, %v4491, %v4902
        %v4904 = vsel %vm4887, %v4498, %v4903
        %v4905 = vsel %vm4889, %v4505, %v4904
        %v4906 = vsel %vm4891, %v4512, %v4905
        %v4907 = vsel %vm4879, %v4526, %v4519
        %v4908 = vsel %vm4881, %v4533, %v4907
        %v4909 = vsel %vm4883, %v4540, %v4908
        %v4910 = vsel %vm4885, %v4547, %v4909
        %v4911 = vsel %vm4887, %v4554, %v4910
        %v4912 = vsel %vm4889, %v4561, %v4911
        %v4913 = vsel %vm4891, %v4568, %v4912
        %v4914 = vsel %vm4879, %v4582, %v4575
        %v4915 = vsel %vm4881, %v4589, %v4914
        %v4916 = vsel %vm4883, %v4596, %v4915
        %v4917 = vsel %vm4885, %v4603, %v4916
        %v4918 = vsel %vm4887, %v4610, %v4917
        %v4919 = vsel %vm4889, %v4617, %v4918
        %v4920 = vsel %vm4891, %v4624, %v4919
        %v4921 = vsel %vm4879, %v4638, %v4631
        %v4922 = vsel %vm4881, %v4645, %v4921
        %v4923 = vsel %vm4883, %v4652, %v4922
        %v4924 = vsel %vm4885, %v4659, %v4923
        %v4925 = vsel %vm4887, %v4666, %v4924
        %v4926 = vsel %vm4889, %v4673, %v4925
        %v4927 = vsel %vm4891, %v4680, %v4926
        %v4928 = vsel %vm4879, %v4694, %v4687
        %v4929 = vsel %vm4881, %v4701, %v4928
        %v4930 = vsel %vm4883, %v4708, %v4929
        %v4931 = vsel %vm4885, %v4715, %v4930
        %v4932 = vsel %vm4887, %v4722, %v4931
        %v4933 = vsel %vm4889, %v4729, %v4932
        %v4934 = vsel %vm4891, %v4736, %v4933
        %v4935 = vsel %vm4879, %v4750, %v4743
        %v4936 = vsel %vm4881, %v4757, %v4935
        %v4937 = vsel %vm4883, %v4764, %v4936
        %v4938 = vsel %vm4885, %v4771, %v4937
        %v4939 = vsel %vm4887, %v4778, %v4938
        %v4940 = vsel %vm4889, %v4785, %v4939
        %v4941 = vsel %vm4891, %v4792, %v4940
        %4950 = vst [vmem:[%s4798 + $0x1] sm:$0xff] %v4892
        %4951 = vst [vmem:[%s4798 + $0x11] sm:$0xff] %v4899
        %4952 = vst [vmem:[%s4798 + $0x21] sm:$0xff] %v4906
        %4953 = vst [vmem:[%s4798 + $0x31] sm:$0xff] %v4913
        %4954 = vst [vmem:[%s4798 + $0x41] sm:$0xff] %v4920
        %4955 = vst [vmem:[%s4798 + $0x51] sm:$0xff] %v4927
        %4956 = vst [vmem:[%s4798 + $0x61] sm:$0xff] %v4934
        %4957 = vst [vmem:[%s4798 + $0x71] sm:$0xff] %v4941
        %v4958 = vld [vmem:[#allocation3] sm:$0xff]
        %v4959 = vld [vmem:[#allocation3 + $0x10] sm:$0xff]
        %v4960 = vld [vmem:[#allocation3 + $0x20] sm:$0xff]
        %v4961 = vld [vmem:[#allocation3 + $0x30] sm:$0xff]
        %v4962 = vld [vmem:[#allocation3 + $0x40] sm:$0xff]
        %v4963 = vld [vmem:[#allocation3 + $0x50] sm:$0xff]
        %v4964 = vld [vmem:[#allocation3 + $0x60] sm:$0xff]
        %v4965 = vld [vmem:[#allocation3 + $0x70] sm:$0xff]
        %v4966 = vld [vmem:[#allocation4] sm:$0xff]
        %v4967 = vld [vmem:[#allocation4 + $0x8] sm:$0xff]
        %v4968 = vld [vmem:[#allocation4 + $0x10] sm:$0xff]
        %v4969 = vld [vmem:[#allocation4 + $0x18] sm:$0xff]
        %v4970 = vld [vmem:[#allocation4 + $0x20] sm:$0xff]
        %v4971 = vld [vmem:[#allocation4 + $0x28] sm:$0xff]
        %v4972 = vld [vmem:[#allocation4 + $0x30] sm:$0xff]
        %v4973 = vld [vmem:[#allocation4 + $0x38] sm:$0xff]
        %v4974 = vld [vmem:[#allocation4 + $0x40] sm:$0xff]
        %v4975 = vld [vmem:[#allocation4 + $0x48] sm:$0xff]
        %v4976 = vld [vmem:[#allocation4 + $0x50] sm:$0xff]
        %v4977 = vld [vmem:[#allocation4 + $0x58] sm:$0xff]
        %v4978 = vld [vmem:[#allocation4 + $0x60] sm:$0xff]
        %v4979 = vld [vmem:[#allocation4 + $0x68] sm:$0xff]
        %v4980 = vld [vmem:[#allocation4 + $0x70] sm:$0xff]
        %v4981 = vld [vmem:[#allocation4 + $0x78] sm:$0xff]
        %v4982 = vld [vmem:[#allocation3 + $0x1] sm:$0xff]
        %v4983 = vld [vmem:[#allocation3 + $0x11] sm:$0xff]
        %v4984 = vld [vmem:[#allocation3 + $0x21] sm:$0xff]
        %v4985 = vld [vmem:[#allocation3 + $0x31] sm:$0xff]
        %v4986 = vld [vmem:[#allocation3 + $0x41] sm:$0xff]
        %v4987 = vld [vmem:[#allocation3 + $0x51] sm:$0xff]
        %v4988 = vld [vmem:[#allocation3 + $0x61] sm:$0xff]
        %v4989 = vld [vmem:[#allocation3 + $0x71] sm:$0xff]
        %s4990 = scalar_lea.vmem [#allocation4], 128
        %v4991 = vld [vmem:[%s4990] sm:$0xff]
        %v4992 = vld [vmem:[%s4990 + $0x8] sm:$0xff]
        %v4993 = vld [vmem:[%s4990 + $0x10] sm:$0xff]
        %v4994 = vld [vmem:[%s4990 + $0x18] sm:$0xff]
        %v4995 = vld [vmem:[%s4990 + $0x20] sm:$0xff]
        %v4996 = vld [vmem:[%s4990 + $0x28] sm:$0xff]
        %v4997 = vld [vmem:[%s4990 + $0x30] sm:$0xff]
        %v4998 = vld [vmem:[%s4990 + $0x38] sm:$0xff]
        %v4999 = vld [vmem:[%s4990 + $0x40] sm:$0xff]
        %v5000 = vld [vmem:[%s4990 + $0x48] sm:$0xff]
        %v5001 = vld [vmem:[%s4990 + $0x50] sm:$0xff]
        %v5002 = vld [vmem:[%s4990 + $0x58] sm:$0xff]
        %v5003 = vld [vmem:[%s4990 + $0x60] sm:$0xff]
        %v5004 = vld [vmem:[%s4990 + $0x68] sm:$0xff]
        %v5005 = vld [vmem:[%s4990 + $0x70] sm:$0xff]
        %v5006 = vld [vmem:[%s4990 + $0x78] sm:$0xff]
        %5007 = vmatprep.subr.mxu0 0.0
        %5008 = vmatpush1.msra.mxu0 %v4991
        %5009 = vmatprep.subr.mxu0 0.0
        %5010 = vmatpush1.msra.mxu0 %v4992
        %5011 = vmatprep.subr.mxu0 0.0
        %5012 = vmatpush1.msra.mxu0 %v4993
        %5013 = vmatprep.subr.mxu0 0.0
        %5014 = vmatpush1.msra.mxu0 %v4994
        %5015 = vmatprep.subr.mxu0 0.0
        %5016 = vmatpush1.msra.mxu0 %v4995
        %5017 = vmatprep.subr.mxu0 0.0
        %5018 = vmatpush1.msra.mxu0 %v4996
        %5019 = vmatprep.subr.mxu0 0.0
        %5020 = vmatpush1.msra.mxu0 %v4997
        %5021 = vmatprep.subr.mxu0 0.0
        %5022 = vmatpush1.msra.mxu0 %v4998
        %5023 = vmatprep.subr.mxu0 0.0
        %5024 = vmatpush1.msra.mxu0 %v4999
        %5025 = vmatprep.subr.mxu0 0.0
        %5026 = vmatpush1.msra.mxu0 %v5000
        %5027 = vmatprep.subr.mxu0 0.0
        %5028 = vmatpush1.msra.mxu0 %v5001
        %5029 = vmatprep.subr.mxu0 0.0
        %5030 = vmatpush1.msra.mxu0 %v5002
        %5031 = vmatprep.subr.mxu0 0.0
        %5032 = vmatpush1.msra.mxu0 %v5003
        %5033 = vmatprep.subr.mxu0 0.0
        %5034 = vmatpush1.msra.mxu0 %v5004
        %5035 = vmatprep.subr.mxu0 0.0
        %5036 = vmatpush1.msra.mxu0 %v5005
        %5037 = vmatprep.subr.mxu0 0.0
        %5038 = vmatpush1.msra.mxu0 %v5006
        %5039 = vmatprep.subr.mxu0 0.0
        %5040 = vmatpush1.msra.mxu0 0.0
        %5041 = vmatprep.subr.mxu0 0.0
        %5042 = vmatpush1.msra.mxu0 0.0
        %5043 = vmatprep.subr.mxu0 0.0
        %5044 = vmatpush1.msra.mxu0 0.0
        %5045 = vmatprep.subr.mxu0 0.0
        %5046 = vmatpush1.msra.mxu0 0.0
        %5047 = vmatprep.subr.mxu0 0.0
        %5048 = vmatpush1.msra.mxu0 0.0
        %5049 = vmatprep.subr.mxu0 0.0
        %5050 = vmatpush1.msra.mxu0 0.0
        %5051 = vmatprep.subr.mxu0 0.0
        %5052 = vmatpush1.msra.mxu0 0.0
        %5053 = vmatprep.subr.mxu0 0.0
        %5054 = vmatpush1.msra.mxu0 0.0
        %5055 = vmatprep.subr.mxu0 0.0
        %5056 = vmatpush1.msra.mxu0 0.0
        %5057 = vmatprep.subr.mxu0 0.0
        %5058 = vmatpush1.msra.mxu0 0.0
        %5059 = vmatprep.subr.mxu0 0.0
        %5060 = vmatpush1.msra.mxu0 0.0
        %5061 = vmatprep.subr.mxu0 0.0
        %5062 = vmatpush1.msra.mxu0 0.0
        %5063 = vmatprep.subr.mxu0 0.0
        %5064 = vmatpush1.msra.mxu0 0.0
        %5065 = vmatprep.subr.mxu0 0.0
        %5066 = vmatpush1.msra.mxu0 0.0
        %5067 = vmatprep.subr.mxu0 0.0
        %5068 = vmatpush1.msra.mxu0 0.0
        %5069 = vmatprep.subr.mxu0 0.0
        %5070 = vmatpush1.msra.mxu0 0.0
        %5071 = vmatprep.mubr.f32.mxu0 0.0
        %5072 = vmatmul.mubr.f32.gmra.mrb[0].mxu0 %v4982
        %v5073 = vpop.f32.mrb[0].mxu0
        %v5074 = vadd.f32 0.0, %v5073
        %v5075 = vpop.f32.mrb[0].mxu0
        %5076 = vmatprep.mubr.f32.mxu0 0.0
        %5077 = vmatmul.mubr.f32.gmra.mrb[0].mxu0 %v4983
        %v5078 = vpop.f32.mrb[0].mxu0
        %v5079 = vadd.f32 0.0, %v5078
        %v5080 = vpop.f32.mrb[0].mxu0
        %5081 = vmatprep.mubr.f32.mxu0 0.0
        %5082 = vmatmul.mubr.f32.gmra.mrb[0].mxu0 %v4984
        %v5083 = vpop.f32.mrb[0].mxu0
        %v5084 = vadd.f32 0.0, %v5083
        %v5085 = vpop.f32.mrb[0].mxu0
        %5086 = vmatprep.mubr.f32.mxu0 0.0
        %5087 = vmatmul.mubr.f32.gmra.mrb[0].mxu0 %v4985
        %v5088 = vpop.f32.mrb[0].mxu0
        %v5089 = vadd.f32 0.0, %v5088
        %v5090 = vpop.f32.mrb[0].mxu0
        %5091 = vmatprep.mubr.f32.mxu0 0.0
        %5092 = vmatmul.mubr.f32.gmra.mrb[0].mxu0 %v4986
        %v5093 = vpop.f32.mrb[0].mxu0
        %v5094 = vadd.f32 0.0, %v5093
        %v5095 = vpop.f32.mrb[0].mxu0
        %5096 = vmatprep.mubr.f32.mxu0 0.0
        %5097 = vmatmul.mubr.f32.gmra.mrb[0].mxu0 %v4987
        %v5098 = vpop.f32.mrb[0].mxu0
        %v5099 = vadd.f32 0.0, %v5098
        %v5100 = vpop.f32.mrb[0].mxu0
        %5101 = vmatprep.mubr.f32.mxu0 0.0
        %5102 = vmatmul.mubr.f32.gmra.mrb[0].mxu0 %v4988
        %v5103 = vpop.f32.mrb[0].mxu0
        %v5104 = vadd.f32 0.0, %v5103
        %v5105 = vpop.f32.mrb[0].mxu0
        %5106 = vmatprep.mubr.f32.mxu0 0.0
        %5107 = vmatmul.mubr.f32.gmra.mrb[0].mxu0 %v4989
        %v5108 = vpop.f32.mrb[0].mxu0
        %v5109 = vadd.f32 0.0, %v5108
        %v5110 = vpop.f32.mrb[0].mxu0
        %5111 = vdwg.mxu0
        %5112 = vmatprep.subr.mxu0 0.0
        %5113 = vmatpush1.msra.mxu0 %v4966
        %5114 = vmatprep.subr.mxu0 0.0
        %5115 = vmatpush1.msra.mxu0 %v4967
        %5116 = vmatprep.subr.mxu0 0.0
        %5117 = vmatpush1.msra.mxu0 %v4968
        %5118 = vmatprep.subr.mxu0 0.0
        %5119 = vmatpush1.msra.mxu0 %v4969
        %5120 = vmatprep.subr.mxu0 0.0
        %5121 = vmatpush1.msra.mxu0 %v4970
        %5122 = vmatprep.subr.mxu0 0.0
        %5123 = vmatpush1.msra.mxu0 %v4971
        %5124 = vmatprep.subr.mxu0 0.0
        %5125 = vmatpush1.msra.mxu0 %v4972
        %5126 = vmatprep.subr.mxu0 0.0
        %5127 = vmatpush1.msra.mxu0 %v4973
        %5128 = vmatprep.subr.mxu0 0.0
        %5129 = vmatpush1.msra.mxu0 %v4974
        %5130 = vmatprep.subr.mxu0 0.0
        %5131 = vmatpush1.msra.mxu0 %v4975
        %5132 = vmatprep.subr.mxu0 0.0
        %5133 = vmatpush1.msra.mxu0 %v4976
        %5134 = vmatprep.subr.mxu0 0.0
        %5135 = vmatpush1.msra.mxu0 %v4977
        %5136 = vmatprep.subr.mxu0 0.0
        %5137 = vmatpush1.msra.mxu0 %v4978
        %5138 = vmatprep.subr.mxu0 0.0
        %5139 = vmatpush1.msra.mxu0 %v4979
        %5140 = vmatprep.subr.mxu0 0.0
        %5141 = vmatpush1.msra.mxu0 %v4980
        %5142 = vmatprep.subr.mxu0 0.0
        %5143 = vmatpush1.msra.mxu0 %v4981
        %5144 = vmatprep.subr.mxu0 0.0
        %5145 = vmatpush1.msra.mxu0 0.0
        %5146 = vmatprep.subr.mxu0 0.0
        %5147 = vmatpush1.msra.mxu0 0.0
        %5148 = vmatprep.subr.mxu0 0.0
        %5149 = vmatpush1.msra.mxu0 0.0
        %5150 = vmatprep.subr.mxu0 0.0
        %5151 = vmatpush1.msra.mxu0 0.0
        %5152 = vmatprep.subr.mxu0 0.0
        %5153 = vmatpush1.msra.mxu0 0.0
        %5154 = vmatprep.subr.mxu0 0.0
        %5155 = vmatpush1.msra.mxu0 0.0
        %5156 = vmatprep.subr.mxu0 0.0
        %5157 = vmatpush1.msra.mxu0 0.0
        %5158 = vmatprep.subr.mxu0 0.0
        %5159 = vmatpush1.msra.mxu0 0.0
        %5160 = vmatprep.subr.mxu0 0.0
        %5161 = vmatpush1.msra.mxu0 0.0
        %5162 = vmatprep.subr.mxu0 0.0
        %5163 = vmatpush1.msra.mxu0 0.0
        %5164 = vmatprep.subr.mxu0 0.0
        %5165 = vmatpush1.msra.mxu0 0.0
        %5166 = vmatprep.subr.mxu0 0.0
        %5167 = vmatpush1.msra.mxu0 0.0
        %5168 = vmatprep.subr.mxu0 0.0
        %5169 = vmatpush1.msra.mxu0 0.0
        %5170 = vmatprep.subr.mxu0 0.0
        %5171 = vmatpush1.msra.mxu0 0.0
        %5172 = vmatprep.subr.mxu0 0.0
        %5173 = vmatpush1.msra.mxu0 0.0
        %5174 = vmatprep.subr.mxu0 0.0
        %5175 = vmatpush1.msra.mxu0 0.0
        %5176 = vmatprep.mubr.f32.mxu0 0.0
        %5177 = vmatmul.mubr.f32.gmra.mrb[0].mxu0 %v4958
        %v5178 = vpop.f32.mrb[0].mxu0
        %v5179 = vadd.f32 %v5074, %v5178
        %v5180 = vpop.f32.mrb[0].mxu0
        %5181 = vmatprep.mubr.f32.mxu0 0.0
        %5182 = vmatmul.mubr.f32.gmra.mrb[0].mxu0 %v4959
        %v5183 = vpop.f32.mrb[0].mxu0
        %v5184 = vadd.f32 %v5079, %v5183
        %v5185 = vpop.f32.mrb[0].mxu0
        %5186 = vmatprep.mubr.f32.mxu0 0.0
        %5187 = vmatmul.mubr.f32.gmra.mrb[0].mxu0 %v4960
        %v5188 = vpop.f32.mrb[0].mxu0
        %v5189 = vadd.f32 %v5084, %v5188
        %v5190 = vpop.f32.mrb[0].mxu0
        %5191 = vmatprep.mubr.f32.mxu0 0.0
        %5192 = vmatmul.mubr.f32.gmra.mrb[0].mxu0 %v4961
        %v5193 = vpop.f32.mrb[0].mxu0
        %v5194 = vadd.f32 %v5089, %v5193
        %v5195 = vpop.f32.mrb[0].mxu0
        %5196 = vmatprep.mubr.f32.mxu0 0.0
        %5197 = vmatmul.mubr.f32.gmra.mrb[0].mxu0 %v4962
        %v5198 = vpop.f32.mrb[0].mxu0
        %v5199 = vadd.f32 %v5094, %v5198
        %v5200 = vpop.f32.mrb[0].mxu0
        %5201 = vmatprep.mubr.f32.mxu0 0.0
        %5202 = vmatmul.mubr.f32.gmra.mrb[0].mxu0 %v4963
        %v5203 = vpop.f32.mrb[0].mxu0
        %v5204 = vadd.f32 %v5099, %v5203
        %v5205 = vpop.f32.mrb[0].mxu0
        %5206 = vmatprep.mubr.f32.mxu0 0.0
        %5207 = vmatmul.mubr.f32.gmra.mrb[0].mxu0 %v4964
        %v5208 = vpop.f32.mrb[0].mxu0
        %v5209 = vadd.f32 %v5104, %v5208
        %v5210 = vpop.f32.mrb[0].mxu0
        %5211 = vmatprep.mubr.f32.mxu0 0.0
        %5212 = vmatmul.mubr.f32.gmra.mrb[0].mxu0 %v4965
        %v5213 = vpop.f32.mrb[0].mxu0
        %v5214 = vadd.f32 %v5109, %v5213
        %v5215 = vpop.f32.mrb[0].mxu0
        %5216 = vdwg.mxu0
        %v5217 = vld [vmem:[#allocation3 + $0x2] sm:$0xff]
        %v5218 = vld [vmem:[#allocation3 + $0x12] sm:$0xff]
        %v5219 = vld [vmem:[#allocation3 + $0x22] sm:$0xff]
        %v5220 = vld [vmem:[#allocation3 + $0x32] sm:$0xff]
        %v5221 = vld [vmem:[#allocation3 + $0x42] sm:$0xff]
        %v5222 = vld [vmem:[#allocation3 + $0x52] sm:$0xff]
        %v5223 = vld [vmem:[#allocation3 + $0x62] sm:$0xff]
        %v5224 = vld [vmem:[#allocation3 + $0x72] sm:$0xff]
        %s5225 = scalar_lea.vmem [#allocation4], 256
        %v5226 = vld [vmem:[%s5225] sm:$0xff]
        %v5227 = vld [vmem:[%s5225 + $0x8] sm:$0xff]
        %v5228 = vld [vmem:[%s5225 + $0x10] sm:$0xff]
        %v5229 = vld [vmem:[%s5225 + $0x18] sm:$0xff]
        %v5230 = vld [vmem:[%s5225 + $0x20] sm:$0xff]
        %v5231 = vld [vmem:[%s5225 + $0x28] sm:$0xff]
        %v5232 = vld [vmem:[%s5225 + $0x30] sm:$0xff]
        %v5233 = vld [vmem:[%s5225 + $0x38] sm:$0xff]
        %v5234 = vld [vmem:[%s5225 + $0x40] sm:$0xff]
        %v5235 = vld [vmem:[%s5225 + $0x48] sm:$0xff]
        %v5236 = vld [vmem:[%s5225 + $0x50] sm:$0xff]
        %v5237 = vld [vmem:[%s5225 + $0x58] sm:$0xff]
        %v5238 = vld [vmem:[%s5225 + $0x60] sm:$0xff]
        %v5239 = vld [vmem:[%s5225 + $0x68] sm:$0xff]
        %v5240 = vld [vmem:[%s5225 + $0x70] sm:$0xff]
        %v5241 = vld [vmem:[%s5225 + $0x78] sm:$0xff]
        %5242 = vmatprep.subr.mxu0 0.0
        %5243 = vmatpush1.msra.mxu0 %v5226
        %5244 = vmatprep.subr.mxu0 0.0
        %5245 = vmatpush1.msra.mxu0 %v5227
        %5246 = vmatprep.subr.mxu0 0.0
        %5247 = vmatpush1.msra.mxu0 %v5228
        %5248 = vmatprep.subr.mxu0 0.0
        %5249 = vmatpush1.msra.mxu0 %v5229
        %5250 = vmatprep.subr.mxu0 0.0
        %5251 = vmatpush1.msra.mxu0 %v5230
        %5252 = vmatprep.subr.mxu0 0.0
        %5253 = vmatpush1.msra.mxu0 %v5231
        %5254 = vmatprep.subr.mxu0 0.0
        %5255 = vmatpush1.msra.mxu0 %v5232
        %5256 = vmatprep.subr.mxu0 0.0
        %5257 = vmatpush1.msra.mxu0 %v5233
        %5258 = vmatprep.subr.mxu0 0.0
        %5259 = vmatpush1.msra.mxu0 %v5234
        %5260 = vmatprep.subr.mxu0 0.0
        %5261 = vmatpush1.msra.mxu0 %v5235
        %5262 = vmatprep.subr.mxu0 0.0
        %5263 = vmatpush1.msra.mxu0 %v5236
        %5264 = vmatprep.subr.mxu0 0.0
        %5265 = vmatpush1.msra.mxu0 %v5237
        %5266 = vmatprep.subr.mxu0 0.0
        %5267 = vmatpush1.msra.mxu0 %v5238
        %5268 = vmatprep.subr.mxu0 0.0
        %5269 = vmatpush1.msra.mxu0 %v5239
        %5270 = vmatprep.subr.mxu0 0.0
        %5271 = vmatpush1.msra.mxu0 %v5240
        %5272 = vmatprep.subr.mxu0 0.0
        %5273 = vmatpush1.msra.mxu0 %v5241
        %5274 = vmatprep.subr.mxu0 0.0
        %5275 = vmatpush1.msra.mxu0 0.0
        %5276 = vmatprep.subr.mxu0 0.0
        %5277 = vmatpush1.msra.mxu0 0.0
        %5278 = vmatprep.subr.mxu0 0.0
        %5279 = vmatpush1.msra.mxu0 0.0
        %5280 = vmatprep.subr.mxu0 0.0
        %5281 = vmatpush1.msra.mxu0 0.0
        %5282 = vmatprep.subr.mxu0 0.0
        %5283 = vmatpush1.msra.mxu0 0.0
        %5284 = vmatprep.subr.mxu0 0.0
        %5285 = vmatpush1.msra.mxu0 0.0
        %5286 = vmatprep.subr.mxu0 0.0
        %5287 = vmatpush1.msra.mxu0 0.0
        %5288 = vmatprep.subr.mxu0 0.0
        %5289 = vmatpush1.msra.mxu0 0.0
        %5290 = vmatprep.subr.mxu0 0.0
        %5291 = vmatpush1.msra.mxu0 0.0
        %5292 = vmatprep.subr.mxu0 0.0
        %5293 = vmatpush1.msra.mxu0 0.0
        %5294 = vmatprep.subr.mxu0 0.0
        %5295 = vmatpush1.msra.mxu0 0.0
        %5296 = vmatprep.subr.mxu0 0.0
        %5297 = vmatpush1.msra.mxu0 0.0
        %5298 = vmatprep.subr.mxu0 0.0
        %5299 = vmatpush1.msra.mxu0 0.0
        %5300 = vmatprep.subr.mxu0 0.0
        %5301 = vmatpush1.msra.mxu0 0.0
        %5302 = vmatprep.subr.mxu0 0.0
        %5303 = vmatpush1.msra.mxu0 0.0
        %5304 = vmatprep.subr.mxu0 0.0
        %5305 = vmatpush1.msra.mxu0 0.0
        %5306 = vmatprep.mubr.f32.mxu0 0.0
        %5307 = vmatmul.mubr.f32.gmra.mrb[0].mxu0 %v5217
        %v5308 = vpop.f32.mrb[0].mxu0
        %v5309 = vadd.f32 0.0, %v5308
        %v5310 = vpop.f32.mrb[0].mxu0
        %5311 = vmatprep.mubr.f32.mxu0 0.0
        %5312 = vmatmul.mubr.f32.gmra.mrb[0].mxu0 %v5218
        %v5313 = vpop.f32.mrb[0].mxu0
        %v5314 = vadd.f32 0.0, %v5313
        %v5315 = vpop.f32.mrb[0].mxu0
        %5316 = vmatprep.mubr.f32.mxu0 0.0
        %5317 = vmatmul.mubr.f32.gmra.mrb[0].mxu0 %v5219
        %v5318 = vpop.f32.mrb[0].mxu0
        %v5319 = vadd.f32 0.0, %v5318
        %v5320 = vpop.f32.mrb[0].mxu0
        %5321 = vmatprep.mubr.f32.mxu0 0.0
        %5322 = vmatmul.mubr.f32.gmra.mrb[0].mxu0 %v5220
        %v5323 = vpop.f32.mrb[0].mxu0
        %v5324 = vadd.f32 0.0, %v5323
        %v5325 = vpop.f32.mrb[0].mxu0
        %5326 = vmatprep.mubr.f32.mxu0 0.0
        %5327 = vmatmul.mubr.f32.gmra.mrb[0].mxu0 %v5221
        %v5328 = vpop.f32.mrb[0].mxu0
        %v5329 = vadd.f32 0.0, %v5328
        %v5330 = vpop.f32.mrb[0].mxu0
        %5331 = vmatprep.mubr.f32.mxu0 0.0
        %5332 = vmatmul.mubr.f32.gmra.mrb[0].mxu0 %v5222
        %v5333 = vpop.f32.mrb[0].mxu0
        %v5334 = vadd.f32 0.0, %v5333
        %v5335 = vpop.f32.mrb[0].mxu0
        %5336 = vmatprep.mubr.f32.mxu0 0.0
        %5337 = vmatmul.mubr.f32.gmra.mrb[0].mxu0 %v5223
        %v5338 = vpop.f32.mrb[0].mxu0
        %v5339 = vadd.f32 0.0, %v5338
        %v5340 = vpop.f32.mrb[0].mxu0
        %5341 = vmatprep.mubr.f32.mxu0 0.0
        %5342 = vmatmul.mubr.f32.gmra.mrb[0].mxu0 %v5224
        %v5343 = vpop.f32.mrb[0].mxu0
        %v5344 = vadd.f32 0.0, %v5343
        %v5345 = vpop.f32.mrb[0].mxu0
        %5346 = vdwg.mxu0
        %v5347 = vadd.f32 %v5179, %v5309
        %v5348 = vadd.f32 %v5184, %v5314
        %v5349 = vadd.f32 %v5189, %v5319
        %v5350 = vadd.f32 %v5194, %v5324
        %v5351 = vadd.f32 %v5199, %v5329
        %v5352 = vadd.f32 %v5204, %v5334
        %v5353 = vadd.f32 %v5209, %v5339
        %v5354 = vadd.f32 %v5214, %v5344
        %v5355 = vld [vmem:[%s4798] sm:$0xff]
        %v5356 = vld [vmem:[%s4798 + $0x10] sm:$0xff]
        %v5357 = vld [vmem:[%s4798 + $0x20] sm:$0xff]
        %v5358 = vld [vmem:[%s4798 + $0x30] sm:$0xff]
        %v5359 = vld [vmem:[%s4798 + $0x40] sm:$0xff]
        %v5360 = vld [vmem:[%s4798 + $0x50] sm:$0xff]
        %v5361 = vld [vmem:[%s4798 + $0x60] sm:$0xff]
        %v5362 = vld [vmem:[%s4798 + $0x70] sm:$0xff]
        %s5363 = scalar_lea.vmem [#allocation4], 384
        %v5364 = vld [vmem:[%s5363] sm:$0xff]
        %v5365 = vld [vmem:[%s5363 + $0x8] sm:$0xff]
        %v5366 = vld [vmem:[%s5363 + $0x10] sm:$0xff]
        %v5367 = vld [vmem:[%s5363 + $0x18] sm:$0xff]
        %v5368 = vld [vmem:[%s5363 + $0x20] sm:$0xff]
        %v5369 = vld [vmem:[%s5363 + $0x28] sm:$0xff]
        %v5370 = vld [vmem:[%s5363 + $0x30] sm:$0xff]
        %v5371 = vld [vmem:[%s5363 + $0x38] sm:$0xff]
        %v5372 = vld [vmem:[%s5363 + $0x40] sm:$0xff]
        %v5373 = vld [vmem:[%s5363 + $0x48] sm:$0xff]
        %v5374 = vld [vmem:[%s5363 + $0x50] sm:$0xff]
        %v5375 = vld [vmem:[%s5363 + $0x58] sm:$0xff]
        %v5376 = vld [vmem:[%s5363 + $0x60] sm:$0xff]
        %v5377 = vld [vmem:[%s5363 + $0x68] sm:$0xff]
        %v5378 = vld [vmem:[%s5363 + $0x70] sm:$0xff]
        %v5379 = vld [vmem:[%s5363 + $0x78] sm:$0xff]
        %5380 = vmatprep.subr.mxu0 0.0
        %5381 = vmatpush1.msra.mxu0 %v5364
        %5382 = vmatprep.subr.mxu0 0.0
        %5383 = vmatpush1.msra.mxu0 %v5365
        %5384 = vmatprep.subr.mxu0 0.0
        %5385 = vmatpush1.msra.mxu0 %v5366
        %5386 = vmatprep.subr.mxu0 0.0
        %5387 = vmatpush1.msra.mxu0 %v5367
        %5388 = vmatprep.subr.mxu0 0.0
        %5389 = vmatpush1.msra.mxu0 %v5368
        %5390 = vmatprep.subr.mxu0 0.0
        %5391 = vmatpush1.msra.mxu0 %v5369
        %5392 = vmatprep.subr.mxu0 0.0
        %5393 = vmatpush1.msra.mxu0 %v5370
        %5394 = vmatprep.subr.mxu0 0.0
        %5395 = vmatpush1.msra.mxu0 %v5371
        %5396 = vmatprep.subr.mxu0 0.0
        %5397 = vmatpush1.msra.mxu0 %v5372
        %5398 = vmatprep.subr.mxu0 0.0
        %5399 = vmatpush1.msra.mxu0 %v5373
        %5400 = vmatprep.subr.mxu0 0.0
        %5401 = vmatpush1.msra.mxu0 %v5374
        %5402 = vmatprep.subr.mxu0 0.0
        %5403 = vmatpush1.msra.mxu0 %v5375
        %5404 = vmatprep.subr.mxu0 0.0
        %5405 = vmatpush1.msra.mxu0 %v5376
        %5406 = vmatprep.subr.mxu0 0.0
        %5407 = vmatpush1.msra.mxu0 %v5377
        %5408 = vmatprep.subr.mxu0 0.0
        %5409 = vmatpush1.msra.mxu0 %v5378
        %5410 = vmatprep.subr.mxu0 0.0
        %5411 = vmatpush1.msra.mxu0 %v5379
        %5412 = vmatprep.subr.mxu0 0.0
        %5413 = vmatpush1.msra.mxu0 0.0
        %5414 = vmatprep.subr.mxu0 0.0
        %5415 = vmatpush1.msra.mxu0 0.0
        %5416 = vmatprep.subr.mxu0 0.0
        %5417 = vmatpush1.msra.mxu0 0.0
        %5418 = vmatprep.subr.mxu0 0.0
        %5419 = vmatpush1.msra.mxu0 0.0
        %5420 = vmatprep.subr.mxu0 0.0
        %5421 = vmatpush1.msra.mxu0 0.0
        %5422 = vmatprep.subr.mxu0 0.0
        %5423 = vmatpush1.msra.mxu0 0.0
        %5424 = vmatprep.subr.mxu0 0.0
        %5425 = vmatpush1.msra.mxu0 0.0
        %5426 = vmatprep.subr.mxu0 0.0
        %5427 = vmatpush1.msra.mxu0 0.0
        %5428 = vmatprep.subr.mxu0 0.0
        %5429 = vmatpush1.msra.mxu0 0.0
        %5430 = vmatprep.subr.mxu0 0.0
        %5431 = vmatpush1.msra.mxu0 0.0
        %5432 = vmatprep.subr.mxu0 0.0
        %5433 = vmatpush1.msra.mxu0 0.0
        %5434 = vmatprep.subr.mxu0 0.0
        %5435 = vmatpush1.msra.mxu0 0.0
        %5436 = vmatprep.subr.mxu0 0.0
        %5437 = vmatpush1.msra.mxu0 0.0
        %5438 = vmatprep.subr.mxu0 0.0
        %5439 = vmatpush1.msra.mxu0 0.0
        %5440 = vmatprep.subr.mxu0 0.0
        %5441 = vmatpush1.msra.mxu0 0.0
        %5442 = vmatprep.subr.mxu0 0.0
        %5443 = vmatpush1.msra.mxu0 0.0
        %5444 = vmatprep.mubr.f32.mxu0 0.0
        %5445 = vmatmul.mubr.f32.gmra.mrb[0].mxu0 %v5355
        %v5446 = vpop.f32.mrb[0].mxu0
        %v5447 = vadd.f32 0.0, %v5446
        %v5448 = vpop.f32.mrb[0].mxu0
        %5449 = vmatprep.mubr.f32.mxu0 0.0
        %5450 = vmatmul.mubr.f32.gmra.mrb[0].mxu0 %v5356
        %v5451 = vpop.f32.mrb[0].mxu0
        %v5452 = vadd.f32 0.0, %v5451
        %v5453 = vpop.f32.mrb[0].mxu0
        %5454 = vmatprep.mubr.f32.mxu0 0.0
        %5455 = vmatmul.mubr.f32.gmra.mrb[0].mxu0 %v5357
        %v5456 = vpop.f32.mrb[0].mxu0
        %v5457 = vadd.f32 0.0, %v5456
        %v5458 = vpop.f32.mrb[0].mxu0
        %5459 = vmatprep.mubr.f32.mxu0 0.0
        %5460 = vmatmul.mubr.f32.gmra.mrb[0].mxu0 %v5358
        %v5461 = vpop.f32.mrb[0].mxu0
        %v5462 = vadd.f32 0.0, %v5461
        %v5463 = vpop.f32.mrb[0].mxu0
        %5464 = vmatprep.mubr.f32.mxu0 0.0
        %5465 = vmatmul.mubr.f32.gmra.mrb[0].mxu0 %v5359
        %v5466 = vpop.f32.mrb[0].mxu0
        %v5467 = vadd.f32 0.0, %v5466
        %v5468 = vpop.f32.mrb[0].mxu0
        %5469 = vmatprep.mubr.f32.mxu0 0.0
        %5470 = vmatmul.mubr.f32.gmra.mrb[0].mxu0 %v5360
        %v5471 = vpop.f32.mrb[0].mxu0
        %v5472 = vadd.f32 0.0, %v5471
        %v5473 = vpop.f32.mrb[0].mxu0
        %5474 = vmatprep.mubr.f32.mxu0 0.0
        %5475 = vmatmul.mubr.f32.gmra.mrb[0].mxu0 %v5361
        %v5476 = vpop.f32.mrb[0].mxu0
        %v5477 = vadd.f32 0.0, %v5476
        %v5478 = vpop.f32.mrb[0].mxu0
        %5479 = vmatprep.mubr.f32.mxu0 0.0
        %5480 = vmatmul.mubr.f32.gmra.mrb[0].mxu0 %v5362
        %v5481 = vpop.f32.mrb[0].mxu0
        %v5482 = vadd.f32 0.0, %v5481
        %v5483 = vpop.f32.mrb[0].mxu0
        %5484 = vdwg.mxu0
        %v5485 = vadd.f32 %v5347, %v5447
        %v5486 = vadd.f32 %v5348, %v5452
        %v5487 = vadd.f32 %v5349, %v5457
        %v5488 = vadd.f32 %v5350, %v5462
        %v5489 = vadd.f32 %v5351, %v5467
        %v5490 = vadd.f32 %v5352, %v5472
        %v5491 = vadd.f32 %v5353, %v5477
        %v5492 = vadd.f32 %v5354, %v5482
        %v5493 = vld [vmem:[%s4798 + $0x1] sm:$0xff]
        %v5494 = vld [vmem:[%s4798 + $0x11] sm:$0xff]
        %v5495 = vld [vmem:[%s4798 + $0x21] sm:$0xff]
        %v5496 = vld [vmem:[%s4798 + $0x31] sm:$0xff]
        %v5497 = vld [vmem:[%s4798 + $0x41] sm:$0xff]
        %v5498 = vld [vmem:[%s4798 + $0x51] sm:$0xff]
        %v5499 = vld [vmem:[%s4798 + $0x61] sm:$0xff]
        %v5500 = vld [vmem:[%s4798 + $0x71] sm:$0xff]
        %s5501 = scalar_lea.vmem [#allocation4], 512
        %v5502 = vld [vmem:[%s5501] sm:$0xff]
        %v5503 = vld [vmem:[%s5501 + $0x8] sm:$0xff]
        %v5504 = vld [vmem:[%s5501 + $0x10] sm:$0xff]
        %v5505 = vld [vmem:[%s5501 + $0x18] sm:$0xff]
        %v5506 = vld [vmem:[%s5501 + $0x20] sm:$0xff]
        %v5507 = vld [vmem:[%s5501 + $0x28] sm:$0xff]
        %v5508 = vld [vmem:[%s5501 + $0x30] sm:$0xff]
        %v5509 = vld [vmem:[%s5501 + $0x38] sm:$0xff]
        %v5510 = vld [vmem:[%s5501 + $0x40] sm:$0xff]
        %v5511 = vld [vmem:[%s5501 + $0x48] sm:$0xff]
        %v5512 = vld [vmem:[%s5501 + $0x50] sm:$0xff]
        %v5513 = vld [vmem:[%s5501 + $0x58] sm:$0xff]
        %v5514 = vld [vmem:[%s5501 + $0x60] sm:$0xff]
        %v5515 = vld [vmem:[%s5501 + $0x68] sm:$0xff]
        %v5516 = vld [vmem:[%s5501 + $0x70] sm:$0xff]
        %v5517 = vld [vmem:[%s5501 + $0x78] sm:$0xff]
        %5518 = vmatprep.subr.mxu0 0.0
        %5519 = vmatpush1.msra.mxu0 %v5502
        %5520 = vmatprep.subr.mxu0 0.0
        %5521 = vmatpush1.msra.mxu0 %v5503
        %5522 = vmatprep.subr.mxu0 0.0
        %5523 = vmatpush1.msra.mxu0 %v5504
        %5524 = vmatprep.subr.mxu0 0.0
        %5525 = vmatpush1.msra.mxu0 %v5505
        %5526 = vmatprep.subr.mxu0 0.0
        %5527 = vmatpush1.msra.mxu0 %v5506
        %5528 = vmatprep.subr.mxu0 0.0
        %5529 = vmatpush1.msra.mxu0 %v5507
        %5530 = vmatprep.subr.mxu0 0.0
        %5531 = vmatpush1.msra.mxu0 %v5508
        %5532 = vmatprep.subr.mxu0 0.0
        %5533 = vmatpush1.msra.mxu0 %v5509
        %5534 = vmatprep.subr.mxu0 0.0
        %5535 = vmatpush1.msra.mxu0 %v5510
        %5536 = vmatprep.subr.mxu0 0.0
        %5537 = vmatpush1.msra.mxu0 %v5511
        %5538 = vmatprep.subr.mxu0 0.0
        %5539 = vmatpush1.msra.mxu0 %v5512
        %5540 = vmatprep.subr.mxu0 0.0
        %5541 = vmatpush1.msra.mxu0 %v5513
        %5542 = vmatprep.subr.mxu0 0.0
        %5543 = vmatpush1.msra.mxu0 %v5514
        %5544 = vmatprep.subr.mxu0 0.0
        %5545 = vmatpush1.msra.mxu0 %v5515
        %5546 = vmatprep.subr.mxu0 0.0
        %5547 = vmatpush1.msra.mxu0 %v5516
        %5548 = vmatprep.subr.mxu0 0.0
        %5549 = vmatpush1.msra.mxu0 %v5517
        %5550 = vmatprep.subr.mxu0 0.0
        %5551 = vmatpush1.msra.mxu0 0.0
        %5552 = vmatprep.subr.mxu0 0.0
        %5553 = vmatpush1.msra.mxu0 0.0
        %5554 = vmatprep.subr.mxu0 0.0
        %5555 = vmatpush1.msra.mxu0 0.0
        %5556 = vmatprep.subr.mxu0 0.0
        %5557 = vmatpush1.msra.mxu0 0.0
        %5558 = vmatprep.subr.mxu0 0.0
        %5559 = vmatpush1.msra.mxu0 0.0
        %5560 = vmatprep.subr.mxu0 0.0
        %5561 = vmatpush1.msra.mxu0 0.0
        %5562 = vmatprep.subr.mxu0 0.0
        %5563 = vmatpush1.msra.mxu0 0.0
        %5564 = vmatprep.subr.mxu0 0.0
        %5565 = vmatpush1.msra.mxu0 0.0
        %5566 = vmatprep.subr.mxu0 0.0
        %5567 = vmatpush1.msra.mxu0 0.0
        %5568 = vmatprep.subr.mxu0 0.0
        %5569 = vmatpush1.msra.mxu0 0.0
        %5570 = vmatprep.subr.mxu0 0.0
        %5571 = vmatpush1.msra.mxu0 0.0
        %5572 = vmatprep.subr.mxu0 0.0
        %5573 = vmatpush1.msra.mxu0 0.0
        %5574 = vmatprep.subr.mxu0 0.0
        %5575 = vmatpush1.msra.mxu0 0.0
        %5576 = vmatprep.subr.mxu0 0.0
        %5577 = vmatpush1.msra.mxu0 0.0
        %5578 = vmatprep.subr.mxu0 0.0
        %5579 = vmatpush1.msra.mxu0 0.0
        %5580 = vmatprep.subr.mxu0 0.0
        %5581 = vmatpush1.msra.mxu0 0.0
        %5582 = vmatprep.mubr.f32.mxu0 0.0
        %5583 = vmatmul.mubr.f32.gmra.mrb[0].mxu0 %v5493
        %v5584 = vpop.f32.mrb[0].mxu0
        %v5585 = vadd.f32 0.0, %v5584
        %v5586 = vpop.f32.mrb[0].mxu0
        %5587 = vmatprep.mubr.f32.mxu0 0.0
        %5588 = vmatmul.mubr.f32.gmra.mrb[0].mxu0 %v5494
        %v5589 = vpop.f32.mrb[0].mxu0
        %v5590 = vadd.f32 0.0, %v5589
        %v5591 = vpop.f32.mrb[0].mxu0
        %5592 = vmatprep.mubr.f32.mxu0 0.0
        %5593 = vmatmul.mubr.f32.gmra.mrb[0].mxu0 %v5495
        %v5594 = vpop.f32.mrb[0].mxu0
        %v5595 = vadd.f32 0.0, %v5594
        %v5596 = vpop.f32.mrb[0].mxu0
        %5597 = vmatprep.mubr.f32.mxu0 0.0
        %5598 = vmatmul.mubr.f32.gmra.mrb[0].mxu0 %v5496
        %v5599 = vpop.f32.mrb[0].mxu0
        %v5600 = vadd.f32 0.0, %v5599
        %v5601 = vpop.f32.mrb[0].mxu0
        %5602 = vmatprep.mubr.f32.mxu0 0.0
        %5603 = vmatmul.mubr.f32.gmra.mrb[0].mxu0 %v5497
        %v5604 = vpop.f32.mrb[0].mxu0
        %v5605 = vadd.f32 0.0, %v5604
        %v5606 = vpop.f32.mrb[0].mxu0
        %5607 = vmatprep.mubr.f32.mxu0 0.0
        %5608 = vmatmul.mubr.f32.gmra.mrb[0].mxu0 %v5498
        %v5609 = vpop.f32.mrb[0].mxu0
        %v5610 = vadd.f32 0.0, %v5609
        %v5611 = vpop.f32.mrb[0].mxu0
        %5612 = vmatprep.mubr.f32.mxu0 0.0
        %5613 = vmatmul.mubr.f32.gmra.mrb[0].mxu0 %v5499
        %v5614 = vpop.f32.mrb[0].mxu0
        %v5615 = vadd.f32 0.0, %v5614
        %v5616 = vpop.f32.mrb[0].mxu0
        %5617 = vmatprep.mubr.f32.mxu0 0.0
        %5618 = vmatmul.mubr.f32.gmra.mrb[0].mxu0 %v5500
        %v5619 = vpop.f32.mrb[0].mxu0
        %v5620 = vadd.f32 0.0, %v5619
        %v5621 = vpop.f32.mrb[0].mxu0
        %5622 = vdwg.mxu0
        %v5623 = vadd.f32 %v5485, %v5585
        %v5624 = vadd.f32 %v5486, %v5590
        %v5625 = vadd.f32 %v5487, %v5595
        %v5626 = vadd.f32 %v5488, %v5600
        %v5627 = vadd.f32 %v5489, %v5605
        %v5628 = vadd.f32 %v5490, %v5610
        %v5629 = vadd.f32 %v5491, %v5615
        %v5630 = vadd.f32 %v5492, %v5620
        %v5631 = vld [vmem:[%s4798 + $0x2] sm:$0xff]
        %v5632 = vld [vmem:[%s4798 + $0x12] sm:$0xff]
        %v5633 = vld [vmem:[%s4798 + $0x22] sm:$0xff]
        %v5634 = vld [vmem:[%s4798 + $0x32] sm:$0xff]
        %v5635 = vld [vmem:[%s4798 + $0x42] sm:$0xff]
        %v5636 = vld [vmem:[%s4798 + $0x52] sm:$0xff]
        %v5637 = vld [vmem:[%s4798 + $0x62] sm:$0xff]
        %v5638 = vld [vmem:[%s4798 + $0x72] sm:$0xff]
        %s5639 = scalar_lea.vmem [#allocation4], 640
        %v5640 = vld [vmem:[%s5639] sm:$0xff]
        %v5641 = vld [vmem:[%s5639 + $0x8] sm:$0xff]
        %v5642 = vld [vmem:[%s5639 + $0x10] sm:$0xff]
        %v5643 = vld [vmem:[%s5639 + $0x18] sm:$0xff]
        %v5644 = vld [vmem:[%s5639 + $0x20] sm:$0xff]
        %v5645 = vld [vmem:[%s5639 + $0x28] sm:$0xff]
        %v5646 = vld [vmem:[%s5639 + $0x30] sm:$0xff]
        %v5647 = vld [vmem:[%s5639 + $0x38] sm:$0xff]
        %v5648 = vld [vmem:[%s5639 + $0x40] sm:$0xff]
        %v5649 = vld [vmem:[%s5639 + $0x48] sm:$0xff]
        %v5650 = vld [vmem:[%s5639 + $0x50] sm:$0xff]
        %v5651 = vld [vmem:[%s5639 + $0x58] sm:$0xff]
        %v5652 = vld [vmem:[%s5639 + $0x60] sm:$0xff]
        %v5653 = vld [vmem:[%s5639 + $0x68] sm:$0xff]
        %v5654 = vld [vmem:[%s5639 + $0x70] sm:$0xff]
        %v5655 = vld [vmem:[%s5639 + $0x78] sm:$0xff]
        %5656 = vmatprep.subr.mxu0 0.0
        %5657 = vmatpush1.msra.mxu0 %v5640
        %5658 = vmatprep.subr.mxu0 0.0
        %5659 = vmatpush1.msra.mxu0 %v5641
        %5660 = vmatprep.subr.mxu0 0.0
        %5661 = vmatpush1.msra.mxu0 %v5642
        %5662 = vmatprep.subr.mxu0 0.0
        %5663 = vmatpush1.msra.mxu0 %v5643
        %5664 = vmatprep.subr.mxu0 0.0
        %5665 = vmatpush1.msra.mxu0 %v5644
        %5666 = vmatprep.subr.mxu0 0.0
        %5667 = vmatpush1.msra.mxu0 %v5645
        %5668 = vmatprep.subr.mxu0 0.0
        %5669 = vmatpush1.msra.mxu0 %v5646
        %5670 = vmatprep.subr.mxu0 0.0
        %5671 = vmatpush1.msra.mxu0 %v5647
        %5672 = vmatprep.subr.mxu0 0.0
        %5673 = vmatpush1.msra.mxu0 %v5648
        %5674 = vmatprep.subr.mxu0 0.0
        %5675 = vmatpush1.msra.mxu0 %v5649
        %5676 = vmatprep.subr.mxu0 0.0
        %5677 = vmatpush1.msra.mxu0 %v5650
        %5678 = vmatprep.subr.mxu0 0.0
        %5679 = vmatpush1.msra.mxu0 %v5651
        %5680 = vmatprep.subr.mxu0 0.0
        %5681 = vmatpush1.msra.mxu0 %v5652
        %5682 = vmatprep.subr.mxu0 0.0
        %5683 = vmatpush1.msra.mxu0 %v5653
        %5684 = vmatprep.subr.mxu0 0.0
        %5685 = vmatpush1.msra.mxu0 %v5654
        %5686 = vmatprep.subr.mxu0 0.0
        %5687 = vmatpush1.msra.mxu0 %v5655
        %5688 = vmatprep.subr.mxu0 0.0
        %5689 = vmatpush1.msra.mxu0 0.0
        %5690 = vmatprep.subr.mxu0 0.0
        %5691 = vmatpush1.msra.mxu0 0.0
        %5692 = vmatprep.subr.mxu0 0.0
        %5693 = vmatpush1.msra.mxu0 0.0
        %5694 = vmatprep.subr.mxu0 0.0
        %5695 = vmatpush1.msra.mxu0 0.0
        %5696 = vmatprep.subr.mxu0 0.0
        %5697 = vmatpush1.msra.mxu0 0.0
        %5698 = vmatprep.subr.mxu0 0.0
        %5699 = vmatpush1.msra.mxu0 0.0
        %5700 = vmatprep.subr.mxu0 0.0
        %5701 = vmatpush1.msra.mxu0 0.0
        %5702 = vmatprep.subr.mxu0 0.0
        %5703 = vmatpush1.msra.mxu0 0.0
        %5704 = vmatprep.subr.mxu0 0.0
        %5705 = vmatpush1.msra.mxu0 0.0
        %5706 = vmatprep.subr.mxu0 0.0
        %5707 = vmatpush1.msra.mxu0 0.0
        %5708 = vmatprep.subr.mxu0 0.0
        %5709 = vmatpush1.msra.mxu0 0.0
        %5710 = vmatprep.subr.mxu0 0.0
        %5711 = vmatpush1.msra.mxu0 0.0
        %5712 = vmatprep.subr.mxu0 0.0
        %5713 = vmatpush1.msra.mxu0 0.0
        %5714 = vmatprep.subr.mxu0 0.0
        %5715 = vmatpush1.msra.mxu0 0.0
        %5716 = vmatprep.subr.mxu0 0.0
        %5717 = vmatpush1.msra.mxu0 0.0
        %5718 = vmatprep.subr.mxu0 0.0
        %5719 = vmatpush1.msra.mxu0 0.0
        %5720 = vmatprep.mubr.f32.mxu0 0.0
        %5721 = vmatmul.mubr.f32.gmra.mrb[0].mxu0 %v5631
        %v5722 = vpop.f32.mrb[0].mxu0
        %v5723 = vadd.f32 0.0, %v5722
        %v5724 = vpop.f32.mrb[0].mxu0
        %5725 = vmatprep.mubr.f32.mxu0 0.0
        %5726 = vmatmul.mubr.f32.gmra.mrb[0].mxu0 %v5632
        %v5727 = vpop.f32.mrb[0].mxu0
        %v5728 = vadd.f32 0.0, %v5727
        %v5729 = vpop.f32.mrb[0].mxu0
        %5730 = vmatprep.mubr.f32.mxu0 0.0
        %5731 = vmatmul.mubr.f32.gmra.mrb[0].mxu0 %v5633
        %v5732 = vpop.f32.mrb[0].mxu0
        %v5733 = vadd.f32 0.0, %v5732
        %v5734 = vpop.f32.mrb[0].mxu0
        %5735 = vmatprep.mubr.f32.mxu0 0.0
        %5736 = vmatmul.mubr.f32.gmra.mrb[0].mxu0 %v5634
        %v5737 = vpop.f32.mrb[0].mxu0
        %v5738 = vadd.f32 0.0, %v5737
        %v5739 = vpop.f32.mrb[0].mxu0
        %5740 = vmatprep.mubr.f32.mxu0 0.0
        %5741 = vmatmul.mubr.f32.gmra.mrb[0].mxu0 %v5635
        %v5742 = vpop.f32.mrb[0].mxu0
        %v5743 = vadd.f32 0.0, %v5742
        %v5744 = vpop.f32.mrb[0].mxu0
        %5745 = vmatprep.mubr.f32.mxu0 0.0
        %5746 = vmatmul.mubr.f32.gmra.mrb[0].mxu0 %v5636
        %v5747 = vpop.f32.mrb[0].mxu0
        %v5748 = vadd.f32 0.0, %v5747
        %v5749 = vpop.f32.mrb[0].mxu0
        %5750 = vmatprep.mubr.f32.mxu0 0.0
        %5751 = vmatmul.mubr.f32.gmra.mrb[0].mxu0 %v5637
        %v5752 = vpop.f32.mrb[0].mxu0
        %v5753 = vadd.f32 0.0, %v5752
        %v5754 = vpop.f32.mrb[0].mxu0
        %5755 = vmatprep.mubr.f32.mxu0 0.0
        %5756 = vmatmul.mubr.f32.gmra.mrb[0].mxu0 %v5638
        %v5757 = vpop.f32.mrb[0].mxu0
        %v5758 = vadd.f32 0.0, %v5757
        %v5759 = vpop.f32.mrb[0].mxu0
        %5760 = vdwg.mxu0
        %v5761 = vadd.f32 %v5623, %v5723
        %v5762 = vadd.f32 %v5624, %v5728
        %v5763 = vadd.f32 %v5625, %v5733
        %v5764 = vadd.f32 %v5626, %v5738
        %v5765 = vadd.f32 %v5627, %v5743
        %v5766 = vadd.f32 %v5628, %v5748
        %v5767 = vadd.f32 %v5629, %v5753
        %v5768 = vadd.f32 %v5630, %v5758
        %s5769 = scalar_lea.vmem [#allocation3], 32
        %v5770 = vld [vmem:[%s5769] sm:$0xff]
        %v5771 = vld [vmem:[%s5769 + $0x10] sm:$0xff]
        %v5772 = vld [vmem:[%s5769 + $0x20] sm:$0xff]
        %v5773 = vld [vmem:[%s5769 + $0x30] sm:$0xff]
        %v5774 = vld [vmem:[%s5769 + $0x40] sm:$0xff]
        %v5775 = vld [vmem:[%s5769 + $0x50] sm:$0xff]
        %v5776 = vld [vmem:[%s5769 + $0x60] sm:$0xff]
        %v5777 = vld [vmem:[%s5769 + $0x70] sm:$0xff]
        %s5778 = scalar_lea.vmem [#allocation4], 768
        %v5779 = vld [vmem:[%s5778] sm:$0xff]
        %v5780 = vld [vmem:[%s5778 + $0x8] sm:$0xff]
        %v5781 = vld [vmem:[%s5778 + $0x10] sm:$0xff]
        %v5782 = vld [vmem:[%s5778 + $0x18] sm:$0xff]
        %v5783 = vld [vmem:[%s5778 + $0x20] sm:$0xff]
        %v5784 = vld [vmem:[%s5778 + $0x28] sm:$0xff]
        %v5785 = vld [vmem:[%s5778 + $0x30] sm:$0xff]
        %v5786 = vld [vmem:[%s5778 + $0x38] sm:$0xff]
        %v5787 = vld [vmem:[%s5778 + $0x40] sm:$0xff]
        %v5788 = vld [vmem:[%s5778 + $0x48] sm:$0xff]
        %v5789 = vld [vmem:[%s5778 + $0x50] sm:$0xff]
        %v5790 = vld [vmem:[%s5778 + $0x58] sm:$0xff]
        %v5791 = vld [vmem:[%s5778 + $0x60] sm:$0xff]
        %v5792 = vld [vmem:[%s5778 + $0x68] sm:$0xff]
        %v5793 = vld [vmem:[%s5778 + $0x70] sm:$0xff]
        %v5794 = vld [vmem:[%s5778 + $0x78] sm:$0xff]
        %5795 = vmatprep.subr.mxu0 0.0
        %5796 = vmatpush1.msra.mxu0 %v5779
        %5797 = vmatprep.subr.mxu0 0.0
        %5798 = vmatpush1.msra.mxu0 %v5780
        %5799 = vmatprep.subr.mxu0 0.0
        %5800 = vmatpush1.msra.mxu0 %v5781
        %5801 = vmatprep.subr.mxu0 0.0
        %5802 = vmatpush1.msra.mxu0 %v5782
        %5803 = vmatprep.subr.mxu0 0.0
        %5804 = vmatpush1.msra.mxu0 %v5783
        %5805 = vmatprep.subr.mxu0 0.0
        %5806 = vmatpush1.msra.mxu0 %v5784
        %5807 = vmatprep.subr.mxu0 0.0
        %5808 = vmatpush1.msra.mxu0 %v5785
        %5809 = vmatprep.subr.mxu0 0.0
        %5810 = vmatpush1.msra.mxu0 %v5786
        %5811 = vmatprep.subr.mxu0 0.0
        %5812 = vmatpush1.msra.mxu0 %v5787
        %5813 = vmatprep.subr.mxu0 0.0
        %5814 = vmatpush1.msra.mxu0 %v5788
        %5815 = vmatprep.subr.mxu0 0.0
        %5816 = vmatpush1.msra.mxu0 %v5789
        %5817 = vmatprep.subr.mxu0 0.0
        %5818 = vmatpush1.msra.mxu0 %v5790
        %5819 = vmatprep.subr.mxu0 0.0
        %5820 = vmatpush1.msra.mxu0 %v5791
        %5821 = vmatprep.subr.mxu0 0.0
        %5822 = vmatpush1.msra.mxu0 %v5792
        %5823 = vmatprep.subr.mxu0 0.0
        %5824 = vmatpush1.msra.mxu0 %v5793
        %5825 = vmatprep.subr.mxu0 0.0
        %5826 = vmatpush1.msra.mxu0 %v5794
        %5827 = vmatprep.subr.mxu0 0.0
        %5828 = vmatpush1.msra.mxu0 0.0
        %5829 = vmatprep.subr.mxu0 0.0
        %5830 = vmatpush1.msra.mxu0 0.0
        %5831 = vmatprep.subr.mxu0 0.0
        %5832 = vmatpush1.msra.mxu0 0.0
        %5833 = vmatprep.subr.mxu0 0.0
        %5834 = vmatpush1.msra.mxu0 0.0
        %5835 = vmatprep.subr.mxu0 0.0
        %5836 = vmatpush1.msra.mxu0 0.0
        %5837 = vmatprep.subr.mxu0 0.0
        %5838 = vmatpush1.msra.mxu0 0.0
        %5839 = vmatprep.subr.mxu0 0.0
        %5840 = vmatpush1.msra.mxu0 0.0
        %5841 = vmatprep.subr.mxu0 0.0
        %5842 = vmatpush1.msra.mxu0 0.0
        %5843 = vmatprep.subr.mxu0 0.0
        %5844 = vmatpush1.msra.mxu0 0.0
        %5845 = vmatprep.subr.mxu0 0.0
        %5846 = vmatpush1.msra.mxu0 0.0
        %5847 = vmatprep.subr.mxu0 0.0
        %5848 = vmatpush1.msra.mxu0 0.0
        %5849 = vmatprep.subr.mxu0 0.0
        %5850 = vmatpush1.msra.mxu0 0.0
        %5851 = vmatprep.subr.mxu0 0.0
        %5852 = vmatpush1.msra.mxu0 0.0
        %5853 = vmatprep.subr.mxu0 0.0
        %5854 = vmatpush1.msra.mxu0 0.0
        %5855 = vmatprep.subr.mxu0 0.0
        %5856 = vmatpush1.msra.mxu0 0.0
        %5857 = vmatprep.subr.mxu0 0.0
        %5858 = vmatpush1.msra.mxu0 0.0
        %5859 = vmatprep.mubr.f32.mxu0 0.0
        %5860 = vmatmul.mubr.f32.gmra.mrb[0].mxu0 %v5770
        %v5861 = vpop.f32.mrb[0].mxu0
        %v5862 = vadd.f32 0.0, %v5861
        %v5863 = vpop.f32.mrb[0].mxu0
        %5864 = vmatprep.mubr.f32.mxu0 0.0
        %5865 = vmatmul.mubr.f32.gmra.mrb[0].mxu0 %v5771
        %v5866 = vpop.f32.mrb[0].mxu0
        %v5867 = vadd.f32 0.0, %v5866
        %v5868 = vpop.f32.mrb[0].mxu0
        %5869 = vmatprep.mubr.f32.mxu0 0.0
        %5870 = vmatmul.mubr.f32.gmra.mrb[0].mxu0 %v5772
        %v5871 = vpop.f32.mrb[0].mxu0
        %v5872 = vadd.f32 0.0, %v5871
        %v5873 = vpop.f32.mrb[0].mxu0
        %5874 = vmatprep.mubr.f32.mxu0 0.0
        %5875 = vmatmul.mubr.f32.gmra.mrb[0].mxu0 %v5773
        %v5876 = vpop.f32.mrb[0].mxu0
        %v5877 = vadd.f32 0.0, %v5876
        %v5878 = vpop.f32.mrb[0].mxu0
        %5879 = vmatprep.mubr.f32.mxu0 0.0
        %5880 = vmatmul.mubr.f32.gmra.mrb[0].mxu0 %v5774
        %v5881 = vpop.f32.mrb[0].mxu0
        %v5882 = vadd.f32 0.0, %v5881
        %v5883 = vpop.f32.mrb[0].mxu0
        %5884 = vmatprep.mubr.f32.mxu0 0.0
        %5885 = vmatmul.mubr.f32.gmra.mrb[0].mxu0 %v5775
        %v5886 = vpop.f32.mrb[0].mxu0
        %v5887 = vadd.f32 0.0, %v5886
        %v5888 = vpop.f32.mrb[0].mxu0
        %5889 = vmatprep.mubr.f32.mxu0 0.0
        %5890 = vmatmul.mubr.f32.gmra.mrb[0].mxu0 %v5776
        %v5891 = vpop.f32.mrb[0].mxu0
        %v5892 = vadd.f32 0.0, %v5891
        %v5893 = vpop.f32.mrb[0].mxu0
        %5894 = vmatprep.mubr.f32.mxu0 0.0
        %5895 = vmatmul.mubr.f32.gmra.mrb[0].mxu0 %v5777
        %v5896 = vpop.f32.mrb[0].mxu0
        %v5897 = vadd.f32 0.0, %v5896
        %v5898 = vpop.f32.mrb[0].mxu0
        %5899 = vdwg.mxu0
        %v5900 = vadd.f32 %v5761, %v5862
        %v5901 = vadd.f32 %v5762, %v5867
        %v5902 = vadd.f32 %v5763, %v5872
        %v5903 = vadd.f32 %v5764, %v5877
        %v5904 = vadd.f32 %v5765, %v5882
        %v5905 = vadd.f32 %v5766, %v5887
        %v5906 = vadd.f32 %v5767, %v5892
        %v5907 = vadd.f32 %v5768, %v5897
        %v5908 = vld [vmem:[%s5769 + $0x1] sm:$0xff]
        %v5909 = vld [vmem:[%s5769 + $0x11] sm:$0xff]
        %v5910 = vld [vmem:[%s5769 + $0x21] sm:$0xff]
        %v5911 = vld [vmem:[%s5769 + $0x31] sm:$0xff]
        %v5912 = vld [vmem:[%s5769 + $0x41] sm:$0xff]
        %v5913 = vld [vmem:[%s5769 + $0x51] sm:$0xff]
        %v5914 = vld [vmem:[%s5769 + $0x61] sm:$0xff]
        %v5915 = vld [vmem:[%s5769 + $0x71] sm:$0xff]
        %s5916 = scalar_lea.vmem [#allocation4], 896
        %v5917 = vld [vmem:[%s5916] sm:$0xff]
        %v5918 = vld [vmem:[%s5916 + $0x8] sm:$0xff]
        %v5919 = vld [vmem:[%s5916 + $0x10] sm:$0xff]
        %v5920 = vld [vmem:[%s5916 + $0x18] sm:$0xff]
        %v5921 = vld [vmem:[%s5916 + $0x20] sm:$0xff]
        %v5922 = vld [vmem:[%s5916 + $0x28] sm:$0xff]
        %v5923 = vld [vmem:[%s5916 + $0x30] sm:$0xff]
        %v5924 = vld [vmem:[%s5916 + $0x38] sm:$0xff]
        %v5925 = vld [vmem:[%s5916 + $0x40] sm:$0xff]
        %v5926 = vld [vmem:[%s5916 + $0x48] sm:$0xff]
        %v5927 = vld [vmem:[%s5916 + $0x50] sm:$0xff]
        %v5928 = vld [vmem:[%s5916 + $0x58] sm:$0xff]
        %v5929 = vld [vmem:[%s5916 + $0x60] sm:$0xff]
        %v5930 = vld [vmem:[%s5916 + $0x68] sm:$0xff]
        %v5931 = vld [vmem:[%s5916 + $0x70] sm:$0xff]
        %v5932 = vld [vmem:[%s5916 + $0x78] sm:$0xff]
        %5933 = vmatprep.subr.mxu0 0.0
        %5934 = vmatpush1.msra.mxu0 %v5917
        %5935 = vmatprep.subr.mxu0 0.0
        %5936 = vmatpush1.msra.mxu0 %v5918
        %5937 = vmatprep.subr.mxu0 0.0
        %5938 = vmatpush1.msra.mxu0 %v5919
        %5939 = vmatprep.subr.mxu0 0.0
        %5940 = vmatpush1.msra.mxu0 %v5920
        %5941 = vmatprep.subr.mxu0 0.0
        %5942 = vmatpush1.msra.mxu0 %v5921
        %5943 = vmatprep.subr.mxu0 0.0
        %5944 = vmatpush1.msra.mxu0 %v5922
        %5945 = vmatprep.subr.mxu0 0.0
        %5946 = vmatpush1.msra.mxu0 %v5923
        %5947 = vmatprep.subr.mxu0 0.0
        %5948 = vmatpush1.msra.mxu0 %v5924
        %5949 = vmatprep.subr.mxu0 0.0
        %5950 = vmatpush1.msra.mxu0 %v5925
        %5951 = vmatprep.subr.mxu0 0.0
        %5952 = vmatpush1.msra.mxu0 %v5926
        %5953 = vmatprep.subr.mxu0 0.0
        %5954 = vmatpush1.msra.mxu0 %v5927
        %5955 = vmatprep.subr.mxu0 0.0
        %5956 = vmatpush1.msra.mxu0 %v5928
        %5957 = vmatprep.subr.mxu0 0.0
        %5958 = vmatpush1.msra.mxu0 %v5929
        %5959 = vmatprep.subr.mxu0 0.0
        %5960 = vmatpush1.msra.mxu0 %v5930
        %5961 = vmatprep.subr.mxu0 0.0
        %5962 = vmatpush1.msra.mxu0 %v5931
        %5963 = vmatprep.subr.mxu0 0.0
        %5964 = vmatpush1.msra.mxu0 %v5932
        %5965 = vmatprep.subr.mxu0 0.0
        %5966 = vmatpush1.msra.mxu0 0.0
        %5967 = vmatprep.subr.mxu0 0.0
        %5968 = vmatpush1.msra.mxu0 0.0
        %5969 = vmatprep.subr.mxu0 0.0
        %5970 = vmatpush1.msra.mxu0 0.0
        %5971 = vmatprep.subr.mxu0 0.0
        %5972 = vmatpush1.msra.mxu0 0.0
        %5973 = vmatprep.subr.mxu0 0.0
        %5974 = vmatpush1.msra.mxu0 0.0
        %5975 = vmatprep.subr.mxu0 0.0
        %5976 = vmatpush1.msra.mxu0 0.0
        %5977 = vmatprep.subr.mxu0 0.0
        %5978 = vmatpush1.msra.mxu0 0.0
        %5979 = vmatprep.subr.mxu0 0.0
        %5980 = vmatpush1.msra.mxu0 0.0
        %5981 = vmatprep.subr.mxu0 0.0
        %5982 = vmatpush1.msra.mxu0 0.0
        %5983 = vmatprep.subr.mxu0 0.0
        %5984 = vmatpush1.msra.mxu0 0.0
        %5985 = vmatprep.subr.mxu0 0.0
        %5986 = vmatpush1.msra.mxu0 0.0
        %5987 = vmatprep.subr.mxu0 0.0
        %5988 = vmatpush1.msra.mxu0 0.0
        %5989 = vmatprep.subr.mxu0 0.0
        %5990 = vmatpush1.msra.mxu0 0.0
        %5991 = vmatprep.subr.mxu0 0.0
        %5992 = vmatpush1.msra.mxu0 0.0
        %5993 = vmatprep.subr.mxu0 0.0
        %5994 = vmatpush1.msra.mxu0 0.0
        %5995 = vmatprep.subr.mxu0 0.0
        %5996 = vmatpush1.msra.mxu0 0.0
        %5997 = vmatprep.mubr.f32.mxu0 0.0
        %5998 = vmatmul.mubr.f32.gmra.mrb[0].mxu0 %v5908
        %v5999 = vpop.f32.mrb[0].mxu0
        %v6000 = vadd.f32 0.0, %v5999
        %v6001 = vpop.f32.mrb[0].mxu0
        %6002 = vmatprep.mubr.f32.mxu0 0.0
        %6003 = vmatmul.mubr.f32.gmra.mrb[0].mxu0 %v5909
        %v6004 = vpop.f32.mrb[0].mxu0
        %v6005 = vadd.f32 0.0, %v6004
        %v6006 = vpop.f32.mrb[0].mxu0
        %6007 = vmatprep.mubr.f32.mxu0 0.0
        %6008 = vmatmul.mubr.f32.gmra.mrb[0].mxu0 %v5910
        %v6009 = vpop.f32.mrb[0].mxu0
        %v6010 = vadd.f32 0.0, %v6009
        %v6011 = vpop.f32.mrb[0].mxu0
        %6012 = vmatprep.mubr.f32.mxu0 0.0
        %6013 = vmatmul.mubr.f32.gmra.mrb[0].mxu0 %v5911
        %v6014 = vpop.f32.mrb[0].mxu0
        %v6015 = vadd.f32 0.0, %v6014
        %v6016 = vpop.f32.mrb[0].mxu0
        %6017 = vmatprep.mubr.f32.mxu0 0.0
        %6018 = vmatmul.mubr.f32.gmra.mrb[0].mxu0 %v5912
        %v6019 = vpop.f32.mrb[0].mxu0
        %v6020 = vadd.f32 0.0, %v6019
        %v6021 = vpop.f32.mrb[0].mxu0
        %6022 = vmatprep.mubr.f32.mxu0 0.0
        %6023 = vmatmul.mubr.f32.gmra.mrb[0].mxu0 %v5913
        %v6024 = vpop.f32.mrb[0].mxu0
        %v6025 = vadd.f32 0.0, %v6024
        %v6026 = vpop.f32.mrb[0].mxu0
        %6027 = vmatprep.mubr.f32.mxu0 0.0
        %6028 = vmatmul.mubr.f32.gmra.mrb[0].mxu0 %v5914
        %v6029 = vpop.f32.mrb[0].mxu0
        %v6030 = vadd.f32 0.0, %v6029
        %v6031 = vpop.f32.mrb[0].mxu0
        %6032 = vmatprep.mubr.f32.mxu0 0.0
        %6033 = vmatmul.mubr.f32.gmra.mrb[0].mxu0 %v5915
        %v6034 = vpop.f32.mrb[0].mxu0
        %v6035 = vadd.f32 0.0, %v6034
        %v6036 = vpop.f32.mrb[0].mxu0
        %6037 = vdwg.mxu0
        %v6038 = vadd.f32 %v5900, %v6000
        %v6039 = vadd.f32 %v5901, %v6005
        %v6040 = vadd.f32 %v5902, %v6010
        %v6041 = vadd.f32 %v5903, %v6015
        %v6042 = vadd.f32 %v5904, %v6020
        %v6043 = vadd.f32 %v5905, %v6025
        %v6044 = vadd.f32 %v5906, %v6030
        %v6045 = vadd.f32 %v5907, %v6035
        %v6046 = vld [vmem:[%s5769 + $0x2] sm:$0xff]
        %v6047 = vld [vmem:[%s5769 + $0x12] sm:$0xff]
        %v6048 = vld [vmem:[%s5769 + $0x22] sm:$0xff]
        %v6049 = vld [vmem:[%s5769 + $0x32] sm:$0xff]
        %v6050 = vld [vmem:[%s5769 + $0x42] sm:$0xff]
        %v6051 = vld [vmem:[%s5769 + $0x52] sm:$0xff]
        %v6052 = vld [vmem:[%s5769 + $0x62] sm:$0xff]
        %v6053 = vld [vmem:[%s5769 + $0x72] sm:$0xff]
        %s6054 = scalar_lea.vmem [#allocation4], 1024
        %v6055 = vld [vmem:[%s6054] sm:$0xff]
        %v6056 = vld [vmem:[%s6054 + $0x8] sm:$0xff]
        %v6057 = vld [vmem:[%s6054 + $0x10] sm:$0xff]
        %v6058 = vld [vmem:[%s6054 + $0x18] sm:$0xff]
        %v6059 = vld [vmem:[%s6054 + $0x20] sm:$0xff]
        %v6060 = vld [vmem:[%s6054 + $0x28] sm:$0xff]
        %v6061 = vld [vmem:[%s6054 + $0x30] sm:$0xff]
        %v6062 = vld [vmem:[%s6054 + $0x38] sm:$0xff]
        %v6063 = vld [vmem:[%s6054 + $0x40] sm:$0xff]
        %v6064 = vld [vmem:[%s6054 + $0x48] sm:$0xff]
        %v6065 = vld [vmem:[%s6054 + $0x50] sm:$0xff]
        %v6066 = vld [vmem:[%s6054 + $0x58] sm:$0xff]
        %v6067 = vld [vmem:[%s6054 + $0x60] sm:$0xff]
        %v6068 = vld [vmem:[%s6054 + $0x68] sm:$0xff]
        %v6069 = vld [vmem:[%s6054 + $0x70] sm:$0xff]
        %v6070 = vld [vmem:[%s6054 + $0x78] sm:$0xff]
        %6071 = vmatprep.subr.mxu0 0.0
        %6072 = vmatpush1.msra.mxu0 %v6055
        %6073 = vmatprep.subr.mxu0 0.0
        %6074 = vmatpush1.msra.mxu0 %v6056
        %6075 = vmatprep.subr.mxu0 0.0
        %6076 = vmatpush1.msra.mxu0 %v6057
        %6077 = vmatprep.subr.mxu0 0.0
        %6078 = vmatpush1.msra.mxu0 %v6058
        %6079 = vmatprep.subr.mxu0 0.0
        %6080 = vmatpush1.msra.mxu0 %v6059
        %6081 = vmatprep.subr.mxu0 0.0
        %6082 = vmatpush1.msra.mxu0 %v6060
        %6083 = vmatprep.subr.mxu0 0.0
        %6084 = vmatpush1.msra.mxu0 %v6061
        %6085 = vmatprep.subr.mxu0 0.0
        %6086 = vmatpush1.msra.mxu0 %v6062
        %6087 = vmatprep.subr.mxu0 0.0
        %6088 = vmatpush1.msra.mxu0 %v6063
        %6089 = vmatprep.subr.mxu0 0.0
        %6090 = vmatpush1.msra.mxu0 %v6064
        %6091 = vmatprep.subr.mxu0 0.0
        %6092 = vmatpush1.msra.mxu0 %v6065
        %6093 = vmatprep.subr.mxu0 0.0
        %6094 = vmatpush1.msra.mxu0 %v6066
        %6095 = vmatprep.subr.mxu0 0.0
        %6096 = vmatpush1.msra.mxu0 %v6067
        %6097 = vmatprep.subr.mxu0 0.0
        %6098 = vmatpush1.msra.mxu0 %v6068
        %6099 = vmatprep.subr.mxu0 0.0
        %6100 = vmatpush1.msra.mxu0 %v6069
        %6101 = vmatprep.subr.mxu0 0.0
        %6102 = vmatpush1.msra.mxu0 %v6070
        %6103 = vmatprep.subr.mxu0 0.0
        %6104 = vmatpush1.msra.mxu0 0.0
        %6105 = vmatprep.subr.mxu0 0.0
        %6106 = vmatpush1.msra.mxu0 0.0
        %6107 = vmatprep.subr.mxu0 0.0
        %6108 = vmatpush1.msra.mxu0 0.0
        %6109 = vmatprep.subr.mxu0 0.0
        %6110 = vmatpush1.msra.mxu0 0.0
        %6111 = vmatprep.subr.mxu0 0.0
        %6112 = vmatpush1.msra.mxu0 0.0
        %6113 = vmatprep.subr.mxu0 0.0
        %6114 = vmatpush1.msra.mxu0 0.0
        %6115 = vmatprep.subr.mxu0 0.0
        %6116 = vmatpush1.msra.mxu0 0.0
        %6117 = vmatprep.subr.mxu0 0.0
        %6118 = vmatpush1.msra.mxu0 0.0
        %6119 = vmatprep.subr.mxu0 0.0
        %6120 = vmatpush1.msra.mxu0 0.0
        %6121 = vmatprep.subr.mxu0 0.0
        %6122 = vmatpush1.msra.mxu0 0.0
        %6123 = vmatprep.subr.mxu0 0.0
        %6124 = vmatpush1.msra.mxu0 0.0
        %6125 = vmatprep.subr.mxu0 0.0
        %6126 = vmatpush1.msra.mxu0 0.0
        %6127 = vmatprep.subr.mxu0 0.0
        %6128 = vmatpush1.msra.mxu0 0.0
        %6129 = vmatprep.subr.mxu0 0.0
        %6130 = vmatpush1.msra.mxu0 0.0
        %6131 = vmatprep.subr.mxu0 0.0
        %6132 = vmatpush1.msra.mxu0 0.0
        %6133 = vmatprep.subr.mxu0 0.0
        %6134 = vmatpush1.msra.mxu0 0.0
        %6135 = vmatprep.mubr.f32.mxu0 0.0
        %6136 = vmatmul.mubr.f32.gmra.mrb[0].mxu0 %v6046
        %v6137 = vpop.f32.mrb[0].mxu0
        %v6138 = vadd.f32 0.0, %v6137
        %v6139 = vpop.f32.mrb[0].mxu0
        %6140 = vmatprep.mubr.f32.mxu0 0.0
        %6141 = vmatmul.mubr.f32.gmra.mrb[0].mxu0 %v6047
        %v6142 = vpop.f32.mrb[0].mxu0
        %v6143 = vadd.f32 0.0, %v6142
        %v6144 = vpop.f32.mrb[0].mxu0
        %6145 = vmatprep.mubr.f32.mxu0 0.0
        %6146 = vmatmul.mubr.f32.gmra.mrb[0].mxu0 %v6048
        %v6147 = vpop.f32.mrb[0].mxu0
        %v6148 = vadd.f32 0.0, %v6147
        %v6149 = vpop.f32.mrb[0].mxu0
        %6150 = vmatprep.mubr.f32.mxu0 0.0
        %6151 = vmatmul.mubr.f32.gmra.mrb[0].mxu0 %v6049
        %v6152 = vpop.f32.mrb[0].mxu0
        %v6153 = vadd.f32 0.0, %v6152
        %v6154 = vpop.f32.mrb[0].mxu0
        %6155 = vmatprep.mubr.f32.mxu0 0.0
        %6156 = vmatmul.mubr.f32.gmra.mrb[0].mxu0 %v6050
        %v6157 = vpop.f32.mrb[0].mxu0
        %v6158 = vadd.f32 0.0, %v6157
        %v6159 = vpop.f32.mrb[0].mxu0
        %6160 = vmatprep.mubr.f32.mxu0 0.0
        %6161 = vmatmul.mubr.f32.gmra.mrb[0].mxu0 %v6051
        %v6162 = vpop.f32.mrb[0].mxu0
        %v6163 = vadd.f32 0.0, %v6162
        %v6164 = vpop.f32.mrb[0].mxu0
        %6165 = vmatprep.mubr.f32.mxu0 0.0
        %6166 = vmatmul.mubr.f32.gmra.mrb[0].mxu0 %v6052
        %v6167 = vpop.f32.mrb[0].mxu0
        %v6168 = vadd.f32 0.0, %v6167
        %v6169 = vpop.f32.mrb[0].mxu0
        %6170 = vmatprep.mubr.f32.mxu0 0.0
        %6171 = vmatmul.mubr.f32.gmra.mrb[0].mxu0 %v6053
        %v6172 = vpop.f32.mrb[0].mxu0
        %v6173 = vadd.f32 0.0, %v6172
        %v6174 = vpop.f32.mrb[0].mxu0
        %6175 = vdwg.mxu0
        %v6176 = vadd.f32 %v6038, %v6138
        %v6177 = vadd.f32 %v6039, %v6143
        %v6178 = vadd.f32 %v6040, %v6148
        %v6179 = vadd.f32 %v6041, %v6153
        %v6180 = vadd.f32 %v6042, %v6158
        %v6181 = vadd.f32 %v6043, %v6163
        %v6182 = vadd.f32 %v6044, %v6168
        %v6183 = vadd.f32 %v6045, %v6173
        %v6184 = vld [vmem:[%s4] sm:$0x1]
        %v6185 = vlaneseq
        %v6186 = vshrl.u32 %v6185, 7
        %v6187 = vsub.s32 0, %v6186
        %v6188 = vrot.slane %v6184, %v6187
        %v6189 = vadd.f32 %v6176, %v6188
        %v6190 = vadd.f32 %v6177, %v6188
        %v6191 = vadd.f32 %v6178, %v6188
        %v6192 = vadd.f32 %v6179, %v6188
        %v6193 = vadd.f32 %v6180, %v6188
        %v6194 = vadd.f32 %v6181, %v6188
        %v6195 = vadd.f32 %v6182, %v6188
        %v6196 = vadd.f32 %v6183, %v6188
        %v6197 = vmax.f32 %v6189, 0.0
        %v6198 = vmax.f32 %v6190, 0.0
        %v6199 = vmax.f32 %v6191, 0.0
        %v6200 = vmax.f32 %v6192, 0.0
        %v6201 = vmax.f32 %v6193, 0.0
        %v6202 = vmax.f32 %v6194, 0.0
        %v6203 = vmax.f32 %v6195, 0.0
        %v6204 = vmax.f32 %v6196, 0.0
        %v6205 = vld [vmem:[%s4 + $0x1] sm:$0x1]
        %v6206 = vlaneseq
        %v6207 = vshrl.u32 %v6206, 7
        %v6208 = vsub.s32 0, %v6207
        %v6209 = vrot.slane %v6205, %v6208
        %v6210 = vmul.f32 %v6197, %v6209
        %v6211 = vmul.f32 %v6198, %v6209
        %v6212 = vmul.f32 %v6199, %v6209
        %v6213 = vmul.f32 %v6200, %v6209
        %v6214 = vmul.f32 %v6201, %v6209
        %v6215 = vmul.f32 %v6202, %v6209
        %v6216 = vmul.f32 %v6203, %v6209
        %v6217 = vmul.f32 %v6204, %v6209
        %v6218 = vld [vmem:[%s4 + $0x2] sm:$0x1]
        %v6219 = vlaneseq
        %v6220 = vshrl.u32 %v6219, 7
        %v6221 = vsub.s32 0, %v6220
        %v6222 = vrot.slane %v6218, %v6221
        %v6223 = vadd.f32 %v6210, %v6222
        %v6224 = vadd.f32 %v6211, %v6222
        %v6225 = vadd.f32 %v6212, %v6222
        %v6226 = vadd.f32 %v6213, %v6222
        %v6227 = vadd.f32 %v6214, %v6222
        %v6228 = vadd.f32 %v6215, %v6222
        %v6229 = vadd.f32 %v6216, %v6222
        %v6230 = vadd.f32 %v6217, %v6222
        %v6231 = vmax.f32 %v6223, %v6224
        %v6232 = vmax.f32 %v6225, %v6226
        %v6233 = vmax.f32 %v6227, %v6228
        %v6234 = vmax.f32 %v6229, %v6230
        %v6239 = vcombine.high %v6231, %v6231
        %v6241 = vunpack.c.l.s4 1983009808
        %v6242 = vunpack.c.0.s8 %v6241
        %v6243 = vlaneseq
        %v6244 = vshrl.u32 %v6243, 7
        %v6245 = vsub.s32 %v6242, %v6244
        %v6246 = vrot.slane %v6231, %v6245
        %v6248 = vunpack.c.l.s4 1983009808
        %v6249 = vunpack.c.0.s8 %v6248
        %v6250 = vlaneseq
        %v6251 = vshrl.u32 %v6250, 7
        %v6252 = vsub.s32 %v6249, %v6251
        %v6253 = vrot.slane %v6239, %v6252
        %v6254 = vcombine.high %v6246, %v6246
        %v6255 = vcombine.high %v6253, %v6253
        %v6256 = vcombine.high %v6232, %v6232
        %v6258 = vunpack.c.l.s4 1983009808
        %v6259 = vunpack.c.0.s8 %v6258
        %v6260 = vlaneseq
        %v6261 = vshrl.u32 %v6260, 7
        %v6262 = vsub.s32 %v6259, %v6261
        %v6263 = vrot.slane %v6232, %v6262
        %v6265 = vunpack.c.l.s4 1983009808
        %v6266 = vunpack.c.0.s8 %v6265
        %v6267 = vlaneseq
        %v6268 = vshrl.u32 %v6267, 7
        %v6269 = vsub.s32 %v6266, %v6268
        %v6270 = vrot.slane %v6256, %v6269
        %v6271 = vcombine.high %v6263, %v6263
        %v6272 = vcombine.high %v6270, %v6270
        %v6273 = vcombine.high %v6233, %v6233
        %v6275 = vunpack.c.l.s4 1983009808
        %v6276 = vunpack.c.0.s8 %v6275
        %v6277 = vlaneseq
        %v6278 = vshrl.u32 %v6277, 7
        %v6279 = vsub.s32 %v6276, %v6278
        %v6280 = vrot.slane %v6233, %v6279
        %v6282 = vunpack.c.l.s4 1983009808
        %v6283 = vunpack.c.0.s8 %v6282
        %v6284 = vlaneseq
        %v6285 = vshrl.u32 %v6284, 7
        %v6286 = vsub.s32 %v6283, %v6285
        %v6287 = vrot.slane %v6273, %v6286
        %v6288 = vcombine.high %v6280, %v6280
        %v6289 = vcombine.high %v6287, %v6287
        %v6290 = vcombine.high %v6234, %v6234
        %v6292 = vunpack.c.l.s4 1983009808
        %v6293 = vunpack.c.0.s8 %v6292
        %v6294 = vlaneseq
        %v6295 = vshrl.u32 %v6294, 7
        %v6296 = vsub.s32 %v6293, %v6295
        %v6297 = vrot.slane %v6234, %v6296
        %v6299 = vunpack.c.l.s4 1983009808
        %v6300 = vunpack.c.0.s8 %v6299
        %v6301 = vlaneseq
        %v6302 = vshrl.u32 %v6301, 7
        %v6303 = vsub.s32 %v6300, %v6302
        %v6304 = vrot.slane %v6290, %v6303
        %v6305 = vcombine.high %v6297, %v6297
        %v6306 = vcombine.high %v6304, %v6304
        %v6323 = vsel %vm4344, %v6246, -inf
        %v6324 = vrot.slane %v6323, 4
        %v6325 = vmax.f32 %v6323, %v6324
        %v6326 = vrot.slane %v6325, 2
        %v6327 = vmax.f32 %v6325, %v6326
        %v6328 = vrot.slane %v6327, 1
        %v6329 = vmax.f32 %v6327, %v6328
        %v6330 = vsel %vm4344, %v6254, -inf
        %v6331 = vrot.slane %v6330, 4
        %v6332 = vmax.f32 %v6330, %v6331
        %v6333 = vrot.slane %v6332, 2
        %v6334 = vmax.f32 %v6332, %v6333
        %v6335 = vrot.slane %v6334, 1
        %v6336 = vmax.f32 %v6334, %v6335
        %v6337 = vsel %vm4344, %v6253, -inf
        %v6338 = vrot.slane %v6337, 4
        %v6339 = vmax.f32 %v6337, %v6338
        %v6340 = vrot.slane %v6339, 2
        %v6341 = vmax.f32 %v6339, %v6340
        %v6342 = vrot.slane %v6341, 1
        %v6343 = vmax.f32 %v6341, %v6342
        %v6344 = vsel %vm4344, %v6255, -inf
        %v6345 = vrot.slane %v6344, 4
        %v6346 = vmax.f32 %v6344, %v6345
        %v6347 = vrot.slane %v6346, 2
        %v6348 = vmax.f32 %v6346, %v6347
        %v6349 = vrot.slane %v6348, 1
        %v6350 = vmax.f32 %v6348, %v6349
        %v6351 = vsel %vm4344, %v6263, -inf
        %v6352 = vrot.slane %v6351, 4
        %v6353 = vmax.f32 %v6351, %v6352
        %v6354 = vrot.slane %v6353, 2
        %v6355 = vmax.f32 %v6353, %v6354
        %v6356 = vrot.slane %v6355, 1
        %v6357 = vmax.f32 %v6355, %v6356
        %v6358 = vsel %vm4344, %v6271, -inf
        %v6359 = vrot.slane %v6358, 4
        %v6360 = vmax.f32 %v6358, %v6359
        %v6361 = vrot.slane %v6360, 2
        %v6362 = vmax.f32 %v6360, %v6361
        %v6363 = vrot.slane %v6362, 1
        %v6364 = vmax.f32 %v6362, %v6363
        %v6365 = vsel %vm4344, %v6270, -inf
        %v6366 = vrot.slane %v6365, 4
        %v6367 = vmax.f32 %v6365, %v6366
        %v6368 = vrot.slane %v6367, 2
        %v6369 = vmax.f32 %v6367, %v6368
        %v6370 = vrot.slane %v6369, 1
        %v6371 = vmax.f32 %v6369, %v6370
        %v6372 = vsel %vm4344, %v6272, -inf
        %v6373 = vrot.slane %v6372, 4
        %v6374 = vmax.f32 %v6372, %v6373
        %v6375 = vrot.slane %v6374, 2
        %v6376 = vmax.f32 %v6374, %v6375
        %v6377 = vrot.slane %v6376, 1
        %v6378 = vmax.f32 %v6376, %v6377
        %v6379 = vsel %vm4344, %v6280, -inf
        %v6380 = vrot.slane %v6379, 4
        %v6381 = vmax.f32 %v6379, %v6380
        %v6382 = vrot.slane %v6381, 2
        %v6383 = vmax.f32 %v6381, %v6382
        %v6384 = vrot.slane %v6383, 1
        %v6385 = vmax.f32 %v6383, %v6384
        %v6386 = vsel %vm4344, %v6288, -inf
        %v6387 = vrot.slane %v6386, 4
        %v6388 = vmax.f32 %v6386, %v6387
        %v6389 = vrot.slane %v6388, 2
        %v6390 = vmax.f32 %v6388, %v6389
        %v6391 = vrot.slane %v6390, 1
        %v6392 = vmax.f32 %v6390, %v6391
        %v6393 = vsel %vm4344, %v6287, -inf
        %v6394 = vrot.slane %v6393, 4
        %v6395 = vmax.f32 %v6393, %v6394
        %v6396 = vrot.slane %v6395, 2
        %v6397 = vmax.f32 %v6395, %v6396
        %v6398 = vrot.slane %v6397, 1
        %v6399 = vmax.f32 %v6397, %v6398
        %v6400 = vsel %vm4344, %v6289, -inf
        %v6401 = vrot.slane %v6400, 4
        %v6402 = vmax.f32 %v6400, %v6401
        %v6403 = vrot.slane %v6402, 2
        %v6404 = vmax.f32 %v6402, %v6403
        %v6405 = vrot.slane %v6404, 1
        %v6406 = vmax.f32 %v6404, %v6405
        %v6407 = vsel %vm4344, %v6297, -inf
        %v6408 = vrot.slane %v6407, 4
        %v6409 = vmax.f32 %v6407, %v6408
        %v6410 = vrot.slane %v6409, 2
        %v6411 = vmax.f32 %v6409, %v6410
        %v6412 = vrot.slane %v6411, 1
        %v6413 = vmax.f32 %v6411, %v6412
        %v6414 = vsel %vm4344, %v6305, -inf
        %v6415 = vrot.slane %v6414, 4
        %v6416 = vmax.f32 %v6414, %v6415
        %v6417 = vrot.slane %v6416, 2
        %v6418 = vmax.f32 %v6416, %v6417
        %v6419 = vrot.slane %v6418, 1
        %v6420 = vmax.f32 %v6418, %v6419
        %v6421 = vsel %vm4344, %v6304, -inf
        %v6422 = vrot.slane %v6421, 4
        %v6423 = vmax.f32 %v6421, %v6422
        %v6424 = vrot.slane %v6423, 2
        %v6425 = vmax.f32 %v6423, %v6424
        %v6426 = vrot.slane %v6425, 1
        %v6427 = vmax.f32 %v6425, %v6426
        %v6428 = vsel %vm4344, %v6306, -inf
        %v6429 = vrot.slane %v6428, 4
        %v6430 = vmax.f32 %v6428, %v6429
        %v6431 = vrot.slane %v6430, 2
        %v6432 = vmax.f32 %v6430, %v6431
        %v6433 = vrot.slane %v6432, 1
        %v6434 = vmax.f32 %v6432, %v6433
        %v6435 = vld [vmem:[#allocation7] sm:$0xff]
        %v6436 = vld [vmem:[#allocation7 + $0x8] sm:$0xff]
        %v6437 = vld [vmem:[#allocation7 + $0x10] sm:$0xff]
        %v6438 = vld [vmem:[#allocation7 + $0x18] sm:$0xff]
        %v6439 = vld [vmem:[#allocation7 + $0x20] sm:$0xff]
        %v6440 = vld [vmem:[#allocation7 + $0x28] sm:$0xff]
        %v6441 = vld [vmem:[#allocation7 + $0x30] sm:$0xff]
        %v6442 = vld [vmem:[#allocation7 + $0x38] sm:$0xff]
        %v6443 = vld [vmem:[#allocation7 + $0x40] sm:$0xff]
        %v6444 = vld [vmem:[#allocation7 + $0x48] sm:$0xff]
        %v6445 = vld [vmem:[#allocation7 + $0x50] sm:$0xff]
        %v6446 = vld [vmem:[#allocation7 + $0x58] sm:$0xff]
        %v6447 = vld [vmem:[#allocation7 + $0x60] sm:$0xff]
        %v6448 = vld [vmem:[#allocation7 + $0x68] sm:$0xff]
        %v6449 = vld [vmem:[#allocation7 + $0x70] sm:$0xff]
        %v6450 = vld [vmem:[#allocation7 + $0x78] sm:$0xff]
        %s6451 = scalar_lea.vmem [#allocation7], 128
        %v6452 = vld [vmem:[%s6451] sm:$0xff]
        %v6453 = vld [vmem:[%s6451 + $0x8] sm:$0xff]
        %v6454 = vld [vmem:[%s6451 + $0x10] sm:$0xff]
        %v6455 = vld [vmem:[%s6451 + $0x18] sm:$0xff]
        %v6456 = vld [vmem:[%s6451 + $0x20] sm:$0xff]
        %v6457 = vld [vmem:[%s6451 + $0x28] sm:$0xff]
        %v6458 = vld [vmem:[%s6451 + $0x30] sm:$0xff]
        %v6459 = vld [vmem:[%s6451 + $0x38] sm:$0xff]
        %v6460 = vld [vmem:[%s6451 + $0x40] sm:$0xff]
        %v6461 = vld [vmem:[%s6451 + $0x48] sm:$0xff]
        %v6462 = vld [vmem:[%s6451 + $0x50] sm:$0xff]
        %v6463 = vld [vmem:[%s6451 + $0x58] sm:$0xff]
        %v6464 = vld [vmem:[%s6451 + $0x60] sm:$0xff]
        %v6465 = vld [vmem:[%s6451 + $0x68] sm:$0xff]
        %v6466 = vld [vmem:[%s6451 + $0x70] sm:$0xff]
        %v6467 = vld [vmem:[%s6451 + $0x78] sm:$0xff]
        %6468 = vmatprep.subr.mxu0 0.0
        %6469 = vmatpush1.msra.mxu0 %v6452
        %6470 = vmatprep.subr.mxu0 0.0
        %6471 = vmatpush1.msra.mxu0 %v6453
        %6472 = vmatprep.subr.mxu0 0.0
        %6473 = vmatpush1.msra.mxu0 %v6454
        %6474 = vmatprep.subr.mxu0 0.0
        %6475 = vmatpush1.msra.mxu0 %v6455
        %6476 = vmatprep.subr.mxu0 0.0
        %6477 = vmatpush1.msra.mxu0 %v6456
        %6478 = vmatprep.subr.mxu0 0.0
        %6479 = vmatpush1.msra.mxu0 %v6457
        %6480 = vmatprep.subr.mxu0 0.0
        %6481 = vmatpush1.msra.mxu0 %v6458
        %6482 = vmatprep.subr.mxu0 0.0
        %6483 = vmatpush1.msra.mxu0 %v6459
        %6484 = vmatprep.subr.mxu0 0.0
        %6485 = vmatpush1.msra.mxu0 %v6460
        %6486 = vmatprep.subr.mxu0 0.0
        %6487 = vmatpush1.msra.mxu0 %v6461
        %6488 = vmatprep.subr.mxu0 0.0
        %6489 = vmatpush1.msra.mxu0 %v6462
        %6490 = vmatprep.subr.mxu0 0.0
        %6491 = vmatpush1.msra.mxu0 %v6463
        %6492 = vmatprep.subr.mxu0 0.0
        %6493 = vmatpush1.msra.mxu0 %v6464
        %6494 = vmatprep.subr.mxu0 0.0
        %6495 = vmatpush1.msra.mxu0 %v6465
        %6496 = vmatprep.subr.mxu0 0.0
        %6497 = vmatpush1.msra.mxu0 %v6466
        %6498 = vmatprep.subr.mxu0 0.0
        %6499 = vmatpush1.msra.mxu0 %v6467
        %6500 = vmatprep.subr.mxu0 0.0
        %6501 = vmatpush1.msra.mxu0 0.0
        %6502 = vmatprep.subr.mxu0 0.0
        %6503 = vmatpush1.msra.mxu0 0.0
        %6504 = vmatprep.subr.mxu0 0.0
        %6505 = vmatpush1.msra.mxu0 0.0
        %6506 = vmatprep.subr.mxu0 0.0
        %6507 = vmatpush1.msra.mxu0 0.0
        %6508 = vmatprep.subr.mxu0 0.0
        %6509 = vmatpush1.msra.mxu0 0.0
        %6510 = vmatprep.subr.mxu0 0.0
        %6511 = vmatpush1.msra.mxu0 0.0
        %6512 = vmatprep.subr.mxu0 0.0
        %6513 = vmatpush1.msra.mxu0 0.0
        %6514 = vmatprep.subr.mxu0 0.0
        %6515 = vmatpush1.msra.mxu0 0.0
        %6516 = vmatprep.subr.mxu0 0.0
        %6517 = vmatpush1.msra.mxu0 0.0
        %6518 = vmatprep.subr.mxu0 0.0
        %6519 = vmatpush1.msra.mxu0 0.0
        %6520 = vmatprep.subr.mxu0 0.0
        %6521 = vmatpush1.msra.mxu0 0.0
        %6522 = vmatprep.subr.mxu0 0.0
        %6523 = vmatpush1.msra.mxu0 0.0
        %6524 = vmatprep.subr.mxu0 0.0
        %6525 = vmatpush1.msra.mxu0 0.0
        %6526 = vmatprep.subr.mxu0 0.0
        %6527 = vmatpush1.msra.mxu0 0.0
        %6528 = vmatprep.subr.mxu0 0.0
        %6529 = vmatpush1.msra.mxu0 0.0
        %6530 = vmatprep.subr.mxu0 0.0
        %6531 = vmatpush1.msra.mxu0 0.0
        %6532 = vmatprep.mubr.f32.mxu0 0.0
        %6533 = vmatmul.mubr.f32.gmra.mrb[0].mxu0 %v6336
        %v6534 = vpop.f32.mrb[0].mxu0
        %v6535 = vadd.f32 0.0, %v6534
        %v6536 = vpop.f32.mrb[0].mxu0
        %6537 = vdwg.mxu0
        %6538 = vmatprep.subr.mxu0 0.0
        %6539 = vmatpush1.msra.mxu0 %v6435
        %6540 = vmatprep.subr.mxu0 0.0
        %6541 = vmatpush1.msra.mxu0 %v6436
        %6542 = vmatprep.subr.mxu0 0.0
        %6543 = vmatpush1.msra.mxu0 %v6437
        %6544 = vmatprep.subr.mxu0 0.0
        %6545 = vmatpush1.msra.mxu0 %v6438
        %6546 = vmatprep.subr.mxu0 0.0
        %6547 = vmatpush1.msra.mxu0 %v6439
        %6548 = vmatprep.subr.mxu0 0.0
        %6549 = vmatpush1.msra.mxu0 %v6440
        %6550 = vmatprep.subr.mxu0 0.0
        %6551 = vmatpush1.msra.mxu0 %v6441
        %6552 = vmatprep.subr.mxu0 0.0
        %6553 = vmatpush1.msra.mxu0 %v6442
        %6554 = vmatprep.subr.mxu0 0.0
        %6555 = vmatpush1.msra.mxu0 %v6443
        %6556 = vmatprep.subr.mxu0 0.0
        %6557 = vmatpush1.msra.mxu0 %v6444
        %6558 = vmatprep.subr.mxu0 0.0
        %6559 = vmatpush1.msra.mxu0 %v6445
        %6560 = vmatprep.subr.mxu0 0.0
        %6561 = vmatpush1.msra.mxu0 %v6446
        %6562 = vmatprep.subr.mxu0 0.0
        %6563 = vmatpush1.msra.mxu0 %v6447
        %6564 = vmatprep.subr.mxu0 0.0
        %6565 = vmatpush1.msra.mxu0 %v6448
        %6566 = vmatprep.subr.mxu0 0.0
        %6567 = vmatpush1.msra.mxu0 %v6449
        %6568 = vmatprep.subr.mxu0 0.0
        %6569 = vmatpush1.msra.mxu0 %v6450
        %6570 = vmatprep.subr.mxu0 0.0
        %6571 = vmatpush1.msra.mxu0 0.0
        %6572 = vmatprep.subr.mxu0 0.0
        %6573 = vmatpush1.msra.mxu0 0.0
        %6574 = vmatprep.subr.mxu0 0.0
        %6575 = vmatpush1.msra.mxu0 0.0
        %6576 = vmatprep.subr.mxu0 0.0
        %6577 = vmatpush1.msra.mxu0 0.0
        %6578 = vmatprep.subr.mxu0 0.0
        %6579 = vmatpush1.msra.mxu0 0.0
        %6580 = vmatprep.subr.mxu0 0.0
        %6581 = vmatpush1.msra.mxu0 0.0
        %6582 = vmatprep.subr.mxu0 0.0
        %6583 = vmatpush1.msra.mxu0 0.0
        %6584 = vmatprep.subr.mxu0 0.0
        %6585 = vmatpush1.msra.mxu0 0.0
        %6586 = vmatprep.subr.mxu0 0.0
        %6587 = vmatpush1.msra.mxu0 0.0
        %6588 = vmatprep.subr.mxu0 0.0
        %6589 = vmatpush1.msra.mxu0 0.0
        %6590 = vmatprep.subr.mxu0 0.0
        %6591 = vmatpush1.msra.mxu0 0.0
        %6592 = vmatprep.subr.mxu0 0.0
        %6593 = vmatpush1.msra.mxu0 0.0
        %6594 = vmatprep.subr.mxu0 0.0
        %6595 = vmatpush1.msra.mxu0 0.0
        %6596 = vmatprep.subr.mxu0 0.0
        %6597 = vmatpush1.msra.mxu0 0.0
        %6598 = vmatprep.subr.mxu0 0.0
        %6599 = vmatpush1.msra.mxu0 0.0
        %6600 = vmatprep.subr.mxu0 0.0
        %6601 = vmatpush1.msra.mxu0 0.0
        %6602 = vmatprep.mubr.f32.mxu0 0.0
        %6603 = vmatmul.mubr.f32.gmra.mrb[0].mxu0 %v6329
        %v6604 = vpop.f32.mrb[0].mxu0
        %v6605 = vadd.f32 %v6535, %v6604
        %v6606 = vpop.f32.mrb[0].mxu0
        %6607 = vdwg.mxu0
        %s6608 = scalar_lea.vmem [#allocation7], 256
        %v6609 = vld [vmem:[%s6608] sm:$0xff]
        %v6610 = vld [vmem:[%s6608 + $0x8] sm:$0xff]
        %v6611 = vld [vmem:[%s6608 + $0x10] sm:$0xff]
        %v6612 = vld [vmem:[%s6608 + $0x18] sm:$0xff]
        %v6613 = vld [vmem:[%s6608 + $0x20] sm:$0xff]
        %v6614 = vld [vmem:[%s6608 + $0x28] sm:$0xff]
        %v6615 = vld [vmem:[%s6608 + $0x30] sm:$0xff]
        %v6616 = vld [vmem:[%s6608 + $0x38] sm:$0xff]
        %v6617 = vld [vmem:[%s6608 + $0x40] sm:$0xff]
        %v6618 = vld [vmem:[%s6608 + $0x48] sm:$0xff]
        %v6619 = vld [vmem:[%s6608 + $0x50] sm:$0xff]
        %v6620 = vld [vmem:[%s6608 + $0x58] sm:$0xff]
        %v6621 = vld [vmem:[%s6608 + $0x60] sm:$0xff]
        %v6622 = vld [vmem:[%s6608 + $0x68] sm:$0xff]
        %v6623 = vld [vmem:[%s6608 + $0x70] sm:$0xff]
        %v6624 = vld [vmem:[%s6608 + $0x78] sm:$0xff]
        %6625 = vmatprep.subr.mxu0 0.0
        %6626 = vmatpush1.msra.mxu0 %v6609
        %6627 = vmatprep.subr.mxu0 0.0
        %6628 = vmatpush1.msra.mxu0 %v6610
        %6629 = vmatprep.subr.mxu0 0.0
        %6630 = vmatpush1.msra.mxu0 %v6611
        %6631 = vmatprep.subr.mxu0 0.0
        %6632 = vmatpush1.msra.mxu0 %v6612
        %6633 = vmatprep.subr.mxu0 0.0
        %6634 = vmatpush1.msra.mxu0 %v6613
        %6635 = vmatprep.subr.mxu0 0.0
        %6636 = vmatpush1.msra.mxu0 %v6614
        %6637 = vmatprep.subr.mxu0 0.0
        %6638 = vmatpush1.msra.mxu0 %v6615
        %6639 = vmatprep.subr.mxu0 0.0
        %6640 = vmatpush1.msra.mxu0 %v6616
        %6641 = vmatprep.subr.mxu0 0.0
        %6642 = vmatpush1.msra.mxu0 %v6617
        %6643 = vmatprep.subr.mxu0 0.0
        %6644 = vmatpush1.msra.mxu0 %v6618
        %6645 = vmatprep.subr.mxu0 0.0
        %6646 = vmatpush1.msra.mxu0 %v6619
        %6647 = vmatprep.subr.mxu0 0.0
        %6648 = vmatpush1.msra.mxu0 %v6620
        %6649 = vmatprep.subr.mxu0 0.0
        %6650 = vmatpush1.msra.mxu0 %v6621
        %6651 = vmatprep.subr.mxu0 0.0
        %6652 = vmatpush1.msra.mxu0 %v6622
        %6653 = vmatprep.subr.mxu0 0.0
        %6654 = vmatpush1.msra.mxu0 %v6623
        %6655 = vmatprep.subr.mxu0 0.0
        %6656 = vmatpush1.msra.mxu0 %v6624
        %6657 = vmatprep.subr.mxu0 0.0
        %6658 = vmatpush1.msra.mxu0 0.0
        %6659 = vmatprep.subr.mxu0 0.0
        %6660 = vmatpush1.msra.mxu0 0.0
        %6661 = vmatprep.subr.mxu0 0.0
        %6662 = vmatpush1.msra.mxu0 0.0
        %6663 = vmatprep.subr.mxu0 0.0
        %6664 = vmatpush1.msra.mxu0 0.0
        %6665 = vmatprep.subr.mxu0 0.0
        %6666 = vmatpush1.msra.mxu0 0.0
        %6667 = vmatprep.subr.mxu0 0.0
        %6668 = vmatpush1.msra.mxu0 0.0
        %6669 = vmatprep.subr.mxu0 0.0
        %6670 = vmatpush1.msra.mxu0 0.0
        %6671 = vmatprep.subr.mxu0 0.0
        %6672 = vmatpush1.msra.mxu0 0.0
        %6673 = vmatprep.subr.mxu0 0.0
        %6674 = vmatpush1.msra.mxu0 0.0
        %6675 = vmatprep.subr.mxu0 0.0
        %6676 = vmatpush1.msra.mxu0 0.0
        %6677 = vmatprep.subr.mxu0 0.0
        %6678 = vmatpush1.msra.mxu0 0.0
        %6679 = vmatprep.subr.mxu0 0.0
        %6680 = vmatpush1.msra.mxu0 0.0
        %6681 = vmatprep.subr.mxu0 0.0
        %6682 = vmatpush1.msra.mxu0 0.0
        %6683 = vmatprep.subr.mxu0 0.0
        %6684 = vmatpush1.msra.mxu0 0.0
        %6685 = vmatprep.subr.mxu0 0.0
        %6686 = vmatpush1.msra.mxu0 0.0
        %6687 = vmatprep.subr.mxu0 0.0
        %6688 = vmatpush1.msra.mxu0 0.0
        %6689 = vmatprep.mubr.f32.mxu0 0.0
        %6690 = vmatmul.mubr.f32.gmra.mrb[0].mxu0 %v6343
        %v6691 = vpop.f32.mrb[0].mxu0
        %v6692 = vadd.f32 0.0, %v6691
        %v6693 = vpop.f32.mrb[0].mxu0
        %6694 = vdwg.mxu0
        %v6695 = vadd.f32 %v6605, %v6692
        %s6696 = scalar_lea.vmem [#allocation7], 384
        %v6697 = vld [vmem:[%s6696] sm:$0xff]
        %v6698 = vld [vmem:[%s6696 + $0x8] sm:$0xff]
        %v6699 = vld [vmem:[%s6696 + $0x10] sm:$0xff]
        %v6700 = vld [vmem:[%s6696 + $0x18] sm:$0xff]
        %v6701 = vld [vmem:[%s6696 + $0x20] sm:$0xff]
        %v6702 = vld [vmem:[%s6696 + $0x28] sm:$0xff]
        %v6703 = vld [vmem:[%s6696 + $0x30] sm:$0xff]
        %v6704 = vld [vmem:[%s6696 + $0x38] sm:$0xff]
        %v6705 = vld [vmem:[%s6696 + $0x40] sm:$0xff]
        %v6706 = vld [vmem:[%s6696 + $0x48] sm:$0xff]
        %v6707 = vld [vmem:[%s6696 + $0x50] sm:$0xff]
        %v6708 = vld [vmem:[%s6696 + $0x58] sm:$0xff]
        %v6709 = vld [vmem:[%s6696 + $0x60] sm:$0xff]
        %v6710 = vld [vmem:[%s6696 + $0x68] sm:$0xff]
        %v6711 = vld [vmem:[%s6696 + $0x70] sm:$0xff]
        %v6712 = vld [vmem:[%s6696 + $0x78] sm:$0xff]
        %6713 = vmatprep.subr.mxu0 0.0
        %6714 = vmatpush1.msra.mxu0 %v6697
        %6715 = vmatprep.subr.mxu0 0.0
        %6716 = vmatpush1.msra.mxu0 %v6698
        %6717 = vmatprep.subr.mxu0 0.0
        %6718 = vmatpush1.msra.mxu0 %v6699
        %6719 = vmatprep.subr.mxu0 0.0
        %6720 = vmatpush1.msra.mxu0 %v6700
        %6721 = vmatprep.subr.mxu0 0.0
        %6722 = vmatpush1.msra.mxu0 %v6701
        %6723 = vmatprep.subr.mxu0 0.0
        %6724 = vmatpush1.msra.mxu0 %v6702
        %6725 = vmatprep.subr.mxu0 0.0
        %6726 = vmatpush1.msra.mxu0 %v6703
        %6727 = vmatprep.subr.mxu0 0.0
        %6728 = vmatpush1.msra.mxu0 %v6704
        %6729 = vmatprep.subr.mxu0 0.0
        %6730 = vmatpush1.msra.mxu0 %v6705
        %6731 = vmatprep.subr.mxu0 0.0
        %6732 = vmatpush1.msra.mxu0 %v6706
        %6733 = vmatprep.subr.mxu0 0.0
        %6734 = vmatpush1.msra.mxu0 %v6707
        %6735 = vmatprep.subr.mxu0 0.0
        %6736 = vmatpush1.msra.mxu0 %v6708
        %6737 = vmatprep.subr.mxu0 0.0
        %6738 = vmatpush1.msra.mxu0 %v6709
        %6739 = vmatprep.subr.mxu0 0.0
        %6740 = vmatpush1.msra.mxu0 %v6710
        %6741 = vmatprep.subr.mxu0 0.0
        %6742 = vmatpush1.msra.mxu0 %v6711
        %6743 = vmatprep.subr.mxu0 0.0
        %6744 = vmatpush1.msra.mxu0 %v6712
        %6745 = vmatprep.subr.mxu0 0.0
        %6746 = vmatpush1.msra.mxu0 0.0
        %6747 = vmatprep.subr.mxu0 0.0
        %6748 = vmatpush1.msra.mxu0 0.0
        %6749 = vmatprep.subr.mxu0 0.0
        %6750 = vmatpush1.msra.mxu0 0.0
        %6751 = vmatprep.subr.mxu0 0.0
        %6752 = vmatpush1.msra.mxu0 0.0
        %6753 = vmatprep.subr.mxu0 0.0
        %6754 = vmatpush1.msra.mxu0 0.0
        %6755 = vmatprep.subr.mxu0 0.0
        %6756 = vmatpush1.msra.mxu0 0.0
        %6757 = vmatprep.subr.mxu0 0.0
        %6758 = vmatpush1.msra.mxu0 0.0
        %6759 = vmatprep.subr.mxu0 0.0
        %6760 = vmatpush1.msra.mxu0 0.0
        %6761 = vmatprep.subr.mxu0 0.0
        %6762 = vmatpush1.msra.mxu0 0.0
        %6763 = vmatprep.subr.mxu0 0.0
        %6764 = vmatpush1.msra.mxu0 0.0
        %6765 = vmatprep.subr.mxu0 0.0
        %6766 = vmatpush1.msra.mxu0 0.0
        %6767 = vmatprep.subr.mxu0 0.0
        %6768 = vmatpush1.msra.mxu0 0.0
        %6769 = vmatprep.subr.mxu0 0.0
        %6770 = vmatpush1.msra.mxu0 0.0
        %6771 = vmatprep.subr.mxu0 0.0
        %6772 = vmatpush1.msra.mxu0 0.0
        %6773 = vmatprep.subr.mxu0 0.0
        %6774 = vmatpush1.msra.mxu0 0.0
        %6775 = vmatprep.subr.mxu0 0.0
        %6776 = vmatpush1.msra.mxu0 0.0
        %6777 = vmatprep.mubr.f32.mxu0 0.0
        %6778 = vmatmul.mubr.f32.gmra.mrb[0].mxu0 %v6350
        %v6779 = vpop.f32.mrb[0].mxu0
        %v6780 = vadd.f32 0.0, %v6779
        %v6781 = vpop.f32.mrb[0].mxu0
        %6782 = vdwg.mxu0
        %v6783 = vadd.f32 %v6695, %v6780
        %s6784 = scalar_lea.vmem [#allocation7], 512
        %v6785 = vld [vmem:[%s6784] sm:$0xff]
        %v6786 = vld [vmem:[%s6784 + $0x8] sm:$0xff]
        %v6787 = vld [vmem:[%s6784 + $0x10] sm:$0xff]
        %v6788 = vld [vmem:[%s6784 + $0x18] sm:$0xff]
        %v6789 = vld [vmem:[%s6784 + $0x20] sm:$0xff]
        %v6790 = vld [vmem:[%s6784 + $0x28] sm:$0xff]
        %v6791 = vld [vmem:[%s6784 + $0x30] sm:$0xff]
        %v6792 = vld [vmem:[%s6784 + $0x38] sm:$0xff]
        %v6793 = vld [vmem:[%s6784 + $0x40] sm:$0xff]
        %v6794 = vld [vmem:[%s6784 + $0x48] sm:$0xff]
        %v6795 = vld [vmem:[%s6784 + $0x50] sm:$0xff]
        %v6796 = vld [vmem:[%s6784 + $0x58] sm:$0xff]
        %v6797 = vld [vmem:[%s6784 + $0x60] sm:$0xff]
        %v6798 = vld [vmem:[%s6784 + $0x68] sm:$0xff]
        %v6799 = vld [vmem:[%s6784 + $0x70] sm:$0xff]
        %v6800 = vld [vmem:[%s6784 + $0x78] sm:$0xff]
        %6801 = vmatprep.subr.mxu0 0.0
        %6802 = vmatpush1.msra.mxu0 %v6785
        %6803 = vmatprep.subr.mxu0 0.0
        %6804 = vmatpush1.msra.mxu0 %v6786
        %6805 = vmatprep.subr.mxu0 0.0
        %6806 = vmatpush1.msra.mxu0 %v6787
        %6807 = vmatprep.subr.mxu0 0.0
        %6808 = vmatpush1.msra.mxu0 %v6788
        %6809 = vmatprep.subr.mxu0 0.0
        %6810 = vmatpush1.msra.mxu0 %v6789
        %6811 = vmatprep.subr.mxu0 0.0
        %6812 = vmatpush1.msra.mxu0 %v6790
        %6813 = vmatprep.subr.mxu0 0.0
        %6814 = vmatpush1.msra.mxu0 %v6791
        %6815 = vmatprep.subr.mxu0 0.0
        %6816 = vmatpush1.msra.mxu0 %v6792
        %6817 = vmatprep.subr.mxu0 0.0
        %6818 = vmatpush1.msra.mxu0 %v6793
        %6819 = vmatprep.subr.mxu0 0.0
        %6820 = vmatpush1.msra.mxu0 %v6794
        %6821 = vmatprep.subr.mxu0 0.0
        %6822 = vmatpush1.msra.mxu0 %v6795
        %6823 = vmatprep.subr.mxu0 0.0
        %6824 = vmatpush1.msra.mxu0 %v6796
        %6825 = vmatprep.subr.mxu0 0.0
        %6826 = vmatpush1.msra.mxu0 %v6797
        %6827 = vmatprep.subr.mxu0 0.0
        %6828 = vmatpush1.msra.mxu0 %v6798
        %6829 = vmatprep.subr.mxu0 0.0
        %6830 = vmatpush1.msra.mxu0 %v6799
        %6831 = vmatprep.subr.mxu0 0.0
        %6832 = vmatpush1.msra.mxu0 %v6800
        %6833 = vmatprep.subr.mxu0 0.0
        %6834 = vmatpush1.msra.mxu0 0.0
        %6835 = vmatprep.subr.mxu0 0.0
        %6836 = vmatpush1.msra.mxu0 0.0
        %6837 = vmatprep.subr.mxu0 0.0
        %6838 = vmatpush1.msra.mxu0 0.0
        %6839 = vmatprep.subr.mxu0 0.0
        %6840 = vmatpush1.msra.mxu0 0.0
        %6841 = vmatprep.subr.mxu0 0.0
        %6842 = vmatpush1.msra.mxu0 0.0
        %6843 = vmatprep.subr.mxu0 0.0
        %6844 = vmatpush1.msra.mxu0 0.0
        %6845 = vmatprep.subr.mxu0 0.0
        %6846 = vmatpush1.msra.mxu0 0.0
        %6847 = vmatprep.subr.mxu0 0.0
        %6848 = vmatpush1.msra.mxu0 0.0
        %6849 = vmatprep.subr.mxu0 0.0
        %6850 = vmatpush1.msra.mxu0 0.0
        %6851 = vmatprep.subr.mxu0 0.0
        %6852 = vmatpush1.msra.mxu0 0.0
        %6853 = vmatprep.subr.mxu0 0.0
        %6854 = vmatpush1.msra.mxu0 0.0
        %6855 = vmatprep.subr.mxu0 0.0
        %6856 = vmatpush1.msra.mxu0 0.0
        %6857 = vmatprep.subr.mxu0 0.0
        %6858 = vmatpush1.msra.mxu0 0.0
        %6859 = vmatprep.subr.mxu0 0.0
        %6860 = vmatpush1.msra.mxu0 0.0
        %6861 = vmatprep.subr.mxu0 0.0
        %6862 = vmatpush1.msra.mxu0 0.0
        %6863 = vmatprep.subr.mxu0 0.0
        %6864 = vmatpush1.msra.mxu0 0.0
        %6865 = vmatprep.mubr.f32.mxu0 0.0
        %6866 = vmatmul.mubr.f32.gmra.mrb[0].mxu0 %v6357
        %v6867 = vpop.f32.mrb[0].mxu0
        %v6868 = vadd.f32 0.0, %v6867
        %v6869 = vpop.f32.mrb[0].mxu0
        %6870 = vdwg.mxu0
        %v6871 = vadd.f32 %v6783, %v6868
        %s6872 = scalar_lea.vmem [#allocation7], 640
        %v6873 = vld [vmem:[%s6872] sm:$0xff]
        %v6874 = vld [vmem:[%s6872 + $0x8] sm:$0xff]
        %v6875 = vld [vmem:[%s6872 + $0x10] sm:$0xff]
        %v6876 = vld [vmem:[%s6872 + $0x18] sm:$0xff]
        %v6877 = vld [vmem:[%s6872 + $0x20] sm:$0xff]
        %v6878 = vld [vmem:[%s6872 + $0x28] sm:$0xff]
        %v6879 = vld [vmem:[%s6872 + $0x30] sm:$0xff]
        %v6880 = vld [vmem:[%s6872 + $0x38] sm:$0xff]
        %v6881 = vld [vmem:[%s6872 + $0x40] sm:$0xff]
        %v6882 = vld [vmem:[%s6872 + $0x48] sm:$0xff]
        %v6883 = vld [vmem:[%s6872 + $0x50] sm:$0xff]
        %v6884 = vld [vmem:[%s6872 + $0x58] sm:$0xff]
        %v6885 = vld [vmem:[%s6872 + $0x60] sm:$0xff]
        %v6886 = vld [vmem:[%s6872 + $0x68] sm:$0xff]
        %v6887 = vld [vmem:[%s6872 + $0x70] sm:$0xff]
        %v6888 = vld [vmem:[%s6872 + $0x78] sm:$0xff]
        %6889 = vmatprep.subr.mxu0 0.0
        %6890 = vmatpush1.msra.mxu0 %v6873
        %6891 = vmatprep.subr.mxu0 0.0
        %6892 = vmatpush1.msra.mxu0 %v6874
        %6893 = vmatprep.subr.mxu0 0.0
        %6894 = vmatpush1.msra.mxu0 %v6875
        %6895 = vmatprep.subr.mxu0 0.0
        %6896 = vmatpush1.msra.mxu0 %v6876
        %6897 = vmatprep.subr.mxu0 0.0
        %6898 = vmatpush1.msra.mxu0 %v6877
        %6899 = vmatprep.subr.mxu0 0.0
        %6900 = vmatpush1.msra.mxu0 %v6878
        %6901 = vmatprep.subr.mxu0 0.0
        %6902 = vmatpush1.msra.mxu0 %v6879
        %6903 = vmatprep.subr.mxu0 0.0
        %6904 = vmatpush1.msra.mxu0 %v6880
        %6905 = vmatprep.subr.mxu0 0.0
        %6906 = vmatpush1.msra.mxu0 %v6881
        %6907 = vmatprep.subr.mxu0 0.0
        %6908 = vmatpush1.msra.mxu0 %v6882
        %6909 = vmatprep.subr.mxu0 0.0
        %6910 = vmatpush1.msra.mxu0 %v6883
        %6911 = vmatprep.subr.mxu0 0.0
        %6912 = vmatpush1.msra.mxu0 %v6884
        %6913 = vmatprep.subr.mxu0 0.0
        %6914 = vmatpush1.msra.mxu0 %v6885
        %6915 = vmatprep.subr.mxu0 0.0
        %6916 = vmatpush1.msra.mxu0 %v6886
        %6917 = vmatprep.subr.mxu0 0.0
        %6918 = vmatpush1.msra.mxu0 %v6887
        %6919 = vmatprep.subr.mxu0 0.0
        %6920 = vmatpush1.msra.mxu0 %v6888
        %6921 = vmatprep.subr.mxu0 0.0
        %6922 = vmatpush1.msra.mxu0 0.0
        %6923 = vmatprep.subr.mxu0 0.0
        %6924 = vmatpush1.msra.mxu0 0.0
        %6925 = vmatprep.subr.mxu0 0.0
        %6926 = vmatpush1.msra.mxu0 0.0
        %6927 = vmatprep.subr.mxu0 0.0
        %6928 = vmatpush1.msra.mxu0 0.0
        %6929 = vmatprep.subr.mxu0 0.0
        %6930 = vmatpush1.msra.mxu0 0.0
        %6931 = vmatprep.subr.mxu0 0.0
        %6932 = vmatpush1.msra.mxu0 0.0
        %6933 = vmatprep.subr.mxu0 0.0
        %6934 = vmatpush1.msra.mxu0 0.0
        %6935 = vmatprep.subr.mxu0 0.0
        %6936 = vmatpush1.msra.mxu0 0.0
        %6937 = vmatprep.subr.mxu0 0.0
        %6938 = vmatpush1.msra.mxu0 0.0
        %6939 = vmatprep.subr.mxu0 0.0
        %6940 = vmatpush1.msra.mxu0 0.0
        %6941 = vmatprep.subr.mxu0 0.0
        %6942 = vmatpush1.msra.mxu0 0.0
        %6943 = vmatprep.subr.mxu0 0.0
        %6944 = vmatpush1.msra.mxu0 0.0
        %6945 = vmatprep.subr.mxu0 0.0
        %6946 = vmatpush1.msra.mxu0 0.0
        %6947 = vmatprep.subr.mxu0 0.0
        %6948 = vmatpush1.msra.mxu0 0.0
        %6949 = vmatprep.subr.mxu0 0.0
        %6950 = vmatpush1.msra.mxu0 0.0
        %6951 = vmatprep.subr.mxu0 0.0
        %6952 = vmatpush1.msra.mxu0 0.0
        %6953 = vmatprep.mubr.f32.mxu0 0.0
        %6954 = vmatmul.mubr.f32.gmra.mrb[0].mxu0 %v6364
        %v6955 = vpop.f32.mrb[0].mxu0
        %v6956 = vadd.f32 0.0, %v6955
        %v6957 = vpop.f32.mrb[0].mxu0
        %6958 = vdwg.mxu0
        %v6959 = vadd.f32 %v6871, %v6956
        %s6960 = scalar_lea.vmem [#allocation7], 768
        %v6961 = vld [vmem:[%s6960] sm:$0xff]
        %v6962 = vld [vmem:[%s6960 + $0x8] sm:$0xff]
        %v6963 = vld [vmem:[%s6960 + $0x10] sm:$0xff]
        %v6964 = vld [vmem:[%s6960 + $0x18] sm:$0xff]
        %v6965 = vld [vmem:[%s6960 + $0x20] sm:$0xff]
        %v6966 = vld [vmem:[%s6960 + $0x28] sm:$0xff]
        %v6967 = vld [vmem:[%s6960 + $0x30] sm:$0xff]
        %v6968 = vld [vmem:[%s6960 + $0x38] sm:$0xff]
        %v6969 = vld [vmem:[%s6960 + $0x40] sm:$0xff]
        %v6970 = vld [vmem:[%s6960 + $0x48] sm:$0xff]
        %v6971 = vld [vmem:[%s6960 + $0x50] sm:$0xff]
        %v6972 = vld [vmem:[%s6960 + $0x58] sm:$0xff]
        %v6973 = vld [vmem:[%s6960 + $0x60] sm:$0xff]
        %v6974 = vld [vmem:[%s6960 + $0x68] sm:$0xff]
        %v6975 = vld [vmem:[%s6960 + $0x70] sm:$0xff]
        %v6976 = vld [vmem:[%s6960 + $0x78] sm:$0xff]
        %6977 = vmatprep.subr.mxu0 0.0
        %6978 = vmatpush1.msra.mxu0 %v6961
        %6979 = vmatprep.subr.mxu0 0.0
        %6980 = vmatpush1.msra.mxu0 %v6962
        %6981 = vmatprep.subr.mxu0 0.0
        %6982 = vmatpush1.msra.mxu0 %v6963
        %6983 = vmatprep.subr.mxu0 0.0
        %6984 = vmatpush1.msra.mxu0 %v6964
        %6985 = vmatprep.subr.mxu0 0.0
        %6986 = vmatpush1.msra.mxu0 %v6965
        %6987 = vmatprep.subr.mxu0 0.0
        %6988 = vmatpush1.msra.mxu0 %v6966
        %6989 = vmatprep.subr.mxu0 0.0
        %6990 = vmatpush1.msra.mxu0 %v6967
        %6991 = vmatprep.subr.mxu0 0.0
        %6992 = vmatpush1.msra.mxu0 %v6968
        %6993 = vmatprep.subr.mxu0 0.0
        %6994 = vmatpush1.msra.mxu0 %v6969
        %6995 = vmatprep.subr.mxu0 0.0
        %6996 = vmatpush1.msra.mxu0 %v6970
        %6997 = vmatprep.subr.mxu0 0.0
        %6998 = vmatpush1.msra.mxu0 %v6971
        %6999 = vmatprep.subr.mxu0 0.0
        %7000 = vmatpush1.msra.mxu0 %v6972
        %7001 = vmatprep.subr.mxu0 0.0
        %7002 = vmatpush1.msra.mxu0 %v6973
        %7003 = vmatprep.subr.mxu0 0.0
        %7004 = vmatpush1.msra.mxu0 %v6974
        %7005 = vmatprep.subr.mxu0 0.0
        %7006 = vmatpush1.msra.mxu0 %v6975
        %7007 = vmatprep.subr.mxu0 0.0
        %7008 = vmatpush1.msra.mxu0 %v6976
        %7009 = vmatprep.subr.mxu0 0.0
        %7010 = vmatpush1.msra.mxu0 0.0
        %7011 = vmatprep.subr.mxu0 0.0
        %7012 = vmatpush1.msra.mxu0 0.0
        %7013 = vmatprep.subr.mxu0 0.0
        %7014 = vmatpush1.msra.mxu0 0.0
        %7015 = vmatprep.subr.mxu0 0.0
        %7016 = vmatpush1.msra.mxu0 0.0
        %7017 = vmatprep.subr.mxu0 0.0
        %7018 = vmatpush1.msra.mxu0 0.0
        %7019 = vmatprep.subr.mxu0 0.0
        %7020 = vmatpush1.msra.mxu0 0.0
        %7021 = vmatprep.subr.mxu0 0.0
        %7022 = vmatpush1.msra.mxu0 0.0
        %7023 = vmatprep.subr.mxu0 0.0
        %7024 = vmatpush1.msra.mxu0 0.0
        %7025 = vmatprep.subr.mxu0 0.0
        %7026 = vmatpush1.msra.mxu0 0.0
        %7027 = vmatprep.subr.mxu0 0.0
        %7028 = vmatpush1.msra.mxu0 0.0
        %7029 = vmatprep.subr.mxu0 0.0
        %7030 = vmatpush1.msra.mxu0 0.0
        %7031 = vmatprep.subr.mxu0 0.0
        %7032 = vmatpush1.msra.mxu0 0.0
        %7033 = vmatprep.subr.mxu0 0.0
        %7034 = vmatpush1.msra.mxu0 0.0
        %7035 = vmatprep.subr.mxu0 0.0
        %7036 = vmatpush1.msra.mxu0 0.0
        %7037 = vmatprep.subr.mxu0 0.0
        %7038 = vmatpush1.msra.mxu0 0.0
        %7039 = vmatprep.subr.mxu0 0.0
        %7040 = vmatpush1.msra.mxu0 0.0
        %7041 = vmatprep.mubr.f32.mxu0 0.0
        %7042 = vmatmul.mubr.f32.gmra.mrb[0].mxu0 %v6371
        %v7043 = vpop.f32.mrb[0].mxu0
        %v7044 = vadd.f32 0.0, %v7043
        %v7045 = vpop.f32.mrb[0].mxu0
        %7046 = vdwg.mxu0
        %v7047 = vadd.f32 %v6959, %v7044
        %s7048 = scalar_lea.vmem [#allocation7], 896
        %v7049 = vld [vmem:[%s7048] sm:$0xff]
        %v7050 = vld [vmem:[%s7048 + $0x8] sm:$0xff]
        %v7051 = vld [vmem:[%s7048 + $0x10] sm:$0xff]
        %v7052 = vld [vmem:[%s7048 + $0x18] sm:$0xff]
        %v7053 = vld [vmem:[%s7048 + $0x20] sm:$0xff]
        %v7054 = vld [vmem:[%s7048 + $0x28] sm:$0xff]
        %v7055 = vld [vmem:[%s7048 + $0x30] sm:$0xff]
        %v7056 = vld [vmem:[%s7048 + $0x38] sm:$0xff]
        %v7057 = vld [vmem:[%s7048 + $0x40] sm:$0xff]
        %v7058 = vld [vmem:[%s7048 + $0x48] sm:$0xff]
        %v7059 = vld [vmem:[%s7048 + $0x50] sm:$0xff]
        %v7060 = vld [vmem:[%s7048 + $0x58] sm:$0xff]
        %v7061 = vld [vmem:[%s7048 + $0x60] sm:$0xff]
        %v7062 = vld [vmem:[%s7048 + $0x68] sm:$0xff]
        %v7063 = vld [vmem:[%s7048 + $0x70] sm:$0xff]
        %v7064 = vld [vmem:[%s7048 + $0x78] sm:$0xff]
        %7065 = vmatprep.subr.mxu0 0.0
        %7066 = vmatpush1.msra.mxu0 %v7049
        %7067 = vmatprep.subr.mxu0 0.0
        %7068 = vmatpush1.msra.mxu0 %v7050
        %7069 = vmatprep.subr.mxu0 0.0
        %7070 = vmatpush1.msra.mxu0 %v7051
        %7071 = vmatprep.subr.mxu0 0.0
        %7072 = vmatpush1.msra.mxu0 %v7052
        %7073 = vmatprep.subr.mxu0 0.0
        %7074 = vmatpush1.msra.mxu0 %v7053
        %7075 = vmatprep.subr.mxu0 0.0
        %7076 = vmatpush1.msra.mxu0 %v7054
        %7077 = vmatprep.subr.mxu0 0.0
        %7078 = vmatpush1.msra.mxu0 %v7055
        %7079 = vmatprep.subr.mxu0 0.0
        %7080 = vmatpush1.msra.mxu0 %v7056
        %7081 = vmatprep.subr.mxu0 0.0
        %7082 = vmatpush1.msra.mxu0 %v7057
        %7083 = vmatprep.subr.mxu0 0.0
        %7084 = vmatpush1.msra.mxu0 %v7058
        %7085 = vmatprep.subr.mxu0 0.0
        %7086 = vmatpush1.msra.mxu0 %v7059
        %7087 = vmatprep.subr.mxu0 0.0
        %7088 = vmatpush1.msra.mxu0 %v7060
        %7089 = vmatprep.subr.mxu0 0.0
        %7090 = vmatpush1.msra.mxu0 %v7061
        %7091 = vmatprep.subr.mxu0 0.0
        %7092 = vmatpush1.msra.mxu0 %v7062
        %7093 = vmatprep.subr.mxu0 0.0
        %7094 = vmatpush1.msra.mxu0 %v7063
        %7095 = vmatprep.subr.mxu0 0.0
        %7096 = vmatpush1.msra.mxu0 %v7064
        %7097 = vmatprep.subr.mxu0 0.0
        %7098 = vmatpush1.msra.mxu0 0.0
        %7099 = vmatprep.subr.mxu0 0.0
        %7100 = vmatpush1.msra.mxu0 0.0
        %7101 = vmatprep.subr.mxu0 0.0
        %7102 = vmatpush1.msra.mxu0 0.0
        %7103 = vmatprep.subr.mxu0 0.0
        %7104 = vmatpush1.msra.mxu0 0.0
        %7105 = vmatprep.subr.mxu0 0.0
        %7106 = vmatpush1.msra.mxu0 0.0
        %7107 = vmatprep.subr.mxu0 0.0
        %7108 = vmatpush1.msra.mxu0 0.0
        %7109 = vmatprep.subr.mxu0 0.0
        %7110 = vmatpush1.msra.mxu0 0.0
        %7111 = vmatprep.subr.mxu0 0.0
        %7112 = vmatpush1.msra.mxu0 0.0
        %7113 = vmatprep.subr.mxu0 0.0
        %7114 = vmatpush1.msra.mxu0 0.0
        %7115 = vmatprep.subr.mxu0 0.0
        %7116 = vmatpush1.msra.mxu0 0.0
        %7117 = vmatprep.subr.mxu0 0.0
        %7118 = vmatpush1.msra.mxu0 0.0
        %7119 = vmatprep.subr.mxu0 0.0
        %7120 = vmatpush1.msra.mxu0 0.0
        %7121 = vmatprep.subr.mxu0 0.0
        %7122 = vmatpush1.msra.mxu0 0.0
        %7123 = vmatprep.subr.mxu0 0.0
        %7124 = vmatpush1.msra.mxu0 0.0
        %7125 = vmatprep.subr.mxu0 0.0
        %7126 = vmatpush1.msra.mxu0 0.0
        %7127 = vmatprep.subr.mxu0 0.0
        %7128 = vmatpush1.msra.mxu0 0.0
        %7129 = vmatprep.mubr.f32.mxu0 0.0
        %7130 = vmatmul.mubr.f32.gmra.mrb[0].mxu0 %v6378
        %v7131 = vpop.f32.mrb[0].mxu0
        %v7132 = vadd.f32 0.0, %v7131
        %v7133 = vpop.f32.mrb[0].mxu0
        %7134 = vdwg.mxu0
        %v7135 = vadd.f32 %v7047, %v7132
        %s7136 = scalar_lea.vmem [#allocation7], 1024
        %v7137 = vld [vmem:[%s7136] sm:$0xff]
        %v7138 = vld [vmem:[%s7136 + $0x8] sm:$0xff]
        %v7139 = vld [vmem:[%s7136 + $0x10] sm:$0xff]
        %v7140 = vld [vmem:[%s7136 + $0x18] sm:$0xff]
        %v7141 = vld [vmem:[%s7136 + $0x20] sm:$0xff]
        %v7142 = vld [vmem:[%s7136 + $0x28] sm:$0xff]
        %v7143 = vld [vmem:[%s7136 + $0x30] sm:$0xff]
        %v7144 = vld [vmem:[%s7136 + $0x38] sm:$0xff]
        %v7145 = vld [vmem:[%s7136 + $0x40] sm:$0xff]
        %v7146 = vld [vmem:[%s7136 + $0x48] sm:$0xff]
        %v7147 = vld [vmem:[%s7136 + $0x50] sm:$0xff]
        %v7148 = vld [vmem:[%s7136 + $0x58] sm:$0xff]
        %v7149 = vld [vmem:[%s7136 + $0x60] sm:$0xff]
        %v7150 = vld [vmem:[%s7136 + $0x68] sm:$0xff]
        %v7151 = vld [vmem:[%s7136 + $0x70] sm:$0xff]
        %v7152 = vld [vmem:[%s7136 + $0x78] sm:$0xff]
        %7153 = vmatprep.subr.mxu0 0.0
        %7154 = vmatpush1.msra.mxu0 %v7137
        %7155 = vmatprep.subr.mxu0 0.0
        %7156 = vmatpush1.msra.mxu0 %v7138
        %7157 = vmatprep.subr.mxu0 0.0
        %7158 = vmatpush1.msra.mxu0 %v7139
        %7159 = vmatprep.subr.mxu0 0.0
        %7160 = vmatpush1.msra.mxu0 %v7140
        %7161 = vmatprep.subr.mxu0 0.0
        %7162 = vmatpush1.msra.mxu0 %v7141
        %7163 = vmatprep.subr.mxu0 0.0
        %7164 = vmatpush1.msra.mxu0 %v7142
        %7165 = vmatprep.subr.mxu0 0.0
        %7166 = vmatpush1.msra.mxu0 %v7143
        %7167 = vmatprep.subr.mxu0 0.0
        %7168 = vmatpush1.msra.mxu0 %v7144
        %7169 = vmatprep.subr.mxu0 0.0
        %7170 = vmatpush1.msra.mxu0 %v7145
        %7171 = vmatprep.subr.mxu0 0.0
        %7172 = vmatpush1.msra.mxu0 %v7146
        %7173 = vmatprep.subr.mxu0 0.0
        %7174 = vmatpush1.msra.mxu0 %v7147
        %7175 = vmatprep.subr.mxu0 0.0
        %7176 = vmatpush1.msra.mxu0 %v7148
        %7177 = vmatprep.subr.mxu0 0.0
        %7178 = vmatpush1.msra.mxu0 %v7149
        %7179 = vmatprep.subr.mxu0 0.0
        %7180 = vmatpush1.msra.mxu0 %v7150
        %7181 = vmatprep.subr.mxu0 0.0
        %7182 = vmatpush1.msra.mxu0 %v7151
        %7183 = vmatprep.subr.mxu0 0.0
        %7184 = vmatpush1.msra.mxu0 %v7152
        %7185 = vmatprep.subr.mxu0 0.0
        %7186 = vmatpush1.msra.mxu0 0.0
        %7187 = vmatprep.subr.mxu0 0.0
        %7188 = vmatpush1.msra.mxu0 0.0
        %7189 = vmatprep.subr.mxu0 0.0
        %7190 = vmatpush1.msra.mxu0 0.0
        %7191 = vmatprep.subr.mxu0 0.0
        %7192 = vmatpush1.msra.mxu0 0.0
        %7193 = vmatprep.subr.mxu0 0.0
        %7194 = vmatpush1.msra.mxu0 0.0
        %7195 = vmatprep.subr.mxu0 0.0
        %7196 = vmatpush1.msra.mxu0 0.0
        %7197 = vmatprep.subr.mxu0 0.0
        %7198 = vmatpush1.msra.mxu0 0.0
        %7199 = vmatprep.subr.mxu0 0.0
        %7200 = vmatpush1.msra.mxu0 0.0
        %7201 = vmatprep.subr.mxu0 0.0
        %7202 = vmatpush1.msra.mxu0 0.0
        %7203 = vmatprep.subr.mxu0 0.0
        %7204 = vmatpush1.msra.mxu0 0.0
        %7205 = vmatprep.subr.mxu0 0.0
        %7206 = vmatpush1.msra.mxu0 0.0
        %7207 = vmatprep.subr.mxu0 0.0
        %7208 = vmatpush1.msra.mxu0 0.0
        %7209 = vmatprep.subr.mxu0 0.0
        %7210 = vmatpush1.msra.mxu0 0.0
        %7211 = vmatprep.subr.mxu0 0.0
        %7212 = vmatpush1.msra.mxu0 0.0
        %7213 = vmatprep.subr.mxu0 0.0
        %7214 = vmatpush1.msra.mxu0 0.0
        %7215 = vmatprep.subr.mxu0 0.0
        %7216 = vmatpush1.msra.mxu0 0.0
        %7217 = vmatprep.mubr.f32.mxu0 0.0
        %7218 = vmatmul.mubr.f32.gmra.mrb[0].mxu0 %v6385
        %v7219 = vpop.f32.mrb[0].mxu0
        %v7220 = vadd.f32 0.0, %v7219
        %v7221 = vpop.f32.mrb[0].mxu0
        %7222 = vdwg.mxu0
        %v7223 = vadd.f32 %v7135, %v7220
        %s7224 = scalar_lea.vmem [#allocation7], 1152
        %v7225 = vld [vmem:[%s7224] sm:$0xff]
        %v7226 = vld [vmem:[%s7224 + $0x8] sm:$0xff]
        %v7227 = vld [vmem:[%s7224 + $0x10] sm:$0xff]
        %v7228 = vld [vmem:[%s7224 + $0x18] sm:$0xff]
        %v7229 = vld [vmem:[%s7224 + $0x20] sm:$0xff]
        %v7230 = vld [vmem:[%s7224 + $0x28] sm:$0xff]
        %v7231 = vld [vmem:[%s7224 + $0x30] sm:$0xff]
        %v7232 = vld [vmem:[%s7224 + $0x38] sm:$0xff]
        %v7233 = vld [vmem:[%s7224 + $0x40] sm:$0xff]
        %v7234 = vld [vmem:[%s7224 + $0x48] sm:$0xff]
        %v7235 = vld [vmem:[%s7224 + $0x50] sm:$0xff]
        %v7236 = vld [vmem:[%s7224 + $0x58] sm:$0xff]
        %v7237 = vld [vmem:[%s7224 + $0x60] sm:$0xff]
        %v7238 = vld [vmem:[%s7224 + $0x68] sm:$0xff]
        %v7239 = vld [vmem:[%s7224 + $0x70] sm:$0xff]
        %v7240 = vld [vmem:[%s7224 + $0x78] sm:$0xff]
        %7241 = vmatprep.subr.mxu0 0.0
        %7242 = vmatpush1.msra.mxu0 %v7225
        %7243 = vmatprep.subr.mxu0 0.0
        %7244 = vmatpush1.msra.mxu0 %v7226
        %7245 = vmatprep.subr.mxu0 0.0
        %7246 = vmatpush1.msra.mxu0 %v7227
        %7247 = vmatprep.subr.mxu0 0.0
        %7248 = vmatpush1.msra.mxu0 %v7228
        %7249 = vmatprep.subr.mxu0 0.0
        %7250 = vmatpush1.msra.mxu0 %v7229
        %7251 = vmatprep.subr.mxu0 0.0
        %7252 = vmatpush1.msra.mxu0 %v7230
        %7253 = vmatprep.subr.mxu0 0.0
        %7254 = vmatpush1.msra.mxu0 %v7231
        %7255 = vmatprep.subr.mxu0 0.0
        %7256 = vmatpush1.msra.mxu0 %v7232
        %7257 = vmatprep.subr.mxu0 0.0
        %7258 = vmatpush1.msra.mxu0 %v7233
        %7259 = vmatprep.subr.mxu0 0.0
        %7260 = vmatpush1.msra.mxu0 %v7234
        %7261 = vmatprep.subr.mxu0 0.0
        %7262 = vmatpush1.msra.mxu0 %v7235
        %7263 = vmatprep.subr.mxu0 0.0
        %7264 = vmatpush1.msra.mxu0 %v7236
        %7265 = vmatprep.subr.mxu0 0.0
        %7266 = vmatpush1.msra.mxu0 %v7237
        %7267 = vmatprep.subr.mxu0 0.0
        %7268 = vmatpush1.msra.mxu0 %v7238
        %7269 = vmatprep.subr.mxu0 0.0
        %7270 = vmatpush1.msra.mxu0 %v7239
        %7271 = vmatprep.subr.mxu0 0.0
        %7272 = vmatpush1.msra.mxu0 %v7240
        %7273 = vmatprep.subr.mxu0 0.0
        %7274 = vmatpush1.msra.mxu0 0.0
        %7275 = vmatprep.subr.mxu0 0.0
        %7276 = vmatpush1.msra.mxu0 0.0
        %7277 = vmatprep.subr.mxu0 0.0
        %7278 = vmatpush1.msra.mxu0 0.0
        %7279 = vmatprep.subr.mxu0 0.0
        %7280 = vmatpush1.msra.mxu0 0.0
        %7281 = vmatprep.subr.mxu0 0.0
        %7282 = vmatpush1.msra.mxu0 0.0
        %7283 = vmatprep.subr.mxu0 0.0
        %7284 = vmatpush1.msra.mxu0 0.0
        %7285 = vmatprep.subr.mxu0 0.0
        %7286 = vmatpush1.msra.mxu0 0.0
        %7287 = vmatprep.subr.mxu0 0.0
        %7288 = vmatpush1.msra.mxu0 0.0
        %7289 = vmatprep.subr.mxu0 0.0
        %7290 = vmatpush1.msra.mxu0 0.0
        %7291 = vmatprep.subr.mxu0 0.0
        %7292 = vmatpush1.msra.mxu0 0.0
        %7293 = vmatprep.subr.mxu0 0.0
        %7294 = vmatpush1.msra.mxu0 0.0
        %7295 = vmatprep.subr.mxu0 0.0
        %7296 = vmatpush1.msra.mxu0 0.0
        %7297 = vmatprep.subr.mxu0 0.0
        %7298 = vmatpush1.msra.mxu0 0.0
        %7299 = vmatprep.subr.mxu0 0.0
        %7300 = vmatpush1.msra.mxu0 0.0
        %7301 = vmatprep.subr.mxu0 0.0
        %7302 = vmatpush1.msra.mxu0 0.0
        %7303 = vmatprep.subr.mxu0 0.0
        %7304 = vmatpush1.msra.mxu0 0.0
        %7305 = vmatprep.mubr.f32.mxu0 0.0
        %7306 = vmatmul.mubr.f32.gmra.mrb[0].mxu0 %v6392
        %v7307 = vpop.f32.mrb[0].mxu0
        %v7308 = vadd.f32 0.0, %v7307
        %v7309 = vpop.f32.mrb[0].mxu0
        %7310 = vdwg.mxu0
        %v7311 = vadd.f32 %v7223, %v7308
        %s7312 = scalar_lea.vmem [#allocation7], 1280
        %v7313 = vld [vmem:[%s7312] sm:$0xff]
        %v7314 = vld [vmem:[%s7312 + $0x8] sm:$0xff]
        %v7315 = vld [vmem:[%s7312 + $0x10] sm:$0xff]
        %v7316 = vld [vmem:[%s7312 + $0x18] sm:$0xff]
        %v7317 = vld [vmem:[%s7312 + $0x20] sm:$0xff]
        %v7318 = vld [vmem:[%s7312 + $0x28] sm:$0xff]
        %v7319 = vld [vmem:[%s7312 + $0x30] sm:$0xff]
        %v7320 = vld [vmem:[%s7312 + $0x38] sm:$0xff]
        %v7321 = vld [vmem:[%s7312 + $0x40] sm:$0xff]
        %v7322 = vld [vmem:[%s7312 + $0x48] sm:$0xff]
        %v7323 = vld [vmem:[%s7312 + $0x50] sm:$0xff]
        %v7324 = vld [vmem:[%s7312 + $0x58] sm:$0xff]
        %v7325 = vld [vmem:[%s7312 + $0x60] sm:$0xff]
        %v7326 = vld [vmem:[%s7312 + $0x68] sm:$0xff]
        %v7327 = vld [vmem:[%s7312 + $0x70] sm:$0xff]
        %v7328 = vld [vmem:[%s7312 + $0x78] sm:$0xff]
        %7329 = vmatprep.subr.mxu0 0.0
        %7330 = vmatpush1.msra.mxu0 %v7313
        %7331 = vmatprep.subr.mxu0 0.0
        %7332 = vmatpush1.msra.mxu0 %v7314
        %7333 = vmatprep.subr.mxu0 0.0
        %7334 = vmatpush1.msra.mxu0 %v7315
        %7335 = vmatprep.subr.mxu0 0.0
        %7336 = vmatpush1.msra.mxu0 %v7316
        %7337 = vmatprep.subr.mxu0 0.0
        %7338 = vmatpush1.msra.mxu0 %v7317
        %7339 = vmatprep.subr.mxu0 0.0
        %7340 = vmatpush1.msra.mxu0 %v7318
        %7341 = vmatprep.subr.mxu0 0.0
        %7342 = vmatpush1.msra.mxu0 %v7319
        %7343 = vmatprep.subr.mxu0 0.0
        %7344 = vmatpush1.msra.mxu0 %v7320
        %7345 = vmatprep.subr.mxu0 0.0
        %7346 = vmatpush1.msra.mxu0 %v7321
        %7347 = vmatprep.subr.mxu0 0.0
        %7348 = vmatpush1.msra.mxu0 %v7322
        %7349 = vmatprep.subr.mxu0 0.0
        %7350 = vmatpush1.msra.mxu0 %v7323
        %7351 = vmatprep.subr.mxu0 0.0
        %7352 = vmatpush1.msra.mxu0 %v7324
        %7353 = vmatprep.subr.mxu0 0.0
        %7354 = vmatpush1.msra.mxu0 %v7325
        %7355 = vmatprep.subr.mxu0 0.0
        %7356 = vmatpush1.msra.mxu0 %v7326
        %7357 = vmatprep.subr.mxu0 0.0
        %7358 = vmatpush1.msra.mxu0 %v7327
        %7359 = vmatprep.subr.mxu0 0.0
        %7360 = vmatpush1.msra.mxu0 %v7328
        %7361 = vmatprep.subr.mxu0 0.0
        %7362 = vmatpush1.msra.mxu0 0.0
        %7363 = vmatprep.subr.mxu0 0.0
        %7364 = vmatpush1.msra.mxu0 0.0
        %7365 = vmatprep.subr.mxu0 0.0
        %7366 = vmatpush1.msra.mxu0 0.0
        %7367 = vmatprep.subr.mxu0 0.0
        %7368 = vmatpush1.msra.mxu0 0.0
        %7369 = vmatprep.subr.mxu0 0.0
        %7370 = vmatpush1.msra.mxu0 0.0
        %7371 = vmatprep.subr.mxu0 0.0
        %7372 = vmatpush1.msra.mxu0 0.0
        %7373 = vmatprep.subr.mxu0 0.0
        %7374 = vmatpush1.msra.mxu0 0.0
        %7375 = vmatprep.subr.mxu0 0.0
        %7376 = vmatpush1.msra.mxu0 0.0
        %7377 = vmatprep.subr.mxu0 0.0
        %7378 = vmatpush1.msra.mxu0 0.0
        %7379 = vmatprep.subr.mxu0 0.0
        %7380 = vmatpush1.msra.mxu0 0.0
        %7381 = vmatprep.subr.mxu0 0.0
        %7382 = vmatpush1.msra.mxu0 0.0
        %7383 = vmatprep.subr.mxu0 0.0
        %7384 = vmatpush1.msra.mxu0 0.0
        %7385 = vmatprep.subr.mxu0 0.0
        %7386 = vmatpush1.msra.mxu0 0.0
        %7387 = vmatprep.subr.mxu0 0.0
        %7388 = vmatpush1.msra.mxu0 0.0
        %7389 = vmatprep.subr.mxu0 0.0
        %7390 = vmatpush1.msra.mxu0 0.0
        %7391 = vmatprep.subr.mxu0 0.0
        %7392 = vmatpush1.msra.mxu0 0.0
        %7393 = vmatprep.mubr.f32.mxu0 0.0
        %7394 = vmatmul.mubr.f32.gmra.mrb[0].mxu0 %v6399
        %v7395 = vpop.f32.mrb[0].mxu0
        %v7396 = vadd.f32 0.0, %v7395
        %v7397 = vpop.f32.mrb[0].mxu0
        %7398 = vdwg.mxu0
        %v7399 = vadd.f32 %v7311, %v7396
        %s7400 = scalar_lea.vmem [#allocation7], 1408
        %v7401 = vld [vmem:[%s7400] sm:$0xff]
        %v7402 = vld [vmem:[%s7400 + $0x8] sm:$0xff]
        %v7403 = vld [vmem:[%s7400 + $0x10] sm:$0xff]
        %v7404 = vld [vmem:[%s7400 + $0x18] sm:$0xff]
        %v7405 = vld [vmem:[%s7400 + $0x20] sm:$0xff]
        %v7406 = vld [vmem:[%s7400 + $0x28] sm:$0xff]
        %v7407 = vld [vmem:[%s7400 + $0x30] sm:$0xff]
        %v7408 = vld [vmem:[%s7400 + $0x38] sm:$0xff]
        %v7409 = vld [vmem:[%s7400 + $0x40] sm:$0xff]
        %v7410 = vld [vmem:[%s7400 + $0x48] sm:$0xff]
        %v7411 = vld [vmem:[%s7400 + $0x50] sm:$0xff]
        %v7412 = vld [vmem:[%s7400 + $0x58] sm:$0xff]
        %v7413 = vld [vmem:[%s7400 + $0x60] sm:$0xff]
        %v7414 = vld [vmem:[%s7400 + $0x68] sm:$0xff]
        %v7415 = vld [vmem:[%s7400 + $0x70] sm:$0xff]
        %v7416 = vld [vmem:[%s7400 + $0x78] sm:$0xff]
        %7417 = vmatprep.subr.mxu0 0.0
        %7418 = vmatpush1.msra.mxu0 %v7401
        %7419 = vmatprep.subr.mxu0 0.0
        %7420 = vmatpush1.msra.mxu0 %v7402
        %7421 = vmatprep.subr.mxu0 0.0
        %7422 = vmatpush1.msra.mxu0 %v7403
        %7423 = vmatprep.subr.mxu0 0.0
        %7424 = vmatpush1.msra.mxu0 %v7404
        %7425 = vmatprep.subr.mxu0 0.0
        %7426 = vmatpush1.msra.mxu0 %v7405
        %7427 = vmatprep.subr.mxu0 0.0
        %7428 = vmatpush1.msra.mxu0 %v7406
        %7429 = vmatprep.subr.mxu0 0.0
        %7430 = vmatpush1.msra.mxu0 %v7407
        %7431 = vmatprep.subr.mxu0 0.0
        %7432 = vmatpush1.msra.mxu0 %v7408
        %7433 = vmatprep.subr.mxu0 0.0
        %7434 = vmatpush1.msra.mxu0 %v7409
        %7435 = vmatprep.subr.mxu0 0.0
        %7436 = vmatpush1.msra.mxu0 %v7410
        %7437 = vmatprep.subr.mxu0 0.0
        %7438 = vmatpush1.msra.mxu0 %v7411
        %7439 = vmatprep.subr.mxu0 0.0
        %7440 = vmatpush1.msra.mxu0 %v7412
        %7441 = vmatprep.subr.mxu0 0.0
        %7442 = vmatpush1.msra.mxu0 %v7413
        %7443 = vmatprep.subr.mxu0 0.0
        %7444 = vmatpush1.msra.mxu0 %v7414
        %7445 = vmatprep.subr.mxu0 0.0
        %7446 = vmatpush1.msra.mxu0 %v7415
        %7447 = vmatprep.subr.mxu0 0.0
        %7448 = vmatpush1.msra.mxu0 %v7416
        %7449 = vmatprep.subr.mxu0 0.0
        %7450 = vmatpush1.msra.mxu0 0.0
        %7451 = vmatprep.subr.mxu0 0.0
        %7452 = vmatpush1.msra.mxu0 0.0
        %7453 = vmatprep.subr.mxu0 0.0
        %7454 = vmatpush1.msra.mxu0 0.0
        %7455 = vmatprep.subr.mxu0 0.0
        %7456 = vmatpush1.msra.mxu0 0.0
        %7457 = vmatprep.subr.mxu0 0.0
        %7458 = vmatpush1.msra.mxu0 0.0
        %7459 = vmatprep.subr.mxu0 0.0
        %7460 = vmatpush1.msra.mxu0 0.0
        %7461 = vmatprep.subr.mxu0 0.0
        %7462 = vmatpush1.msra.mxu0 0.0
        %7463 = vmatprep.subr.mxu0 0.0
        %7464 = vmatpush1.msra.mxu0 0.0
        %7465 = vmatprep.subr.mxu0 0.0
        %7466 = vmatpush1.msra.mxu0 0.0
        %7467 = vmatprep.subr.mxu0 0.0
        %7468 = vmatpush1.msra.mxu0 0.0
        %7469 = vmatprep.subr.mxu0 0.0
        %7470 = vmatpush1.msra.mxu0 0.0
        %7471 = vmatprep.subr.mxu0 0.0
        %7472 = vmatpush1.msra.mxu0 0.0
        %7473 = vmatprep.subr.mxu0 0.0
        %7474 = vmatpush1.msra.mxu0 0.0
        %7475 = vmatprep.subr.mxu0 0.0
        %7476 = vmatpush1.msra.mxu0 0.0
        %7477 = vmatprep.subr.mxu0 0.0
        %7478 = vmatpush1.msra.mxu0 0.0
        %7479 = vmatprep.subr.mxu0 0.0
        %7480 = vmatpush1.msra.mxu0 0.0
        %7481 = vmatprep.mubr.f32.mxu0 0.0
        %7482 = vmatmul.mubr.f32.gmra.mrb[0].mxu0 %v6406
        %v7483 = vpop.f32.mrb[0].mxu0
        %v7484 = vadd.f32 0.0, %v7483
        %v7485 = vpop.f32.mrb[0].mxu0
        %7486 = vdwg.mxu0
        %v7487 = vadd.f32 %v7399, %v7484
        %s7488 = scalar_lea.vmem [#allocation7], 1536
        %v7489 = vld [vmem:[%s7488] sm:$0xff]
        %v7490 = vld [vmem:[%s7488 + $0x8] sm:$0xff]
        %v7491 = vld [vmem:[%s7488 + $0x10] sm:$0xff]
        %v7492 = vld [vmem:[%s7488 + $0x18] sm:$0xff]
        %v7493 = vld [vmem:[%s7488 + $0x20] sm:$0xff]
        %v7494 = vld [vmem:[%s7488 + $0x28] sm:$0xff]
        %v7495 = vld [vmem:[%s7488 + $0x30] sm:$0xff]
        %v7496 = vld [vmem:[%s7488 + $0x38] sm:$0xff]
        %v7497 = vld [vmem:[%s7488 + $0x40] sm:$0xff]
        %v7498 = vld [vmem:[%s7488 + $0x48] sm:$0xff]
        %v7499 = vld [vmem:[%s7488 + $0x50] sm:$0xff]
        %v7500 = vld [vmem:[%s7488 + $0x58] sm:$0xff]
        %v7501 = vld [vmem:[%s7488 + $0x60] sm:$0xff]
        %v7502 = vld [vmem:[%s7488 + $0x68] sm:$0xff]
        %v7503 = vld [vmem:[%s7488 + $0x70] sm:$0xff]
        %v7504 = vld [vmem:[%s7488 + $0x78] sm:$0xff]
        %7505 = vmatprep.subr.mxu0 0.0
        %7506 = vmatpush1.msra.mxu0 %v7489
        %7507 = vmatprep.subr.mxu0 0.0
        %7508 = vmatpush1.msra.mxu0 %v7490
        %7509 = vmatprep.subr.mxu0 0.0
        %7510 = vmatpush1.msra.mxu0 %v7491
        %7511 = vmatprep.subr.mxu0 0.0
        %7512 = vmatpush1.msra.mxu0 %v7492
        %7513 = vmatprep.subr.mxu0 0.0
        %7514 = vmatpush1.msra.mxu0 %v7493
        %7515 = vmatprep.subr.mxu0 0.0
        %7516 = vmatpush1.msra.mxu0 %v7494
        %7517 = vmatprep.subr.mxu0 0.0
        %7518 = vmatpush1.msra.mxu0 %v7495
        %7519 = vmatprep.subr.mxu0 0.0
        %7520 = vmatpush1.msra.mxu0 %v7496
        %7521 = vmatprep.subr.mxu0 0.0
        %7522 = vmatpush1.msra.mxu0 %v7497
        %7523 = vmatprep.subr.mxu0 0.0
        %7524 = vmatpush1.msra.mxu0 %v7498
        %7525 = vmatprep.subr.mxu0 0.0
        %7526 = vmatpush1.msra.mxu0 %v7499
        %7527 = vmatprep.subr.mxu0 0.0
        %7528 = vmatpush1.msra.mxu0 %v7500
        %7529 = vmatprep.subr.mxu0 0.0
        %7530 = vmatpush1.msra.mxu0 %v7501
        %7531 = vmatprep.subr.mxu0 0.0
        %7532 = vmatpush1.msra.mxu0 %v7502
        %7533 = vmatprep.subr.mxu0 0.0
        %7534 = vmatpush1.msra.mxu0 %v7503
        %7535 = vmatprep.subr.mxu0 0.0
        %7536 = vmatpush1.msra.mxu0 %v7504
        %7537 = vmatprep.subr.mxu0 0.0
        %7538 = vmatpush1.msra.mxu0 0.0
        %7539 = vmatprep.subr.mxu0 0.0
        %7540 = vmatpush1.msra.mxu0 0.0
        %7541 = vmatprep.subr.mxu0 0.0
        %7542 = vmatpush1.msra.mxu0 0.0
        %7543 = vmatprep.subr.mxu0 0.0
        %7544 = vmatpush1.msra.mxu0 0.0
        %7545 = vmatprep.subr.mxu0 0.0
        %7546 = vmatpush1.msra.mxu0 0.0
        %7547 = vmatprep.subr.mxu0 0.0
        %7548 = vmatpush1.msra.mxu0 0.0
        %7549 = vmatprep.subr.mxu0 0.0
        %7550 = vmatpush1.msra.mxu0 0.0
        %7551 = vmatprep.subr.mxu0 0.0
        %7552 = vmatpush1.msra.mxu0 0.0
        %7553 = vmatprep.subr.mxu0 0.0
        %7554 = vmatpush1.msra.mxu0 0.0
        %7555 = vmatprep.subr.mxu0 0.0
        %7556 = vmatpush1.msra.mxu0 0.0
        %7557 = vmatprep.subr.mxu0 0.0
        %7558 = vmatpush1.msra.mxu0 0.0
        %7559 = vmatprep.subr.mxu0 0.0
        %7560 = vmatpush1.msra.mxu0 0.0
        %7561 = vmatprep.subr.mxu0 0.0
        %7562 = vmatpush1.msra.mxu0 0.0
        %7563 = vmatprep.subr.mxu0 0.0
        %7564 = vmatpush1.msra.mxu0 0.0
        %7565 = vmatprep.subr.mxu0 0.0
        %7566 = vmatpush1.msra.mxu0 0.0
        %7567 = vmatprep.subr.mxu0 0.0
        %7568 = vmatpush1.msra.mxu0 0.0
        %7569 = vmatprep.mubr.f32.mxu0 0.0
        %7570 = vmatmul.mubr.f32.gmra.mrb[0].mxu0 %v6413
        %v7571 = vpop.f32.mrb[0].mxu0
        %v7572 = vadd.f32 0.0, %v7571
        %v7573 = vpop.f32.mrb[0].mxu0
        %7574 = vdwg.mxu0
        %v7575 = vadd.f32 %v7487, %v7572
        %s7576 = scalar_lea.vmem [#allocation7], 1664
        %v7577 = vld [vmem:[%s7576] sm:$0xff]
        %v7578 = vld [vmem:[%s7576 + $0x8] sm:$0xff]
        %v7579 = vld [vmem:[%s7576 + $0x10] sm:$0xff]
        %v7580 = vld [vmem:[%s7576 + $0x18] sm:$0xff]
        %v7581 = vld [vmem:[%s7576 + $0x20] sm:$0xff]
        %v7582 = vld [vmem:[%s7576 + $0x28] sm:$0xff]
        %v7583 = vld [vmem:[%s7576 + $0x30] sm:$0xff]
        %v7584 = vld [vmem:[%s7576 + $0x38] sm:$0xff]
        %v7585 = vld [vmem:[%s7576 + $0x40] sm:$0xff]
        %v7586 = vld [vmem:[%s7576 + $0x48] sm:$0xff]
        %v7587 = vld [vmem:[%s7576 + $0x50] sm:$0xff]
        %v7588 = vld [vmem:[%s7576 + $0x58] sm:$0xff]
        %v7589 = vld [vmem:[%s7576 + $0x60] sm:$0xff]
        %v7590 = vld [vmem:[%s7576 + $0x68] sm:$0xff]
        %v7591 = vld [vmem:[%s7576 + $0x70] sm:$0xff]
        %v7592 = vld [vmem:[%s7576 + $0x78] sm:$0xff]
        %7593 = vmatprep.subr.mxu0 0.0
        %7594 = vmatpush1.msra.mxu0 %v7577
        %7595 = vmatprep.subr.mxu0 0.0
        %7596 = vmatpush1.msra.mxu0 %v7578
        %7597 = vmatprep.subr.mxu0 0.0
        %7598 = vmatpush1.msra.mxu0 %v7579
        %7599 = vmatprep.subr.mxu0 0.0
        %7600 = vmatpush1.msra.mxu0 %v7580
        %7601 = vmatprep.subr.mxu0 0.0
        %7602 = vmatpush1.msra.mxu0 %v7581
        %7603 = vmatprep.subr.mxu0 0.0
        %7604 = vmatpush1.msra.mxu0 %v7582
        %7605 = vmatprep.subr.mxu0 0.0
        %7606 = vmatpush1.msra.mxu0 %v7583
        %7607 = vmatprep.subr.mxu0 0.0
        %7608 = vmatpush1.msra.mxu0 %v7584
        %7609 = vmatprep.subr.mxu0 0.0
        %7610 = vmatpush1.msra.mxu0 %v7585
        %7611 = vmatprep.subr.mxu0 0.0
        %7612 = vmatpush1.msra.mxu0 %v7586
        %7613 = vmatprep.subr.mxu0 0.0
        %7614 = vmatpush1.msra.mxu0 %v7587
        %7615 = vmatprep.subr.mxu0 0.0
        %7616 = vmatpush1.msra.mxu0 %v7588
        %7617 = vmatprep.subr.mxu0 0.0
        %7618 = vmatpush1.msra.mxu0 %v7589
        %7619 = vmatprep.subr.mxu0 0.0
        %7620 = vmatpush1.msra.mxu0 %v7590
        %7621 = vmatprep.subr.mxu0 0.0
        %7622 = vmatpush1.msra.mxu0 %v7591
        %7623 = vmatprep.subr.mxu0 0.0
        %7624 = vmatpush1.msra.mxu0 %v7592
        %7625 = vmatprep.subr.mxu0 0.0
        %7626 = vmatpush1.msra.mxu0 0.0
        %7627 = vmatprep.subr.mxu0 0.0
        %7628 = vmatpush1.msra.mxu0 0.0
        %7629 = vmatprep.subr.mxu0 0.0
        %7630 = vmatpush1.msra.mxu0 0.0
        %7631 = vmatprep.subr.mxu0 0.0
        %7632 = vmatpush1.msra.mxu0 0.0
        %7633 = vmatprep.subr.mxu0 0.0
        %7634 = vmatpush1.msra.mxu0 0.0
        %7635 = vmatprep.subr.mxu0 0.0
        %7636 = vmatpush1.msra.mxu0 0.0
        %7637 = vmatprep.subr.mxu0 0.0
        %7638 = vmatpush1.msra.mxu0 0.0
        %7639 = vmatprep.subr.mxu0 0.0
        %7640 = vmatpush1.msra.mxu0 0.0
        %7641 = vmatprep.subr.mxu0 0.0
        %7642 = vmatpush1.msra.mxu0 0.0
        %7643 = vmatprep.subr.mxu0 0.0
        %7644 = vmatpush1.msra.mxu0 0.0
        %7645 = vmatprep.subr.mxu0 0.0
        %7646 = vmatpush1.msra.mxu0 0.0
        %7647 = vmatprep.subr.mxu0 0.0
        %7648 = vmatpush1.msra.mxu0 0.0
        %7649 = vmatprep.subr.mxu0 0.0
        %7650 = vmatpush1.msra.mxu0 0.0
        %7651 = vmatprep.subr.mxu0 0.0
        %7652 = vmatpush1.msra.mxu0 0.0
        %7653 = vmatprep.subr.mxu0 0.0
        %7654 = vmatpush1.msra.mxu0 0.0
        %7655 = vmatprep.subr.mxu0 0.0
        %7656 = vmatpush1.msra.mxu0 0.0
        %7657 = vmatprep.mubr.f32.mxu0 0.0
        %7658 = vmatmul.mubr.f32.gmra.mrb[0].mxu0 %v6420
        %v7659 = vpop.f32.mrb[0].mxu0
        %v7660 = vadd.f32 0.0, %v7659
        %v7661 = vpop.f32.mrb[0].mxu0
        %7662 = vdwg.mxu0
        %v7663 = vadd.f32 %v7575, %v7660
        %s7664 = scalar_lea.vmem [#allocation7], 1792
        %v7665 = vld [vmem:[%s7664] sm:$0xff]
        %v7666 = vld [vmem:[%s7664 + $0x8] sm:$0xff]
        %v7667 = vld [vmem:[%s7664 + $0x10] sm:$0xff]
        %v7668 = vld [vmem:[%s7664 + $0x18] sm:$0xff]
        %v7669 = vld [vmem:[%s7664 + $0x20] sm:$0xff]
        %v7670 = vld [vmem:[%s7664 + $0x28] sm:$0xff]
        %v7671 = vld [vmem:[%s7664 + $0x30] sm:$0xff]
        %v7672 = vld [vmem:[%s7664 + $0x38] sm:$0xff]
        %v7673 = vld [vmem:[%s7664 + $0x40] sm:$0xff]
        %v7674 = vld [vmem:[%s7664 + $0x48] sm:$0xff]
        %v7675 = vld [vmem:[%s7664 + $0x50] sm:$0xff]
        %v7676 = vld [vmem:[%s7664 + $0x58] sm:$0xff]
        %v7677 = vld [vmem:[%s7664 + $0x60] sm:$0xff]
        %v7678 = vld [vmem:[%s7664 + $0x68] sm:$0xff]
        %v7679 = vld [vmem:[%s7664 + $0x70] sm:$0xff]
        %v7680 = vld [vmem:[%s7664 + $0x78] sm:$0xff]
        %7681 = vmatprep.subr.mxu0 0.0
        %7682 = vmatpush1.msra.mxu0 %v7665
        %7683 = vmatprep.subr.mxu0 0.0
        %7684 = vmatpush1.msra.mxu0 %v7666
        %7685 = vmatprep.subr.mxu0 0.0
        %7686 = vmatpush1.msra.mxu0 %v7667
        %7687 = vmatprep.subr.mxu0 0.0
        %7688 = vmatpush1.msra.mxu0 %v7668
        %7689 = vmatprep.subr.mxu0 0.0
        %7690 = vmatpush1.msra.mxu0 %v7669
        %7691 = vmatprep.subr.mxu0 0.0
        %7692 = vmatpush1.msra.mxu0 %v7670
        %7693 = vmatprep.subr.mxu0 0.0
        %7694 = vmatpush1.msra.mxu0 %v7671
        %7695 = vmatprep.subr.mxu0 0.0
        %7696 = vmatpush1.msra.mxu0 %v7672
        %7697 = vmatprep.subr.mxu0 0.0
        %7698 = vmatpush1.msra.mxu0 %v7673
        %7699 = vmatprep.subr.mxu0 0.0
        %7700 = vmatpush1.msra.mxu0 %v7674
        %7701 = vmatprep.subr.mxu0 0.0
        %7702 = vmatpush1.msra.mxu0 %v7675
        %7703 = vmatprep.subr.mxu0 0.0
        %7704 = vmatpush1.msra.mxu0 %v7676
        %7705 = vmatprep.subr.mxu0 0.0
        %7706 = vmatpush1.msra.mxu0 %v7677
        %7707 = vmatprep.subr.mxu0 0.0
        %7708 = vmatpush1.msra.mxu0 %v7678
        %7709 = vmatprep.subr.mxu0 0.0
        %7710 = vmatpush1.msra.mxu0 %v7679
        %7711 = vmatprep.subr.mxu0 0.0
        %7712 = vmatpush1.msra.mxu0 %v7680
        %7713 = vmatprep.subr.mxu0 0.0
        %7714 = vmatpush1.msra.mxu0 0.0
        %7715 = vmatprep.subr.mxu0 0.0
        %7716 = vmatpush1.msra.mxu0 0.0
        %7717 = vmatprep.subr.mxu0 0.0
        %7718 = vmatpush1.msra.mxu0 0.0
        %7719 = vmatprep.subr.mxu0 0.0
        %7720 = vmatpush1.msra.mxu0 0.0
        %7721 = vmatprep.subr.mxu0 0.0
        %7722 = vmatpush1.msra.mxu0 0.0
        %7723 = vmatprep.subr.mxu0 0.0
        %7724 = vmatpush1.msra.mxu0 0.0
        %7725 = vmatprep.subr.mxu0 0.0
        %7726 = vmatpush1.msra.mxu0 0.0
        %7727 = vmatprep.subr.mxu0 0.0
        %7728 = vmatpush1.msra.mxu0 0.0
        %7729 = vmatprep.subr.mxu0 0.0
        %7730 = vmatpush1.msra.mxu0 0.0
        %7731 = vmatprep.subr.mxu0 0.0
        %7732 = vmatpush1.msra.mxu0 0.0
        %7733 = vmatprep.subr.mxu0 0.0
        %7734 = vmatpush1.msra.mxu0 0.0
        %7735 = vmatprep.subr.mxu0 0.0
        %7736 = vmatpush1.msra.mxu0 0.0
        %7737 = vmatprep.subr.mxu0 0.0
        %7738 = vmatpush1.msra.mxu0 0.0
        %7739 = vmatprep.subr.mxu0 0.0
        %7740 = vmatpush1.msra.mxu0 0.0
        %7741 = vmatprep.subr.mxu0 0.0
        %7742 = vmatpush1.msra.mxu0 0.0
        %7743 = vmatprep.subr.mxu0 0.0
        %7744 = vmatpush1.msra.mxu0 0.0
        %7745 = vmatprep.mubr.f32.mxu0 0.0
        %7746 = vmatmul.mubr.f32.gmra.mrb[0].mxu0 %v6427
        %v7747 = vpop.f32.mrb[0].mxu0
        %v7748 = vadd.f32 0.0, %v7747
        %v7749 = vpop.f32.mrb[0].mxu0
        %7750 = vdwg.mxu0
        %v7751 = vadd.f32 %v7663, %v7748
        %s7752 = scalar_lea.vmem [#allocation7], 1920
        %v7753 = vld [vmem:[%s7752] sm:$0xff]
        %v7754 = vld [vmem:[%s7752 + $0x8] sm:$0xff]
        %v7755 = vld [vmem:[%s7752 + $0x10] sm:$0xff]
        %v7756 = vld [vmem:[%s7752 + $0x18] sm:$0xff]
        %v7757 = vld [vmem:[%s7752 + $0x20] sm:$0xff]
        %v7758 = vld [vmem:[%s7752 + $0x28] sm:$0xff]
        %v7759 = vld [vmem:[%s7752 + $0x30] sm:$0xff]
        %v7760 = vld [vmem:[%s7752 + $0x38] sm:$0xff]
        %v7761 = vld [vmem:[%s7752 + $0x40] sm:$0xff]
        %v7762 = vld [vmem:[%s7752 + $0x48] sm:$0xff]
        %v7763 = vld [vmem:[%s7752 + $0x50] sm:$0xff]
        %v7764 = vld [vmem:[%s7752 + $0x58] sm:$0xff]
        %v7765 = vld [vmem:[%s7752 + $0x60] sm:$0xff]
        %v7766 = vld [vmem:[%s7752 + $0x68] sm:$0xff]
        %v7767 = vld [vmem:[%s7752 + $0x70] sm:$0xff]
        %v7768 = vld [vmem:[%s7752 + $0x78] sm:$0xff]
        %7769 = vmatprep.subr.mxu0 0.0
        %7770 = vmatpush1.msra.mxu0 %v7753
        %7771 = vmatprep.subr.mxu0 0.0
        %7772 = vmatpush1.msra.mxu0 %v7754
        %7773 = vmatprep.subr.mxu0 0.0
        %7774 = vmatpush1.msra.mxu0 %v7755
        %7775 = vmatprep.subr.mxu0 0.0
        %7776 = vmatpush1.msra.mxu0 %v7756
        %7777 = vmatprep.subr.mxu0 0.0
        %7778 = vmatpush1.msra.mxu0 %v7757
        %7779 = vmatprep.subr.mxu0 0.0
        %7780 = vmatpush1.msra.mxu0 %v7758
        %7781 = vmatprep.subr.mxu0 0.0
        %7782 = vmatpush1.msra.mxu0 %v7759
        %7783 = vmatprep.subr.mxu0 0.0
        %7784 = vmatpush1.msra.mxu0 %v7760
        %7785 = vmatprep.subr.mxu0 0.0
        %7786 = vmatpush1.msra.mxu0 %v7761
        %7787 = vmatprep.subr.mxu0 0.0
        %7788 = vmatpush1.msra.mxu0 %v7762
        %7789 = vmatprep.subr.mxu0 0.0
        %7790 = vmatpush1.msra.mxu0 %v7763
        %7791 = vmatprep.subr.mxu0 0.0
        %7792 = vmatpush1.msra.mxu0 %v7764
        %7793 = vmatprep.subr.mxu0 0.0
        %7794 = vmatpush1.msra.mxu0 %v7765
        %7795 = vmatprep.subr.mxu0 0.0
        %7796 = vmatpush1.msra.mxu0 %v7766
        %7797 = vmatprep.subr.mxu0 0.0
        %7798 = vmatpush1.msra.mxu0 %v7767
        %7799 = vmatprep.subr.mxu0 0.0
        %7800 = vmatpush1.msra.mxu0 %v7768
        %7801 = vmatprep.subr.mxu0 0.0
        %7802 = vmatpush1.msra.mxu0 0.0
        %7803 = vmatprep.subr.mxu0 0.0
        %7804 = vmatpush1.msra.mxu0 0.0
        %7805 = vmatprep.subr.mxu0 0.0
        %7806 = vmatpush1.msra.mxu0 0.0
        %7807 = vmatprep.subr.mxu0 0.0
        %7808 = vmatpush1.msra.mxu0 0.0
        %7809 = vmatprep.subr.mxu0 0.0
        %7810 = vmatpush1.msra.mxu0 0.0
        %7811 = vmatprep.subr.mxu0 0.0
        %7812 = vmatpush1.msra.mxu0 0.0
        %7813 = vmatprep.subr.mxu0 0.0
        %7814 = vmatpush1.msra.mxu0 0.0
        %7815 = vmatprep.subr.mxu0 0.0
        %7816 = vmatpush1.msra.mxu0 0.0
        %7817 = vmatprep.subr.mxu0 0.0
        %7818 = vmatpush1.msra.mxu0 0.0
        %7819 = vmatprep.subr.mxu0 0.0
        %7820 = vmatpush1.msra.mxu0 0.0
        %7821 = vmatprep.subr.mxu0 0.0
        %7822 = vmatpush1.msra.mxu0 0.0
        %7823 = vmatprep.subr.mxu0 0.0
        %7824 = vmatpush1.msra.mxu0 0.0
        %7825 = vmatprep.subr.mxu0 0.0
        %7826 = vmatpush1.msra.mxu0 0.0
        %7827 = vmatprep.subr.mxu0 0.0
        %7828 = vmatpush1.msra.mxu0 0.0
        %7829 = vmatprep.subr.mxu0 0.0
        %7830 = vmatpush1.msra.mxu0 0.0
        %7831 = vmatprep.subr.mxu0 0.0
        %7832 = vmatpush1.msra.mxu0 0.0
        %7833 = vmatprep.mubr.f32.mxu0 0.0
        %7834 = vmatmul.mubr.f32.gmra.mrb[0].mxu0 %v6434
        %v7835 = vpop.f32.mrb[0].mxu0
        %v7836 = vadd.f32 0.0, %v7835
        %v7837 = vpop.f32.mrb[0].mxu0
        %7838 = vdwg.mxu0
        %v7839 = vadd.f32 %v7751, %v7836
        %7840 = vst [vmem:[%s273] sm:$0x1] %v7839
        %s7841 = sand.u32 %s161, 1
        %s7842 = scalar_lea.sflag [#allocation6], %s7841
        %s7843 = sand.u32 %s161, 1
        %s7844 = scalar_lea.vmem [#allocation9], %s7843
        // Predicated region
        $region53: #{forward.1} parent=43 // pred_check
          %p7845 = pneg %p171
        $region54: #{forward.1} parent=43 // pred_check_branch
          %7847 = sbr.rel (%p7845) target = $region56
        $region55: #{forward.1} parent=43 // pred_region
          %s7849 = ssub.s32 16, 16
          %7850 = vsyncadd %s7842, %s7849
          %s7851 = smul.addr %s22, 16
          %s7852 = scalar_lea.hbm %s6, %s7851
          %s7854 = sshll.u32 %s7844, 4
          %s7855 = int_to_ptr.vmem [resolvable:$true] %s7854
          %7857 = dma.vmem_to_hbm [thread:$0]  %s7855, 16, %s7852, %s7842
        $region56: #{forward.1} parent=43 // pred_fallthru
          _
      $region44: #{forward.1} parent=5 // pred_fallthru
        _
      %p7858 = scmp.le.s32.totalorder 2, %s17
      // Predicated region
      $region57: #{forward.1} parent=5 // pred_check
        %p7859 = pneg %p7858
      $region58: #{forward.1} parent=5 // pred_check_branch
        %7861 = sbr.rel (%p7859) target = $region60
      $region59: #{forward.1} parent=5 // pred_region
        %s7862 = ssub.s32 %s17, 2
        // Predicated region
        $region61: #{forward.1} parent=59 // pred_check
          %p7863 = pneg %p177
        $region62: #{forward.1} parent=59 // pred_check_branch
          %7865 = sbr.rel (%p7863) target = $region64
        $region63: #{forward.1} parent=59 // pred_region
          %s7866 = sand.u32 %s162, 1
          %s7867 = scalar_lea.sflag [#allocation6], %s7866
          %s7868 = sand.u32 %s162, 1
          %s7869 = scalar_lea.vmem [#allocation9], %s7868
          %7870 = dma.done %s7867, 16
        $region64: #{forward.1} parent=59 // pred_fallthru
          _
      $region60: #{forward.1} parent=5 // pred_fallthru
        _
    $region6: #{forward.1} parent=1 // loop_footer
      %s21 = sadd.s32 1, %s17
    $region7: #{forward.1} parent=1 // loop_footer_branch
      %16 = sbr.rel target = $region3
    $region8: #{forward.1} parent=1 // loop_exit
      _
    %7871 = vsyncpa [#allocation5], 1
    %s7872 = scalar_lea.sflag [#allocation5], 1
    %7873 = vsyncpa %s7872, 1
    %7874 = vsyncpa [#allocation8], 1
    %7875 = vsyncpa [#allocation6], 1
    %s7876 = scalar_lea.sflag [#allocation6], 1
    %7877 = vsyncpa %s7876, 1

</llo_original>
